<compile_context>
chip_gen: v7x
topology: tpu7x:2x2x1
jax: 0.10.0
libtpu: 0.0.40
codegen_flags: <defaults>
</compile_context>

<pallas_src>
import functools

import jax
import jax.numpy as jnp
from jax.experimental import pallas as pl
from jax.experimental.pallas import tpu as pltpu


def _tile_n(n):
    # Point-tile size: whole cloud for small N, 256-row tiles otherwise.
    return n if n <= 256 else 256


_PARALLEL2 = pltpu.CompilerParams(dimension_semantics=("parallel", "parallel"))


# ----------------------------------------------------------------------------
# Kernel 1: fully fused EdgeConv layer
#   kNN + neighbor selection + (conv w/ folded BN) + LeakyReLU + max over k
# ----------------------------------------------------------------------------

def _edgeconv_kernel(xr_ref, xct_ref, xall_ref, cn_ref, wa_ref, wd_ref, b_ref,
                     out_ref, *, k):
    """One (batch, row-tile) step of a fused EdgeConv layer.

    xr_ref:   (1, TN, C)   row-tile of points (centers)
    xct_ref:  (1, C, N)    all points, pre-transposed (for the distance matmul)
    xall_ref: (1, N, C)    all points (for the neighbor projection p = x @ Wa)
    cn_ref:   (1, 1, N)    per-column squared norms ||x_j||^2
    wa_ref:   (C, Cout)    neighbor-term weight  (applied to x_j)
    wd_ref:   (C, Cout)    center-term weight    (Wb - Wa, applied to x_i)
    b_ref:    (1, Cout)    folded BN bias
    out_ref:  (1, TN, Cout)
    """
    f32 = jnp.float32
    xr = xr_ref[0]                                                   # (TN, C)
    xct = xct_ref[0]                                                 # (C, N)
    xall = xall_ref[0]                                               # (N, C)

    # score s[i, j] = 2 x_i.x_j - ||x_j||^2 ; the row term -||x_i||^2 is constant
    # per row and does not change the per-row top-k ranking, so it is dropped.
    s = 2.0 * jnp.dot(xr, xct, preferred_element_type=f32) - cn_ref[0]   # (TN, N)
    tn, n = s.shape

    # Per-point projections (linearity split of the 1x1 conv over [x_j - x_i, x_i]).
    # p_all is recomputed per row-tile; it is tiny (N*C*Cout FLOPs) vs. the rest.
    p_all = jnp.dot(xall, wa_ref[...], preferred_element_type=f32)       # (N, Cout)
    q = jnp.dot(xr, wd_ref[...], preferred_element_type=f32) + b_ref[...]  # (TN, Cout)

    col = jax.lax.broadcasted_iota(jnp.int32, (tn, n), 1).astype(f32)
    nbr_max = jnp.full(q.shape, -jnp.inf, f32)
    for _ in range(k):                       # K is small & static: unrolled passes
        m = jnp.max(s, axis=-1, keepdims=True)                           # (TN, 1)
        # first argmax column per row
        amax = jnp.min(jnp.where(s == m, col, float(n)), axis=-1, keepdims=True)
        onehot = (col == amax).astype(f32)                               # (TN, N)
        sel = jnp.dot(onehot, p_all, preferred_element_type=f32)         # (TN, Cout)
        nbr_max = jnp.maximum(nbr_max, sel)
        s = jnp.where(col == amax, -jnp.inf, s)                          # mask selected

    h = nbr_max + q
    out_ref[0] = jnp.where(h >= 0, h, 0.2 * h).astype(out_ref.dtype)     # LeakyReLU(0.2)


def edgeconv_layer(x_bnc, wa, wd, bias, k):
    """x_bnc: (B, N, C) -> (B, N, Cout) fused EdgeConv layer output."""
    B, N, C = x_bnc.shape
    Cout = wa.shape[1]
    cn = jnp.sum(x_bnc * x_bnc, axis=-1)[:, None, :]                 # (B, 1, N)
    xct = jnp.transpose(x_bnc, (0, 2, 1))                            # (B, C, N)
    TN = _tile_n(N)
    row = lambda b, t: (b, t, 0)
    full3 = lambda b, t: (b, 0, 0)
    const2 = lambda b, t: (0, 0)
    kern = functools.partial(_edgeconv_kernel, k=k)
    return pl.pallas_call(
        kern,
        out_shape=jax.ShapeDtypeStruct((B, N, Cout), jnp.float32),
        grid=(B, pl.cdiv(N, TN)),
        in_specs=[
            pl.BlockSpec((1, TN, C), row),
            pl.BlockSpec((1, C, N), full3),
            pl.BlockSpec((1, N, C), full3),
            pl.BlockSpec((1, 1, N), full3),
            pl.BlockSpec((C, Cout), const2),
            pl.BlockSpec((C, Cout), const2),
            pl.BlockSpec((1, Cout), const2),
        ],
        out_specs=pl.BlockSpec((1, TN, Cout), row),
        compiler_params=_PARALLEL2,
    )(x_bnc, xct, x_bnc, cn, wa, wd, bias)


# ----------------------------------------------------------------------------
# Kernel 2: final MLP_CONV head (512 -> 256 -> 64 -> 3), no HBM concat of x1..x4
# ----------------------------------------------------------------------------

def _mlp_head_kernel(x1_ref, x2_ref, x3_ref, x4_ref,
                     w1a_ref, w1b_ref, w1c_ref, w1d_ref, b1_ref,
                     w2_ref, b2_ref, w3_ref, b3_ref, out_ref):
    f32 = jnp.float32
    h = jnp.dot(x1_ref[0], w1a_ref[...], preferred_element_type=f32)
    h = h + jnp.dot(x2_ref[0], w1b_ref[...], preferred_element_type=f32)
    h = h + jnp.dot(x3_ref[0], w1c_ref[...], preferred_element_type=f32)
    h = h + jnp.dot(x4_ref[0], w1d_ref[...], preferred_element_type=f32)
    h = jnp.maximum(h + b1_ref[...], 0.0)
    h = jnp.maximum(jnp.dot(h, w2_ref[...], preferred_element_type=f32) + b2_ref[...], 0.0)
    h = jnp.dot(h, w3_ref[...], preferred_element_type=f32) + b3_ref[...]
    out_ref[0] = h.astype(out_ref.dtype)


def mlp_head(x1, x2, x3, x4, wm1, bm1, wm2, bm2, wm3, bm3):
    B, N, c1 = x1.shape
    c2, c3, c4 = x2.shape[-1], x3.shape[-1], x4.shape[-1]
    d1, d2, d3 = wm1.shape[1], wm2.shape[1], wm3.shape[1]
    # Split first-layer weight rows per input so x1..x4 never get concatenated in HBM.
    w1a = wm1[:c1]
    w1b = wm1[c1:c1 + c2]
    w1c = wm1[c1 + c2:c1 + c2 + c3]
    w1d = wm1[c1 + c2 + c3:]
    TN = _tile_n(N)
    row = lambda b, t: (b, t, 0)
    const2 = lambda b, t: (0, 0)
    return pl.pallas_call(
        _mlp_head_kernel,
        out_shape=jax.ShapeDtypeStruct((B, N, d3), jnp.float32),
        grid=(B, pl.cdiv(N, TN)),
        in_specs=[
            pl.BlockSpec((1, TN, c1), row),
            pl.BlockSpec((1, TN, c2), row),
            pl.BlockSpec((1, TN, c3), row),
            pl.BlockSpec((1, TN, c4), row),
            pl.BlockSpec((c1, d1), const2),
            pl.BlockSpec((c2, d1), const2),
            pl.BlockSpec((c3, d1), const2),
            pl.BlockSpec((c4, d1), const2),
            pl.BlockSpec((1, d1), const2),
            pl.BlockSpec((d1, d2), const2),
            pl.BlockSpec((1, d2), const2),
            pl.BlockSpec((d2, d3), const2),
            pl.BlockSpec((1, d3), const2),
        ],
        out_specs=pl.BlockSpec((1, TN, d3), row),
        compiler_params=_PARALLEL2,
    )(x1, x2, x3, x4, w1a, w1b, w1c, w1d, bm1, wm2, bm2, wm3, bm3)


# ----------------------------------------------------------------------------
# Parameter construction (deterministic, eval-mode BN folded into conv weight/bias)
# ----------------------------------------------------------------------------

def _fold_bn(w, conv_bias, gamma, beta, mean, var, eps=1e-5):
    scale = gamma / jnp.sqrt(var + eps)                              # (Cout,)
    w_eff = w * scale[None, :]
    b_eff = (conv_bias - mean) * scale + beta
    return w_eff, b_eff.reshape(1, -1)


def init_params(key):
    ks = iter(jax.random.split(key, 32))

    def conv_w(cin, cout):
        # PyTorch Conv weight (Cout, Cin, 1, 1) stored here as (Cin, Cout).
        return jax.random.normal(next(ks), (cin, cout), jnp.float32) * (1.0 / jnp.sqrt(cin))

    def bn(cout):
        gamma = 1.0 + 0.1 * jax.random.normal(next(ks), (cout,), jnp.float32)
        beta = 0.1 * jax.random.normal(next(ks), (cout,), jnp.float32)
        mean = jnp.zeros((cout,), jnp.float32)
        var = jnp.ones((cout,), jnp.float32)
        return gamma, beta, mean, var

    p = {}
    # EdgeConv layers: Conv2d(2*cin -> cout, bias=False) + BN2d + LeakyReLU(0.2)
    # Stored split for linearity: wa = W[:cin] (applied to x_j), wd = W[cin:] - W[:cin].
    for name, cin, cout in [("1", 3, 64), ("2", 64, 64), ("3", 64, 128), ("4", 128, 256)]:
        w = conv_w(2 * cin, cout)
        g, b, m, v = bn(cout)
        w_eff, b_eff = _fold_bn(w, jnp.zeros((cout,), jnp.float32), g, b, m, v)
        p["wa" + name] = w_eff[:cin]
        p["wd" + name] = w_eff[cin:] - w_eff[:cin]
        p["b" + name] = b_eff

    # MLP_CONV(512, [256, 64, 3], bn=True): Conv1d+BN+ReLU, Conv1d+BN+ReLU, Conv1d
    for name, cin, cout, has_bn in [("m1", 512, 256, True), ("m2", 256, 64, True), ("m3", 64, 3, False)]:
        w = conv_w(cin, cout)
        cb = 0.05 * jax.random.normal(next(ks), (cout,), jnp.float32)
        if has_bn:
            g, b, m, v = bn(cout)
            w_eff, b_eff = _fold_bn(w, cb, g, b, m, v)
        else:
            w_eff, b_eff = w, cb.reshape(1, -1)
        p["w" + name], p["b" + name] = w_eff, b_eff
    return p


# ----------------------------------------------------------------------------
# DGCNN forward
# ----------------------------------------------------------------------------

def dgcnn_forward(x_bcn, params, k):
    """x_bcn: (B, 3, N) point cloud (PyTorch layout). Returns (B, 3, N)."""
    x = jnp.transpose(x_bcn, (0, 2, 1)).astype(jnp.float32)         # (B, N, 3)

    feats = []
    h = x
    for name in ("1", "2", "3", "4"):
        h = edgeconv_layer(h, params["wa" + name], params["wd" + name],
                           params["b" + name], k)                   # fused Pallas kernel
        feats.append(h)                                             # 64, 64, 128, 256 ch

    out = mlp_head(feats[0], feats[1], feats[2], feats[3],
                   params["wm1"], params["bm1"],
                   params["wm2"], params["bm2"],
                   params["wm3"], params["bm3"])                    # (B, N, 3)
    return jnp.transpose(out, (0, 2, 1))                            # (B, 3, N)


# ----------------------------------------------------------------------------
# Pure-JAX reference (mirrors the PyTorch module) for a correctness check
# ----------------------------------------------------------------------------

def _ref_knn(x_bnc, k):
    inner = jnp.einsum("bnc,bmc->bnm", x_bnc, x_bnc)
    sq = jnp.sum(x_bnc * x_bnc, axis=-1)
    d = -sq[:, :, None] + 2.0 * inner - sq[:, None, :]
    return jax.lax.top_k(d, k)[1]


def _ref_edgeconv(x_bnc, wa, wd, bias, k):
    idx = _ref_knn(x_bnc, k)                                         # (B, N, K)
    xj = jax.vmap(lambda xb, ib: xb[ib])(x_bnc, idx)                 # (B, N, K, C)
    xi = jnp.broadcast_to(x_bnc[:, :, None, :], xj.shape)
    edge = jnp.concatenate([xj - xi, xi], axis=-1)                   # (B, N, K, 2C)
    w_full = jnp.concatenate([wa, wa + wd], axis=0)                  # (2C, Cout)
    h = jnp.einsum("bnkc,cd->bnkd", edge, w_full) + bias[None, None]
    h = jnp.where(h >= 0, h, 0.2 * h)
    return jnp.max(h, axis=2)


def _ref_forward(x_bcn, params, k):
    x = jnp.transpose(x_bcn, (0, 2, 1)).astype(jnp.float32)
    feats, h = [], x
    for name in ("1", "2", "3", "4"):
        h = _ref_edgeconv(h, params["wa" + name], params["wd" + name],
                          params["b" + name], k)
        feats.append(h)
    f = jnp.concatenate(feats, axis=-1)                              # (B, N, 512)
    h = jnp.maximum(f @ params["wm1"] + params["bm1"], 0.0)
    h = jnp.maximum(h @ params["wm2"] + params["bm2"], 0.0)
    h = h @ params["wm3"] + params["bm3"]
    return jnp.transpose(h, (0, 2, 1))


if __name__ == "__main__":
    key = jax.random.PRNGKey(0)
    k_pts, k_params = jax.random.split(key)

    B, N, K = 2, 16, 4                                               # input is (B, 3, N)
    x = jax.random.normal(k_pts, (B, 3, N), jnp.float32)
    params = init_params(k_params)

    fwd = jax.jit(lambda xx: dgcnn_forward(xx, params, K))
    out = fwd(x)
    jax.block_until_ready(out)

    assert out.shape == (B, 3, N), out.shape
    assert bool(jnp.all(jnp.isfinite(out)))

    ref = _ref_forward(x, params, K)
    assert bool(jnp.allclose(out, ref, rtol=1e-2, atol=1e-2)), float(
        jnp.max(jnp.abs(out - ref)))
    print("KERNEL_OK")
</pallas_src>

<mosaic_0001>
module attributes {stable_mosaic.version = 11 : i64} {
  func.func @_edgeconv_kernel(%arg0: i32, %arg1: i32, %arg2: memref<1x16x3xf32, #tpu.memory_space<vmem>>, %arg3: memref<1x3x16xf32, #tpu.memory_space<vmem>>, %arg4: memref<1x16x3xf32, #tpu.memory_space<vmem>>, %arg5: memref<1x1x16xf32, #tpu.memory_space<vmem>>, %arg6: memref<3x64xf32, #tpu.memory_space<vmem>>, %arg7: memref<3x64xf32, #tpu.memory_space<vmem>>, %arg8: memref<1x64xf32, #tpu.memory_space<vmem>>, %arg9: memref<1x16x64xf32, #tpu.memory_space<vmem>>) attributes {dimension_semantics = [#tpu.dimension_semantics<parallel>, #tpu.dimension_semantics<parallel>], iteration_bounds = array<i64: 2, 1>, scalar_prefetch = 0 : i64, scratch_operands = 0 : i64, tpu.core_type = #tpu.core_type<tc>, window_params = [{transform_indices = @transform_0, window_bounds = array<i64: 1, 16, 3>}, {transform_indices = @transform_1, window_bounds = array<i64: 1, 3, 16>}, {transform_indices = @transform_2, window_bounds = array<i64: 1, 16, 3>}, {transform_indices = @transform_3, window_bounds = array<i64: 1, 1, 16>}, {pipeline_mode = #tpu.pipeline_mode<synchronous>, transform_indices = @transform_4, window_bounds = array<i64: 3, 64>}, {pipeline_mode = #tpu.pipeline_mode<synchronous>, transform_indices = @transform_5, window_bounds = array<i64: 3, 64>}, {pipeline_mode = #tpu.pipeline_mode<synchronous>, transform_indices = @transform_6, window_bounds = array<i64: 1, 64>}, {transform_indices = @transform_7, window_bounds = array<i64: 1, 16, 64>}]} {
    %c0 = arith.constant 0 : index
    %c0_0 = arith.constant 0 : index
    %c0_1 = arith.constant 0 : index
    %0 = vector.load %arg2[%c0, %c0_0, %c0_1] : memref<1x16x3xf32, #tpu.memory_space<vmem>>, vector<1x16x3xf32>
    %1 = vector.shape_cast %0 : vector<1x16x3xf32> to vector<16x3xf32>
    %c0_2 = arith.constant 0 : index
    %c0_3 = arith.constant 0 : index
    %c0_4 = arith.constant 0 : index
    %2 = vector.load %arg3[%c0_2, %c0_3, %c0_4] : memref<1x3x16xf32, #tpu.memory_space<vmem>>, vector<1x3x16xf32>
    %3 = vector.shape_cast %2 : vector<1x3x16xf32> to vector<3x16xf32>
    %c0_5 = arith.constant 0 : index
    %c0_6 = arith.constant 0 : index
    %c0_7 = arith.constant 0 : index
    %4 = vector.load %arg4[%c0_5, %c0_6, %c0_7] : memref<1x16x3xf32, #tpu.memory_space<vmem>>, vector<1x16x3xf32>
    %5 = vector.shape_cast %4 : vector<1x16x3xf32> to vector<16x3xf32>
    %cst = arith.constant dense<0.000000e+00> : vector<16x16xf32>
    %6 = tpu.matmul %1, %3, %cst {dimension_numbers = #tpu.dot_dimension_numbers<[1], [0], [0], [1], [0, 0, 1, 1], [], []>} : vector<16x3xf32>, vector<3x16xf32>, vector<16x16xf32> -> vector<16x16xf32>
    %cst_8 = arith.constant 2.000000e+00 : f32
    %7 = vector.broadcast %cst_8 : f32 to vector<16x16xf32>
    %8 = arith.mulf %7, %6 : vector<16x16xf32>
    %c0_9 = arith.constant 0 : index
    %c0_10 = arith.constant 0 : index
    %c0_11 = arith.constant 0 : index
    %9 = vector.load %arg5[%c0_9, %c0_10, %c0_11] : memref<1x1x16xf32, #tpu.memory_space<vmem>>, vector<1x1x16xf32>
    %10 = vector.shape_cast %9 : vector<1x1x16xf32> to vector<1x16xf32>
    %11 = vector.broadcast %10 : vector<1x16xf32> to vector<16x16xf32>
    %12 = arith.subf %8, %11 : vector<16x16xf32>
    %c0_12 = arith.constant 0 : index
    %c0_13 = arith.constant 0 : index
    %13 = vector.load %arg6[%c0_12, %c0_13] : memref<3x64xf32, #tpu.memory_space<vmem>>, vector<3x64xf32>
    %cst_14 = arith.constant dense<0.000000e+00> : vector<16x64xf32>
    %14 = tpu.matmul %5, %13, %cst_14 {dimension_numbers = #tpu.dot_dimension_numbers<[1], [0], [0], [1], [0, 0, 1, 1], [], []>} : vector<16x3xf32>, vector<3x64xf32>, vector<16x64xf32> -> vector<16x64xf32>
    %c0_15 = arith.constant 0 : index
    %c0_16 = arith.constant 0 : index
    %15 = vector.load %arg7[%c0_15, %c0_16] : memref<3x64xf32, #tpu.memory_space<vmem>>, vector<3x64xf32>
    %cst_17 = arith.constant dense<0.000000e+00> : vector<16x64xf32>
    %16 = tpu.matmul %1, %15, %cst_17 {dimension_numbers = #tpu.dot_dimension_numbers<[1], [0], [0], [1], [0, 0, 1, 1], [], []>} : vector<16x3xf32>, vector<3x64xf32>, vector<16x64xf32> -> vector<16x64xf32>
    %c0_18 = arith.constant 0 : index
    %c0_19 = arith.constant 0 : index
    %17 = vector.load %arg8[%c0_18, %c0_19] : memref<1x64xf32, #tpu.memory_space<vmem>>, vector<1x64xf32>
    %18 = vector.broadcast %17 : vector<1x64xf32> to vector<16x64xf32>
    %19 = arith.addf %16, %18 : vector<16x64xf32>
    %20 = tpu.iota {dimensions = array<i32: 1>} : vector<16x16xi32>
    %21 = arith.sitofp %20 : vector<16x16xi32> to vector<16x16xf32>
    %cst_20 = arith.constant 0xFF800000 : f32
    %22 = vector.broadcast %cst_20 : f32 to vector<16x64xf32>
    %cst_21 = arith.constant dense<0xFF800000> : vector<16xf32>
    %23 = vector.multi_reduction <maximumf>, %12, %cst_21 [1] : vector<16x16xf32> to vector<16xf32>
    %24 = vector.shape_cast %23 : vector<16xf32> to vector<16x1xf32>
    %25 = vector.broadcast %24 : vector<16x1xf32> to vector<16x16xf32>
    %26 = arith.cmpf oeq, %12, %25 : vector<16x16xf32>
    %cst_22 = arith.constant 1.600000e+01 : f32
    %27 = vector.broadcast %cst_22 : f32 to vector<16x16xf32>
    %28 = arith.select %26, %21, %27 : vector<16x16xi1>, vector<16x16xf32>
    %cst_23 = arith.constant dense<0x7F800000> : vector<16xf32>
    %29 = vector.multi_reduction <minimumf>, %28, %cst_23 [1] : vector<16x16xf32> to vector<16xf32>
    %30 = vector.shape_cast %29 : vector<16xf32> to vector<16x1xf32>
    %31 = vector.broadcast %30 : vector<16x1xf32> to vector<16x16xf32>
    %32 = arith.cmpf oeq, %21, %31 : vector<16x16xf32>
    %33 = arith.extui %32 : vector<16x16xi1> to vector<16x16xi32>
    %34 = arith.sitofp %33 : vector<16x16xi32> to vector<16x16xf32>
    %cst_24 = arith.constant dense<0.000000e+00> : vector<16x64xf32>
    %35 = tpu.matmul %34, %14, %cst_24 {dimension_numbers = #tpu.dot_dimension_numbers<[1], [0], [0], [1], [0, 0, 1, 1], [], []>} : vector<16x16xf32>, vector<16x64xf32>, vector<16x64xf32> -> vector<16x64xf32>
    %36 = arith.maximumf %22, %35 : vector<16x64xf32>
    %37 = vector.broadcast %30 : vector<16x1xf32> to vector<16x16xf32>
    %38 = arith.cmpf oeq, %21, %37 : vector<16x16xf32>
    %cst_25 = arith.constant 0xFF800000 : f32
    %39 = vector.broadcast %cst_25 : f32 to vector<16x16xf32>
    %40 = arith.select %38, %39, %12 : vector<16x16xi1>, vector<16x16xf32>
    %cst_26 = arith.constant dense<0xFF800000> : vector<16xf32>
    %41 = vector.multi_reduction <maximumf>, %40, %cst_26 [1] : vector<16x16xf32> to vector<16xf32>
    %42 = vector.shape_cast %41 : vector<16xf32> to vector<16x1xf32>
    %43 = vector.broadcast %42 : vector<16x1xf32> to vector<16x16xf32>
    %44 = arith.cmpf oeq, %40, %43 : vector<16x16xf32>
    %cst_27 = arith.constant 1.600000e+01 : f32
    %45 = vector.broadcast %cst_27 : f32 to vector<16x16xf32>
    %46 = arith.select %44, %21, %45 : vector<16x16xi1>, vector<16x16xf32>
    %cst_28 = arith.constant dense<0x7F800000> : vector<16xf32>
    %47 = vector.multi_reduction <minimumf>, %46, %cst_28 [1] : vector<16x16xf32> to vector<16xf32>
    %48 = vector.shape_cast %47 : vector<16xf32> to vector<16x1xf32>
    %49 = vector.broadcast %48 : vector<16x1xf32> to vector<16x16xf32>
    %50 = arith.cmpf oeq, %21, %49 : vector<16x16xf32>
    %51 = arith.extui %50 : vector<16x16xi1> to vector<16x16xi32>
    %52 = arith.sitofp %51 : vector<16x16xi32> to vector<16x16xf32>
    %cst_29 = arith.constant dense<0.000000e+00> : vector<16x64xf32>
    %53 = tpu.matmul %52, %14, %cst_29 {dimension_numbers = #tpu.dot_dimension_numbers<[1], [0], [0], [1], [0, 0, 1, 1], [], []>} : vector<16x16xf32>, vector<16x64xf32>, vector<16x64xf32> -> vector<16x64xf32>
    %54 = arith.maximumf %36, %53 : vector<16x64xf32>
    %55 = vector.broadcast %48 : vector<16x1xf32> to vector<16x16xf32>
    %56 = arith.cmpf oeq, %21, %55 : vector<16x16xf32>
    %cst_30 = arith.constant 0xFF800000 : f32
    %57 = vector.broadcast %cst_30 : f32 to vector<16x16xf32>
    %58 = arith.select %56, %57, %40 : vector<16x16xi1>, vector<16x16xf32>
    %cst_31 = arith.constant dense<0xFF800000> : vector<16xf32>
    %59 = vector.multi_reduction <maximumf>, %58, %cst_31 [1] : vector<16x16xf32> to vector<16xf32>
    %60 = vector.shape_cast %59 : vector<16xf32> to vector<16x1xf32>
    %61 = vector.broadcast %60 : vector<16x1xf32> to vector<16x16xf32>
    %62 = arith.cmpf oeq, %58, %61 : vector<16x16xf32>
    %cst_32 = arith.constant 1.600000e+01 : f32
    %63 = vector.broadcast %cst_32 : f32 to vector<16x16xf32>
    %64 = arith.select %62, %21, %63 : vector<16x16xi1>, vector<16x16xf32>
    %cst_33 = arith.constant dense<0x7F800000> : vector<16xf32>
    %65 = vector.multi_reduction <minimumf>, %64, %cst_33 [1] : vector<16x16xf32> to vector<16xf32>
    %66 = vector.shape_cast %65 : vector<16xf32> to vector<16x1xf32>
    %67 = vector.broadcast %66 : vector<16x1xf32> to vector<16x16xf32>
    %68 = arith.cmpf oeq, %21, %67 : vector<16x16xf32>
    %69 = arith.extui %68 : vector<16x16xi1> to vector<16x16xi32>
    %70 = arith.sitofp %69 : vector<16x16xi32> to vector<16x16xf32>
    %cst_34 = arith.constant dense<0.000000e+00> : vector<16x64xf32>
    %71 = tpu.matmul %70, %14, %cst_34 {dimension_numbers = #tpu.dot_dimension_numbers<[1], [0], [0], [1], [0, 0, 1, 1], [], []>} : vector<16x16xf32>, vector<16x64xf32>, vector<16x64xf32> -> vector<16x64xf32>
    %72 = arith.maximumf %54, %71 : vector<16x64xf32>
    %73 = vector.broadcast %66 : vector<16x1xf32> to vector<16x16xf32>
    %74 = arith.cmpf oeq, %21, %73 : vector<16x16xf32>
    %cst_35 = arith.constant 0xFF800000 : f32
    %75 = vector.broadcast %cst_35 : f32 to vector<16x16xf32>
    %76 = arith.select %74, %75, %58 : vector<16x16xi1>, vector<16x16xf32>
    %cst_36 = arith.constant dense<0xFF800000> : vector<16xf32>
    %77 = vector.multi_reduction <maximumf>, %76, %cst_36 [1] : vector<16x16xf32> to vector<16xf32>
    %78 = vector.shape_cast %77 : vector<16xf32> to vector<16x1xf32>
    %79 = vector.broadcast %78 : vector<16x1xf32> to vector<16x16xf32>
    %80 = arith.cmpf oeq, %76, %79 : vector<16x16xf32>
    %cst_37 = arith.constant 1.600000e+01 : f32
    %81 = vector.broadcast %cst_37 : f32 to vector<16x16xf32>
    %82 = arith.select %80, %21, %81 : vector<16x16xi1>, vector<16x16xf32>
    %cst_38 = arith.constant dense<0x7F800000> : vector<16xf32>
    %83 = vector.multi_reduction <minimumf>, %82, %cst_38 [1] : vector<16x16xf32> to vector<16xf32>
    %84 = vector.shape_cast %83 : vector<16xf32> to vector<16x1xf32>
    %85 = vector.broadcast %84 : vector<16x1xf32> to vector<16x16xf32>
    %86 = arith.cmpf oeq, %21, %85 : vector<16x16xf32>
    %87 = arith.extui %86 : vector<16x16xi1> to vector<16x16xi32>
    %88 = arith.sitofp %87 : vector<16x16xi32> to vector<16x16xf32>
    %cst_39 = arith.constant dense<0.000000e+00> : vector<16x64xf32>
    %89 = tpu.matmul %88, %14, %cst_39 {dimension_numbers = #tpu.dot_dimension_numbers<[1], [0], [0], [1], [0, 0, 1, 1], [], []>} : vector<16x16xf32>, vector<16x64xf32>, vector<16x64xf32> -> vector<16x64xf32>
    %90 = arith.maximumf %72, %89 : vector<16x64xf32>
    %91 = arith.addf %90, %19 : vector<16x64xf32>
    %cst_40 = arith.constant 0.000000e+00 : f32
    %92 = vector.broadcast %cst_40 : f32 to vector<16x64xf32>
    %93 = arith.cmpf oge, %91, %92 : vector<16x64xf32>
    %cst_41 = arith.constant 2.000000e-01 : f32
    %94 = vector.broadcast %cst_41 : f32 to vector<16x64xf32>
    %95 = arith.mulf %94, %91 : vector<16x64xf32>
    %96 = arith.select %93, %91, %95 : vector<16x64xi1>, vector<16x64xf32>
    %c0_42 = arith.constant 0 : index
    %c0_43 = arith.constant 0 : index
    %c0_44 = arith.constant 0 : index
    %97 = vector.load %arg9[%c0_42, %c0_43, %c0_44] : memref<1x16x64xf32, #tpu.memory_space<vmem>>, vector<1x16x64xf32>
    %98 = vector.shape_cast %97 : vector<1x16x64xf32> to vector<16x64xf32>
    %99 = vector.shape_cast %96 : vector<16x64xf32> to vector<1x16x64xf32>
    tpu.vector_store %arg9[%c0_42, %c0_43, %c0_44], %99 {strides = array<i32>} : memref<1x16x64xf32, #tpu.memory_space<vmem>>, vector<1x16x64xf32>,
    return
  }
  func.func @transform_0(%arg0: i32, %arg1: i32) -> (i32, i32, i32) {
    %c0_i32 = arith.constant 0 : i32
    %c0_i32_0 = arith.constant 0 : i32
    return %arg0, %arg1, %c0_i32 : i32, i32, i32
  }
  func.func @transform_1(%arg0: i32, %arg1: i32) -> (i32, i32, i32) {
    %c0_i32 = arith.constant 0 : i32
    %c0_i32_0 = arith.constant 0 : i32
    %c0_i32_1 = arith.constant 0 : i32
    return %arg0, %c0_i32, %c0_i32_0 : i32, i32, i32
  }
  func.func @transform_2(%arg0: i32, %arg1: i32) -> (i32, i32, i32) {
    %c0_i32 = arith.constant 0 : i32
    %c0_i32_0 = arith.constant 0 : i32
    %c0_i32_1 = arith.constant 0 : i32
    return %arg0, %c0_i32, %c0_i32_0 : i32, i32, i32
  }
  func.func @transform_3(%arg0: i32, %arg1: i32) -> (i32, i32, i32) {
    %c0_i32 = arith.constant 0 : i32
    %c0_i32_0 = arith.constant 0 : i32
    %c0_i32_1 = arith.constant 0 : i32
    return %arg0, %c0_i32, %c0_i32_0 : i32, i32, i32
  }
  func.func @transform_4(%arg0: i32, %arg1: i32) -> (i32, i32) {
    %c0_i32 = arith.constant 0 : i32
    %c0_i32_0 = arith.constant 0 : i32
    %c0_i32_1 = arith.constant 0 : i32
    return %c0_i32, %c0_i32_0 : i32, i32
  }
  func.func @transform_5(%arg0: i32, %arg1: i32) -> (i32, i32) {
    %c0_i32 = arith.constant 0 : i32
    %c0_i32_0 = arith.constant 0 : i32
    %c0_i32_1 = arith.constant 0 : i32
    return %c0_i32, %c0_i32_0 : i32, i32
  }
  func.func @transform_6(%arg0: i32, %arg1: i32) -> (i32, i32) {
    %c0_i32 = arith.constant 0 : i32
    %c0_i32_0 = arith.constant 0 : i32
    %c0_i32_1 = arith.constant 0 : i32
    return %c0_i32, %c0_i32_0 : i32, i32
  }
  func.func @transform_7(%arg0: i32, %arg1: i32) -> (i32, i32, i32) {
    %c0_i32 = arith.constant 0 : i32
    %c0_i32_0 = arith.constant 0 : i32
    return %arg0, %arg1, %c0_i32 : i32, i32, i32
  }
}

module attributes {stable_mosaic.version = 11 : i64} {
  func.func @_edgeconv_kernel(%arg0: i32, %arg1: i32, %arg2: memref<1x16x64xf32, #tpu.memory_space<vmem>>, %arg3: memref<1x64x16xf32, #tpu.memory_space<vmem>>, %arg4: memref<1x16x64xf32, #tpu.memory_space<vmem>>, %arg5: memref<1x1x16xf32, #tpu.memory_space<vmem>>, %arg6: memref<64x64xf32, #tpu.memory_space<vmem>>, %arg7: memref<64x64xf32, #tpu.memory_space<vmem>>, %arg8: memref<1x64xf32, #tpu.memory_space<vmem>>, %arg9: memref<1x16x64xf32, #tpu.memory_space<vmem>>) attributes {dimension_semantics = [#tpu.dimension_semantics<parallel>, #tpu.dimension_semantics<parallel>], iteration_bounds = array<i64: 2, 1>, scalar_prefetch = 0 : i64, scratch_operands = 0 : i64, tpu.core_type = #tpu.core_type<tc>, window_params = [{transform_indices = @transform_0, window_bounds = array<i64: 1, 16, 64>}, {transform_indices = @transform_1, window_bounds = array<i64: 1, 64, 16>}, {transform_indices = @transform_2, window_bounds = array<i64: 1, 16, 64>}, {transform_indices = @transform_3, window_bounds = array<i64: 1, 1, 16>}, {pipeline_mode = #tpu.pipeline_mode<synchronous>, transform_indices = @transform_4, window_bounds = array<i64: 64, 64>}, {pipeline_mode = #tpu.pipeline_mode<synchronous>, transform_indices = @transform_5, window_bounds = array<i64: 64, 64>}, {pipeline_mode = #tpu.pipeline_mode<synchronous>, transform_indices = @transform_6, window_bounds = array<i64: 1, 64>}, {transform_indices = @transform_7, window_bounds = array<i64: 1, 16, 64>}]} {
    %c0 = arith.constant 0 : index
    %c0_0 = arith.constant 0 : index
    %c0_1 = arith.constant 0 : index
    %0 = vector.load %arg2[%c0, %c0_0, %c0_1] : memref<1x16x64xf32, #tpu.memory_space<vmem>>, vector<1x16x64xf32>
    %1 = vector.shape_cast %0 : vector<1x16x64xf32> to vector<16x64xf32>
    %c0_2 = arith.constant 0 : index
    %c0_3 = arith.constant 0 : index
    %c0_4 = arith.constant 0 : index
    %2 = vector.load %arg3[%c0_2, %c0_3, %c0_4] : memref<1x64x16xf32, #tpu.memory_space<vmem>>, vector<1x64x16xf32>
    %3 = vector.shape_cast %2 : vector<1x64x16xf32> to vector<64x16xf32>
    %c0_5 = arith.constant 0 : index
    %c0_6 = arith.constant 0 : index
    %c0_7 = arith.constant 0 : index
    %4 = vector.load %arg4[%c0_5, %c0_6, %c0_7] : memref<1x16x64xf32, #tpu.memory_space<vmem>>, vector<1x16x64xf32>
    %5 = vector.shape_cast %4 : vector<1x16x64xf32> to vector<16x64xf32>
    %cst = arith.constant dense<0.000000e+00> : vector<16x16xf32>
    %6 = tpu.matmul %1, %3, %cst {dimension_numbers = #tpu.dot_dimension_numbers<[1], [0], [0], [1], [0, 0, 1, 1], [], []>} : vector<16x64xf32>, vector<64x16xf32>, vector<16x16xf32> -> vector<16x16xf32>
    %cst_8 = arith.constant 2.000000e+00 : f32
    %7 = vector.broadcast %cst_8 : f32 to vector<16x16xf32>
    %8 = arith.mulf %7, %6 : vector<16x16xf32>
    %c0_9 = arith.constant 0 : index
    %c0_10 = arith.constant 0 : index
    %c0_11 = arith.constant 0 : index
    %9 = vector.load %arg5[%c0_9, %c0_10, %c0_11] : memref<1x1x16xf32, #tpu.memory_space<vmem>>, vector<1x1x16xf32>
    %10 = vector.shape_cast %9 : vector<1x1x16xf32> to vector<1x16xf32>
    %11 = vector.broadcast %10 : vector<1x16xf32> to vector<16x16xf32>
    %12 = arith.subf %8, %11 : vector<16x16xf32>
    %c0_12 = arith.constant 0 : index
    %c0_13 = arith.constant 0 : index
    %13 = vector.load %arg6[%c0_12, %c0_13] : memref<64x64xf32, #tpu.memory_space<vmem>>, vector<64x64xf32>
    %cst_14 = arith.constant dense<0.000000e+00> : vector<16x64xf32>
    %14 = tpu.matmul %5, %13, %cst_14 {dimension_numbers = #tpu.dot_dimension_numbers<[1], [0], [0], [1], [0, 0, 1, 1], [], []>} : vector<16x64xf32>, vector<64x64xf32>, vector<16x64xf32> -> vector<16x64xf32>
    %c0_15 = arith.constant 0 : index
    %c0_16 = arith.constant 0 : index
    %15 = vector.load %arg7[%c0_15, %c0_16] : memref<64x64xf32, #tpu.memory_space<vmem>>, vector<64x64xf32>
    %cst_17 = arith.constant dense<0.000000e+00> : vector<16x64xf32>
    %16 = tpu.matmul %1, %15, %cst_17 {dimension_numbers = #tpu.dot_dimension_numbers<[1], [0], [0], [1], [0, 0, 1, 1], [], []>} : vector<16x64xf32>, vector<64x64xf32>, vector<16x64xf32> -> vector<16x64xf32>
    %c0_18 = arith.constant 0 : index
    %c0_19 = arith.constant 0 : index
    %17 = vector.load %arg8[%c0_18, %c0_19] : memref<1x64xf32, #tpu.memory_space<vmem>>, vector<1x64xf32>
    %18 = vector.broadcast %17 : vector<1x64xf32> to vector<16x64xf32>
    %19 = arith.addf %16, %18 : vector<16x64xf32>
    %20 = tpu.iota {dimensions = array<i32: 1>} : vector<16x16xi32>
    %21 = arith.sitofp %20 : vector<16x16xi32> to vector<16x16xf32>
    %cst_20 = arith.constant 0xFF800000 : f32
    %22 = vector.broadcast %cst_20 : f32 to vector<16x64xf32>
    %cst_21 = arith.constant dense<0xFF800000> : vector<16xf32>
    %23 = vector.multi_reduction <maximumf>, %12, %cst_21 [1] : vector<16x16xf32> to vector<16xf32>
    %24 = vector.shape_cast %23 : vector<16xf32> to vector<16x1xf32>
    %25 = vector.broadcast %24 : vector<16x1xf32> to vector<16x16xf32>
    %26 = arith.cmpf oeq, %12, %25 : vector<16x16xf32>
    %cst_22 = arith.constant 1.600000e+01 : f32
    %27 = vector.broadcast %cst_22 : f32 to vector<16x16xf32>
    %28 = arith.select %26, %21, %27 : vector<16x16xi1>, vector<16x16xf32>
    %cst_23 = arith.constant dense<0x7F800000> : vector<16xf32>
    %29 = vector.multi_reduction <minimumf>, %28, %cst_23 [1] : vector<16x16xf32> to vector<16xf32>
    %30 = vector.shape_cast %29 : vector<16xf32> to vector<16x1xf32>
    %31 = vector.broadcast %30 : vector<16x1xf32> to vector<16x16xf32>
    %32 = arith.cmpf oeq, %21, %31 : vector<16x16xf32>
    %33 = arith.extui %32 : vector<16x16xi1> to vector<16x16xi32>
    %34 = arith.sitofp %33 : vector<16x16xi32> to vector<16x16xf32>
    %cst_24 = arith.constant dense<0.000000e+00> : vector<16x64xf32>
    %35 = tpu.matmul %34, %14, %cst_24 {dimension_numbers = #tpu.dot_dimension_numbers<[1], [0], [0], [1], [0, 0, 1, 1], [], []>} : vector<16x16xf32>, vector<16x64xf32>, vector<16x64xf32> -> vector<16x64xf32>
    %36 = arith.maximumf %22, %35 : vector<16x64xf32>
    %37 = vector.broadcast %30 : vector<16x1xf32> to vector<16x16xf32>
    %38 = arith.cmpf oeq, %21, %37 : vector<16x16xf32>
    %cst_25 = arith.constant 0xFF800000 : f32
    %39 = vector.broadcast %cst_25 : f32 to vector<16x16xf32>
    %40 = arith.select %38, %39, %12 : vector<16x16xi1>, vector<16x16xf32>
    %cst_26 = arith.constant dense<0xFF800000> : vector<16xf32>
    %41 = vector.multi_reduction <maximumf>, %40, %cst_26 [1] : vector<16x16xf32> to vector<16xf32>
    %42 = vector.shape_cast %41 : vector<16xf32> to vector<16x1xf32>
    %43 = vector.broadcast %42 : vector<16x1xf32> to vector<16x16xf32>
    %44 = arith.cmpf oeq, %40, %43 : vector<16x16xf32>
    %cst_27 = arith.constant 1.600000e+01 : f32
    %45 = vector.broadcast %cst_27 : f32 to vector<16x16xf32>
    %46 = arith.select %44, %21, %45 : vector<16x16xi1>, vector<16x16xf32>
    %cst_28 = arith.constant dense<0x7F800000> : vector<16xf32>
    %47 = vector.multi_reduction <minimumf>, %46, %cst_28 [1] : vector<16x16xf32> to vector<16xf32>
    %48 = vector.shape_cast %47 : vector<16xf32> to vector<16x1xf32>
    %49 = vector.broadcast %48 : vector<16x1xf32> to vector<16x16xf32>
    %50 = arith.cmpf oeq, %21, %49 : vector<16x16xf32>
    %51 = arith.extui %50 : vector<16x16xi1> to vector<16x16xi32>
    %52 = arith.sitofp %51 : vector<16x16xi32> to vector<16x16xf32>
    %cst_29 = arith.constant dense<0.000000e+00> : vector<16x64xf32>
    %53 = tpu.matmul %52, %14, %cst_29 {dimension_numbers = #tpu.dot_dimension_numbers<[1], [0], [0], [1], [0, 0, 1, 1], [], []>} : vector<16x16xf32>, vector<16x64xf32>, vector<16x64xf32> -> vector<16x64xf32>
    %54 = arith.maximumf %36, %53 : vector<16x64xf32>
    %55 = vector.broadcast %48 : vector<16x1xf32> to vector<16x16xf32>
    %56 = arith.cmpf oeq, %21, %55 : vector<16x16xf32>
    %cst_30 = arith.constant 0xFF800000 : f32
    %57 = vector.broadcast %cst_30 : f32 to vector<16x16xf32>
    %58 = arith.select %56, %57, %40 : vector<16x16xi1>, vector<16x16xf32>
    %cst_31 = arith.constant dense<0xFF800000> : vector<16xf32>
    %59 = vector.multi_reduction <maximumf>, %58, %cst_31 [1] : vector<16x16xf32> to vector<16xf32>
    %60 = vector.shape_cast %59 : vector<16xf32> to vector<16x1xf32>
    %61 = vector.broadcast %60 : vector<16x1xf32> to vector<16x16xf32>
    %62 = arith.cmpf oeq, %58, %61 : vector<16x16xf32>
    %cst_32 = arith.constant 1.600000e+01 : f32
    %63 = vector.broadcast %cst_32 : f32 to vector<16x16xf32>
    %64 = arith.select %62, %21, %63 : vector<16x16xi1>, vector<16x16xf32>
    %cst_33 = arith.constant dense<0x7F800000> : vector<16xf32>
    %65 = vector.multi_reduction <minimumf>, %64, %cst_33 [1] : vector<16x16xf32> to vector<16xf32>
    %66 = vector.shape_cast %65 : vector<16xf32> to vector<16x1xf32>
    %67 = vector.broadcast %66 : vector<16x1xf32> to vector<16x16xf32>
    %68 = arith.cmpf oeq, %21, %67 : vector<16x16xf32>
    %69 = arith.extui %68 : vector<16x16xi1> to vector<16x16xi32>
    %70 = arith.sitofp %69 : vector<16x16xi32> to vector<16x16xf32>
    %cst_34 = arith.constant dense<0.000000e+00> : vector<16x64xf32>
    %71 = tpu.matmul %70, %14, %cst_34 {dimension_numbers = #tpu.dot_dimension_numbers<[1], [0], [0], [1], [0, 0, 1, 1], [], []>} : vector<16x16xf32>, vector<16x64xf32>, vector<16x64xf32> -> vector<16x64xf32>
    %72 = arith.maximumf %54, %71 : vector<16x64xf32>
    %73 = vector.broadcast %66 : vector<16x1xf32> to vector<16x16xf32>
    %74 = arith.cmpf oeq, %21, %73 : vector<16x16xf32>
    %cst_35 = arith.constant 0xFF800000 : f32
    %75 = vector.broadcast %cst_35 : f32 to vector<16x16xf32>
    %76 = arith.select %74, %75, %58 : vector<16x16xi1>, vector<16x16xf32>
    %cst_36 = arith.constant dense<0xFF800000> : vector<16xf32>
    %77 = vector.multi_reduction <maximumf>, %76, %cst_36 [1] : vector<16x16xf32> to vector<16xf32>
    %78 = vector.shape_cast %77 : vector<16xf32> to vector<16x1xf32>
    %79 = vector.broadcast %78 : vector<16x1xf32> to vector<16x16xf32>
    %80 = arith.cmpf oeq, %76, %79 : vector<16x16xf32>
    %cst_37 = arith.constant 1.600000e+01 : f32
    %81 = vector.broadcast %cst_37 : f32 to vector<16x16xf32>
    %82 = arith.select %80, %21, %81 : vector<16x16xi1>, vector<16x16xf32>
    %cst_38 = arith.constant dense<0x7F800000> : vector<16xf32>
    %83 = vector.multi_reduction <minimumf>, %82, %cst_38 [1] : vector<16x16xf32> to vector<16xf32>
    %84 = vector.shape_cast %83 : vector<16xf32> to vector<16x1xf32>
    %85 = vector.broadcast %84 : vector<16x1xf32> to vector<16x16xf32>
    %86 = arith.cmpf oeq, %21, %85 : vector<16x16xf32>
    %87 = arith.extui %86 : vector<16x16xi1> to vector<16x16xi32>
    %88 = arith.sitofp %87 : vector<16x16xi32> to vector<16x16xf32>
    %cst_39 = arith.constant dense<0.000000e+00> : vector<16x64xf32>
    %89 = tpu.matmul %88, %14, %cst_39 {dimension_numbers = #tpu.dot_dimension_numbers<[1], [0], [0], [1], [0, 0, 1, 1], [], []>} : vector<16x16xf32>, vector<16x64xf32>, vector<16x64xf32> -> vector<16x64xf32>
    %90 = arith.maximumf %72, %89 : vector<16x64xf32>
    %91 = arith.addf %90, %19 : vector<16x64xf32>
    %cst_40 = arith.constant 0.000000e+00 : f32
    %92 = vector.broadcast %cst_40 : f32 to vector<16x64xf32>
    %93 = arith.cmpf oge, %91, %92 : vector<16x64xf32>
    %cst_41 = arith.constant 2.000000e-01 : f32
    %94 = vector.broadcast %cst_41 : f32 to vector<16x64xf32>
    %95 = arith.mulf %94, %91 : vector<16x64xf32>
    %96 = arith.select %93, %91, %95 : vector<16x64xi1>, vector<16x64xf32>
    %c0_42 = arith.constant 0 : index
    %c0_43 = arith.constant 0 : index
    %c0_44 = arith.constant 0 : index
    %97 = vector.load %arg9[%c0_42, %c0_43, %c0_44] : memref<1x16x64xf32, #tpu.memory_space<vmem>>, vector<1x16x64xf32>
    %98 = vector.shape_cast %97 : vector<1x16x64xf32> to vector<16x64xf32>
    %99 = vector.shape_cast %96 : vector<16x64xf32> to vector<1x16x64xf32>
    tpu.vector_store %arg9[%c0_42, %c0_43, %c0_44], %99 {strides = array<i32>} : memref<1x16x64xf32, #tpu.memory_space<vmem>>, vector<1x16x64xf32>,
    return
  }
  func.func @transform_0(%arg0: i32, %arg1: i32) -> (i32, i32, i32) {
    %c0_i32 = arith.constant 0 : i32
    %c0_i32_0 = arith.constant 0 : i32
    return %arg0, %arg1, %c0_i32 : i32, i32, i32
  }
  func.func @transform_1(%arg0: i32, %arg1: i32) -> (i32, i32, i32) {
    %c0_i32 = arith.constant 0 : i32
    %c0_i32_0 = arith.constant 0 : i32
    %c0_i32_1 = arith.constant 0 : i32
    return %arg0, %c0_i32, %c0_i32_0 : i32, i32, i32
  }
  func.func @transform_2(%arg0: i32, %arg1: i32) -> (i32, i32, i32) {
    %c0_i32 = arith.constant 0 : i32
    %c0_i32_0 = arith.constant 0 : i32
    %c0_i32_1 = arith.constant 0 : i32
    return %arg0, %c0_i32, %c0_i32_0 : i32, i32, i32
  }
  func.func @transform_3(%arg0: i32, %arg1: i32) -> (i32, i32, i32) {
    %c0_i32 = arith.constant 0 : i32
    %c0_i32_0 = arith.constant 0 : i32
    %c0_i32_1 = arith.constant 0 : i32
    return %arg0, %c0_i32, %c0_i32_0 : i32, i32, i32
  }
  func.func @transform_4(%arg0: i32, %arg1: i32) -> (i32, i32) {
    %c0_i32 = arith.constant 0 : i32
    %c0_i32_0 = arith.constant 0 : i32
    %c0_i32_1 = arith.constant 0 : i32
    return %c0_i32, %c0_i32_0 : i32, i32
  }
  func.func @transform_5(%arg0: i32, %arg1: i32) -> (i32, i32) {
    %c0_i32 = arith.constant 0 : i32
    %c0_i32_0 = arith.constant 0 : i32
    %c0_i32_1 = arith.constant 0 : i32
    return %c0_i32, %c0_i32_0 : i32, i32
  }
  func.func @transform_6(%arg0: i32, %arg1: i32) -> (i32, i32) {
    %c0_i32 = arith.constant 0 : i32
    %c0_i32_0 = arith.constant 0 : i32
    %c0_i32_1 = arith.constant 0 : i32
    return %c0_i32, %c0_i32_0 : i32, i32
  }
  func.func @transform_7(%arg0: i32, %arg1: i32) -> (i32, i32, i32) {
    %c0_i32 = arith.constant 0 : i32
    %c0_i32_0 = arith.constant 0 : i32
    return %arg0, %arg1, %c0_i32 : i32, i32, i32
  }
}

module attributes {stable_mosaic.version = 11 : i64} {
  func.func @_edgeconv_kernel(%arg0: i32, %arg1: i32, %arg2: memref<1x16x64xf32, #tpu.memory_space<vmem>>, %arg3: memref<1x64x16xf32, #tpu.memory_space<vmem>>, %arg4: memref<1x16x64xf32, #tpu.memory_space<vmem>>, %arg5: memref<1x1x16xf32, #tpu.memory_space<vmem>>, %arg6: memref<64x128xf32, #tpu.memory_space<vmem>>, %arg7: memref<64x128xf32, #tpu.memory_space<vmem>>, %arg8: memref<1x128xf32, #tpu.memory_space<vmem>>, %arg9: memref<1x16x128xf32, #tpu.memory_space<vmem>>) attributes {dimension_semantics = [#tpu.dimension_semantics<parallel>, #tpu.dimension_semantics<parallel>], iteration_bounds = array<i64: 2, 1>, scalar_prefetch = 0 : i64, scratch_operands = 0 : i64, tpu.core_type = #tpu.core_type<tc>, window_params = [{transform_indices = @transform_0, window_bounds = array<i64: 1, 16, 64>}, {transform_indices = @transform_1, window_bounds = array<i64: 1, 64, 16>}, {transform_indices = @transform_2, window_bounds = array<i64: 1, 16, 64>}, {transform_indices = @transform_3, window_bounds = array<i64: 1, 1, 16>}, {pipeline_mode = #tpu.pipeline_mode<synchronous>, transform_indices = @transform_4, window_bounds = array<i64: 64, 128>}, {pipeline_mode = #tpu.pipeline_mode<synchronous>, transform_indices = @transform_5, window_bounds = array<i64: 64, 128>}, {pipeline_mode = #tpu.pipeline_mode<synchronous>, transform_indices = @transform_6, window_bounds = array<i64: 1, 128>}, {transform_indices = @transform_7, window_bounds = array<i64: 1, 16, 128>}]} {
    %c0 = arith.constant 0 : index
    %c0_0 = arith.constant 0 : index
    %c0_1 = arith.constant 0 : index
    %0 = vector.load %arg2[%c0, %c0_0, %c0_1] : memref<1x16x64xf32, #tpu.memory_space<vmem>>, vector<1x16x64xf32>
    %1 = vector.shape_cast %0 : vector<1x16x64xf32> to vector<16x64xf32>
    %c0_2 = arith.constant 0 : index
    %c0_3 = arith.constant 0 : index
    %c0_4 = arith.constant 0 : index
    %2 = vector.load %arg3[%c0_2, %c0_3, %c0_4] : memref<1x64x16xf32, #tpu.memory_space<vmem>>, vector<1x64x16xf32>
    %3 = vector.shape_cast %2 : vector<1x64x16xf32> to vector<64x16xf32>
    %c0_5 = arith.constant 0 : index
    %c0_6 = arith.constant 0 : index
    %c0_7 = arith.constant 0 : index
    %4 = vector.load %arg4[%c0_5, %c0_6, %c0_7] : memref<1x16x64xf32, #tpu.memory_space<vmem>>, vector<1x16x64xf32>
    %5 = vector.shape_cast %4 : vector<1x16x64xf32> to vector<16x64xf32>
    %cst = arith.constant dense<0.000000e+00> : vector<16x16xf32>
    %6 = tpu.matmul %1, %3, %cst {dimension_numbers = #tpu.dot_dimension_numbers<[1], [0], [0], [1], [0, 0, 1, 1], [], []>} : vector<16x64xf32>, vector<64x16xf32>, vector<16x16xf32> -> vector<16x16xf32>
    %cst_8 = arith.constant 2.000000e+00 : f32
    %7 = vector.broadcast %cst_8 : f32 to vector<16x16xf32>
    %8 = arith.mulf %7, %6 : vector<16x16xf32>
    %c0_9 = arith.constant 0 : index
    %c0_10 = arith.constant 0 : index
    %c0_11 = arith.constant 0 : index
    %9 = vector.load %arg5[%c0_9, %c0_10, %c0_11] : memref<1x1x16xf32, #tpu.memory_space<vmem>>, vector<1x1x16xf32>
    %10 = vector.shape_cast %9 : vector<1x1x16xf32> to vector<1x16xf32>
    %11 = vector.broadcast %10 : vector<1x16xf32> to vector<16x16xf32>
    %12 = arith.subf %8, %11 : vector<16x16xf32>
    %c0_12 = arith.constant 0 : index
    %c0_13 = arith.constant 0 : index
    %13 = vector.load %arg6[%c0_12, %c0_13] : memref<64x128xf32, #tpu.memory_space<vmem>>, vector<64x128xf32>
    %cst_14 = arith.constant dense<0.000000e+00> : vector<16x128xf32>
    %14 = tpu.matmul %5, %13, %cst_14 {dimension_numbers = #tpu.dot_dimension_numbers<[1], [0], [0], [1], [0, 0, 1, 1], [], []>} : vector<16x64xf32>, vector<64x128xf32>, vector<16x128xf32> -> vector<16x128xf32>
    %c0_15 = arith.constant 0 : index
    %c0_16 = arith.constant 0 : index
    %15 = vector.load %arg7[%c0_15, %c0_16] : memref<64x128xf32, #tpu.memory_space<vmem>>, vector<64x128xf32>
    %cst_17 = arith.constant dense<0.000000e+00> : vector<16x128xf32>
    %16 = tpu.matmul %1, %15, %cst_17 {dimension_numbers = #tpu.dot_dimension_numbers<[1], [0], [0], [1], [0, 0, 1, 1], [], []>} : vector<16x64xf32>, vector<64x128xf32>, vector<16x128xf32> -> vector<16x128xf32>
    %c0_18 = arith.constant 0 : index
    %c0_19 = arith.constant 0 : index
    %17 = vector.load %arg8[%c0_18, %c0_19] : memref<1x128xf32, #tpu.memory_space<vmem>>, vector<1x128xf32>
    %18 = vector.broadcast %17 : vector<1x128xf32> to vector<16x128xf32>
    %19 = arith.addf %16, %18 : vector<16x128xf32>
    %20 = tpu.iota {dimensions = array<i32: 1>} : vector<16x16xi32>
    %21 = arith.sitofp %20 : vector<16x16xi32> to vector<16x16xf32>
    %cst_20 = arith.constant 0xFF800000 : f32
    %22 = vector.broadcast %cst_20 : f32 to vector<16x128xf32>
    %cst_21 = arith.constant dense<0xFF800000> : vector<16xf32>
    %23 = vector.multi_reduction <maximumf>, %12, %cst_21 [1] : vector<16x16xf32> to vector<16xf32>
    %24 = vector.shape_cast %23 : vector<16xf32> to vector<16x1xf32>
    %25 = vector.broadcast %24 : vector<16x1xf32> to vector<16x16xf32>
    %26 = arith.cmpf oeq, %12, %25 : vector<16x16xf32>
    %cst_22 = arith.constant 1.600000e+01 : f32
    %27 = vector.broadcast %cst_22 : f32 to vector<16x16xf32>
    %28 = arith.select %26, %21, %27 : vector<16x16xi1>, vector<16x16xf32>
    %cst_23 = arith.constant dense<0x7F800000> : vector<16xf32>
    %29 = vector.multi_reduction <minimumf>, %28, %cst_23 [1] : vector<16x16xf32> to vector<16xf32>
    %30 = vector.shape_cast %29 : vector<16xf32> to vector<16x1xf32>
    %31 = vector.broadcast %30 : vector<16x1xf32> to vector<16x16xf32>
    %32 = arith.cmpf oeq, %21, %31 : vector<16x16xf32>
    %33 = arith.extui %32 : vector<16x16xi1> to vector<16x16xi32>
    %34 = arith.sitofp %33 : vector<16x16xi32> to vector<16x16xf32>
    %cst_24 = arith.constant dense<0.000000e+00> : vector<16x128xf32>
    %35 = tpu.matmul %34, %14, %cst_24 {dimension_numbers = #tpu.dot_dimension_numbers<[1], [0], [0], [1], [0, 0, 1, 1], [], []>} : vector<16x16xf32>, vector<16x128xf32>, vector<16x128xf32> -> vector<16x128xf32>
    %36 = arith.maximumf %22, %35 : vector<16x128xf32>
    %37 = vector.broadcast %30 : vector<16x1xf32> to vector<16x16xf32>
    %38 = arith.cmpf oeq, %21, %37 : vector<16x16xf32>
    %cst_25 = arith.constant 0xFF800000 : f32
    %39 = vector.broadcast %cst_25 : f32 to vector<16x16xf32>
    %40 = arith.select %38, %39, %12 : vector<16x16xi1>, vector<16x16xf32>
    %cst_26 = arith.constant dense<0xFF800000> : vector<16xf32>
    %41 = vector.multi_reduction <maximumf>, %40, %cst_26 [1] : vector<16x16xf32> to vector<16xf32>
    %42 = vector.shape_cast %41 : vector<16xf32> to vector<16x1xf32>
    %43 = vector.broadcast %42 : vector<16x1xf32> to vector<16x16xf32>
    %44 = arith.cmpf oeq, %40, %43 : vector<16x16xf32>
    %cst_27 = arith.constant 1.600000e+01 : f32
    %45 = vector.broadcast %cst_27 : f32 to vector<16x16xf32>
    %46 = arith.select %44, %21, %45 : vector<16x16xi1>, vector<16x16xf32>
    %cst_28 = arith.constant dense<0x7F800000> : vector<16xf32>
    %47 = vector.multi_reduction <minimumf>, %46, %cst_28 [1] : vector<16x16xf32> to vector<16xf32>
    %48 = vector.shape_cast %47 : vector<16xf32> to vector<16x1xf32>
    %49 = vector.broadcast %48 : vector<16x1xf32> to vector<16x16xf32>
    %50 = arith.cmpf oeq, %21, %49 : vector<16x16xf32>
    %51 = arith.extui %50 : vector<16x16xi1> to vector<16x16xi32>
    %52 = arith.sitofp %51 : vector<16x16xi32> to vector<16x16xf32>
    %cst_29 = arith.constant dense<0.000000e+00> : vector<16x128xf32>
    %53 = tpu.matmul %52, %14, %cst_29 {dimension_numbers = #tpu.dot_dimension_numbers<[1], [0], [0], [1], [0, 0, 1, 1], [], []>} : vector<16x16xf32>, vector<16x128xf32>, vector<16x128xf32> -> vector<16x128xf32>
    %54 = arith.maximumf %36, %53 : vector<16x128xf32>
    %55 = vector.broadcast %48 : vector<16x1xf32> to vector<16x16xf32>
    %56 = arith.cmpf oeq, %21, %55 : vector<16x16xf32>
    %cst_30 = arith.constant 0xFF800000 : f32
    %57 = vector.broadcast %cst_30 : f32 to vector<16x16xf32>
    %58 = arith.select %56, %57, %40 : vector<16x16xi1>, vector<16x16xf32>
    %cst_31 = arith.constant dense<0xFF800000> : vector<16xf32>
    %59 = vector.multi_reduction <maximumf>, %58, %cst_31 [1] : vector<16x16xf32> to vector<16xf32>
    %60 = vector.shape_cast %59 : vector<16xf32> to vector<16x1xf32>
    %61 = vector.broadcast %60 : vector<16x1xf32> to vector<16x16xf32>
    %62 = arith.cmpf oeq, %58, %61 : vector<16x16xf32>
    %cst_32 = arith.constant 1.600000e+01 : f32
    %63 = vector.broadcast %cst_32 : f32 to vector<16x16xf32>
    %64 = arith.select %62, %21, %63 : vector<16x16xi1>, vector<16x16xf32>
    %cst_33 = arith.constant dense<0x7F800000> : vector<16xf32>
    %65 = vector.multi_reduction <minimumf>, %64, %cst_33 [1] : vector<16x16xf32> to vector<16xf32>
    %66 = vector.shape_cast %65 : vector<16xf32> to vector<16x1xf32>
    %67 = vector.broadcast %66 : vector<16x1xf32> to vector<16x16xf32>
    %68 = arith.cmpf oeq, %21, %67 : vector<16x16xf32>
    %69 = arith.extui %68 : vector<16x16xi1> to vector<16x16xi32>
    %70 = arith.sitofp %69 : vector<16x16xi32> to vector<16x16xf32>
    %cst_34 = arith.constant dense<0.000000e+00> : vector<16x128xf32>
    %71 = tpu.matmul %70, %14, %cst_34 {dimension_numbers = #tpu.dot_dimension_numbers<[1], [0], [0], [1], [0, 0, 1, 1], [], []>} : vector<16x16xf32>, vector<16x128xf32>, vector<16x128xf32> -> vector<16x128xf32>
    %72 = arith.maximumf %54, %71 : vector<16x128xf32>
    %73 = vector.broadcast %66 : vector<16x1xf32> to vector<16x16xf32>
    %74 = arith.cmpf oeq, %21, %73 : vector<16x16xf32>
    %cst_35 = arith.constant 0xFF800000 : f32
    %75 = vector.broadcast %cst_35 : f32 to vector<16x16xf32>
    %76 = arith.select %74, %75, %58 : vector<16x16xi1>, vector<16x16xf32>
    %cst_36 = arith.constant dense<0xFF800000> : vector<16xf32>
    %77 = vector.multi_reduction <maximumf>, %76, %cst_36 [1] : vector<16x16xf32> to vector<16xf32>
    %78 = vector.shape_cast %77 : vector<16xf32> to vector<16x1xf32>
    %79 = vector.broadcast %78 : vector<16x1xf32> to vector<16x16xf32>
    %80 = arith.cmpf oeq, %76, %79 : vector<16x16xf32>
    %cst_37 = arith.constant 1.600000e+01 : f32
    %81 = vector.broadcast %cst_37 : f32 to vector<16x16xf32>
    %82 = arith.select %80, %21, %81 : vector<16x16xi1>, vector<16x16xf32>
    %cst_38 = arith.constant dense<0x7F800000> : vector<16xf32>
    %83 = vector.multi_reduction <minimumf>, %82, %cst_38 [1] : vector<16x16xf32> to vector<16xf32>
    %84 = vector.shape_cast %83 : vector<16xf32> to vector<16x1xf32>
    %85 = vector.broadcast %84 : vector<16x1xf32> to vector<16x16xf32>
    %86 = arith.cmpf oeq, %21, %85 : vector<16x16xf32>
    %87 = arith.extui %86 : vector<16x16xi1> to vector<16x16xi32>
    %88 = arith.sitofp %87 : vector<16x16xi32> to vector<16x16xf32>
    %cst_39 = arith.constant dense<0.000000e+00> : vector<16x128xf32>
    %89 = tpu.matmul %88, %14, %cst_39 {dimension_numbers = #tpu.dot_dimension_numbers<[1], [0], [0], [1], [0, 0, 1, 1], [], []>} : vector<16x16xf32>, vector<16x128xf32>, vector<16x128xf32> -> vector<16x128xf32>
    %90 = arith.maximumf %72, %89 : vector<16x128xf32>
    %91 = arith.addf %90, %19 : vector<16x128xf32>
    %cst_40 = arith.constant 0.000000e+00 : f32
    %92 = vector.broadcast %cst_40 : f32 to vector<16x128xf32>
    %93 = arith.cmpf oge, %91, %92 : vector<16x128xf32>
    %cst_41 = arith.constant 2.000000e-01 : f32
    %94 = vector.broadcast %cst_41 : f32 to vector<16x128xf32>
    %95 = arith.mulf %94, %91 : vector<16x128xf32>
    %96 = arith.select %93, %91, %95 : vector<16x128xi1>, vector<16x128xf32>
    %c0_42 = arith.constant 0 : index
    %c0_43 = arith.constant 0 : index
    %c0_44 = arith.constant 0 : index
    %97 = vector.load %arg9[%c0_42, %c0_43, %c0_44] : memref<1x16x128xf32, #tpu.memory_space<vmem>>, vector<1x16x128xf32>
    %98 = vector.shape_cast %97 : vector<1x16x128xf32> to vector<16x128xf32>
    %99 = vector.shape_cast %96 : vector<16x128xf32> to vector<1x16x128xf32>
    tpu.vector_store %arg9[%c0_42, %c0_43, %c0_44], %99 {strides = array<i32>} : memref<1x16x128xf32, #tpu.memory_space<vmem>>, vector<1x16x128xf32>,
    return
  }
  func.func @transform_0(%arg0: i32, %arg1: i32) -> (i32, i32, i32) {
    %c0_i32 = arith.constant 0 : i32
    %c0_i32_0 = arith.constant 0 : i32
    return %arg0, %arg1, %c0_i32 : i32, i32, i32
  }
  func.func @transform_1(%arg0: i32, %arg1: i32) -> (i32, i32, i32) {
    %c0_i32 = arith.constant 0 : i32
    %c0_i32_0 = arith.constant 0 : i32
    %c0_i32_1 = arith.constant 0 : i32
    return %arg0, %c0_i32, %c0_i32_0 : i32, i32, i32
  }
  func.func @transform_2(%arg0: i32, %arg1: i32) -> (i32, i32, i32) {
    %c0_i32 = arith.constant 0 : i32
    %c0_i32_0 = arith.constant 0 : i32
    %c0_i32_1 = arith.constant 0 : i32
    return %arg0, %c0_i32, %c0_i32_0 : i32, i32, i32
  }
  func.func @transform_3(%arg0: i32, %arg1: i32) -> (i32, i32, i32) {
    %c0_i32 = arith.constant 0 : i32
    %c0_i32_0 = arith.constant 0 : i32
    %c0_i32_1 = arith.constant 0 : i32
    return %arg0, %c0_i32, %c0_i32_0 : i32, i32, i32
  }
  func.func @transform_4(%arg0: i32, %arg1: i32) -> (i32, i32) {
    %c0_i32 = arith.constant 0 : i32
    %c0_i32_0 = arith.constant 0 : i32
    %c0_i32_1 = arith.constant 0 : i32
    return %c0_i32, %c0_i32_0 : i32, i32
  }
  func.func @transform_5(%arg0: i32, %arg1: i32) -> (i32, i32) {
    %c0_i32 = arith.constant 0 : i32
    %c0_i32_0 = arith.constant 0 : i32
    %c0_i32_1 = arith.constant 0 : i32
    return %c0_i32, %c0_i32_0 : i32, i32
  }
  func.func @transform_6(%arg0: i32, %arg1: i32) -> (i32, i32) {
    %c0_i32 = arith.constant 0 : i32
    %c0_i32_0 = arith.constant 0 : i32
    %c0_i32_1 = arith.constant 0 : i32
    return %c0_i32, %c0_i32_0 : i32, i32
  }
  func.func @transform_7(%arg0: i32, %arg1: i32) -> (i32, i32, i32) {
    %c0_i32 = arith.constant 0 : i32
    %c0_i32_0 = arith.constant 0 : i32
    return %arg0, %arg1, %c0_i32 : i32, i32, i32
  }
}

module attributes {stable_mosaic.version = 11 : i64} {
  func.func @_edgeconv_kernel(%arg0: i32, %arg1: i32, %arg2: memref<1x16x128xf32, #tpu.memory_space<vmem>>, %arg3: memref<1x128x16xf32, #tpu.memory_space<vmem>>, %arg4: memref<1x16x128xf32, #tpu.memory_space<vmem>>, %arg5: memref<1x1x16xf32, #tpu.memory_space<vmem>>, %arg6: memref<128x256xf32, #tpu.memory_space<vmem>>, %arg7: memref<128x256xf32, #tpu.memory_space<vmem>>, %arg8: memref<1x256xf32, #tpu.memory_space<vmem>>, %arg9: memref<1x16x256xf32, #tpu.memory_space<vmem>>) attributes {dimension_semantics = [#tpu.dimension_semantics<parallel>, #tpu.dimension_semantics<parallel>], iteration_bounds = array<i64: 2, 1>, scalar_prefetch = 0 : i64, scratch_operands = 0 : i64, tpu.core_type = #tpu.core_type<tc>, window_params = [{transform_indices = @transform_0, window_bounds = array<i64: 1, 16, 128>}, {transform_indices = @transform_1, window_bounds = array<i64: 1, 128, 16>}, {transform_indices = @transform_2, window_bounds = array<i64: 1, 16, 128>}, {transform_indices = @transform_3, window_bounds = array<i64: 1, 1, 16>}, {pipeline_mode = #tpu.pipeline_mode<synchronous>, transform_indices = @transform_4, window_bounds = array<i64: 128, 256>}, {pipeline_mode = #tpu.pipeline_mode<synchronous>, transform_indices = @transform_5, window_bounds = array<i64: 128, 256>}, {pipeline_mode = #tpu.pipeline_mode<synchronous>, transform_indices = @transform_6, window_bounds = array<i64: 1, 256>}, {transform_indices = @transform_7, window_bounds = array<i64: 1, 16, 256>}]} {
    %c0 = arith.constant 0 : index
    %c0_0 = arith.constant 0 : index
    %c0_1 = arith.constant 0 : index
    %0 = vector.load %arg2[%c0, %c0_0, %c0_1] : memref<1x16x128xf32, #tpu.memory_space<vmem>>, vector<1x16x128xf32>
    %1 = vector.shape_cast %0 : vector<1x16x128xf32> to vector<16x128xf32>
    %c0_2 = arith.constant 0 : index
    %c0_3 = arith.constant 0 : index
    %c0_4 = arith.constant 0 : index
    %2 = vector.load %arg3[%c0_2, %c0_3, %c0_4] : memref<1x128x16xf32, #tpu.memory_space<vmem>>, vector<1x128x16xf32>
    %3 = vector.shape_cast %2 : vector<1x128x16xf32> to vector<128x16xf32>
    %c0_5 = arith.constant 0 : index
    %c0_6 = arith.constant 0 : index
    %c0_7 = arith.constant 0 : index
    %4 = vector.load %arg4[%c0_5, %c0_6, %c0_7] : memref<1x16x128xf32, #tpu.memory_space<vmem>>, vector<1x16x128xf32>
    %5 = vector.shape_cast %4 : vector<1x16x128xf32> to vector<16x128xf32>
    %cst = arith.constant dense<0.000000e+00> : vector<16x16xf32>
    %6 = tpu.matmul %1, %3, %cst {dimension_numbers = #tpu.dot_dimension_numbers<[1], [0], [0], [1], [0, 0, 1, 1], [], []>} : vector<16x128xf32>, vector<128x16xf32>, vector<16x16xf32> -> vector<16x16xf32>
    %cst_8 = arith.constant 2.000000e+00 : f32
    %7 = vector.broadcast %cst_8 : f32 to vector<16x16xf32>
    %8 = arith.mulf %7, %6 : vector<16x16xf32>
    %c0_9 = arith.constant 0 : index
    %c0_10 = arith.constant 0 : index
    %c0_11 = arith.constant 0 : index
    %9 = vector.load %arg5[%c0_9, %c0_10, %c0_11] : memref<1x1x16xf32, #tpu.memory_space<vmem>>, vector<1x1x16xf32>
    %10 = vector.shape_cast %9 : vector<1x1x16xf32> to vector<1x16xf32>
    %11 = vector.broadcast %10 : vector<1x16xf32> to vector<16x16xf32>
    %12 = arith.subf %8, %11 : vector<16x16xf32>
    %c0_12 = arith.constant 0 : index
    %c0_13 = arith.constant 0 : index
    %13 = vector.load %arg6[%c0_12, %c0_13] : memref<128x256xf32, #tpu.memory_space<vmem>>, vector<128x256xf32>
    %cst_14 = arith.constant dense<0.000000e+00> : vector<16x256xf32>
    %14 = tpu.matmul %5, %13, %cst_14 {dimension_numbers = #tpu.dot_dimension_numbers<[1], [0], [0], [1], [0, 0, 1, 1], [], []>} : vector<16x128xf32>, vector<128x256xf32>, vector<16x256xf32> -> vector<16x256xf32>
    %c0_15 = arith.constant 0 : index
    %c0_16 = arith.constant 0 : index
    %15 = vector.load %arg7[%c0_15, %c0_16] : memref<128x256xf32, #tpu.memory_space<vmem>>, vector<128x256xf32>
    %cst_17 = arith.constant dense<0.000000e+00> : vector<16x256xf32>
    %16 = tpu.matmul %1, %15, %cst_17 {dimension_numbers = #tpu.dot_dimension_numbers<[1], [0], [0], [1], [0, 0, 1, 1], [], []>} : vector<16x128xf32>, vector<128x256xf32>, vector<16x256xf32> -> vector<16x256xf32>
    %c0_18 = arith.constant 0 : index
    %c0_19 = arith.constant 0 : index
    %17 = vector.load %arg8[%c0_18, %c0_19] : memref<1x256xf32, #tpu.memory_space<vmem>>, vector<1x256xf32>
    %18 = vector.broadcast %17 : vector<1x256xf32> to vector<16x256xf32>
    %19 = arith.addf %16, %18 : vector<16x256xf32>
    %20 = tpu.iota {dimensions = array<i32: 1>} : vector<16x16xi32>
    %21 = arith.sitofp %20 : vector<16x16xi32> to vector<16x16xf32>
    %cst_20 = arith.constant 0xFF800000 : f32
    %22 = vector.broadcast %cst_20 : f32 to vector<16x256xf32>
    %cst_21 = arith.constant dense<0xFF800000> : vector<16xf32>
    %23 = vector.multi_reduction <maximumf>, %12, %cst_21 [1] : vector<16x16xf32> to vector<16xf32>
    %24 = vector.shape_cast %23 : vector<16xf32> to vector<16x1xf32>
    %25 = vector.broadcast %24 : vector<16x1xf32> to vector<16x16xf32>
    %26 = arith.cmpf oeq, %12, %25 : vector<16x16xf32>
    %cst_22 = arith.constant 1.600000e+01 : f32
    %27 = vector.broadcast %cst_22 : f32 to vector<16x16xf32>
    %28 = arith.select %26, %21, %27 : vector<16x16xi1>, vector<16x16xf32>
    %cst_23 = arith.constant dense<0x7F800000> : vector<16xf32>
    %29 = vector.multi_reduction <minimumf>, %28, %cst_23 [1] : vector<16x16xf32> to vector<16xf32>
    %30 = vector.shape_cast %29 : vector<16xf32> to vector<16x1xf32>
    %31 = vector.broadcast %30 : vector<16x1xf32> to vector<16x16xf32>
    %32 = arith.cmpf oeq, %21, %31 : vector<16x16xf32>
    %33 = arith.extui %32 : vector<16x16xi1> to vector<16x16xi32>
    %34 = arith.sitofp %33 : vector<16x16xi32> to vector<16x16xf32>
    %cst_24 = arith.constant dense<0.000000e+00> : vector<16x256xf32>
    %35 = tpu.matmul %34, %14, %cst_24 {dimension_numbers = #tpu.dot_dimension_numbers<[1], [0], [0], [1], [0, 0, 1, 1], [], []>} : vector<16x16xf32>, vector<16x256xf32>, vector<16x256xf32> -> vector<16x256xf32>
    %36 = arith.maximumf %22, %35 : vector<16x256xf32>
    %37 = vector.broadcast %30 : vector<16x1xf32> to vector<16x16xf32>
    %38 = arith.cmpf oeq, %21, %37 : vector<16x16xf32>
    %cst_25 = arith.constant 0xFF800000 : f32
    %39 = vector.broadcast %cst_25 : f32 to vector<16x16xf32>
    %40 = arith.select %38, %39, %12 : vector<16x16xi1>, vector<16x16xf32>
    %cst_26 = arith.constant dense<0xFF800000> : vector<16xf32>
    %41 = vector.multi_reduction <maximumf>, %40, %cst_26 [1] : vector<16x16xf32> to vector<16xf32>
    %42 = vector.shape_cast %41 : vector<16xf32> to vector<16x1xf32>
    %43 = vector.broadcast %42 : vector<16x1xf32> to vector<16x16xf32>
    %44 = arith.cmpf oeq, %40, %43 : vector<16x16xf32>
    %cst_27 = arith.constant 1.600000e+01 : f32
    %45 = vector.broadcast %cst_27 : f32 to vector<16x16xf32>
    %46 = arith.select %44, %21, %45 : vector<16x16xi1>, vector<16x16xf32>
    %cst_28 = arith.constant dense<0x7F800000> : vector<16xf32>
    %47 = vector.multi_reduction <minimumf>, %46, %cst_28 [1] : vector<16x16xf32> to vector<16xf32>
    %48 = vector.shape_cast %47 : vector<16xf32> to vector<16x1xf32>
    %49 = vector.broadcast %48 : vector<16x1xf32> to vector<16x16xf32>
    %50 = arith.cmpf oeq, %21, %49 : vector<16x16xf32>
    %51 = arith.extui %50 : vector<16x16xi1> to vector<16x16xi32>
    %52 = arith.sitofp %51 : vector<16x16xi32> to vector<16x16xf32>
    %cst_29 = arith.constant dense<0.000000e+00> : vector<16x256xf32>
    %53 = tpu.matmul %52, %14, %cst_29 {dimension_numbers = #tpu.dot_dimension_numbers<[1], [0], [0], [1], [0, 0, 1, 1], [], []>} : vector<16x16xf32>, vector<16x256xf32>, vector<16x256xf32> -> vector<16x256xf32>
    %54 = arith.maximumf %36, %53 : vector<16x256xf32>
    %55 = vector.broadcast %48 : vector<16x1xf32> to vector<16x16xf32>
    %56 = arith.cmpf oeq, %21, %55 : vector<16x16xf32>
    %cst_30 = arith.constant 0xFF800000 : f32
    %57 = vector.broadcast %cst_30 : f32 to vector<16x16xf32>
    %58 = arith.select %56, %57, %40 : vector<16x16xi1>, vector<16x16xf32>
    %cst_31 = arith.constant dense<0xFF800000> : vector<16xf32>
    %59 = vector.multi_reduction <maximumf>, %58, %cst_31 [1] : vector<16x16xf32> to vector<16xf32>
    %60 = vector.shape_cast %59 : vector<16xf32> to vector<16x1xf32>
    %61 = vector.broadcast %60 : vector<16x1xf32> to vector<16x16xf32>
    %62 = arith.cmpf oeq, %58, %61 : vector<16x16xf32>
    %cst_32 = arith.constant 1.600000e+01 : f32
    %63 = vector.broadcast %cst_32 : f32 to vector<16x16xf32>
    %64 = arith.select %62, %21, %63 : vector<16x16xi1>, vector<16x16xf32>
    %cst_33 = arith.constant dense<0x7F800000> : vector<16xf32>
    %65 = vector.multi_reduction <minimumf>, %64, %cst_33 [1] : vector<16x16xf32> to vector<16xf32>
    %66 = vector.shape_cast %65 : vector<16xf32> to vector<16x1xf32>
    %67 = vector.broadcast %66 : vector<16x1xf32> to vector<16x16xf32>
    %68 = arith.cmpf oeq, %21, %67 : vector<16x16xf32>
    %69 = arith.extui %68 : vector<16x16xi1> to vector<16x16xi32>
    %70 = arith.sitofp %69 : vector<16x16xi32> to vector<16x16xf32>
    %cst_34 = arith.constant dense<0.000000e+00> : vector<16x256xf32>
    %71 = tpu.matmul %70, %14, %cst_34 {dimension_numbers = #tpu.dot_dimension_numbers<[1], [0], [0], [1], [0, 0, 1, 1], [], []>} : vector<16x16xf32>, vector<16x256xf32>, vector<16x256xf32> -> vector<16x256xf32>
    %72 = arith.maximumf %54, %71 : vector<16x256xf32>
    %73 = vector.broadcast %66 : vector<16x1xf32> to vector<16x16xf32>
    %74 = arith.cmpf oeq, %21, %73 : vector<16x16xf32>
    %cst_35 = arith.constant 0xFF800000 : f32
    %75 = vector.broadcast %cst_35 : f32 to vector<16x16xf32>
    %76 = arith.select %74, %75, %58 : vector<16x16xi1>, vector<16x16xf32>
    %cst_36 = arith.constant dense<0xFF800000> : vector<16xf32>
    %77 = vector.multi_reduction <maximumf>, %76, %cst_36 [1] : vector<16x16xf32> to vector<16xf32>
    %78 = vector.shape_cast %77 : vector<16xf32> to vector<16x1xf32>
    %79 = vector.broadcast %78 : vector<16x1xf32> to vector<16x16xf32>
    %80 = arith.cmpf oeq, %76, %79 : vector<16x16xf32>
    %cst_37 = arith.constant 1.600000e+01 : f32
    %81 = vector.broadcast %cst_37 : f32 to vector<16x16xf32>
    %82 = arith.select %80, %21, %81 : vector<16x16xi1>, vector<16x16xf32>
    %cst_38 = arith.constant dense<0x7F800000> : vector<16xf32>
    %83 = vector.multi_reduction <minimumf>, %82, %cst_38 [1] : vector<16x16xf32> to vector<16xf32>
    %84 = vector.shape_cast %83 : vector<16xf32> to vector<16x1xf32>
    %85 = vector.broadcast %84 : vector<16x1xf32> to vector<16x16xf32>
    %86 = arith.cmpf oeq, %21, %85 : vector<16x16xf32>
    %87 = arith.extui %86 : vector<16x16xi1> to vector<16x16xi32>
    %88 = arith.sitofp %87 : vector<16x16xi32> to vector<16x16xf32>
    %cst_39 = arith.constant dense<0.000000e+00> : vector<16x256xf32>
    %89 = tpu.matmul %88, %14, %cst_39 {dimension_numbers = #tpu.dot_dimension_numbers<[1], [0], [0], [1], [0, 0, 1, 1], [], []>} : vector<16x16xf32>, vector<16x256xf32>, vector<16x256xf32> -> vector<16x256xf32>
    %90 = arith.maximumf %72, %89 : vector<16x256xf32>
    %91 = arith.addf %90, %19 : vector<16x256xf32>
    %cst_40 = arith.constant 0.000000e+00 : f32
    %92 = vector.broadcast %cst_40 : f32 to vector<16x256xf32>
    %93 = arith.cmpf oge, %91, %92 : vector<16x256xf32>
    %cst_41 = arith.constant 2.000000e-01 : f32
    %94 = vector.broadcast %cst_41 : f32 to vector<16x256xf32>
    %95 = arith.mulf %94, %91 : vector<16x256xf32>
    %96 = arith.select %93, %91, %95 : vector<16x256xi1>, vector<16x256xf32>
    %c0_42 = arith.constant 0 : index
    %c0_43 = arith.constant 0 : index
    %c0_44 = arith.constant 0 : index
    %97 = vector.load %arg9[%c0_42, %c0_43, %c0_44] : memref<1x16x256xf32, #tpu.memory_space<vmem>>, vector<1x16x256xf32>
    %98 = vector.shape_cast %97 : vector<1x16x256xf32> to vector<16x256xf32>
    %99 = vector.shape_cast %96 : vector<16x256xf32> to vector<1x16x256xf32>
    tpu.vector_store %arg9[%c0_42, %c0_43, %c0_44], %99 {strides = array<i32>} : memref<1x16x256xf32, #tpu.memory_space<vmem>>, vector<1x16x256xf32>,
    return
  }
  func.func @transform_0(%arg0: i32, %arg1: i32) -> (i32, i32, i32) {
    %c0_i32 = arith.constant 0 : i32
    %c0_i32_0 = arith.constant 0 : i32
    return %arg0, %arg1, %c0_i32 : i32, i32, i32
  }
  func.func @transform_1(%arg0: i32, %arg1: i32) -> (i32, i32, i32) {
    %c0_i32 = arith.constant 0 : i32
    %c0_i32_0 = arith.constant 0 : i32
    %c0_i32_1 = arith.constant 0 : i32
    return %arg0, %c0_i32, %c0_i32_0 : i32, i32, i32
  }
  func.func @transform_2(%arg0: i32, %arg1: i32) -> (i32, i32, i32) {
    %c0_i32 = arith.constant 0 : i32
    %c0_i32_0 = arith.constant 0 : i32
    %c0_i32_1 = arith.constant 0 : i32
    return %arg0, %c0_i32, %c0_i32_0 : i32, i32, i32
  }
  func.func @transform_3(%arg0: i32, %arg1: i32) -> (i32, i32, i32) {
    %c0_i32 = arith.constant 0 : i32
    %c0_i32_0 = arith.constant 0 : i32
    %c0_i32_1 = arith.constant 0 : i32
    return %arg0, %c0_i32, %c0_i32_0 : i32, i32, i32
  }
  func.func @transform_4(%arg0: i32, %arg1: i32) -> (i32, i32) {
    %c0_i32 = arith.constant 0 : i32
    %c0_i32_0 = arith.constant 0 : i32
    %c0_i32_1 = arith.constant 0 : i32
    return %c0_i32, %c0_i32_0 : i32, i32
  }
  func.func @transform_5(%arg0: i32, %arg1: i32) -> (i32, i32) {
    %c0_i32 = arith.constant 0 : i32
    %c0_i32_0 = arith.constant 0 : i32
    %c0_i32_1 = arith.constant 0 : i32
    return %c0_i32, %c0_i32_0 : i32, i32
  }
  func.func @transform_6(%arg0: i32, %arg1: i32) -> (i32, i32) {
    %c0_i32 = arith.constant 0 : i32
    %c0_i32_0 = arith.constant 0 : i32
    %c0_i32_1 = arith.constant 0 : i32
    return %c0_i32, %c0_i32_0 : i32, i32
  }
  func.func @transform_7(%arg0: i32, %arg1: i32) -> (i32, i32, i32) {
    %c0_i32 = arith.constant 0 : i32
    %c0_i32_0 = arith.constant 0 : i32
    return %arg0, %arg1, %c0_i32 : i32, i32, i32
  }
}

module attributes {stable_mosaic.version = 11 : i64} {
  func.func @_mlp_head_kernel(%arg0: i32, %arg1: i32, %arg2: memref<1x16x64xf32, #tpu.memory_space<vmem>>, %arg3: memref<1x16x64xf32, #tpu.memory_space<vmem>>, %arg4: memref<1x16x128xf32, #tpu.memory_space<vmem>>, %arg5: memref<1x16x256xf32, #tpu.memory_space<vmem>>, %arg6: memref<64x256xf32, #tpu.memory_space<vmem>>, %arg7: memref<64x256xf32, #tpu.memory_space<vmem>>, %arg8: memref<128x256xf32, #tpu.memory_space<vmem>>, %arg9: memref<256x256xf32, #tpu.memory_space<vmem>>, %arg10: memref<1x256xf32, #tpu.memory_space<vmem>>, %arg11: memref<256x64xf32, #tpu.memory_space<vmem>>, %arg12: memref<1x64xf32, #tpu.memory_space<vmem>>, %arg13: memref<64x3xf32, #tpu.memory_space<vmem>>, %arg14: memref<1x3xf32, #tpu.memory_space<vmem>>, %arg15: memref<1x16x3xf32, #tpu.memory_space<vmem>>) attributes {dimension_semantics = [#tpu.dimension_semantics<parallel>, #tpu.dimension_semantics<parallel>], iteration_bounds = array<i64: 2, 1>, scalar_prefetch = 0 : i64, scratch_operands = 0 : i64, tpu.core_type = #tpu.core_type<tc>, window_params = [{transform_indices = @transform_0, window_bounds = array<i64: 1, 16, 64>}, {transform_indices = @transform_1, window_bounds = array<i64: 1, 16, 64>}, {transform_indices = @transform_2, window_bounds = array<i64: 1, 16, 128>}, {transform_indices = @transform_3, window_bounds = array<i64: 1, 16, 256>}, {pipeline_mode = #tpu.pipeline_mode<synchronous>, transform_indices = @transform_4, window_bounds = array<i64: 64, 256>}, {pipeline_mode = #tpu.pipeline_mode<synchronous>, transform_indices = @transform_5, window_bounds = array<i64: 64, 256>}, {pipeline_mode = #tpu.pipeline_mode<synchronous>, transform_indices = @transform_6, window_bounds = array<i64: 128, 256>}, {pipeline_mode = #tpu.pipeline_mode<synchronous>, transform_indices = @transform_7, window_bounds = array<i64: 256, 256>}, {pipeline_mode = #tpu.pipeline_mode<synchronous>, transform_indices = @transform_8, window_bounds = array<i64: 1, 256>}, {pipeline_mode = #tpu.pipeline_mode<synchronous>, transform_indices = @transform_9, window_bounds = array<i64: 256, 64>}, {pipeline_mode = #tpu.pipeline_mode<synchronous>, transform_indices = @transform_10, window_bounds = array<i64: 1, 64>}, {pipeline_mode = #tpu.pipeline_mode<synchronous>, transform_indices = @transform_11, window_bounds = array<i64: 64, 3>}, {pipeline_mode = #tpu.pipeline_mode<synchronous>, transform_indices = @transform_12, window_bounds = array<i64: 1, 3>}, {transform_indices = @transform_13, window_bounds = array<i64: 1, 16, 3>}]} {
    %c0 = arith.constant 0 : index
    %c0_0 = arith.constant 0 : index
    %c0_1 = arith.constant 0 : index
    %0 = vector.load %arg2[%c0, %c0_0, %c0_1] : memref<1x16x64xf32, #tpu.memory_space<vmem>>, vector<1x16x64xf32>
    %1 = vector.shape_cast %0 : vector<1x16x64xf32> to vector<16x64xf32>
    %c0_2 = arith.constant 0 : index
    %c0_3 = arith.constant 0 : index
    %2 = vector.load %arg6[%c0_2, %c0_3] : memref<64x256xf32, #tpu.memory_space<vmem>>, vector<64x256xf32>
    %cst = arith.constant dense<0.000000e+00> : vector<16x256xf32>
    %3 = tpu.matmul %1, %2, %cst {dimension_numbers = #tpu.dot_dimension_numbers<[1], [0], [0], [1], [0, 0, 1, 1], [], []>} : vector<16x64xf32>, vector<64x256xf32>, vector<16x256xf32> -> vector<16x256xf32>
    %c0_4 = arith.constant 0 : index
    %c0_5 = arith.constant 0 : index
    %c0_6 = arith.constant 0 : index
    %4 = vector.load %arg3[%c0_4, %c0_5, %c0_6] : memref<1x16x64xf32, #tpu.memory_space<vmem>>, vector<1x16x64xf32>
    %5 = vector.shape_cast %4 : vector<1x16x64xf32> to vector<16x64xf32>
    %c0_7 = arith.constant 0 : index
    %c0_8 = arith.constant 0 : index
    %6 = vector.load %arg7[%c0_7, %c0_8] : memref<64x256xf32, #tpu.memory_space<vmem>>, vector<64x256xf32>
    %cst_9 = arith.constant dense<0.000000e+00> : vector<16x256xf32>
    %7 = tpu.matmul %5, %6, %cst_9 {dimension_numbers = #tpu.dot_dimension_numbers<[1], [0], [0], [1], [0, 0, 1, 1], [], []>} : vector<16x64xf32>, vector<64x256xf32>, vector<16x256xf32> -> vector<16x256xf32>
    %8 = arith.addf %3, %7 : vector<16x256xf32>
    %c0_10 = arith.constant 0 : index
    %c0_11 = arith.constant 0 : index
    %c0_12 = arith.constant 0 : index
    %9 = vector.load %arg4[%c0_10, %c0_11, %c0_12] : memref<1x16x128xf32, #tpu.memory_space<vmem>>, vector<1x16x128xf32>
    %10 = vector.shape_cast %9 : vector<1x16x128xf32> to vector<16x128xf32>
    %c0_13 = arith.constant 0 : index
    %c0_14 = arith.constant 0 : index
    %11 = vector.load %arg8[%c0_13, %c0_14] : memref<128x256xf32, #tpu.memory_space<vmem>>, vector<128x256xf32>
    %cst_15 = arith.constant dense<0.000000e+00> : vector<16x256xf32>
    %12 = tpu.matmul %10, %11, %cst_15 {dimension_numbers = #tpu.dot_dimension_numbers<[1], [0], [0], [1], [0, 0, 1, 1], [], []>} : vector<16x128xf32>, vector<128x256xf32>, vector<16x256xf32> -> vector<16x256xf32>
    %13 = arith.addf %8, %12 : vector<16x256xf32>
    %c0_16 = arith.constant 0 : index
    %c0_17 = arith.constant 0 : index
    %c0_18 = arith.constant 0 : index
    %14 = vector.load %arg5[%c0_16, %c0_17, %c0_18] : memref<1x16x256xf32, #tpu.memory_space<vmem>>, vector<1x16x256xf32>
    %15 = vector.shape_cast %14 : vector<1x16x256xf32> to vector<16x256xf32>
    %c0_19 = arith.constant 0 : index
    %c0_20 = arith.constant 0 : index
    %16 = vector.load %arg9[%c0_19, %c0_20] : memref<256x256xf32, #tpu.memory_space<vmem>>, vector<256x256xf32>
    %cst_21 = arith.constant dense<0.000000e+00> : vector<16x256xf32>
    %17 = tpu.matmul %15, %16, %cst_21 {dimension_numbers = #tpu.dot_dimension_numbers<[1], [0], [0], [1], [0, 0, 1, 1], [], []>} : vector<16x256xf32>, vector<256x256xf32>, vector<16x256xf32> -> vector<16x256xf32>
    %18 = arith.addf %13, %17 : vector<16x256xf32>
    %c0_22 = arith.constant 0 : index
    %c0_23 = arith.constant 0 : index
    %19 = vector.load %arg10[%c0_22, %c0_23] : memref<1x256xf32, #tpu.memory_space<vmem>>, vector<1x256xf32>
    %20 = vector.broadcast %19 : vector<1x256xf32> to vector<16x256xf32>
    %21 = arith.addf %18, %20 : vector<16x256xf32>
    %cst_24 = arith.constant 0.000000e+00 : f32
    %22 = vector.broadcast %cst_24 : f32 to vector<16x256xf32>
    %23 = arith.maximumf %21, %22 : vector<16x256xf32>
    %c0_25 = arith.constant 0 : index
    %c0_26 = arith.constant 0 : index
    %24 = vector.load %arg11[%c0_25, %c0_26] : memref<256x64xf32, #tpu.memory_space<vmem>>, vector<256x64xf32>
    %cst_27 = arith.constant dense<0.000000e+00> : vector<16x64xf32>
    %25 = tpu.matmul %23, %24, %cst_27 {dimension_numbers = #tpu.dot_dimension_numbers<[1], [0], [0], [1], [0, 0, 1, 1], [], []>} : vector<16x256xf32>, vector<256x64xf32>, vector<16x64xf32> -> vector<16x64xf32>
    %c0_28 = arith.constant 0 : index
    %c0_29 = arith.constant 0 : index
    %26 = vector.load %arg12[%c0_28, %c0_29] : memref<1x64xf32, #tpu.memory_space<vmem>>, vector<1x64xf32>
    %27 = vector.broadcast %26 : vector<1x64xf32> to vector<16x64xf32>
    %28 = arith.addf %25, %27 : vector<16x64xf32>
    %cst_30 = arith.constant 0.000000e+00 : f32
    %29 = vector.broadcast %cst_30 : f32 to vector<16x64xf32>
    %30 = arith.maximumf %28, %29 : vector<16x64xf32>
    %c0_31 = arith.constant 0 : index
    %c0_32 = arith.constant 0 : index
    %31 = vector.load %arg13[%c0_31, %c0_32] : memref<64x3xf32, #tpu.memory_space<vmem>>, vector<64x3xf32>
    %cst_33 = arith.constant dense<0.000000e+00> : vector<16x3xf32>
    %32 = tpu.matmul %30, %31, %cst_33 {dimension_numbers = #tpu.dot_dimension_numbers<[1], [0], [0], [1], [0, 0, 1, 1], [], []>} : vector<16x64xf32>, vector<64x3xf32>, vector<16x3xf32> -> vector<16x3xf32>
    %c0_34 = arith.constant 0 : index
    %c0_35 = arith.constant 0 : index
    %33 = vector.load %arg14[%c0_34, %c0_35] : memref<1x3xf32, #tpu.memory_space<vmem>>, vector<1x3xf32>
    %34 = vector.broadcast %33 : vector<1x3xf32> to vector<16x3xf32>
    %35 = arith.addf %32, %34 : vector<16x3xf32>
    %c0_36 = arith.constant 0 : index
    %c0_37 = arith.constant 0 : index
    %c0_38 = arith.constant 0 : index
    %36 = vector.load %arg15[%c0_36, %c0_37, %c0_38] : memref<1x16x3xf32, #tpu.memory_space<vmem>>, vector<1x16x3xf32>
    %37 = vector.shape_cast %36 : vector<1x16x3xf32> to vector<16x3xf32>
    %38 = vector.shape_cast %35 : vector<16x3xf32> to vector<1x16x3xf32>
    tpu.vector_store %arg15[%c0_36, %c0_37, %c0_38], %38 {strides = array<i32>} : memref<1x16x3xf32, #tpu.memory_space<vmem>>, vector<1x16x3xf32>,
    return
  }
  func.func @transform_0(%arg0: i32, %arg1: i32) -> (i32, i32, i32) {
    %c0_i32 = arith.constant 0 : i32
    %c0_i32_0 = arith.constant 0 : i32
    return %arg0, %arg1, %c0_i32 : i32, i32, i32
  }
  func.func @transform_1(%arg0: i32, %arg1: i32) -> (i32, i32, i32) {
    %c0_i32 = arith.constant 0 : i32
    %c0_i32_0 = arith.constant 0 : i32
    return %arg0, %arg1, %c0_i32 : i32, i32, i32
  }
  func.func @transform_2(%arg0: i32, %arg1: i32) -> (i32, i32, i32) {
    %c0_i32 = arith.constant 0 : i32
    %c0_i32_0 = arith.constant 0 : i32
    return %arg0, %arg1, %c0_i32 : i32, i32, i32
  }
  func.func @transform_3(%arg0: i32, %arg1: i32) -> (i32, i32, i32) {
    %c0_i32 = arith.constant 0 : i32
    %c0_i32_0 = arith.constant 0 : i32
    return %arg0, %arg1, %c0_i32 : i32, i32, i32
  }
  func.func @transform_4(%arg0: i32, %arg1: i32) -> (i32, i32) {
    %c0_i32 = arith.constant 0 : i32
    %c0_i32_0 = arith.constant 0 : i32
    %c0_i32_1 = arith.constant 0 : i32
    return %c0_i32, %c0_i32_0 : i32, i32
  }
  func.func @transform_5(%arg0: i32, %arg1: i32) -> (i32, i32) {
    %c0_i32 = arith.constant 0 : i32
    %c0_i32_0 = arith.constant 0 : i32
    %c0_i32_1 = arith.constant 0 : i32
    return %c0_i32, %c0_i32_0 : i32, i32
  }
  func.func @transform_6(%arg0: i32, %arg1: i32) -> (i32, i32) {
    %c0_i32 = arith.constant 0 : i32
    %c0_i32_0 = arith.constant 0 : i32
    %c0_i32_1 = arith.constant 0 : i32
    return %c0_i32, %c0_i32_0 : i32, i32
  }
  func.func @transform_7(%arg0: i32, %arg1: i32) -> (i32, i32) {
    %c0_i32 = arith.constant 0 : i32
    %c0_i32_0 = arith.constant 0 : i32
    %c0_i32_1 = arith.constant 0 : i32
    return %c0_i32, %c0_i32_0 : i32, i32
  }
  func.func @transform_8(%arg0: i32, %arg1: i32) -> (i32, i32) {
    %c0_i32 = arith.constant 0 : i32
    %c0_i32_0 = arith.constant 0 : i32
    %c0_i32_1 = arith.constant 0 : i32
    return %c0_i32, %c0_i32_0 : i32, i32
  }
  func.func @transform_9(%arg0: i32, %arg1: i32) -> (i32, i32) {
    %c0_i32 = arith.constant 0 : i32
    %c0_i32_0 = arith.constant 0 : i32
    %c0_i32_1 = arith.constant 0 : i32
    return %c0_i32, %c0_i32_0 : i32, i32
  }
  func.func @transform_10(%arg0: i32, %arg1: i32) -> (i32, i32) {
    %c0_i32 = arith.constant 0 : i32
    %c0_i32_0 = arith.constant 0 : i32
    %c0_i32_1 = arith.constant 0 : i32
    return %c0_i32, %c0_i32_0 : i32, i32
  }
  func.func @transform_11(%arg0: i32, %arg1: i32) -> (i32, i32) {
    %c0_i32 = arith.constant 0 : i32
    %c0_i32_0 = arith.constant 0 : i32
    %c0_i32_1 = arith.constant 0 : i32
    return %c0_i32, %c0_i32_0 : i32, i32
  }
  func.func @transform_12(%arg0: i32, %arg1: i32) -> (i32, i32) {
    %c0_i32 = arith.constant 0 : i32
    %c0_i32_0 = arith.constant 0 : i32
    %c0_i32_1 = arith.constant 0 : i32
    return %c0_i32, %c0_i32_0 : i32, i32
  }
  func.func @transform_13(%arg0: i32, %arg1: i32) -> (i32, i32, i32) {
    %c0_i32 = arith.constant 0 : i32
    %c0_i32_0 = arith.constant 0 : i32
    return %arg0, %arg1, %c0_i32 : i32, i32, i32
  }
}

</mosaic_0001>

<llo_original>
// kernel: _lambda_.6
$region0: #{_lambda_.6}
  #allocation0 [shape = 'u32[]', space=smem, size = 0x4, offset = 0x4, fixed_abs, tag = 'smem constant byte address 0x4 - core index']
  #allocation1 [shape = 'u32[144,128]{1,0:T(1,128)}', space=vmem, size = 0x12000, scoped, tag = 'internal scratch']
  %s0 = inlined_call_operand.vmem [shape: f32[2,16,64], index: 0, kind: input, shape index: {}, may-alias: {0,2}]
  %s1 = inlined_call_operand.vmem [shape: f32[2,64,16], index: 1, kind: input, shape index: {}]
  %s2 = inlined_call_operand.vmem [shape: f32[2,16,64], index: 2, kind: input, shape index: {}, may-alias: {0,2}]
  %s3 = inlined_call_operand.vmem [shape: f32[2,1,16], index: 3, kind: input, shape index: {}]
  %s4 = inlined_call_operand.vmem [shape: f32[64,64], index: 4, kind: input, shape index: {}]
  %s5 = inlined_call_operand.vmem [shape: f32[64,64], index: 5, kind: input, shape index: {}]
  %s6 = inlined_call_operand.vmem [shape: f32[1,64], index: 6, kind: input, shape index: {}]
  %s7 = inlined_call_operand.vmem [shape: f32[2,16,64], index: 7, kind: output, shape index: {}]
  %s8 = sld [smem:[#allocation0]]
  $region61: #{_lambda_.6} parent=0
    _
  %s10 = ssub.s32 1, %s8
  %s11 = scalar_select 0, %s10, %s8
  loop: start=0, step=1, limit=4
  $region2: #{_lambda_.6} parent=0 // loop_pre_header
    _
  $region3: #{_lambda_.6} parent=0 // loop_header
    %s13 = sphi 0, %s17
    %p14 = scmp.ge.s32.totalorder %s13, 4
    %s20 = sphi 0, %s32
    %s21 = sphi 0, %s28
    %s22 = sphi 0, %s20
    %s23 = sphi 0, %s21
    %s24 = sphi 0, %s22
    %s25 = sphi 0, %s23
    %s37 = sphi 0, %s39
    %s40 = sphi 0, %s37
    %s41 = sphi 0, %s40
    %s57 = sphi 0, %s41
    %s63 = sphi 0, %s65
    %s66 = sphi 0, %s63
    %s67 = sphi 0, %s66
    %s83 = sphi 0, %s67
    %s89 = sphi 0, %s91
    %s92 = sphi 0, %s89
    %s93 = sphi 0, %s92
    %s109 = sphi 0, %s93
    %s115 = sphi 0, %s117
    %s118 = sphi 0, %s115
    %s119 = sphi 0, %s118
    %s135 = sphi 0, %s119
    %s139 = sphi 0, %s139
    %s141 = sphi 0, %s139
    %s142 = sphi 0, %s141
    %s156 = sphi 0, %s142
    %s160 = sphi 0, %s160
    %s162 = sphi 0, %s160
    %s163 = sphi 0, %s162
    %s177 = sphi 0, %s163
    %s181 = sphi 0, %s181
    %s183 = sphi 0, %s181
    %s184 = sphi 0, %s183
    %s198 = sphi 0, %s184
    %s206 = sphi 0, %s208
    %s209 = sphi 0, %s206
    %s210 = sphi 0, %s209
    %s226 = sphi 0, %s210
  $region4: #{_lambda_.6} parent=0 // loop_header_branch
    %16 = sbr.rel (%p14) target = $region8
  $region5: #{_lambda_.6} parent=0 // loop_body
    %s18 = ssub.s32 %s13, 1
    %s19 = ssub.s32 %s13, 2
    %s26 = sadd.s32 1, %s21
    %p27 = scmp.ge.s32.totalorder %s26, 1
    %s28 = scalar_select %p27, 0, %s26
    %s29 = sadd.s32 1, %s20
    %s30 = scalar_select %p27, %s29, %s20
    %p31 = scmp.ge.s32.totalorder %s30, 2
    %s32 = scalar_select %p31, 0, %s30
    %s33 = ssub.s32 %s20, %s32
    %s34 = ssub.s32 %s21, %s28
    %s35 = sor.u32 %s33, %s34
    %p36 = scmp.eq.s32.totalorder %s35, 0
    %s38 = sadd.s32 %s37, 1
    %s39 = scalar_select %p36, %s37, %s38
    %p42 = pneg %p36
    %p43 = scmp.eq.s32.totalorder %s13, 1
    %p44 = por %p42, %p43
    %p45 = scmp.ne.s32.totalorder %s37, %s40
    %p46 = scmp.eq.s32.totalorder %s13, 0
    %p47 = por %p45, %p46
    %p48 = scmp.ne.s32.totalorder %s37, %s40
    %p49 = scmp.eq.s32.totalorder %s18, 1
    %p50 = por %p48, %p49
    %p51 = scmp.ne.s32.totalorder %s40, %s41
    %p52 = scmp.eq.s32.totalorder %s18, 0
    %p53 = por %p51, %p52
    %p54 = scmp.ne.s32.totalorder %s40, %s41
    %p55 = scmp.eq.s32.totalorder %s19, 1
    %p56 = por %p54, %p55
    %p58 = scmp.ne.s32.totalorder %s41, %s57
    %p59 = scmp.eq.s32.totalorder %s19, 0
    %p60 = por %p58, %p59
    %s61 = ssub.s32 %s20, %s32
    %p62 = scmp.eq.s32.totalorder %s61, 0
    %s64 = sadd.s32 %s63, 1
    %s65 = scalar_select %p62, %s63, %s64
    %p68 = pneg %p62
    %p69 = scmp.eq.s32.totalorder %s13, 1
    %p70 = por %p68, %p69
    %p71 = scmp.ne.s32.totalorder %s63, %s66
    %p72 = scmp.eq.s32.totalorder %s13, 0
    %p73 = por %p71, %p72
    %p74 = scmp.ne.s32.totalorder %s63, %s66
    %p75 = scmp.eq.s32.totalorder %s18, 1
    %p76 = por %p74, %p75
    %p77 = scmp.ne.s32.totalorder %s66, %s67
    %p78 = scmp.eq.s32.totalorder %s18, 0
    %p79 = por %p77, %p78
    %p80 = scmp.ne.s32.totalorder %s66, %s67
    %p81 = scmp.eq.s32.totalorder %s19, 1
    %p82 = por %p80, %p81
    %p84 = scmp.ne.s32.totalorder %s67, %s83
    %p85 = scmp.eq.s32.totalorder %s19, 0
    %p86 = por %p84, %p85
    %s87 = ssub.s32 %s20, %s32
    %p88 = scmp.eq.s32.totalorder %s87, 0
    %s90 = sadd.s32 %s89, 1
    %s91 = scalar_select %p88, %s89, %s90
    %p94 = pneg %p88
    %p95 = scmp.eq.s32.totalorder %s13, 1
    %p96 = por %p94, %p95
    %p97 = scmp.ne.s32.totalorder %s89, %s92
    %p98 = scmp.eq.s32.totalorder %s13, 0
    %p99 = por %p97, %p98
    %p100 = scmp.ne.s32.totalorder %s89, %s92
    %p101 = scmp.eq.s32.totalorder %s18, 1
    %p102 = por %p100, %p101
    %p103 = scmp.ne.s32.totalorder %s92, %s93
    %p104 = scmp.eq.s32.totalorder %s18, 0
    %p105 = por %p103, %p104
    %p106 = scmp.ne.s32.totalorder %s92, %s93
    %p107 = scmp.eq.s32.totalorder %s19, 1
    %p108 = por %p106, %p107
    %p110 = scmp.ne.s32.totalorder %s93, %s109
    %p111 = scmp.eq.s32.totalorder %s19, 0
    %p112 = por %p110, %p111
    %s113 = ssub.s32 %s20, %s32
    %p114 = scmp.eq.s32.totalorder %s113, 0
    %s116 = sadd.s32 %s115, 1
    %s117 = scalar_select %p114, %s115, %s116
    %p120 = pneg %p114
    %p121 = scmp.eq.s32.totalorder %s13, 1
    %p122 = por %p120, %p121
    %p123 = scmp.ne.s32.totalorder %s115, %s118
    %p124 = scmp.eq.s32.totalorder %s13, 0
    %p125 = por %p123, %p124
    %p126 = scmp.ne.s32.totalorder %s115, %s118
    %p127 = scmp.eq.s32.totalorder %s18, 1
    %p128 = por %p126, %p127
    %p129 = scmp.ne.s32.totalorder %s118, %s119
    %p130 = scmp.eq.s32.totalorder %s18, 0
    %p131 = por %p129, %p130
    %p132 = scmp.ne.s32.totalorder %s118, %s119
    %p133 = scmp.eq.s32.totalorder %s19, 1
    %p134 = por %p132, %p133
    %p136 = scmp.ne.s32.totalorder %s119, %s135
    %p137 = scmp.eq.s32.totalorder %s19, 0
    %p138 = por %p136, %p137
    %s140 = sadd.s32 %s139, 1
    %p143 = scmp.eq.s32.totalorder %s13, 1
    %p144 = scmp.ne.s32.totalorder %s139, %s141
    %p145 = scmp.eq.s32.totalorder %s13, 0
    %p146 = por %p144, %p145
    %p147 = scmp.ne.s32.totalorder %s139, %s141
    %p148 = scmp.eq.s32.totalorder %s18, 1
    %p149 = por %p147, %p148
    %p150 = scmp.ne.s32.totalorder %s141, %s142
    %p151 = scmp.eq.s32.totalorder %s18, 0
    %p152 = por %p150, %p151
    %p153 = scmp.ne.s32.totalorder %s141, %s142
    %p154 = scmp.eq.s32.totalorder %s19, 1
    %p155 = por %p153, %p154
    %p157 = scmp.ne.s32.totalorder %s142, %s156
    %p158 = scmp.eq.s32.totalorder %s19, 0
    %p159 = por %p157, %p158
    %s161 = sadd.s32 %s160, 1
    %p164 = scmp.eq.s32.totalorder %s13, 1
    %p165 = scmp.ne.s32.totalorder %s160, %s162
    %p166 = scmp.eq.s32.totalorder %s13, 0
    %p167 = por %p165, %p166
    %p168 = scmp.ne.s32.totalorder %s160, %s162
    %p169 = scmp.eq.s32.totalorder %s18, 1
    %p170 = por %p168, %p169
    %p171 = scmp.ne.s32.totalorder %s162, %s163
    %p172 = scmp.eq.s32.totalorder %s18, 0
    %p173 = por %p171, %p172
    %p174 = scmp.ne.s32.totalorder %s162, %s163
    %p175 = scmp.eq.s32.totalorder %s19, 1
    %p176 = por %p174, %p175
    %p178 = scmp.ne.s32.totalorder %s163, %s177
    %p179 = scmp.eq.s32.totalorder %s19, 0
    %p180 = por %p178, %p179
    %s182 = sadd.s32 %s181, 1
    %p185 = scmp.eq.s32.totalorder %s13, 1
    %p186 = scmp.ne.s32.totalorder %s181, %s183
    %p187 = scmp.eq.s32.totalorder %s13, 0
    %p188 = por %p186, %p187
    %p189 = scmp.ne.s32.totalorder %s181, %s183
    %p190 = scmp.eq.s32.totalorder %s18, 1
    %p191 = por %p189, %p190
    %p192 = scmp.ne.s32.totalorder %s183, %s184
    %p193 = scmp.eq.s32.totalorder %s18, 0
    %p194 = por %p192, %p193
    %p195 = scmp.ne.s32.totalorder %s183, %s184
    %p196 = scmp.eq.s32.totalorder %s19, 1
    %p197 = por %p195, %p196
    %p199 = scmp.ne.s32.totalorder %s184, %s198
    %p200 = scmp.eq.s32.totalorder %s19, 0
    %p201 = por %p199, %p200
    %s202 = ssub.s32 %s20, %s32
    %s203 = ssub.s32 %s21, %s28
    %s204 = sor.u32 %s202, %s203
    %p205 = scmp.eq.s32.totalorder %s204, 0
    %s207 = sadd.s32 %s206, 1
    %s208 = scalar_select %p205, %s206, %s207
    %p211 = pneg %p205
    %p212 = scmp.eq.s32.totalorder %s13, 1
    %p213 = por %p211, %p212
    %p214 = scmp.ne.s32.totalorder %s206, %s209
    %p215 = scmp.eq.s32.totalorder %s13, 0
    %p216 = por %p214, %p215
    %p217 = scmp.ne.s32.totalorder %s206, %s209
    %p218 = scmp.eq.s32.totalorder %s18, 1
    %p219 = por %p217, %p218
    %p220 = scmp.ne.s32.totalorder %s209, %s210
    %p221 = scmp.eq.s32.totalorder %s18, 0
    %p222 = por %p220, %p221
    %p223 = scmp.ne.s32.totalorder %s209, %s210
    %p224 = scmp.eq.s32.totalorder %s19, 1
    %p225 = por %p223, %p224
    %p227 = scmp.ne.s32.totalorder %s210, %s226
    %p228 = scmp.eq.s32.totalorder %s19, 0
    %p229 = por %p227, %p228
    %p230 = scmp.le.s32.totalorder 1, %s13
    %p231 = scmp.lt.s32.totalorder %s13, 3
    %p232 = pnand %p230, %p231
    %p233 = pneg %p232
    // Predicated region
    $region9: #{_lambda_.6} parent=5 // pred_check
      _
    $region10: #{_lambda_.6} parent=5 // pred_check_branch
      %235 = sbr.rel (%p232) target = $region12
    $region11: #{_lambda_.6} parent=5 // pred_region
      %s236 = ssub.s32 %s13, 1
      // Predicated region
      $region13: #{_lambda_.6} parent=11 // pred_check
        %p237 = pneg %p152
      $region14: #{_lambda_.6} parent=11 // pred_check_branch
        %239 = sbr.rel (%p237) target = $region16
      $region15: #{_lambda_.6} parent=11 // pred_region
        _
      $region16: #{_lambda_.6} parent=11 // pred_fallthru
        _
      // Predicated region
      $region17: #{_lambda_.6} parent=11 // pred_check
        %p240 = pneg %p173
      $region18: #{_lambda_.6} parent=11 // pred_check_branch
        %242 = sbr.rel (%p240) target = $region20
      $region19: #{_lambda_.6} parent=11 // pred_region
        _
      $region20: #{_lambda_.6} parent=11 // pred_fallthru
        _
      // Predicated region
      $region21: #{_lambda_.6} parent=11 // pred_check
        %p243 = pneg %p194
      $region22: #{_lambda_.6} parent=11 // pred_check_branch
        %245 = sbr.rel (%p243) target = $region24
      $region23: #{_lambda_.6} parent=11 // pred_region
        _
      $region24: #{_lambda_.6} parent=11 // pred_fallthru
        _
    $region12: #{_lambda_.6} parent=5 // pred_fallthru
      _
    %p246 = scmp.lt.s32.totalorder %s13, 2
    // Predicated region
    $region25: #{_lambda_.6} parent=5 // pred_check
      %p247 = pneg %p246
    $region26: #{_lambda_.6} parent=5 // pred_check_branch
      %249 = sbr.rel (%p247) target = $region28
    $region27: #{_lambda_.6} parent=5 // pred_region
      // Predicated region
      $region29: #{_lambda_.6} parent=27 // pred_check
        %p250 = pneg %p47
      $region30: #{_lambda_.6} parent=27 // pred_check_branch
        %252 = sbr.rel (%p250) target = $region32
      $region31: #{_lambda_.6} parent=27 // pred_region
        %s253 = smul.u32 2, %s21
        %p254 = scmp.lt.s32.totalorder %s20, 1
        %s255 = scalar_select %p254, %s20, 1
        %p256 = scmp.lt.s32.totalorder %s253, 1
        %s257 = scalar_select %p256, %s253, 1
        %s258 = smul.addr %s255, 2
        %s259 = sadd.s32 %s257, %s258
        %s260 = smul.addr %s259, 8
        %s261 = scalar_lea.vmem %s0, %s260
        %s262 = smul.u32 2, %s21
      $region32: #{_lambda_.6} parent=27 // pred_fallthru
        _
      // Predicated region
      $region33: #{_lambda_.6} parent=27 // pred_check
        %p263 = pneg %p73
      $region34: #{_lambda_.6} parent=27 // pred_check_branch
        %265 = sbr.rel (%p263) target = $region36
      $region35: #{_lambda_.6} parent=27 // pred_region
        %p266 = scmp.lt.s32.totalorder %s20, 1
        %s267 = scalar_select %p266, %s20, 1
        %s268 = smul.addr %s267, 8
        %s269 = smul.addr %s268, 8
        %s270 = scalar_lea.vmem %s1, %s269
      $region36: #{_lambda_.6} parent=27 // pred_fallthru
        _
      // Predicated region
      $region37: #{_lambda_.6} parent=27 // pred_check
        %p271 = pneg %p99
      $region38: #{_lambda_.6} parent=27 // pred_check_branch
        %273 = sbr.rel (%p271) target = $region40
      $region39: #{_lambda_.6} parent=27 // pred_region
        %p274 = scmp.lt.s32.totalorder %s20, 1
        %s275 = scalar_select %p274, %s20, 1
        %s276 = smul.addr %s275, 2
        %s277 = smul.addr %s276, 8
        %s278 = scalar_lea.vmem %s2, %s277
      $region40: #{_lambda_.6} parent=27 // pred_fallthru
        _
      // Predicated region
      $region41: #{_lambda_.6} parent=27 // pred_check
        %p279 = pneg %p125
      $region42: #{_lambda_.6} parent=27 // pred_check_branch
        %281 = sbr.rel (%p279) target = $region44
      $region43: #{_lambda_.6} parent=27 // pred_region
        %p282 = scmp.lt.s32.totalorder %s20, 1
        %s283 = scalar_select %p282, %s20, 1
        %s284 = scalar_lea.vmem %s3, %s283
      $region44: #{_lambda_.6} parent=27 // pred_fallthru
        _
    $region28: #{_lambda_.6} parent=5 // pred_fallthru
      _
    %p285 = scmp.le.s32.totalorder 1, %s13
    %p286 = scmp.lt.s32.totalorder %s13, 3
    %p287 = pnand %p285, %p286
    %p288 = pneg %p287
    // Predicated region
    $region45: #{_lambda_.6} parent=5 // pred_check
      _
    $region46: #{_lambda_.6} parent=5 // pred_check_branch
      %290 = sbr.rel (%p287) target = $region48
    $region47: #{_lambda_.6} parent=5 // pred_region
      %s291 = ssub.s32 %s13, 1
      %s292 = smul.u32 2, %s23
      %p293 = scmp.lt.s32.totalorder %s22, 1
      %s294 = scalar_select %p293, %s22, 1
      %p295 = scmp.lt.s32.totalorder %s292, 1
      %s296 = scalar_select %p295, %s292, 1
      %s297 = smul.addr %s294, 2
      %s298 = sadd.s32 %s296, %s297
      %s299 = smul.addr %s298, 8
      %s300 = scalar_lea.vmem %s0, %s299
      %p301 = pneg %p53
      %p302 = pneg %p50
      %p303 = scmp.lt.s32.totalorder %s22, 1
      %s304 = scalar_select %p303, %s22, 1
      %s305 = smul.addr %s304, 8
      %s306 = smul.addr %s305, 8
      %s307 = scalar_lea.vmem %s1, %s306
      %p308 = pneg %p79
      %p309 = pneg %p76
      %p310 = scmp.lt.s32.totalorder %s22, 1
      %s311 = scalar_select %p310, %s22, 1
      %s312 = smul.addr %s311, 2
      %s313 = smul.addr %s312, 8
      %s314 = scalar_lea.vmem %s2, %s313
      %p315 = pneg %p105
      %p316 = pneg %p102
      %p317 = scmp.lt.s32.totalorder %s22, 1
      %s318 = scalar_select %p317, %s22, 1
      %s319 = scalar_lea.vmem %s3, %s318
      %p320 = pneg %p131
      %p321 = pneg %p128
      %p322 = pneg %p152
      %p323 = pneg %p149
      %p324 = pneg %p173
      %p325 = pneg %p170
      %p326 = pneg %p194
      %p327 = pneg %p191
      %p328 = pneg %p222
      %p329 = pneg %p219
      %s330 = smul.u32 2, %s23
      %p331 = scmp.lt.s32.totalorder %s22, 1
      %s332 = scalar_select %p331, %s22, 1
      %p333 = scmp.lt.s32.totalorder %s330, 1
      %s334 = scalar_select %p333, %s330, 1
      %s335 = smul.addr %s332, 2
      %s336 = sadd.s32 %s334, %s335
      %s337 = smul.addr %s336, 8
      %s338 = scalar_lea.vmem %s7, %s337
      %s339 = smul.u32 2, %s23
      %p340 = scmp.lt.s32.totalorder %s22, 1
      %s341 = scalar_select %p340, %s22, 1
      %p342 = scmp.lt.s32.totalorder %s339, 1
      %s343 = scalar_select %p342, %s339, 1
      %s344 = smul.addr %s341, 2
      %s345 = sadd.s32 %s343, %s344
      %s346 = smul.addr %s345, 8
      %s347 = scalar_lea.vmem %s0, %s346
      %s348 = smul.u32 2, %s23
      %p349 = scmp.lt.s32.totalorder %s22, 1
      %s350 = scalar_select %p349, %s22, 1
      %s351 = smul.addr %s350, 8
      %s352 = smul.addr %s351, 8
      %s353 = scalar_lea.vmem %s1, %s352
      %p354 = scmp.lt.s32.totalorder %s22, 1
      %s355 = scalar_select %p354, %s22, 1
      %s356 = smul.addr %s355, 2
      %s357 = smul.addr %s356, 8
      %s358 = scalar_lea.vmem %s2, %s357
      %p359 = scmp.lt.s32.totalorder %s22, 1
      %s360 = scalar_select %p359, %s22, 1
      %s361 = scalar_lea.vmem %s3, %s360
      %s362 = smul.u32 2, %s23
      %p363 = scmp.lt.s32.totalorder %s22, 1
      %s364 = scalar_select %p363, %s22, 1
      %p365 = scmp.lt.s32.totalorder %s362, 1
      %s366 = scalar_select %p365, %s362, 1
      %s367 = smul.addr %s364, 2
      %s368 = sadd.s32 %s366, %s367
      %s369 = smul.addr %s368, 8
      %s370 = scalar_lea.vmem %s7, %s369
      %s371 = smul.u32 2, %s23
      %v372 = vld [vmem:[%s347] sm:$0xff]
      %v373 = vld [vmem:[%s347 + $0x8] sm:$0xff]
      %v374 = vld [vmem:[%s353] sm:$0xff]
      %v375 = vld [vmem:[%s353 + $0x8] sm:$0xff]
      %v376 = vld [vmem:[%s353 + $0x10] sm:$0xff]
      %v377 = vld [vmem:[%s353 + $0x18] sm:$0xff]
      %v378 = vld [vmem:[%s353 + $0x20] sm:$0xff]
      %v379 = vld [vmem:[%s353 + $0x28] sm:$0xff]
      %v380 = vld [vmem:[%s353 + $0x30] sm:$0xff]
      %v381 = vld [vmem:[%s353 + $0x38] sm:$0xff]
      %v382 = vld [vmem:[%s358] sm:$0xff]
      %v383 = vld [vmem:[%s358 + $0x8] sm:$0xff]
      %vm384 = vcmask 523264
      %v386 = vsel %vm384, %v372, 0
      %v389 = vsel %vm384, %v373, 0
      %391 = vmatprep.subr.mxu0 0.0
      %392 = vmatpush1.msra.mxu0 %v374
      %393 = vmatprep.subr.mxu0 0.0
      %394 = vmatpush1.msra.mxu0 %v375
      %395 = vmatprep.subr.mxu0 0.0
      %396 = vmatpush1.msra.mxu0 %v376
      %397 = vmatprep.subr.mxu0 0.0
      %398 = vmatpush1.msra.mxu0 %v377
      %399 = vmatprep.subr.mxu0 0.0
      %400 = vmatpush1.msra.mxu0 %v378
      %401 = vmatprep.subr.mxu0 0.0
      %402 = vmatpush1.msra.mxu0 %v379
      %403 = vmatprep.subr.mxu0 0.0
      %404 = vmatpush1.msra.mxu0 %v380
      %405 = vmatprep.subr.mxu0 0.0
      %406 = vmatpush1.msra.mxu0 %v381
      %407 = vmatprep.subr.mxu0 0.0
      %408 = vmatpush1.msra.mxu0 0.0
      %409 = vmatprep.subr.mxu0 0.0
      %410 = vmatpush1.msra.mxu0 0.0
      %411 = vmatprep.subr.mxu0 0.0
      %412 = vmatpush1.msra.mxu0 0.0
      %413 = vmatprep.subr.mxu0 0.0
      %414 = vmatpush1.msra.mxu0 0.0
      %415 = vmatprep.subr.mxu0 0.0
      %416 = vmatpush1.msra.mxu0 0.0
      %417 = vmatprep.subr.mxu0 0.0
      %418 = vmatpush1.msra.mxu0 0.0
      %419 = vmatprep.subr.mxu0 0.0
      %420 = vmatpush1.msra.mxu0 0.0
      %421 = vmatprep.subr.mxu0 0.0
      %422 = vmatpush1.msra.mxu0 0.0
      %423 = vmatprep.subr.mxu0 0.0
      %424 = vmatpush1.msra.mxu0 0.0
      %425 = vmatprep.subr.mxu0 0.0
      %426 = vmatpush1.msra.mxu0 0.0
      %427 = vmatprep.subr.mxu0 0.0
      %428 = vmatpush1.msra.mxu0 0.0
      %429 = vmatprep.subr.mxu0 0.0
      %430 = vmatpush1.msra.mxu0 0.0
      %431 = vmatprep.subr.mxu0 0.0
      %432 = vmatpush1.msra.mxu0 0.0
      %433 = vmatprep.subr.mxu0 0.0
      %434 = vmatpush1.msra.mxu0 0.0
      %435 = vmatprep.subr.mxu0 0.0
      %436 = vmatpush1.msra.mxu0 0.0
      %437 = vmatprep.subr.mxu0 0.0
      %438 = vmatpush1.msra.mxu0 0.0
      %439 = vmatprep.subr.mxu0 0.0
      %440 = vmatpush1.msra.mxu0 0.0
      %441 = vmatprep.subr.mxu0 0.0
      %442 = vmatpush1.msra.mxu0 0.0
      %443 = vmatprep.subr.mxu0 0.0
      %444 = vmatpush1.msra.mxu0 0.0
      %445 = vmatprep.subr.mxu0 0.0
      %446 = vmatpush1.msra.mxu0 0.0
      %447 = vmatprep.subr.mxu0 0.0
      %448 = vmatpush1.msra.mxu0 0.0
      %449 = vmatprep.subr.mxu0 0.0
      %450 = vmatpush1.msra.mxu0 0.0
      %451 = vmatprep.subr.mxu0 0.0
      %452 = vmatpush1.msra.mxu0 0.0
      %453 = vmatprep.subr.mxu0 0.0
      %454 = vmatpush1.msra.mxu0 0.0
      %455 = vmatprep.mubr.f32.mxu0 0.0
      %456 = vmatmul.mubr.f32.gmra.mrb[0].mxu0 %v386
      %v457 = vpop.f32.mrb[0].mxu0
      %v458 = vadd.f32 0.0, %v457
      %v459 = vpop.f32.mrb[0].mxu0
      %460 = vmatprep.mubr.f32.mxu0 0.0
      %461 = vmatmul.mubr.f32.gmra.mrb[0].mxu0 %v389
      %v462 = vpop.f32.mrb[0].mxu0
      %v463 = vadd.f32 0.0, %v462
      %v464 = vpop.f32.mrb[0].mxu0
      %465 = vdwg.mxu0
      %v466 = vmul.f32 %v458, 2.0
      %v467 = vmul.f32 %v463, 2.0
      %v468 = vld [vmem:[%s361] sm:$0x1]
      %v470 = vlaneseq
      %v471 = vshrl.u32 %v470, 7
      %v472 = vsub.s32 0, %v471
      %v473 = vrot.slane %v468, %v472
      %v475 = vsub.f32 %v466, %v473
      %v476 = vsub.f32 %v467, %v473
      %v477 = vld [vmem:[%s4] sm:$0xff]
      %v478 = vld [vmem:[%s4 + $0x8] sm:$0xff]
      %v479 = vld [vmem:[%s4 + $0x10] sm:$0xff]
      %v480 = vld [vmem:[%s4 + $0x18] sm:$0xff]
      %v481 = vld [vmem:[%s4 + $0x20] sm:$0xff]
      %v482 = vld [vmem:[%s4 + $0x28] sm:$0xff]
      %v483 = vld [vmem:[%s4 + $0x30] sm:$0xff]
      %v484 = vld [vmem:[%s4 + $0x38] sm:$0xff]
      %v486 = vsel %vm384, %v382, 0
      %v489 = vsel %vm384, %v383, 0
      %491 = vmatprep.subr.mxu0 0.0
      %492 = vmatpush1.msra.mxu0 %v477
      %493 = vmatprep.subr.mxu0 0.0
      %494 = vmatpush1.msra.mxu0 %v478
      %495 = vmatprep.subr.mxu0 0.0
      %496 = vmatpush1.msra.mxu0 %v479
      %497 = vmatprep.subr.mxu0 0.0
      %498 = vmatpush1.msra.mxu0 %v480
      %499 = vmatprep.subr.mxu0 0.0
      %500 = vmatpush1.msra.mxu0 %v481
      %501 = vmatprep.subr.mxu0 0.0
      %502 = vmatpush1.msra.mxu0 %v482
      %503 = vmatprep.subr.mxu0 0.0
      %504 = vmatpush1.msra.mxu0 %v483
      %505 = vmatprep.subr.mxu0 0.0
      %506 = vmatpush1.msra.mxu0 %v484
      %507 = vmatprep.subr.mxu0 0.0
      %508 = vmatpush1.msra.mxu0 0.0
      %509 = vmatprep.subr.mxu0 0.0
      %510 = vmatpush1.msra.mxu0 0.0
      %511 = vmatprep.subr.mxu0 0.0
      %512 = vmatpush1.msra.mxu0 0.0
      %513 = vmatprep.subr.mxu0 0.0
      %514 = vmatpush1.msra.mxu0 0.0
      %515 = vmatprep.subr.mxu0 0.0
      %516 = vmatpush1.msra.mxu0 0.0
      %517 = vmatprep.subr.mxu0 0.0
      %518 = vmatpush1.msra.mxu0 0.0
      %519 = vmatprep.subr.mxu0 0.0
      %520 = vmatpush1.msra.mxu0 0.0
      %521 = vmatprep.subr.mxu0 0.0
      %522 = vmatpush1.msra.mxu0 0.0
      %523 = vmatprep.subr.mxu0 0.0
      %524 = vmatpush1.msra.mxu0 0.0
      %525 = vmatprep.subr.mxu0 0.0
      %526 = vmatpush1.msra.mxu0 0.0
      %527 = vmatprep.subr.mxu0 0.0
      %528 = vmatpush1.msra.mxu0 0.0
      %529 = vmatprep.subr.mxu0 0.0
      %530 = vmatpush1.msra.mxu0 0.0
      %531 = vmatprep.subr.mxu0 0.0
      %532 = vmatpush1.msra.mxu0 0.0
      %533 = vmatprep.subr.mxu0 0.0
      %534 = vmatpush1.msra.mxu0 0.0
      %535 = vmatprep.subr.mxu0 0.0
      %536 = vmatpush1.msra.mxu0 0.0
      %537 = vmatprep.subr.mxu0 0.0
      %538 = vmatpush1.msra.mxu0 0.0
      %539 = vmatprep.subr.mxu0 0.0
      %540 = vmatpush1.msra.mxu0 0.0
      %541 = vmatprep.subr.mxu0 0.0
      %542 = vmatpush1.msra.mxu0 0.0
      %543 = vmatprep.subr.mxu0 0.0
      %544 = vmatpush1.msra.mxu0 0.0
      %545 = vmatprep.subr.mxu0 0.0
      %546 = vmatpush1.msra.mxu0 0.0
      %547 = vmatprep.subr.mxu0 0.0
      %548 = vmatpush1.msra.mxu0 0.0
      %549 = vmatprep.subr.mxu0 0.0
      %550 = vmatpush1.msra.mxu0 0.0
      %551 = vmatprep.subr.mxu0 0.0
      %552 = vmatpush1.msra.mxu0 0.0
      %553 = vmatprep.subr.mxu0 0.0
      %554 = vmatpush1.msra.mxu0 0.0
      %555 = vmatprep.mubr.f32.mxu0 0.0
      %556 = vmatmul.mubr.f32.gmra.mrb[0].mxu0 %v486
      %v557 = vpop.f32.mrb[0].mxu0
      %v558 = vadd.f32 0.0, %v557
      %v559 = vpop.f32.mrb[0].mxu0
      %560 = vmatprep.mubr.f32.mxu0 0.0
      %561 = vmatmul.mubr.f32.gmra.mrb[0].mxu0 %v489
      %v562 = vpop.f32.mrb[0].mxu0
      %v563 = vadd.f32 0.0, %v562
      %v564 = vpop.f32.mrb[0].mxu0
      %565 = vdwg.mxu0
      %v566 = vld [vmem:[%s5] sm:$0xff]
      %v567 = vld [vmem:[%s5 + $0x8] sm:$0xff]
      %v568 = vld [vmem:[%s5 + $0x10] sm:$0xff]
      %v569 = vld [vmem:[%s5 + $0x18] sm:$0xff]
      %v570 = vld [vmem:[%s5 + $0x20] sm:$0xff]
      %v571 = vld [vmem:[%s5 + $0x28] sm:$0xff]
      %v572 = vld [vmem:[%s5 + $0x30] sm:$0xff]
      %v573 = vld [vmem:[%s5 + $0x38] sm:$0xff]
      %v574 = vld [vmem:[%s6] sm:$0x1]
      %v576 = vlaneseq
      %v577 = vshrl.u32 %v576, 7
      %v578 = vsub.s32 0, %v577
      %v579 = vrot.slane %v574, %v578
      %581 = vmatprep.subr.mxu0 0.0
      %582 = vmatpush1.msra.mxu0 %v566
      %583 = vmatprep.subr.mxu0 0.0
      %584 = vmatpush1.msra.mxu0 %v567
      %585 = vmatprep.subr.mxu0 0.0
      %586 = vmatpush1.msra.mxu0 %v568
      %587 = vmatprep.subr.mxu0 0.0
      %588 = vmatpush1.msra.mxu0 %v569
      %589 = vmatprep.subr.mxu0 0.0
      %590 = vmatpush1.msra.mxu0 %v570
      %591 = vmatprep.subr.mxu0 0.0
      %592 = vmatpush1.msra.mxu0 %v571
      %593 = vmatprep.subr.mxu0 0.0
      %594 = vmatpush1.msra.mxu0 %v572
      %595 = vmatprep.subr.mxu0 0.0
      %596 = vmatpush1.msra.mxu0 %v573
      %597 = vmatprep.subr.mxu0 0.0
      %598 = vmatpush1.msra.mxu0 0.0
      %599 = vmatprep.subr.mxu0 0.0
      %600 = vmatpush1.msra.mxu0 0.0
      %601 = vmatprep.subr.mxu0 0.0
      %602 = vmatpush1.msra.mxu0 0.0
      %603 = vmatprep.subr.mxu0 0.0
      %604 = vmatpush1.msra.mxu0 0.0
      %605 = vmatprep.subr.mxu0 0.0
      %606 = vmatpush1.msra.mxu0 0.0
      %607 = vmatprep.subr.mxu0 0.0
      %608 = vmatpush1.msra.mxu0 0.0
      %609 = vmatprep.subr.mxu0 0.0
      %610 = vmatpush1.msra.mxu0 0.0
      %611 = vmatprep.subr.mxu0 0.0
      %612 = vmatpush1.msra.mxu0 0.0
      %613 = vmatprep.subr.mxu0 0.0
      %614 = vmatpush1.msra.mxu0 0.0
      %615 = vmatprep.subr.mxu0 0.0
      %616 = vmatpush1.msra.mxu0 0.0
      %617 = vmatprep.subr.mxu0 0.0
      %618 = vmatpush1.msra.mxu0 0.0
      %619 = vmatprep.subr.mxu0 0.0
      %620 = vmatpush1.msra.mxu0 0.0
      %621 = vmatprep.subr.mxu0 0.0
      %622 = vmatpush1.msra.mxu0 0.0
      %623 = vmatprep.subr.mxu0 0.0
      %624 = vmatpush1.msra.mxu0 0.0
      %625 = vmatprep.subr.mxu0 0.0
      %626 = vmatpush1.msra.mxu0 0.0
      %627 = vmatprep.subr.mxu0 0.0
      %628 = vmatpush1.msra.mxu0 0.0
      %629 = vmatprep.subr.mxu0 0.0
      %630 = vmatpush1.msra.mxu0 0.0
      %631 = vmatprep.subr.mxu0 0.0
      %632 = vmatpush1.msra.mxu0 0.0
      %633 = vmatprep.subr.mxu0 0.0
      %634 = vmatpush1.msra.mxu0 0.0
      %635 = vmatprep.subr.mxu0 0.0
      %636 = vmatpush1.msra.mxu0 0.0
      %637 = vmatprep.subr.mxu0 0.0
      %638 = vmatpush1.msra.mxu0 0.0
      %639 = vmatprep.subr.mxu0 0.0
      %640 = vmatpush1.msra.mxu0 0.0
      %641 = vmatprep.subr.mxu0 0.0
      %642 = vmatpush1.msra.mxu0 0.0
      %643 = vmatprep.subr.mxu0 0.0
      %644 = vmatpush1.msra.mxu0 0.0
      %645 = vmatprep.mubr.f32.mxu0 0.0
      %646 = vmatmul.mubr.f32.gmra.mrb[0].mxu0 %v386
      %v647 = vpop.f32.mrb[0].mxu0
      %v648 = vadd.f32 %v579, %v647
      %v649 = vpop.f32.mrb[0].mxu0
      %650 = vmatprep.mubr.f32.mxu0 0.0
      %651 = vmatmul.mubr.f32.gmra.mrb[0].mxu0 %v389
      %v652 = vpop.f32.mrb[0].mxu0
      %v653 = vadd.f32 %v579, %v652
      %v654 = vpop.f32.mrb[0].mxu0
      %655 = vdwg.mxu0
      %v656 = vlaneseq
      %v657 = vand.u32 %v656, 127
      %v658 = vcvt.s32.f32 %v657
      %vm659 = vcmask 130048
      %v660 = vsel %vm659, %v475, -inf
      %661 = vmax.xlane.f32.xlu0 %v660
      %v662 = vpop.xlane.xlu0 %661
      %v663 = vsel %vm659, %v476, -inf
      %664 = vmax.xlane.f32.xlu0 %v663
      %v665 = vpop.xlane.xlu0 %664
      %vm666 = vcmp.eq.f32.partialorder %v475, %v662
      %vm667 = vcmp.eq.f32.partialorder %v476, %v665
      %v668 = vsel %vm666, %v658, 16.0
      %v669 = vsel %vm667, %v658, 16.0
      %v670 = vsel %vm659, %v668, inf
      %671 = vmin.xlane.f32.xlu0 %v670
      %v672 = vpop.xlane.xlu0 %671
      %v673 = vsel %vm659, %v669, inf
      %674 = vmin.xlane.f32.xlu0 %v673
      %v675 = vpop.xlane.xlu0 %674
      %vm676 = vcmp.eq.f32.partialorder %v658, %v672
      %vm677 = vcmp.eq.f32.partialorder %v658, %v675
      %v678 = vsel %vm676, 1, 0
      %v679 = vsel %vm677, 1, 0
      %v680 = vcvt.s32.f32 %v678
      %v681 = vcvt.s32.f32 %v679
      %v683 = vsel %vm659, %v680, 0
      %v686 = vsel %vm659, %v681, 0
      %688 = vmatprep.subr.mxu0 0.0
      %689 = vmatpush1.msra.mxu0 %v558
      %690 = vmatprep.subr.mxu0 0.0
      %691 = vmatpush1.msra.mxu0 %v563
      %692 = vmatprep.subr.mxu0 0.0
      %693 = vmatpush1.msra.mxu0 0.0
      %694 = vmatprep.subr.mxu0 0.0
      %695 = vmatpush1.msra.mxu0 0.0
      %696 = vmatprep.subr.mxu0 0.0
      %697 = vmatpush1.msra.mxu0 0.0
      %698 = vmatprep.subr.mxu0 0.0
      %699 = vmatpush1.msra.mxu0 0.0
      %700 = vmatprep.subr.mxu0 0.0
      %701 = vmatpush1.msra.mxu0 0.0
      %702 = vmatprep.subr.mxu0 0.0
      %703 = vmatpush1.msra.mxu0 0.0
      %704 = vmatprep.subr.mxu0 0.0
      %705 = vmatpush1.msra.mxu0 0.0
      %706 = vmatprep.subr.mxu0 0.0
      %707 = vmatpush1.msra.mxu0 0.0
      %708 = vmatprep.subr.mxu0 0.0
      %709 = vmatpush1.msra.mxu0 0.0
      %710 = vmatprep.subr.mxu0 0.0
      %711 = vmatpush1.msra.mxu0 0.0
      %712 = vmatprep.subr.mxu0 0.0
      %713 = vmatpush1.msra.mxu0 0.0
      %714 = vmatprep.subr.mxu0 0.0
      %715 = vmatpush1.msra.mxu0 0.0
      %716 = vmatprep.subr.mxu0 0.0
      %717 = vmatpush1.msra.mxu0 0.0
      %718 = vmatprep.subr.mxu0 0.0
      %719 = vmatpush1.msra.mxu0 0.0
      %720 = vmatprep.subr.mxu0 0.0
      %721 = vmatpush1.msra.mxu0 0.0
      %722 = vmatprep.subr.mxu0 0.0
      %723 = vmatpush1.msra.mxu0 0.0
      %724 = vmatprep.subr.mxu0 0.0
      %725 = vmatpush1.msra.mxu0 0.0
      %726 = vmatprep.subr.mxu0 0.0
      %727 = vmatpush1.msra.mxu0 0.0
      %728 = vmatprep.subr.mxu0 0.0
      %729 = vmatpush1.msra.mxu0 0.0
      %730 = vmatprep.subr.mxu0 0.0
      %731 = vmatpush1.msra.mxu0 0.0
      %732 = vmatprep.subr.mxu0 0.0
      %733 = vmatpush1.msra.mxu0 0.0
      %734 = vmatprep.subr.mxu0 0.0
      %735 = vmatpush1.msra.mxu0 0.0
      %736 = vmatprep.subr.mxu0 0.0
      %737 = vmatpush1.msra.mxu0 0.0
      %738 = vmatprep.subr.mxu0 0.0
      %739 = vmatpush1.msra.mxu0 0.0
      %740 = vmatprep.subr.mxu0 0.0
      %741 = vmatpush1.msra.mxu0 0.0
      %742 = vmatprep.subr.mxu0 0.0
      %743 = vmatpush1.msra.mxu0 0.0
      %744 = vmatprep.subr.mxu0 0.0
      %745 = vmatpush1.msra.mxu0 0.0
      %746 = vmatprep.subr.mxu0 0.0
      %747 = vmatpush1.msra.mxu0 0.0
      %748 = vmatprep.subr.mxu0 0.0
      %749 = vmatpush1.msra.mxu0 0.0
      %750 = vmatprep.subr.mxu0 0.0
      %751 = vmatpush1.msra.mxu0 0.0
      %752 = vmatprep.mubr.f32.mxu0 0.0
      %753 = vmatmul.mubr.f32.gmra.mrb[0].mxu0 %v683
      %v754 = vpop.f32.mrb[0].mxu0
      %v755 = vadd.f32 0.0, %v754
      %v756 = vpop.f32.mrb[0].mxu0
      %757 = vmatprep.mubr.f32.mxu0 0.0
      %758 = vmatmul.mubr.f32.gmra.mrb[0].mxu0 %v686
      %v759 = vpop.f32.mrb[0].mxu0
      %v760 = vadd.f32 0.0, %v759
      %v761 = vpop.f32.mrb[0].mxu0
      %762 = vdwg.mxu0
      %v763 = vsel %vm676, -inf, %v475
      %v764 = vsel %vm677, -inf, %v476
      %v765 = vsel %vm659, %v763, -inf
      %766 = vmax.xlane.f32.xlu0 %v765
      %v767 = vpop.xlane.xlu0 %766
      %v768 = vsel %vm659, %v764, -inf
      %769 = vmax.xlane.f32.xlu0 %v768
      %v770 = vpop.xlane.xlu0 %769
      %vm771 = vcmp.eq.f32.partialorder %v763, %v767
      %vm772 = vcmp.eq.f32.partialorder %v764, %v770
      %v773 = vsel %vm771, %v658, 16.0
      %v774 = vsel %vm772, %v658, 16.0
      %v775 = vsel %vm659, %v773, inf
      %776 = vmin.xlane.f32.xlu0 %v775
      %v777 = vpop.xlane.xlu0 %776
      %v778 = vsel %vm659, %v774, inf
      %779 = vmin.xlane.f32.xlu0 %v778
      %v780 = vpop.xlane.xlu0 %779
      %vm781 = vcmp.eq.f32.partialorder %v658, %v777
      %vm782 = vcmp.eq.f32.partialorder %v658, %v780
      %v783 = vsel %vm781, 1, 0
      %v784 = vsel %vm782, 1, 0
      %v785 = vcvt.s32.f32 %v783
      %v786 = vcvt.s32.f32 %v784
      %v788 = vsel %vm659, %v785, 0
      %v791 = vsel %vm659, %v786, 0
      %793 = vmatprep.subr.mxu0 0.0
      %794 = vmatpush1.msra.mxu0 %v558
      %795 = vmatprep.subr.mxu0 0.0
      %796 = vmatpush1.msra.mxu0 %v563
      %797 = vmatprep.subr.mxu0 0.0
      %798 = vmatpush1.msra.mxu0 0.0
      %799 = vmatprep.subr.mxu0 0.0
      %800 = vmatpush1.msra.mxu0 0.0
      %801 = vmatprep.subr.mxu0 0.0
      %802 = vmatpush1.msra.mxu0 0.0
      %803 = vmatprep.subr.mxu0 0.0
      %804 = vmatpush1.msra.mxu0 0.0
      %805 = vmatprep.subr.mxu0 0.0
      %806 = vmatpush1.msra.mxu0 0.0
      %807 = vmatprep.subr.mxu0 0.0
      %808 = vmatpush1.msra.mxu0 0.0
      %809 = vmatprep.subr.mxu0 0.0
      %810 = vmatpush1.msra.mxu0 0.0
      %811 = vmatprep.subr.mxu0 0.0
      %812 = vmatpush1.msra.mxu0 0.0
      %813 = vmatprep.subr.mxu0 0.0
      %814 = vmatpush1.msra.mxu0 0.0
      %815 = vmatprep.subr.mxu0 0.0
      %816 = vmatpush1.msra.mxu0 0.0
      %817 = vmatprep.subr.mxu0 0.0
      %818 = vmatpush1.msra.mxu0 0.0
      %819 = vmatprep.subr.mxu0 0.0
      %820 = vmatpush1.msra.mxu0 0.0
      %821 = vmatprep.subr.mxu0 0.0
      %822 = vmatpush1.msra.mxu0 0.0
      %823 = vmatprep.subr.mxu0 0.0
      %824 = vmatpush1.msra.mxu0 0.0
      %825 = vmatprep.subr.mxu0 0.0
      %826 = vmatpush1.msra.mxu0 0.0
      %827 = vmatprep.subr.mxu0 0.0
      %828 = vmatpush1.msra.mxu0 0.0
      %829 = vmatprep.subr.mxu0 0.0
      %830 = vmatpush1.msra.mxu0 0.0
      %831 = vmatprep.subr.mxu0 0.0
      %832 = vmatpush1.msra.mxu0 0.0
      %833 = vmatprep.subr.mxu0 0.0
      %834 = vmatpush1.msra.mxu0 0.0
      %835 = vmatprep.subr.mxu0 0.0
      %836 = vmatpush1.msra.mxu0 0.0
      %837 = vmatprep.subr.mxu0 0.0
      %838 = vmatpush1.msra.mxu0 0.0
      %839 = vmatprep.subr.mxu0 0.0
      %840 = vmatpush1.msra.mxu0 0.0
      %841 = vmatprep.subr.mxu0 0.0
      %842 = vmatpush1.msra.mxu0 0.0
      %843 = vmatprep.subr.mxu0 0.0
      %844 = vmatpush1.msra.mxu0 0.0
      %845 = vmatprep.subr.mxu0 0.0
      %846 = vmatpush1.msra.mxu0 0.0
      %847 = vmatprep.subr.mxu0 0.0
      %848 = vmatpush1.msra.mxu0 0.0
      %849 = vmatprep.subr.mxu0 0.0
      %850 = vmatpush1.msra.mxu0 0.0
      %851 = vmatprep.subr.mxu0 0.0
      %852 = vmatpush1.msra.mxu0 0.0
      %853 = vmatprep.subr.mxu0 0.0
      %854 = vmatpush1.msra.mxu0 0.0
      %855 = vmatprep.subr.mxu0 0.0
      %856 = vmatpush1.msra.mxu0 0.0
      %857 = vmatprep.mubr.f32.mxu0 0.0
      %858 = vmatmul.mubr.f32.gmra.mrb[0].mxu0 %v788
      %v859 = vpop.f32.mrb[0].mxu0
      %v860 = vadd.f32 0.0, %v859
      %v861 = vpop.f32.mrb[0].mxu0
      %862 = vmatprep.mubr.f32.mxu0 0.0
      %863 = vmatmul.mubr.f32.gmra.mrb[0].mxu0 %v791
      %v864 = vpop.f32.mrb[0].mxu0
      %v865 = vadd.f32 0.0, %v864
      %v866 = vpop.f32.mrb[0].mxu0
      %867 = vdwg.mxu0
      %v868 = vmax.f32 %v755, %v860
      %v869 = vmax.f32 %v760, %v865
      %v870 = vsel %vm781, -inf, %v763
      %v871 = vsel %vm782, -inf, %v764
      %v872 = vsel %vm659, %v870, -inf
      %873 = vmax.xlane.f32.xlu0 %v872
      %v874 = vpop.xlane.xlu0 %873
      %v875 = vsel %vm659, %v871, -inf
      %876 = vmax.xlane.f32.xlu0 %v875
      %v877 = vpop.xlane.xlu0 %876
      %vm878 = vcmp.eq.f32.partialorder %v870, %v874
      %vm879 = vcmp.eq.f32.partialorder %v871, %v877
      %v880 = vsel %vm878, %v658, 16.0
      %v881 = vsel %vm879, %v658, 16.0
      %v882 = vsel %vm659, %v880, inf
      %883 = vmin.xlane.f32.xlu0 %v882
      %v884 = vpop.xlane.xlu0 %883
      %v885 = vsel %vm659, %v881, inf
      %886 = vmin.xlane.f32.xlu0 %v885
      %v887 = vpop.xlane.xlu0 %886
      %vm888 = vcmp.eq.f32.partialorder %v658, %v884
      %vm889 = vcmp.eq.f32.partialorder %v658, %v887
      %v890 = vsel %vm888, 1, 0
      %v891 = vsel %vm889, 1, 0
      %v892 = vcvt.s32.f32 %v890
      %v893 = vcvt.s32.f32 %v891
      %v895 = vsel %vm659, %v892, 0
      %v898 = vsel %vm659, %v893, 0
      %900 = vmatprep.subr.mxu0 0.0
      %901 = vmatpush1.msra.mxu0 %v558
      %902 = vmatprep.subr.mxu0 0.0
      %903 = vmatpush1.msra.mxu0 %v563
      %904 = vmatprep.subr.mxu0 0.0
      %905 = vmatpush1.msra.mxu0 0.0
      %906 = vmatprep.subr.mxu0 0.0
      %907 = vmatpush1.msra.mxu0 0.0
      %908 = vmatprep.subr.mxu0 0.0
      %909 = vmatpush1.msra.mxu0 0.0
      %910 = vmatprep.subr.mxu0 0.0
      %911 = vmatpush1.msra.mxu0 0.0
      %912 = vmatprep.subr.mxu0 0.0
      %913 = vmatpush1.msra.mxu0 0.0
      %914 = vmatprep.subr.mxu0 0.0
      %915 = vmatpush1.msra.mxu0 0.0
      %916 = vmatprep.subr.mxu0 0.0
      %917 = vmatpush1.msra.mxu0 0.0
      %918 = vmatprep.subr.mxu0 0.0
      %919 = vmatpush1.msra.mxu0 0.0
      %920 = vmatprep.subr.mxu0 0.0
      %921 = vmatpush1.msra.mxu0 0.0
      %922 = vmatprep.subr.mxu0 0.0
      %923 = vmatpush1.msra.mxu0 0.0
      %924 = vmatprep.subr.mxu0 0.0
      %925 = vmatpush1.msra.mxu0 0.0
      %926 = vmatprep.subr.mxu0 0.0
      %927 = vmatpush1.msra.mxu0 0.0
      %928 = vmatprep.subr.mxu0 0.0
      %929 = vmatpush1.msra.mxu0 0.0
      %930 = vmatprep.subr.mxu0 0.0
      %931 = vmatpush1.msra.mxu0 0.0
      %932 = vmatprep.subr.mxu0 0.0
      %933 = vmatpush1.msra.mxu0 0.0
      %934 = vmatprep.subr.mxu0 0.0
      %935 = vmatpush1.msra.mxu0 0.0
      %936 = vmatprep.subr.mxu0 0.0
      %937 = vmatpush1.msra.mxu0 0.0
      %938 = vmatprep.subr.mxu0 0.0
      %939 = vmatpush1.msra.mxu0 0.0
      %940 = vmatprep.subr.mxu0 0.0
      %941 = vmatpush1.msra.mxu0 0.0
      %942 = vmatprep.subr.mxu0 0.0
      %943 = vmatpush1.msra.mxu0 0.0
      %944 = vmatprep.subr.mxu0 0.0
      %945 = vmatpush1.msra.mxu0 0.0
      %946 = vmatprep.subr.mxu0 0.0
      %947 = vmatpush1.msra.mxu0 0.0
      %948 = vmatprep.subr.mxu0 0.0
      %949 = vmatpush1.msra.mxu0 0.0
      %950 = vmatprep.subr.mxu0 0.0
      %951 = vmatpush1.msra.mxu0 0.0
      %952 = vmatprep.subr.mxu0 0.0
      %953 = vmatpush1.msra.mxu0 0.0
      %954 = vmatprep.subr.mxu0 0.0
      %955 = vmatpush1.msra.mxu0 0.0
      %956 = vmatprep.subr.mxu0 0.0
      %957 = vmatpush1.msra.mxu0 0.0
      %958 = vmatprep.subr.mxu0 0.0
      %959 = vmatpush1.msra.mxu0 0.0
      %960 = vmatprep.subr.mxu0 0.0
      %961 = vmatpush1.msra.mxu0 0.0
      %962 = vmatprep.subr.mxu0 0.0
      %963 = vmatpush1.msra.mxu0 0.0
      %964 = vmatprep.mubr.f32.mxu0 0.0
      %965 = vmatmul.mubr.f32.gmra.mrb[0].mxu0 %v895
      %v966 = vpop.f32.mrb[0].mxu0
      %v967 = vadd.f32 0.0, %v966
      %v968 = vpop.f32.mrb[0].mxu0
      %969 = vmatprep.mubr.f32.mxu0 0.0
      %970 = vmatmul.mubr.f32.gmra.mrb[0].mxu0 %v898
      %v971 = vpop.f32.mrb[0].mxu0
      %v972 = vadd.f32 0.0, %v971
      %v973 = vpop.f32.mrb[0].mxu0
      %974 = vdwg.mxu0
      %v975 = vmax.f32 %v868, %v967
      %v976 = vmax.f32 %v869, %v972
      %v977 = vsel %vm888, -inf, %v870
      %v978 = vsel %vm889, -inf, %v871
      %v979 = vsel %vm659, %v977, -inf
      %980 = vmax.xlane.f32.xlu0 %v979
      %v981 = vpop.xlane.xlu0 %980
      %v982 = vsel %vm659, %v978, -inf
      %983 = vmax.xlane.f32.xlu0 %v982
      %v984 = vpop.xlane.xlu0 %983
      %vm985 = vcmp.eq.f32.partialorder %v977, %v981
      %vm986 = vcmp.eq.f32.partialorder %v978, %v984
      %v987 = vsel %vm985, %v658, 16.0
      %v988 = vsel %vm986, %v658, 16.0
      %v989 = vsel %vm659, %v987, inf
      %990 = vmin.xlane.f32.xlu0 %v989
      %v991 = vpop.xlane.xlu0 %990
      %v992 = vsel %vm659, %v988, inf
      %993 = vmin.xlane.f32.xlu0 %v992
      %v994 = vpop.xlane.xlu0 %993
      %vm995 = vcmp.eq.f32.partialorder %v658, %v991
      %vm996 = vcmp.eq.f32.partialorder %v658, %v994
      %v997 = vsel %vm995, 1, 0
      %v998 = vsel %vm996, 1, 0
      %v999 = vcvt.s32.f32 %v997
      %v1000 = vcvt.s32.f32 %v998
      %v1002 = vsel %vm659, %v999, 0
      %v1005 = vsel %vm659, %v1000, 0
      %1007 = vmatprep.subr.mxu0 0.0
      %1008 = vmatpush1.msra.mxu0 %v558
      %1009 = vmatprep.subr.mxu0 0.0
      %1010 = vmatpush1.msra.mxu0 %v563
      %1011 = vmatprep.subr.mxu0 0.0
      %1012 = vmatpush1.msra.mxu0 0.0
      %1013 = vmatprep.subr.mxu0 0.0
      %1014 = vmatpush1.msra.mxu0 0.0
      %1015 = vmatprep.subr.mxu0 0.0
      %1016 = vmatpush1.msra.mxu0 0.0
      %1017 = vmatprep.subr.mxu0 0.0
      %1018 = vmatpush1.msra.mxu0 0.0
      %1019 = vmatprep.subr.mxu0 0.0
      %1020 = vmatpush1.msra.mxu0 0.0
      %1021 = vmatprep.subr.mxu0 0.0
      %1022 = vmatpush1.msra.mxu0 0.0
      %1023 = vmatprep.subr.mxu0 0.0
      %1024 = vmatpush1.msra.mxu0 0.0
      %1025 = vmatprep.subr.mxu0 0.0
      %1026 = vmatpush1.msra.mxu0 0.0
      %1027 = vmatprep.subr.mxu0 0.0
      %1028 = vmatpush1.msra.mxu0 0.0
      %1029 = vmatprep.subr.mxu0 0.0
      %1030 = vmatpush1.msra.mxu0 0.0
      %1031 = vmatprep.subr.mxu0 0.0
      %1032 = vmatpush1.msra.mxu0 0.0
      %1033 = vmatprep.subr.mxu0 0.0
      %1034 = vmatpush1.msra.mxu0 0.0
      %1035 = vmatprep.subr.mxu0 0.0
      %1036 = vmatpush1.msra.mxu0 0.0
      %1037 = vmatprep.subr.mxu0 0.0
      %1038 = vmatpush1.msra.mxu0 0.0
      %1039 = vmatprep.subr.mxu0 0.0
      %1040 = vmatpush1.msra.mxu0 0.0
      %1041 = vmatprep.subr.mxu0 0.0
      %1042 = vmatpush1.msra.mxu0 0.0
      %1043 = vmatprep.subr.mxu0 0.0
      %1044 = vmatpush1.msra.mxu0 0.0
      %1045 = vmatprep.subr.mxu0 0.0
      %1046 = vmatpush1.msra.mxu0 0.0
      %1047 = vmatprep.subr.mxu0 0.0
      %1048 = vmatpush1.msra.mxu0 0.0
      %1049 = vmatprep.subr.mxu0 0.0
      %1050 = vmatpush1.msra.mxu0 0.0
      %1051 = vmatprep.subr.mxu0 0.0
      %1052 = vmatpush1.msra.mxu0 0.0
      %1053 = vmatprep.subr.mxu0 0.0
      %1054 = vmatpush1.msra.mxu0 0.0
      %1055 = vmatprep.subr.mxu0 0.0
      %1056 = vmatpush1.msra.mxu0 0.0
      %1057 = vmatprep.subr.mxu0 0.0
      %1058 = vmatpush1.msra.mxu0 0.0
      %1059 = vmatprep.subr.mxu0 0.0
      %1060 = vmatpush1.msra.mxu0 0.0
      %1061 = vmatprep.subr.mxu0 0.0
      %1062 = vmatpush1.msra.mxu0 0.0
      %1063 = vmatprep.subr.mxu0 0.0
      %1064 = vmatpush1.msra.mxu0 0.0
      %1065 = vmatprep.subr.mxu0 0.0
      %1066 = vmatpush1.msra.mxu0 0.0
      %1067 = vmatprep.subr.mxu0 0.0
      %1068 = vmatpush1.msra.mxu0 0.0
      %1069 = vmatprep.subr.mxu0 0.0
      %1070 = vmatpush1.msra.mxu0 0.0
      %1071 = vmatprep.mubr.f32.mxu0 0.0
      %1072 = vmatmul.mubr.f32.gmra.mrb[0].mxu0 %v1002
      %v1073 = vpop.f32.mrb[0].mxu0
      %v1074 = vadd.f32 0.0, %v1073
      %v1075 = vpop.f32.mrb[0].mxu0
      %1076 = vmatprep.mubr.f32.mxu0 0.0
      %1077 = vmatmul.mubr.f32.gmra.mrb[0].mxu0 %v1005
      %v1078 = vpop.f32.mrb[0].mxu0
      %v1079 = vadd.f32 0.0, %v1078
      %v1080 = vpop.f32.mrb[0].mxu0
      %1081 = vdwg.mxu0
      %v1082 = vmax.f32 %v975, %v1074
      %v1083 = vmax.f32 %v976, %v1079
      %v1084 = vadd.f32 %v1082, %v648
      %v1085 = vadd.f32 %v1083, %v653
      %vm1086 = vcmp.ge.f32.partialorder %v1084, 0.0
      %vm1087 = vcmp.ge.f32.partialorder %v1085, 0.0
      %v1088 = vmul.f32 %v1084, 0.2
      %v1089 = vmul.f32 %v1085, 0.2
      %v1090 = vsel %vm1086, %v1084, %v1088
      %v1091 = vsel %vm1087, %v1085, %v1089
      %1092 = vst.msk [vmem:[%s370] sm:$0xff] %vm384, %v1090
      %1093 = vst.msk [vmem:[%s370 + $0x8] sm:$0xff] %vm384, %v1091
      %s1094 = smul.u32 2, %s23
      %p1095 = scmp.lt.s32.totalorder %s22, 1
      %s1096 = scalar_select %p1095, %s22, 1
      %p1097 = scmp.lt.s32.totalorder %s1094, 1
      %s1098 = scalar_select %p1097, %s1094, 1
      %s1099 = smul.addr %s1096, 2
      %s1100 = sadd.s32 %s1098, %s1099
      %s1101 = smul.addr %s1100, 8
      %s1102 = scalar_lea.vmem %s7, %s1101
      // Predicated region
      $region49: #{_lambda_.6} parent=47 // pred_check
        %p1103 = pneg %p219
      $region50: #{_lambda_.6} parent=47 // pred_check_branch
        %1105 = sbr.rel (%p1103) target = $region52
      $region51: #{_lambda_.6} parent=47 // pred_region
        %s1106 = smul.u32 2, %s23
      $region52: #{_lambda_.6} parent=47 // pred_fallthru
        _
    $region48: #{_lambda_.6} parent=5 // pred_fallthru
      _
    %p1107 = scmp.le.s32.totalorder 2, %s13
    // Predicated region
    $region53: #{_lambda_.6} parent=5 // pred_check
      %p1108 = pneg %p1107
    $region54: #{_lambda_.6} parent=5 // pred_check_branch
      %1110 = sbr.rel (%p1108) target = $region56
    $region55: #{_lambda_.6} parent=5 // pred_region
      %s1111 = ssub.s32 %s13, 2
      // Predicated region
      $region57: #{_lambda_.6} parent=55 // pred_check
        %p1112 = pneg %p225
      $region58: #{_lambda_.6} parent=55 // pred_check_branch
        %1114 = sbr.rel (%p1112) target = $region60
      $region59: #{_lambda_.6} parent=55 // pred_region
        %s1115 = smul.u32 2, %s25
        %p1116 = scmp.lt.s32.totalorder %s24, 1
        %s1117 = scalar_select %p1116, %s24, 1
        %p1118 = scmp.lt.s32.totalorder %s1115, 1
        %s1119 = scalar_select %p1118, %s1115, 1
        %s1120 = smul.addr %s1117, 2
        %s1121 = sadd.s32 %s1119, %s1120
        %s1122 = smul.addr %s1121, 8
        %s1123 = scalar_lea.vmem %s7, %s1122
      $region60: #{_lambda_.6} parent=55 // pred_fallthru
        _
    $region56: #{_lambda_.6} parent=5 // pred_fallthru
      _
  $region6: #{_lambda_.6} parent=0 // loop_footer
    %s17 = sadd.s32 1, %s13
  $region7: #{_lambda_.6} parent=0 // loop_footer_branch
    %12 = sbr.rel target = $region3
  $region8: #{_lambda_.6} parent=0 // loop_exit
    _

// kernel: _lambda_.5
$region0: #{_lambda_.5}
  #allocation0 [shape = 'u32[]', space=smem, size = 0x4, offset = 0x4, fixed_abs, tag = 'smem constant byte address 0x4 - core index']
  #allocation1 [shape = 'u32[144,128]{1,0:T(1,128)}', space=vmem, size = 0x12000, scoped, tag = 'internal scratch']
  %s0 = inlined_call_operand.vmem [shape: f32[2,16,3], index: 0, kind: input, shape index: {}, may-alias: {0,2}]
  %s1 = inlined_call_operand.vmem [shape: f32[2,3,16], index: 1, kind: input, shape index: {}]
  %s2 = inlined_call_operand.vmem [shape: f32[2,16,3], index: 2, kind: input, shape index: {}, may-alias: {0,2}]
  %s3 = inlined_call_operand.vmem [shape: f32[2,1,16], index: 3, kind: input, shape index: {}]
  %s4 = inlined_call_operand.vmem [shape: f32[3,64], index: 4, kind: input, shape index: {}]
  %s5 = inlined_call_operand.vmem [shape: f32[3,64], index: 5, kind: input, shape index: {}]
  %s6 = inlined_call_operand.vmem [shape: f32[1,64], index: 6, kind: input, shape index: {}]
  %s7 = inlined_call_operand.vmem [shape: f32[2,16,64], index: 7, kind: output, shape index: {}]
  %s8 = sld [smem:[#allocation0]]
  $region61: #{_lambda_.5} parent=0
    _
  %s10 = ssub.s32 1, %s8
  %s11 = scalar_select 0, %s10, %s8
  loop: start=0, step=1, limit=4
  $region2: #{_lambda_.5} parent=0 // loop_pre_header
    _
  $region3: #{_lambda_.5} parent=0 // loop_header
    %s13 = sphi 0, %s17
    %p14 = scmp.ge.s32.totalorder %s13, 4
    %s20 = sphi 0, %s32
    %s21 = sphi 0, %s28
    %s22 = sphi 0, %s20
    %s23 = sphi 0, %s21
    %s24 = sphi 0, %s22
    %s25 = sphi 0, %s23
    %s37 = sphi 0, %s39
    %s40 = sphi 0, %s37
    %s41 = sphi 0, %s40
    %s57 = sphi 0, %s41
    %s63 = sphi 0, %s65
    %s66 = sphi 0, %s63
    %s67 = sphi 0, %s66
    %s83 = sphi 0, %s67
    %s89 = sphi 0, %s91
    %s92 = sphi 0, %s89
    %s93 = sphi 0, %s92
    %s109 = sphi 0, %s93
    %s115 = sphi 0, %s117
    %s118 = sphi 0, %s115
    %s119 = sphi 0, %s118
    %s135 = sphi 0, %s119
    %s139 = sphi 0, %s139
    %s141 = sphi 0, %s139
    %s142 = sphi 0, %s141
    %s156 = sphi 0, %s142
    %s160 = sphi 0, %s160
    %s162 = sphi 0, %s160
    %s163 = sphi 0, %s162
    %s177 = sphi 0, %s163
    %s181 = sphi 0, %s181
    %s183 = sphi 0, %s181
    %s184 = sphi 0, %s183
    %s198 = sphi 0, %s184
    %s206 = sphi 0, %s208
    %s209 = sphi 0, %s206
    %s210 = sphi 0, %s209
    %s226 = sphi 0, %s210
  $region4: #{_lambda_.5} parent=0 // loop_header_branch
    %16 = sbr.rel (%p14) target = $region8
  $region5: #{_lambda_.5} parent=0 // loop_body
    %s18 = ssub.s32 %s13, 1
    %s19 = ssub.s32 %s13, 2
    %s26 = sadd.s32 1, %s21
    %p27 = scmp.ge.s32.totalorder %s26, 1
    %s28 = scalar_select %p27, 0, %s26
    %s29 = sadd.s32 1, %s20
    %s30 = scalar_select %p27, %s29, %s20
    %p31 = scmp.ge.s32.totalorder %s30, 2
    %s32 = scalar_select %p31, 0, %s30
    %s33 = ssub.s32 %s20, %s32
    %s34 = ssub.s32 %s21, %s28
    %s35 = sor.u32 %s33, %s34
    %p36 = scmp.eq.s32.totalorder %s35, 0
    %s38 = sadd.s32 %s37, 1
    %s39 = scalar_select %p36, %s37, %s38
    %p42 = pneg %p36
    %p43 = scmp.eq.s32.totalorder %s13, 1
    %p44 = por %p42, %p43
    %p45 = scmp.ne.s32.totalorder %s37, %s40
    %p46 = scmp.eq.s32.totalorder %s13, 0
    %p47 = por %p45, %p46
    %p48 = scmp.ne.s32.totalorder %s37, %s40
    %p49 = scmp.eq.s32.totalorder %s18, 1
    %p50 = por %p48, %p49
    %p51 = scmp.ne.s32.totalorder %s40, %s41
    %p52 = scmp.eq.s32.totalorder %s18, 0
    %p53 = por %p51, %p52
    %p54 = scmp.ne.s32.totalorder %s40, %s41
    %p55 = scmp.eq.s32.totalorder %s19, 1
    %p56 = por %p54, %p55
    %p58 = scmp.ne.s32.totalorder %s41, %s57
    %p59 = scmp.eq.s32.totalorder %s19, 0
    %p60 = por %p58, %p59
    %s61 = ssub.s32 %s20, %s32
    %p62 = scmp.eq.s32.totalorder %s61, 0
    %s64 = sadd.s32 %s63, 1
    %s65 = scalar_select %p62, %s63, %s64
    %p68 = pneg %p62
    %p69 = scmp.eq.s32.totalorder %s13, 1
    %p70 = por %p68, %p69
    %p71 = scmp.ne.s32.totalorder %s63, %s66
    %p72 = scmp.eq.s32.totalorder %s13, 0
    %p73 = por %p71, %p72
    %p74 = scmp.ne.s32.totalorder %s63, %s66
    %p75 = scmp.eq.s32.totalorder %s18, 1
    %p76 = por %p74, %p75
    %p77 = scmp.ne.s32.totalorder %s66, %s67
    %p78 = scmp.eq.s32.totalorder %s18, 0
    %p79 = por %p77, %p78
    %p80 = scmp.ne.s32.totalorder %s66, %s67
    %p81 = scmp.eq.s32.totalorder %s19, 1
    %p82 = por %p80, %p81
    %p84 = scmp.ne.s32.totalorder %s67, %s83
    %p85 = scmp.eq.s32.totalorder %s19, 0
    %p86 = por %p84, %p85
    %s87 = ssub.s32 %s20, %s32
    %p88 = scmp.eq.s32.totalorder %s87, 0
    %s90 = sadd.s32 %s89, 1
    %s91 = scalar_select %p88, %s89, %s90
    %p94 = pneg %p88
    %p95 = scmp.eq.s32.totalorder %s13, 1
    %p96 = por %p94, %p95
    %p97 = scmp.ne.s32.totalorder %s89, %s92
    %p98 = scmp.eq.s32.totalorder %s13, 0
    %p99 = por %p97, %p98
    %p100 = scmp.ne.s32.totalorder %s89, %s92
    %p101 = scmp.eq.s32.totalorder %s18, 1
    %p102 = por %p100, %p101
    %p103 = scmp.ne.s32.totalorder %s92, %s93
    %p104 = scmp.eq.s32.totalorder %s18, 0
    %p105 = por %p103, %p104
    %p106 = scmp.ne.s32.totalorder %s92, %s93
    %p107 = scmp.eq.s32.totalorder %s19, 1
    %p108 = por %p106, %p107
    %p110 = scmp.ne.s32.totalorder %s93, %s109
    %p111 = scmp.eq.s32.totalorder %s19, 0
    %p112 = por %p110, %p111
    %s113 = ssub.s32 %s20, %s32
    %p114 = scmp.eq.s32.totalorder %s113, 0
    %s116 = sadd.s32 %s115, 1
    %s117 = scalar_select %p114, %s115, %s116
    %p120 = pneg %p114
    %p121 = scmp.eq.s32.totalorder %s13, 1
    %p122 = por %p120, %p121
    %p123 = scmp.ne.s32.totalorder %s115, %s118
    %p124 = scmp.eq.s32.totalorder %s13, 0
    %p125 = por %p123, %p124
    %p126 = scmp.ne.s32.totalorder %s115, %s118
    %p127 = scmp.eq.s32.totalorder %s18, 1
    %p128 = por %p126, %p127
    %p129 = scmp.ne.s32.totalorder %s118, %s119
    %p130 = scmp.eq.s32.totalorder %s18, 0
    %p131 = por %p129, %p130
    %p132 = scmp.ne.s32.totalorder %s118, %s119
    %p133 = scmp.eq.s32.totalorder %s19, 1
    %p134 = por %p132, %p133
    %p136 = scmp.ne.s32.totalorder %s119, %s135
    %p137 = scmp.eq.s32.totalorder %s19, 0
    %p138 = por %p136, %p137
    %s140 = sadd.s32 %s139, 1
    %p143 = scmp.eq.s32.totalorder %s13, 1
    %p144 = scmp.ne.s32.totalorder %s139, %s141
    %p145 = scmp.eq.s32.totalorder %s13, 0
    %p146 = por %p144, %p145
    %p147 = scmp.ne.s32.totalorder %s139, %s141
    %p148 = scmp.eq.s32.totalorder %s18, 1
    %p149 = por %p147, %p148
    %p150 = scmp.ne.s32.totalorder %s141, %s142
    %p151 = scmp.eq.s32.totalorder %s18, 0
    %p152 = por %p150, %p151
    %p153 = scmp.ne.s32.totalorder %s141, %s142
    %p154 = scmp.eq.s32.totalorder %s19, 1
    %p155 = por %p153, %p154
    %p157 = scmp.ne.s32.totalorder %s142, %s156
    %p158 = scmp.eq.s32.totalorder %s19, 0
    %p159 = por %p157, %p158
    %s161 = sadd.s32 %s160, 1
    %p164 = scmp.eq.s32.totalorder %s13, 1
    %p165 = scmp.ne.s32.totalorder %s160, %s162
    %p166 = scmp.eq.s32.totalorder %s13, 0
    %p167 = por %p165, %p166
    %p168 = scmp.ne.s32.totalorder %s160, %s162
    %p169 = scmp.eq.s32.totalorder %s18, 1
    %p170 = por %p168, %p169
    %p171 = scmp.ne.s32.totalorder %s162, %s163
    %p172 = scmp.eq.s32.totalorder %s18, 0
    %p173 = por %p171, %p172
    %p174 = scmp.ne.s32.totalorder %s162, %s163
    %p175 = scmp.eq.s32.totalorder %s19, 1
    %p176 = por %p174, %p175
    %p178 = scmp.ne.s32.totalorder %s163, %s177
    %p179 = scmp.eq.s32.totalorder %s19, 0
    %p180 = por %p178, %p179
    %s182 = sadd.s32 %s181, 1
    %p185 = scmp.eq.s32.totalorder %s13, 1
    %p186 = scmp.ne.s32.totalorder %s181, %s183
    %p187 = scmp.eq.s32.totalorder %s13, 0
    %p188 = por %p186, %p187
    %p189 = scmp.ne.s32.totalorder %s181, %s183
    %p190 = scmp.eq.s32.totalorder %s18, 1
    %p191 = por %p189, %p190
    %p192 = scmp.ne.s32.totalorder %s183, %s184
    %p193 = scmp.eq.s32.totalorder %s18, 0
    %p194 = por %p192, %p193
    %p195 = scmp.ne.s32.totalorder %s183, %s184
    %p196 = scmp.eq.s32.totalorder %s19, 1
    %p197 = por %p195, %p196
    %p199 = scmp.ne.s32.totalorder %s184, %s198
    %p200 = scmp.eq.s32.totalorder %s19, 0
    %p201 = por %p199, %p200
    %s202 = ssub.s32 %s20, %s32
    %s203 = ssub.s32 %s21, %s28
    %s204 = sor.u32 %s202, %s203
    %p205 = scmp.eq.s32.totalorder %s204, 0
    %s207 = sadd.s32 %s206, 1
    %s208 = scalar_select %p205, %s206, %s207
    %p211 = pneg %p205
    %p212 = scmp.eq.s32.totalorder %s13, 1
    %p213 = por %p211, %p212
    %p214 = scmp.ne.s32.totalorder %s206, %s209
    %p215 = scmp.eq.s32.totalorder %s13, 0
    %p216 = por %p214, %p215
    %p217 = scmp.ne.s32.totalorder %s206, %s209
    %p218 = scmp.eq.s32.totalorder %s18, 1
    %p219 = por %p217, %p218
    %p220 = scmp.ne.s32.totalorder %s209, %s210
    %p221 = scmp.eq.s32.totalorder %s18, 0
    %p222 = por %p220, %p221
    %p223 = scmp.ne.s32.totalorder %s209, %s210
    %p224 = scmp.eq.s32.totalorder %s19, 1
    %p225 = por %p223, %p224
    %p227 = scmp.ne.s32.totalorder %s210, %s226
    %p228 = scmp.eq.s32.totalorder %s19, 0
    %p229 = por %p227, %p228
    %p230 = scmp.le.s32.totalorder 1, %s13
    %p231 = scmp.lt.s32.totalorder %s13, 3
    %p232 = pnand %p230, %p231
    %p233 = pneg %p232
    // Predicated region
    $region9: #{_lambda_.5} parent=5 // pred_check
      _
    $region10: #{_lambda_.5} parent=5 // pred_check_branch
      %235 = sbr.rel (%p232) target = $region12
    $region11: #{_lambda_.5} parent=5 // pred_region
      %s236 = ssub.s32 %s13, 1
      // Predicated region
      $region13: #{_lambda_.5} parent=11 // pred_check
        %p237 = pneg %p152
      $region14: #{_lambda_.5} parent=11 // pred_check_branch
        %239 = sbr.rel (%p237) target = $region16
      $region15: #{_lambda_.5} parent=11 // pred_region
        _
      $region16: #{_lambda_.5} parent=11 // pred_fallthru
        _
      // Predicated region
      $region17: #{_lambda_.5} parent=11 // pred_check
        %p240 = pneg %p173
      $region18: #{_lambda_.5} parent=11 // pred_check_branch
        %242 = sbr.rel (%p240) target = $region20
      $region19: #{_lambda_.5} parent=11 // pred_region
        _
      $region20: #{_lambda_.5} parent=11 // pred_fallthru
        _
      // Predicated region
      $region21: #{_lambda_.5} parent=11 // pred_check
        %p243 = pneg %p194
      $region22: #{_lambda_.5} parent=11 // pred_check_branch
        %245 = sbr.rel (%p243) target = $region24
      $region23: #{_lambda_.5} parent=11 // pred_region
        _
      $region24: #{_lambda_.5} parent=11 // pred_fallthru
        _
    $region12: #{_lambda_.5} parent=5 // pred_fallthru
      _
    %p246 = scmp.lt.s32.totalorder %s13, 2
    // Predicated region
    $region25: #{_lambda_.5} parent=5 // pred_check
      %p247 = pneg %p246
    $region26: #{_lambda_.5} parent=5 // pred_check_branch
      %249 = sbr.rel (%p247) target = $region28
    $region27: #{_lambda_.5} parent=5 // pred_region
      // Predicated region
      $region29: #{_lambda_.5} parent=27 // pred_check
        %p250 = pneg %p47
      $region30: #{_lambda_.5} parent=27 // pred_check_branch
        %252 = sbr.rel (%p250) target = $region32
      $region31: #{_lambda_.5} parent=27 // pred_region
        %s253 = smul.u32 2, %s21
        %p254 = scmp.lt.s32.totalorder %s20, 1
        %s255 = scalar_select %p254, %s20, 1
        %p256 = scmp.lt.s32.totalorder %s253, 1
        %s257 = scalar_select %p256, %s253, 1
        %s258 = smul.addr %s255, 2
        %s259 = sadd.s32 %s257, %s258
        %s260 = smul.addr %s259, 8
        %s261 = scalar_lea.vmem %s0, %s260
        %s262 = smul.u32 2, %s21
      $region32: #{_lambda_.5} parent=27 // pred_fallthru
        _
      // Predicated region
      $region33: #{_lambda_.5} parent=27 // pred_check
        %p263 = pneg %p73
      $region34: #{_lambda_.5} parent=27 // pred_check_branch
        %265 = sbr.rel (%p263) target = $region36
      $region35: #{_lambda_.5} parent=27 // pred_region
        %p266 = scmp.lt.s32.totalorder %s20, 1
        %s267 = scalar_select %p266, %s20, 1
        %s268 = smul.addr %s267, 4
        %s269 = scalar_lea.vmem %s1, %s268
      $region36: #{_lambda_.5} parent=27 // pred_fallthru
        _
      // Predicated region
      $region37: #{_lambda_.5} parent=27 // pred_check
        %p270 = pneg %p99
      $region38: #{_lambda_.5} parent=27 // pred_check_branch
        %272 = sbr.rel (%p270) target = $region40
      $region39: #{_lambda_.5} parent=27 // pred_region
        %p273 = scmp.lt.s32.totalorder %s20, 1
        %s274 = scalar_select %p273, %s20, 1
        %s275 = smul.addr %s274, 2
        %s276 = smul.addr %s275, 8
        %s277 = scalar_lea.vmem %s2, %s276
      $region40: #{_lambda_.5} parent=27 // pred_fallthru
        _
      // Predicated region
      $region41: #{_lambda_.5} parent=27 // pred_check
        %p278 = pneg %p125
      $region42: #{_lambda_.5} parent=27 // pred_check_branch
        %280 = sbr.rel (%p278) target = $region44
      $region43: #{_lambda_.5} parent=27 // pred_region
        %p281 = scmp.lt.s32.totalorder %s20, 1
        %s282 = scalar_select %p281, %s20, 1
        %s283 = scalar_lea.vmem %s3, %s282
      $region44: #{_lambda_.5} parent=27 // pred_fallthru
        _
    $region28: #{_lambda_.5} parent=5 // pred_fallthru
      _
    %p284 = scmp.le.s32.totalorder 1, %s13
    %p285 = scmp.lt.s32.totalorder %s13, 3
    %p286 = pnand %p284, %p285
    %p287 = pneg %p286
    // Predicated region
    $region45: #{_lambda_.5} parent=5 // pred_check
      _
    $region46: #{_lambda_.5} parent=5 // pred_check_branch
      %289 = sbr.rel (%p286) target = $region48
    $region47: #{_lambda_.5} parent=5 // pred_region
      %s290 = ssub.s32 %s13, 1
      %s291 = smul.u32 2, %s23
      %p292 = scmp.lt.s32.totalorder %s22, 1
      %s293 = scalar_select %p292, %s22, 1
      %p294 = scmp.lt.s32.totalorder %s291, 1
      %s295 = scalar_select %p294, %s291, 1
      %s296 = smul.addr %s293, 2
      %s297 = sadd.s32 %s295, %s296
      %s298 = smul.addr %s297, 8
      %s299 = scalar_lea.vmem %s0, %s298
      %p300 = pneg %p53
      %p301 = pneg %p50
      %p302 = scmp.lt.s32.totalorder %s22, 1
      %s303 = scalar_select %p302, %s22, 1
      %s304 = smul.addr %s303, 4
      %s305 = scalar_lea.vmem %s1, %s304
      %p306 = pneg %p79
      %p307 = pneg %p76
      %p308 = scmp.lt.s32.totalorder %s22, 1
      %s309 = scalar_select %p308, %s22, 1
      %s310 = smul.addr %s309, 2
      %s311 = smul.addr %s310, 8
      %s312 = scalar_lea.vmem %s2, %s311
      %p313 = pneg %p105
      %p314 = pneg %p102
      %p315 = scmp.lt.s32.totalorder %s22, 1
      %s316 = scalar_select %p315, %s22, 1
      %s317 = scalar_lea.vmem %s3, %s316
      %p318 = pneg %p131
      %p319 = pneg %p128
      %p320 = pneg %p152
      %p321 = pneg %p149
      %p322 = pneg %p173
      %p323 = pneg %p170
      %p324 = pneg %p194
      %p325 = pneg %p191
      %p326 = pneg %p222
      %p327 = pneg %p219
      %s328 = smul.u32 2, %s23
      %p329 = scmp.lt.s32.totalorder %s22, 1
      %s330 = scalar_select %p329, %s22, 1
      %p331 = scmp.lt.s32.totalorder %s328, 1
      %s332 = scalar_select %p331, %s328, 1
      %s333 = smul.addr %s330, 2
      %s334 = sadd.s32 %s332, %s333
      %s335 = smul.addr %s334, 8
      %s336 = scalar_lea.vmem %s7, %s335
      %s337 = smul.u32 2, %s23
      %p338 = scmp.lt.s32.totalorder %s22, 1
      %s339 = scalar_select %p338, %s22, 1
      %p340 = scmp.lt.s32.totalorder %s337, 1
      %s341 = scalar_select %p340, %s337, 1
      %s342 = smul.addr %s339, 2
      %s343 = sadd.s32 %s341, %s342
      %s344 = smul.addr %s343, 8
      %s345 = scalar_lea.vmem %s0, %s344
      %s346 = smul.u32 2, %s23
      %p347 = scmp.lt.s32.totalorder %s22, 1
      %s348 = scalar_select %p347, %s22, 1
      %s349 = smul.addr %s348, 4
      %s350 = scalar_lea.vmem %s1, %s349
      %p351 = scmp.lt.s32.totalorder %s22, 1
      %s352 = scalar_select %p351, %s22, 1
      %s353 = smul.addr %s352, 2
      %s354 = smul.addr %s353, 8
      %s355 = scalar_lea.vmem %s2, %s354
      %p356 = scmp.lt.s32.totalorder %s22, 1
      %s357 = scalar_select %p356, %s22, 1
      %s358 = scalar_lea.vmem %s3, %s357
      %s359 = smul.u32 2, %s23
      %p360 = scmp.lt.s32.totalorder %s22, 1
      %s361 = scalar_select %p360, %s22, 1
      %p362 = scmp.lt.s32.totalorder %s359, 1
      %s363 = scalar_select %p362, %s359, 1
      %s364 = smul.addr %s361, 2
      %s365 = sadd.s32 %s363, %s364
      %s366 = smul.addr %s365, 8
      %s367 = scalar_lea.vmem %s7, %s366
      %s368 = smul.u32 2, %s23
      %v369 = vld [vmem:[%s345] sm:$0xff]
      %v370 = vld [vmem:[%s345 + $0x8] sm:$0xff]
      %v371 = vld [vmem:[%s350] sm:$0x7]
      %v372 = vld [vmem:[%s355] sm:$0xff]
      %v373 = vld [vmem:[%s355 + $0x8] sm:$0xff]
      %vm374 = vcmask 23552
      %v376 = vsel %vm374, %v369, 0
      %v379 = vsel %vm374, %v370, 0
      %vm381 = vcmask 1042432
      %v383 = vsel %vm381, %v371, 0
      %385 = vmatprep.subr.mxu0 0.0
      %386 = vmatpush1.msra.mxu0 %v383
      %387 = vmatprep.subr.mxu0 0.0
      %388 = vmatpush1.msra.mxu0 0.0
      %389 = vmatprep.subr.mxu0 0.0
      %390 = vmatpush1.msra.mxu0 0.0
      %391 = vmatprep.subr.mxu0 0.0
      %392 = vmatpush1.msra.mxu0 0.0
      %393 = vmatprep.subr.mxu0 0.0
      %394 = vmatpush1.msra.mxu0 0.0
      %395 = vmatprep.subr.mxu0 0.0
      %396 = vmatpush1.msra.mxu0 0.0
      %397 = vmatprep.subr.mxu0 0.0
      %398 = vmatpush1.msra.mxu0 0.0
      %399 = vmatprep.subr.mxu0 0.0
      %400 = vmatpush1.msra.mxu0 0.0
      %401 = vmatprep.subr.mxu0 0.0
      %402 = vmatpush1.msra.mxu0 0.0
      %403 = vmatprep.subr.mxu0 0.0
      %404 = vmatpush1.msra.mxu0 0.0
      %405 = vmatprep.subr.mxu0 0.0
      %406 = vmatpush1.msra.mxu0 0.0
      %407 = vmatprep.subr.mxu0 0.0
      %408 = vmatpush1.msra.mxu0 0.0
      %409 = vmatprep.subr.mxu0 0.0
      %410 = vmatpush1.msra.mxu0 0.0
      %411 = vmatprep.subr.mxu0 0.0
      %412 = vmatpush1.msra.mxu0 0.0
      %413 = vmatprep.subr.mxu0 0.0
      %414 = vmatpush1.msra.mxu0 0.0
      %415 = vmatprep.subr.mxu0 0.0
      %416 = vmatpush1.msra.mxu0 0.0
      %417 = vmatprep.subr.mxu0 0.0
      %418 = vmatpush1.msra.mxu0 0.0
      %419 = vmatprep.subr.mxu0 0.0
      %420 = vmatpush1.msra.mxu0 0.0
      %421 = vmatprep.subr.mxu0 0.0
      %422 = vmatpush1.msra.mxu0 0.0
      %423 = vmatprep.subr.mxu0 0.0
      %424 = vmatpush1.msra.mxu0 0.0
      %425 = vmatprep.subr.mxu0 0.0
      %426 = vmatpush1.msra.mxu0 0.0
      %427 = vmatprep.subr.mxu0 0.0
      %428 = vmatpush1.msra.mxu0 0.0
      %429 = vmatprep.subr.mxu0 0.0
      %430 = vmatpush1.msra.mxu0 0.0
      %431 = vmatprep.subr.mxu0 0.0
      %432 = vmatpush1.msra.mxu0 0.0
      %433 = vmatprep.subr.mxu0 0.0
      %434 = vmatpush1.msra.mxu0 0.0
      %435 = vmatprep.subr.mxu0 0.0
      %436 = vmatpush1.msra.mxu0 0.0
      %437 = vmatprep.subr.mxu0 0.0
      %438 = vmatpush1.msra.mxu0 0.0
      %439 = vmatprep.subr.mxu0 0.0
      %440 = vmatpush1.msra.mxu0 0.0
      %441 = vmatprep.subr.mxu0 0.0
      %442 = vmatpush1.msra.mxu0 0.0
      %443 = vmatprep.subr.mxu0 0.0
      %444 = vmatpush1.msra.mxu0 0.0
      %445 = vmatprep.subr.mxu0 0.0
      %446 = vmatpush1.msra.mxu0 0.0
      %447 = vmatprep.subr.mxu0 0.0
      %448 = vmatpush1.msra.mxu0 0.0
      %449 = vmatprep.mubr.f32.mxu0 0.0
      %450 = vmatmul.mubr.f32.gmra.mrb[0].mxu0 %v376
      %v451 = vpop.f32.mrb[0].mxu0
      %v452 = vadd.f32 0.0, %v451
      %v453 = vpop.f32.mrb[0].mxu0
      %454 = vmatprep.mubr.f32.mxu0 0.0
      %455 = vmatmul.mubr.f32.gmra.mrb[0].mxu0 %v379
      %v456 = vpop.f32.mrb[0].mxu0
      %v457 = vadd.f32 0.0, %v456
      %v458 = vpop.f32.mrb[0].mxu0
      %459 = vdwg.mxu0
      %v460 = vmul.f32 %v452, 2.0
      %v461 = vmul.f32 %v457, 2.0
      %v462 = vld [vmem:[%s358] sm:$0x1]
      %v464 = vlaneseq
      %v465 = vshrl.u32 %v464, 7
      %v466 = vsub.s32 0, %v465
      %v467 = vrot.slane %v462, %v466
      %v469 = vsub.f32 %v460, %v467
      %v470 = vsub.f32 %v461, %v467
      %v471 = vld [vmem:[%s4] sm:$0x7]
      %v473 = vsel %vm374, %v372, 0
      %v476 = vsel %vm374, %v373, 0
      %v479 = vsel %vm381, %v471, 0
      %481 = vmatprep.subr.mxu0 0.0
      %482 = vmatpush1.msra.mxu0 %v479
      %483 = vmatprep.subr.mxu0 0.0
      %484 = vmatpush1.msra.mxu0 0.0
      %485 = vmatprep.subr.mxu0 0.0
      %486 = vmatpush1.msra.mxu0 0.0
      %487 = vmatprep.subr.mxu0 0.0
      %488 = vmatpush1.msra.mxu0 0.0
      %489 = vmatprep.subr.mxu0 0.0
      %490 = vmatpush1.msra.mxu0 0.0
      %491 = vmatprep.subr.mxu0 0.0
      %492 = vmatpush1.msra.mxu0 0.0
      %493 = vmatprep.subr.mxu0 0.0
      %494 = vmatpush1.msra.mxu0 0.0
      %495 = vmatprep.subr.mxu0 0.0
      %496 = vmatpush1.msra.mxu0 0.0
      %497 = vmatprep.subr.mxu0 0.0
      %498 = vmatpush1.msra.mxu0 0.0
      %499 = vmatprep.subr.mxu0 0.0
      %500 = vmatpush1.msra.mxu0 0.0
      %501 = vmatprep.subr.mxu0 0.0
      %502 = vmatpush1.msra.mxu0 0.0
      %503 = vmatprep.subr.mxu0 0.0
      %504 = vmatpush1.msra.mxu0 0.0
      %505 = vmatprep.subr.mxu0 0.0
      %506 = vmatpush1.msra.mxu0 0.0
      %507 = vmatprep.subr.mxu0 0.0
      %508 = vmatpush1.msra.mxu0 0.0
      %509 = vmatprep.subr.mxu0 0.0
      %510 = vmatpush1.msra.mxu0 0.0
      %511 = vmatprep.subr.mxu0 0.0
      %512 = vmatpush1.msra.mxu0 0.0
      %513 = vmatprep.subr.mxu0 0.0
      %514 = vmatpush1.msra.mxu0 0.0
      %515 = vmatprep.subr.mxu0 0.0
      %516 = vmatpush1.msra.mxu0 0.0
      %517 = vmatprep.subr.mxu0 0.0
      %518 = vmatpush1.msra.mxu0 0.0
      %519 = vmatprep.subr.mxu0 0.0
      %520 = vmatpush1.msra.mxu0 0.0
      %521 = vmatprep.subr.mxu0 0.0
      %522 = vmatpush1.msra.mxu0 0.0
      %523 = vmatprep.subr.mxu0 0.0
      %524 = vmatpush1.msra.mxu0 0.0
      %525 = vmatprep.subr.mxu0 0.0
      %526 = vmatpush1.msra.mxu0 0.0
      %527 = vmatprep.subr.mxu0 0.0
      %528 = vmatpush1.msra.mxu0 0.0
      %529 = vmatprep.subr.mxu0 0.0
      %530 = vmatpush1.msra.mxu0 0.0
      %531 = vmatprep.subr.mxu0 0.0
      %532 = vmatpush1.msra.mxu0 0.0
      %533 = vmatprep.subr.mxu0 0.0
      %534 = vmatpush1.msra.mxu0 0.0
      %535 = vmatprep.subr.mxu0 0.0
      %536 = vmatpush1.msra.mxu0 0.0
      %537 = vmatprep.subr.mxu0 0.0
      %538 = vmatpush1.msra.mxu0 0.0
      %539 = vmatprep.subr.mxu0 0.0
      %540 = vmatpush1.msra.mxu0 0.0
      %541 = vmatprep.subr.mxu0 0.0
      %542 = vmatpush1.msra.mxu0 0.0
      %543 = vmatprep.subr.mxu0 0.0
      %544 = vmatpush1.msra.mxu0 0.0
      %545 = vmatprep.mubr.f32.mxu0 0.0
      %546 = vmatmul.mubr.f32.gmra.mrb[0].mxu0 %v473
      %v547 = vpop.f32.mrb[0].mxu0
      %v548 = vadd.f32 0.0, %v547
      %v549 = vpop.f32.mrb[0].mxu0
      %550 = vmatprep.mubr.f32.mxu0 0.0
      %551 = vmatmul.mubr.f32.gmra.mrb[0].mxu0 %v476
      %v552 = vpop.f32.mrb[0].mxu0
      %v553 = vadd.f32 0.0, %v552
      %v554 = vpop.f32.mrb[0].mxu0
      %555 = vdwg.mxu0
      %v556 = vld [vmem:[%s5] sm:$0x7]
      %v557 = vld [vmem:[%s6] sm:$0x1]
      %v559 = vlaneseq
      %v560 = vshrl.u32 %v559, 7
      %v561 = vsub.s32 0, %v560
      %v562 = vrot.slane %v557, %v561
      %v565 = vsel %vm381, %v556, 0
      %567 = vmatprep.subr.mxu0 0.0
      %568 = vmatpush1.msra.mxu0 %v565
      %569 = vmatprep.subr.mxu0 0.0
      %570 = vmatpush1.msra.mxu0 0.0
      %571 = vmatprep.subr.mxu0 0.0
      %572 = vmatpush1.msra.mxu0 0.0
      %573 = vmatprep.subr.mxu0 0.0
      %574 = vmatpush1.msra.mxu0 0.0
      %575 = vmatprep.subr.mxu0 0.0
      %576 = vmatpush1.msra.mxu0 0.0
      %577 = vmatprep.subr.mxu0 0.0
      %578 = vmatpush1.msra.mxu0 0.0
      %579 = vmatprep.subr.mxu0 0.0
      %580 = vmatpush1.msra.mxu0 0.0
      %581 = vmatprep.subr.mxu0 0.0
      %582 = vmatpush1.msra.mxu0 0.0
      %583 = vmatprep.subr.mxu0 0.0
      %584 = vmatpush1.msra.mxu0 0.0
      %585 = vmatprep.subr.mxu0 0.0
      %586 = vmatpush1.msra.mxu0 0.0
      %587 = vmatprep.subr.mxu0 0.0
      %588 = vmatpush1.msra.mxu0 0.0
      %589 = vmatprep.subr.mxu0 0.0
      %590 = vmatpush1.msra.mxu0 0.0
      %591 = vmatprep.subr.mxu0 0.0
      %592 = vmatpush1.msra.mxu0 0.0
      %593 = vmatprep.subr.mxu0 0.0
      %594 = vmatpush1.msra.mxu0 0.0
      %595 = vmatprep.subr.mxu0 0.0
      %596 = vmatpush1.msra.mxu0 0.0
      %597 = vmatprep.subr.mxu0 0.0
      %598 = vmatpush1.msra.mxu0 0.0
      %599 = vmatprep.subr.mxu0 0.0
      %600 = vmatpush1.msra.mxu0 0.0
      %601 = vmatprep.subr.mxu0 0.0
      %602 = vmatpush1.msra.mxu0 0.0
      %603 = vmatprep.subr.mxu0 0.0
      %604 = vmatpush1.msra.mxu0 0.0
      %605 = vmatprep.subr.mxu0 0.0
      %606 = vmatpush1.msra.mxu0 0.0
      %607 = vmatprep.subr.mxu0 0.0
      %608 = vmatpush1.msra.mxu0 0.0
      %609 = vmatprep.subr.mxu0 0.0
      %610 = vmatpush1.msra.mxu0 0.0
      %611 = vmatprep.subr.mxu0 0.0
      %612 = vmatpush1.msra.mxu0 0.0
      %613 = vmatprep.subr.mxu0 0.0
      %614 = vmatpush1.msra.mxu0 0.0
      %615 = vmatprep.subr.mxu0 0.0
      %616 = vmatpush1.msra.mxu0 0.0
      %617 = vmatprep.subr.mxu0 0.0
      %618 = vmatpush1.msra.mxu0 0.0
      %619 = vmatprep.subr.mxu0 0.0
      %620 = vmatpush1.msra.mxu0 0.0
      %621 = vmatprep.subr.mxu0 0.0
      %622 = vmatpush1.msra.mxu0 0.0
      %623 = vmatprep.subr.mxu0 0.0
      %624 = vmatpush1.msra.mxu0 0.0
      %625 = vmatprep.subr.mxu0 0.0
      %626 = vmatpush1.msra.mxu0 0.0
      %627 = vmatprep.subr.mxu0 0.0
      %628 = vmatpush1.msra.mxu0 0.0
      %629 = vmatprep.subr.mxu0 0.0
      %630 = vmatpush1.msra.mxu0 0.0
      %631 = vmatprep.mubr.f32.mxu0 0.0
      %632 = vmatmul.mubr.f32.gmra.mrb[0].mxu0 %v376
      %v633 = vpop.f32.mrb[0].mxu0
      %v634 = vadd.f32 %v562, %v633
      %v635 = vpop.f32.mrb[0].mxu0
      %636 = vmatprep.mubr.f32.mxu0 0.0
      %637 = vmatmul.mubr.f32.gmra.mrb[0].mxu0 %v379
      %v638 = vpop.f32.mrb[0].mxu0
      %v639 = vadd.f32 %v562, %v638
      %v640 = vpop.f32.mrb[0].mxu0
      %641 = vdwg.mxu0
      %v642 = vlaneseq
      %v643 = vand.u32 %v642, 127
      %v644 = vcvt.s32.f32 %v643
      %vm645 = vcmask 130048
      %v646 = vsel %vm645, %v469, -inf
      %647 = vmax.xlane.f32.xlu0 %v646
      %v648 = vpop.xlane.xlu0 %647
      %v649 = vsel %vm645, %v470, -inf
      %650 = vmax.xlane.f32.xlu0 %v649
      %v651 = vpop.xlane.xlu0 %650
      %vm652 = vcmp.eq.f32.partialorder %v469, %v648
      %vm653 = vcmp.eq.f32.partialorder %v470, %v651
      %v654 = vsel %vm652, %v644, 16.0
      %v655 = vsel %vm653, %v644, 16.0
      %v656 = vsel %vm645, %v654, inf
      %657 = vmin.xlane.f32.xlu0 %v656
      %v658 = vpop.xlane.xlu0 %657
      %v659 = vsel %vm645, %v655, inf
      %660 = vmin.xlane.f32.xlu0 %v659
      %v661 = vpop.xlane.xlu0 %660
      %vm662 = vcmp.eq.f32.partialorder %v644, %v658
      %vm663 = vcmp.eq.f32.partialorder %v644, %v661
      %v664 = vsel %vm662, 1, 0
      %v665 = vsel %vm663, 1, 0
      %v666 = vcvt.s32.f32 %v664
      %v667 = vcvt.s32.f32 %v665
      %v669 = vsel %vm645, %v666, 0
      %v672 = vsel %vm645, %v667, 0
      %674 = vmatprep.subr.mxu0 0.0
      %675 = vmatpush1.msra.mxu0 %v548
      %676 = vmatprep.subr.mxu0 0.0
      %677 = vmatpush1.msra.mxu0 %v553
      %678 = vmatprep.subr.mxu0 0.0
      %679 = vmatpush1.msra.mxu0 0.0
      %680 = vmatprep.subr.mxu0 0.0
      %681 = vmatpush1.msra.mxu0 0.0
      %682 = vmatprep.subr.mxu0 0.0
      %683 = vmatpush1.msra.mxu0 0.0
      %684 = vmatprep.subr.mxu0 0.0
      %685 = vmatpush1.msra.mxu0 0.0
      %686 = vmatprep.subr.mxu0 0.0
      %687 = vmatpush1.msra.mxu0 0.0
      %688 = vmatprep.subr.mxu0 0.0
      %689 = vmatpush1.msra.mxu0 0.0
      %690 = vmatprep.subr.mxu0 0.0
      %691 = vmatpush1.msra.mxu0 0.0
      %692 = vmatprep.subr.mxu0 0.0
      %693 = vmatpush1.msra.mxu0 0.0
      %694 = vmatprep.subr.mxu0 0.0
      %695 = vmatpush1.msra.mxu0 0.0
      %696 = vmatprep.subr.mxu0 0.0
      %697 = vmatpush1.msra.mxu0 0.0
      %698 = vmatprep.subr.mxu0 0.0
      %699 = vmatpush1.msra.mxu0 0.0
      %700 = vmatprep.subr.mxu0 0.0
      %701 = vmatpush1.msra.mxu0 0.0
      %702 = vmatprep.subr.mxu0 0.0
      %703 = vmatpush1.msra.mxu0 0.0
      %704 = vmatprep.subr.mxu0 0.0
      %705 = vmatpush1.msra.mxu0 0.0
      %706 = vmatprep.subr.mxu0 0.0
      %707 = vmatpush1.msra.mxu0 0.0
      %708 = vmatprep.subr.mxu0 0.0
      %709 = vmatpush1.msra.mxu0 0.0
      %710 = vmatprep.subr.mxu0 0.0
      %711 = vmatpush1.msra.mxu0 0.0
      %712 = vmatprep.subr.mxu0 0.0
      %713 = vmatpush1.msra.mxu0 0.0
      %714 = vmatprep.subr.mxu0 0.0
      %715 = vmatpush1.msra.mxu0 0.0
      %716 = vmatprep.subr.mxu0 0.0
      %717 = vmatpush1.msra.mxu0 0.0
      %718 = vmatprep.subr.mxu0 0.0
      %719 = vmatpush1.msra.mxu0 0.0
      %720 = vmatprep.subr.mxu0 0.0
      %721 = vmatpush1.msra.mxu0 0.0
      %722 = vmatprep.subr.mxu0 0.0
      %723 = vmatpush1.msra.mxu0 0.0
      %724 = vmatprep.subr.mxu0 0.0
      %725 = vmatpush1.msra.mxu0 0.0
      %726 = vmatprep.subr.mxu0 0.0
      %727 = vmatpush1.msra.mxu0 0.0
      %728 = vmatprep.subr.mxu0 0.0
      %729 = vmatpush1.msra.mxu0 0.0
      %730 = vmatprep.subr.mxu0 0.0
      %731 = vmatpush1.msra.mxu0 0.0
      %732 = vmatprep.subr.mxu0 0.0
      %733 = vmatpush1.msra.mxu0 0.0
      %734 = vmatprep.subr.mxu0 0.0
      %735 = vmatpush1.msra.mxu0 0.0
      %736 = vmatprep.subr.mxu0 0.0
      %737 = vmatpush1.msra.mxu0 0.0
      %738 = vmatprep.mubr.f32.mxu0 0.0
      %739 = vmatmul.mubr.f32.gmra.mrb[0].mxu0 %v669
      %v740 = vpop.f32.mrb[0].mxu0
      %v741 = vadd.f32 0.0, %v740
      %v742 = vpop.f32.mrb[0].mxu0
      %743 = vmatprep.mubr.f32.mxu0 0.0
      %744 = vmatmul.mubr.f32.gmra.mrb[0].mxu0 %v672
      %v745 = vpop.f32.mrb[0].mxu0
      %v746 = vadd.f32 0.0, %v745
      %v747 = vpop.f32.mrb[0].mxu0
      %748 = vdwg.mxu0
      %v749 = vsel %vm662, -inf, %v469
      %v750 = vsel %vm663, -inf, %v470
      %v751 = vsel %vm645, %v749, -inf
      %752 = vmax.xlane.f32.xlu0 %v751
      %v753 = vpop.xlane.xlu0 %752
      %v754 = vsel %vm645, %v750, -inf
      %755 = vmax.xlane.f32.xlu0 %v754
      %v756 = vpop.xlane.xlu0 %755
      %vm757 = vcmp.eq.f32.partialorder %v749, %v753
      %vm758 = vcmp.eq.f32.partialorder %v750, %v756
      %v759 = vsel %vm757, %v644, 16.0
      %v760 = vsel %vm758, %v644, 16.0
      %v761 = vsel %vm645, %v759, inf
      %762 = vmin.xlane.f32.xlu0 %v761
      %v763 = vpop.xlane.xlu0 %762
      %v764 = vsel %vm645, %v760, inf
      %765 = vmin.xlane.f32.xlu0 %v764
      %v766 = vpop.xlane.xlu0 %765
      %vm767 = vcmp.eq.f32.partialorder %v644, %v763
      %vm768 = vcmp.eq.f32.partialorder %v644, %v766
      %v769 = vsel %vm767, 1, 0
      %v770 = vsel %vm768, 1, 0
      %v771 = vcvt.s32.f32 %v769
      %v772 = vcvt.s32.f32 %v770
      %v774 = vsel %vm645, %v771, 0
      %v777 = vsel %vm645, %v772, 0
      %779 = vmatprep.subr.mxu0 0.0
      %780 = vmatpush1.msra.mxu0 %v548
      %781 = vmatprep.subr.mxu0 0.0
      %782 = vmatpush1.msra.mxu0 %v553
      %783 = vmatprep.subr.mxu0 0.0
      %784 = vmatpush1.msra.mxu0 0.0
      %785 = vmatprep.subr.mxu0 0.0
      %786 = vmatpush1.msra.mxu0 0.0
      %787 = vmatprep.subr.mxu0 0.0
      %788 = vmatpush1.msra.mxu0 0.0
      %789 = vmatprep.subr.mxu0 0.0
      %790 = vmatpush1.msra.mxu0 0.0
      %791 = vmatprep.subr.mxu0 0.0
      %792 = vmatpush1.msra.mxu0 0.0
      %793 = vmatprep.subr.mxu0 0.0
      %794 = vmatpush1.msra.mxu0 0.0
      %795 = vmatprep.subr.mxu0 0.0
      %796 = vmatpush1.msra.mxu0 0.0
      %797 = vmatprep.subr.mxu0 0.0
      %798 = vmatpush1.msra.mxu0 0.0
      %799 = vmatprep.subr.mxu0 0.0
      %800 = vmatpush1.msra.mxu0 0.0
      %801 = vmatprep.subr.mxu0 0.0
      %802 = vmatpush1.msra.mxu0 0.0
      %803 = vmatprep.subr.mxu0 0.0
      %804 = vmatpush1.msra.mxu0 0.0
      %805 = vmatprep.subr.mxu0 0.0
      %806 = vmatpush1.msra.mxu0 0.0
      %807 = vmatprep.subr.mxu0 0.0
      %808 = vmatpush1.msra.mxu0 0.0
      %809 = vmatprep.subr.mxu0 0.0
      %810 = vmatpush1.msra.mxu0 0.0
      %811 = vmatprep.subr.mxu0 0.0
      %812 = vmatpush1.msra.mxu0 0.0
      %813 = vmatprep.subr.mxu0 0.0
      %814 = vmatpush1.msra.mxu0 0.0
      %815 = vmatprep.subr.mxu0 0.0
      %816 = vmatpush1.msra.mxu0 0.0
      %817 = vmatprep.subr.mxu0 0.0
      %818 = vmatpush1.msra.mxu0 0.0
      %819 = vmatprep.subr.mxu0 0.0
      %820 = vmatpush1.msra.mxu0 0.0
      %821 = vmatprep.subr.mxu0 0.0
      %822 = vmatpush1.msra.mxu0 0.0
      %823 = vmatprep.subr.mxu0 0.0
      %824 = vmatpush1.msra.mxu0 0.0
      %825 = vmatprep.subr.mxu0 0.0
      %826 = vmatpush1.msra.mxu0 0.0
      %827 = vmatprep.subr.mxu0 0.0
      %828 = vmatpush1.msra.mxu0 0.0
      %829 = vmatprep.subr.mxu0 0.0
      %830 = vmatpush1.msra.mxu0 0.0
      %831 = vmatprep.subr.mxu0 0.0
      %832 = vmatpush1.msra.mxu0 0.0
      %833 = vmatprep.subr.mxu0 0.0
      %834 = vmatpush1.msra.mxu0 0.0
      %835 = vmatprep.subr.mxu0 0.0
      %836 = vmatpush1.msra.mxu0 0.0
      %837 = vmatprep.subr.mxu0 0.0
      %838 = vmatpush1.msra.mxu0 0.0
      %839 = vmatprep.subr.mxu0 0.0
      %840 = vmatpush1.msra.mxu0 0.0
      %841 = vmatprep.subr.mxu0 0.0
      %842 = vmatpush1.msra.mxu0 0.0
      %843 = vmatprep.mubr.f32.mxu0 0.0
      %844 = vmatmul.mubr.f32.gmra.mrb[0].mxu0 %v774
      %v845 = vpop.f32.mrb[0].mxu0
      %v846 = vadd.f32 0.0, %v845
      %v847 = vpop.f32.mrb[0].mxu0
      %848 = vmatprep.mubr.f32.mxu0 0.0
      %849 = vmatmul.mubr.f32.gmra.mrb[0].mxu0 %v777
      %v850 = vpop.f32.mrb[0].mxu0
      %v851 = vadd.f32 0.0, %v850
      %v852 = vpop.f32.mrb[0].mxu0
      %853 = vdwg.mxu0
      %v854 = vmax.f32 %v741, %v846
      %v855 = vmax.f32 %v746, %v851
      %v856 = vsel %vm767, -inf, %v749
      %v857 = vsel %vm768, -inf, %v750
      %v858 = vsel %vm645, %v856, -inf
      %859 = vmax.xlane.f32.xlu0 %v858
      %v860 = vpop.xlane.xlu0 %859
      %v861 = vsel %vm645, %v857, -inf
      %862 = vmax.xlane.f32.xlu0 %v861
      %v863 = vpop.xlane.xlu0 %862
      %vm864 = vcmp.eq.f32.partialorder %v856, %v860
      %vm865 = vcmp.eq.f32.partialorder %v857, %v863
      %v866 = vsel %vm864, %v644, 16.0
      %v867 = vsel %vm865, %v644, 16.0
      %v868 = vsel %vm645, %v866, inf
      %869 = vmin.xlane.f32.xlu0 %v868
      %v870 = vpop.xlane.xlu0 %869
      %v871 = vsel %vm645, %v867, inf
      %872 = vmin.xlane.f32.xlu0 %v871
      %v873 = vpop.xlane.xlu0 %872
      %vm874 = vcmp.eq.f32.partialorder %v644, %v870
      %vm875 = vcmp.eq.f32.partialorder %v644, %v873
      %v876 = vsel %vm874, 1, 0
      %v877 = vsel %vm875, 1, 0
      %v878 = vcvt.s32.f32 %v876
      %v879 = vcvt.s32.f32 %v877
      %v881 = vsel %vm645, %v878, 0
      %v884 = vsel %vm645, %v879, 0
      %886 = vmatprep.subr.mxu0 0.0
      %887 = vmatpush1.msra.mxu0 %v548
      %888 = vmatprep.subr.mxu0 0.0
      %889 = vmatpush1.msra.mxu0 %v553
      %890 = vmatprep.subr.mxu0 0.0
      %891 = vmatpush1.msra.mxu0 0.0
      %892 = vmatprep.subr.mxu0 0.0
      %893 = vmatpush1.msra.mxu0 0.0
      %894 = vmatprep.subr.mxu0 0.0
      %895 = vmatpush1.msra.mxu0 0.0
      %896 = vmatprep.subr.mxu0 0.0
      %897 = vmatpush1.msra.mxu0 0.0
      %898 = vmatprep.subr.mxu0 0.0
      %899 = vmatpush1.msra.mxu0 0.0
      %900 = vmatprep.subr.mxu0 0.0
      %901 = vmatpush1.msra.mxu0 0.0
      %902 = vmatprep.subr.mxu0 0.0
      %903 = vmatpush1.msra.mxu0 0.0
      %904 = vmatprep.subr.mxu0 0.0
      %905 = vmatpush1.msra.mxu0 0.0
      %906 = vmatprep.subr.mxu0 0.0
      %907 = vmatpush1.msra.mxu0 0.0
      %908 = vmatprep.subr.mxu0 0.0
      %909 = vmatpush1.msra.mxu0 0.0
      %910 = vmatprep.subr.mxu0 0.0
      %911 = vmatpush1.msra.mxu0 0.0
      %912 = vmatprep.subr.mxu0 0.0
      %913 = vmatpush1.msra.mxu0 0.0
      %914 = vmatprep.subr.mxu0 0.0
      %915 = vmatpush1.msra.mxu0 0.0
      %916 = vmatprep.subr.mxu0 0.0
      %917 = vmatpush1.msra.mxu0 0.0
      %918 = vmatprep.subr.mxu0 0.0
      %919 = vmatpush1.msra.mxu0 0.0
      %920 = vmatprep.subr.mxu0 0.0
      %921 = vmatpush1.msra.mxu0 0.0
      %922 = vmatprep.subr.mxu0 0.0
      %923 = vmatpush1.msra.mxu0 0.0
      %924 = vmatprep.subr.mxu0 0.0
      %925 = vmatpush1.msra.mxu0 0.0
      %926 = vmatprep.subr.mxu0 0.0
      %927 = vmatpush1.msra.mxu0 0.0
      %928 = vmatprep.subr.mxu0 0.0
      %929 = vmatpush1.msra.mxu0 0.0
      %930 = vmatprep.subr.mxu0 0.0
      %931 = vmatpush1.msra.mxu0 0.0
      %932 = vmatprep.subr.mxu0 0.0
      %933 = vmatpush1.msra.mxu0 0.0
      %934 = vmatprep.subr.mxu0 0.0
      %935 = vmatpush1.msra.mxu0 0.0
      %936 = vmatprep.subr.mxu0 0.0
      %937 = vmatpush1.msra.mxu0 0.0
      %938 = vmatprep.subr.mxu0 0.0
      %939 = vmatpush1.msra.mxu0 0.0
      %940 = vmatprep.subr.mxu0 0.0
      %941 = vmatpush1.msra.mxu0 0.0
      %942 = vmatprep.subr.mxu0 0.0
      %943 = vmatpush1.msra.mxu0 0.0
      %944 = vmatprep.subr.mxu0 0.0
      %945 = vmatpush1.msra.mxu0 0.0
      %946 = vmatprep.subr.mxu0 0.0
      %947 = vmatpush1.msra.mxu0 0.0
      %948 = vmatprep.subr.mxu0 0.0
      %949 = vmatpush1.msra.mxu0 0.0
      %950 = vmatprep.mubr.f32.mxu0 0.0
      %951 = vmatmul.mubr.f32.gmra.mrb[0].mxu0 %v881
      %v952 = vpop.f32.mrb[0].mxu0
      %v953 = vadd.f32 0.0, %v952
      %v954 = vpop.f32.mrb[0].mxu0
      %955 = vmatprep.mubr.f32.mxu0 0.0
      %956 = vmatmul.mubr.f32.gmra.mrb[0].mxu0 %v884
      %v957 = vpop.f32.mrb[0].mxu0
      %v958 = vadd.f32 0.0, %v957
      %v959 = vpop.f32.mrb[0].mxu0
      %960 = vdwg.mxu0
      %v961 = vmax.f32 %v854, %v953
      %v962 = vmax.f32 %v855, %v958
      %v963 = vsel %vm874, -inf, %v856
      %v964 = vsel %vm875, -inf, %v857
      %v965 = vsel %vm645, %v963, -inf
      %966 = vmax.xlane.f32.xlu0 %v965
      %v967 = vpop.xlane.xlu0 %966
      %v968 = vsel %vm645, %v964, -inf
      %969 = vmax.xlane.f32.xlu0 %v968
      %v970 = vpop.xlane.xlu0 %969
      %vm971 = vcmp.eq.f32.partialorder %v963, %v967
      %vm972 = vcmp.eq.f32.partialorder %v964, %v970
      %v973 = vsel %vm971, %v644, 16.0
      %v974 = vsel %vm972, %v644, 16.0
      %v975 = vsel %vm645, %v973, inf
      %976 = vmin.xlane.f32.xlu0 %v975
      %v977 = vpop.xlane.xlu0 %976
      %v978 = vsel %vm645, %v974, inf
      %979 = vmin.xlane.f32.xlu0 %v978
      %v980 = vpop.xlane.xlu0 %979
      %vm981 = vcmp.eq.f32.partialorder %v644, %v977
      %vm982 = vcmp.eq.f32.partialorder %v644, %v980
      %v983 = vsel %vm981, 1, 0
      %v984 = vsel %vm982, 1, 0
      %v985 = vcvt.s32.f32 %v983
      %v986 = vcvt.s32.f32 %v984
      %v988 = vsel %vm645, %v985, 0
      %v991 = vsel %vm645, %v986, 0
      %993 = vmatprep.subr.mxu0 0.0
      %994 = vmatpush1.msra.mxu0 %v548
      %995 = vmatprep.subr.mxu0 0.0
      %996 = vmatpush1.msra.mxu0 %v553
      %997 = vmatprep.subr.mxu0 0.0
      %998 = vmatpush1.msra.mxu0 0.0
      %999 = vmatprep.subr.mxu0 0.0
      %1000 = vmatpush1.msra.mxu0 0.0
      %1001 = vmatprep.subr.mxu0 0.0
      %1002 = vmatpush1.msra.mxu0 0.0
      %1003 = vmatprep.subr.mxu0 0.0
      %1004 = vmatpush1.msra.mxu0 0.0
      %1005 = vmatprep.subr.mxu0 0.0
      %1006 = vmatpush1.msra.mxu0 0.0
      %1007 = vmatprep.subr.mxu0 0.0
      %1008 = vmatpush1.msra.mxu0 0.0
      %1009 = vmatprep.subr.mxu0 0.0
      %1010 = vmatpush1.msra.mxu0 0.0
      %1011 = vmatprep.subr.mxu0 0.0
      %1012 = vmatpush1.msra.mxu0 0.0
      %1013 = vmatprep.subr.mxu0 0.0
      %1014 = vmatpush1.msra.mxu0 0.0
      %1015 = vmatprep.subr.mxu0 0.0
      %1016 = vmatpush1.msra.mxu0 0.0
      %1017 = vmatprep.subr.mxu0 0.0
      %1018 = vmatpush1.msra.mxu0 0.0
      %1019 = vmatprep.subr.mxu0 0.0
      %1020 = vmatpush1.msra.mxu0 0.0
      %1021 = vmatprep.subr.mxu0 0.0
      %1022 = vmatpush1.msra.mxu0 0.0
      %1023 = vmatprep.subr.mxu0 0.0
      %1024 = vmatpush1.msra.mxu0 0.0
      %1025 = vmatprep.subr.mxu0 0.0
      %1026 = vmatpush1.msra.mxu0 0.0
      %1027 = vmatprep.subr.mxu0 0.0
      %1028 = vmatpush1.msra.mxu0 0.0
      %1029 = vmatprep.subr.mxu0 0.0
      %1030 = vmatpush1.msra.mxu0 0.0
      %1031 = vmatprep.subr.mxu0 0.0
      %1032 = vmatpush1.msra.mxu0 0.0
      %1033 = vmatprep.subr.mxu0 0.0
      %1034 = vmatpush1.msra.mxu0 0.0
      %1035 = vmatprep.subr.mxu0 0.0
      %1036 = vmatpush1.msra.mxu0 0.0
      %1037 = vmatprep.subr.mxu0 0.0
      %1038 = vmatpush1.msra.mxu0 0.0
      %1039 = vmatprep.subr.mxu0 0.0
      %1040 = vmatpush1.msra.mxu0 0.0
      %1041 = vmatprep.subr.mxu0 0.0
      %1042 = vmatpush1.msra.mxu0 0.0
      %1043 = vmatprep.subr.mxu0 0.0
      %1044 = vmatpush1.msra.mxu0 0.0
      %1045 = vmatprep.subr.mxu0 0.0
      %1046 = vmatpush1.msra.mxu0 0.0
      %1047 = vmatprep.subr.mxu0 0.0
      %1048 = vmatpush1.msra.mxu0 0.0
      %1049 = vmatprep.subr.mxu0 0.0
      %1050 = vmatpush1.msra.mxu0 0.0
      %1051 = vmatprep.subr.mxu0 0.0
      %1052 = vmatpush1.msra.mxu0 0.0
      %1053 = vmatprep.subr.mxu0 0.0
      %1054 = vmatpush1.msra.mxu0 0.0
      %1055 = vmatprep.subr.mxu0 0.0
      %1056 = vmatpush1.msra.mxu0 0.0
      %1057 = vmatprep.mubr.f32.mxu0 0.0
      %1058 = vmatmul.mubr.f32.gmra.mrb[0].mxu0 %v988
      %v1059 = vpop.f32.mrb[0].mxu0
      %v1060 = vadd.f32 0.0, %v1059
      %v1061 = vpop.f32.mrb[0].mxu0
      %1062 = vmatprep.mubr.f32.mxu0 0.0
      %1063 = vmatmul.mubr.f32.gmra.mrb[0].mxu0 %v991
      %v1064 = vpop.f32.mrb[0].mxu0
      %v1065 = vadd.f32 0.0, %v1064
      %v1066 = vpop.f32.mrb[0].mxu0
      %1067 = vdwg.mxu0
      %v1068 = vmax.f32 %v961, %v1060
      %v1069 = vmax.f32 %v962, %v1065
      %v1070 = vadd.f32 %v1068, %v634
      %v1071 = vadd.f32 %v1069, %v639
      %vm1072 = vcmp.ge.f32.partialorder %v1070, 0.0
      %vm1073 = vcmp.ge.f32.partialorder %v1071, 0.0
      %v1074 = vmul.f32 %v1070, 0.2
      %v1075 = vmul.f32 %v1071, 0.2
      %v1076 = vsel %vm1072, %v1070, %v1074
      %v1077 = vsel %vm1073, %v1071, %v1075
      %vm1078 = vcmask 523264
      %1079 = vst.msk [vmem:[%s367] sm:$0xff] %vm1078, %v1076
      %1080 = vst.msk [vmem:[%s367 + $0x8] sm:$0xff] %vm1078, %v1077
      %s1081 = smul.u32 2, %s23
      %p1082 = scmp.lt.s32.totalorder %s22, 1
      %s1083 = scalar_select %p1082, %s22, 1
      %p1084 = scmp.lt.s32.totalorder %s1081, 1
      %s1085 = scalar_select %p1084, %s1081, 1
      %s1086 = smul.addr %s1083, 2
      %s1087 = sadd.s32 %s1085, %s1086
      %s1088 = smul.addr %s1087, 8
      %s1089 = scalar_lea.vmem %s7, %s1088
      // Predicated region
      $region49: #{_lambda_.5} parent=47 // pred_check
        %p1090 = pneg %p219
      $region50: #{_lambda_.5} parent=47 // pred_check_branch
        %1092 = sbr.rel (%p1090) target = $region52
      $region51: #{_lambda_.5} parent=47 // pred_region
        %s1093 = smul.u32 2, %s23
      $region52: #{_lambda_.5} parent=47 // pred_fallthru
        _
    $region48: #{_lambda_.5} parent=5 // pred_fallthru
      _
    %p1094 = scmp.le.s32.totalorder 2, %s13
    // Predicated region
    $region53: #{_lambda_.5} parent=5 // pred_check
      %p1095 = pneg %p1094
    $region54: #{_lambda_.5} parent=5 // pred_check_branch
      %1097 = sbr.rel (%p1095) target = $region56
    $region55: #{_lambda_.5} parent=5 // pred_region
      %s1098 = ssub.s32 %s13, 2
      // Predicated region
      $region57: #{_lambda_.5} parent=55 // pred_check
        %p1099 = pneg %p225
      $region58: #{_lambda_.5} parent=55 // pred_check_branch
        %1101 = sbr.rel (%p1099) target = $region60
      $region59: #{_lambda_.5} parent=55 // pred_region
        %s1102 = smul.u32 2, %s25
        %p1103 = scmp.lt.s32.totalorder %s24, 1
        %s1104 = scalar_select %p1103, %s24, 1
        %p1105 = scmp.lt.s32.totalorder %s1102, 1
        %s1106 = scalar_select %p1105, %s1102, 1
        %s1107 = smul.addr %s1104, 2
        %s1108 = sadd.s32 %s1106, %s1107
        %s1109 = smul.addr %s1108, 8
        %s1110 = scalar_lea.vmem %s7, %s1109
      $region60: #{_lambda_.5} parent=55 // pred_fallthru
        _
    $region56: #{_lambda_.5} parent=5 // pred_fallthru
      _
  $region6: #{_lambda_.5} parent=0 // loop_footer
    %s17 = sadd.s32 1, %s13
  $region7: #{_lambda_.5} parent=0 // loop_footer_branch
    %12 = sbr.rel target = $region3
  $region8: #{_lambda_.5} parent=0 // loop_exit
    _

// kernel: _lambda_.7
$region0: #{_lambda_.7}
  #allocation0 [shape = 'u32[]', space=smem, size = 0x4, offset = 0x4, fixed_abs, tag = 'smem constant byte address 0x4 - core index']
  #allocation1 [shape = 'u32[144,128]{1,0:T(1,128)}', space=vmem, size = 0x12000, scoped, tag = 'internal scratch']
  %s0 = inlined_call_operand.vmem [shape: f32[2,16,64], index: 0, kind: input, shape index: {}, may-alias: {0,2}]
  %s1 = inlined_call_operand.vmem [shape: f32[2,64,16], index: 1, kind: input, shape index: {}]
  %s2 = inlined_call_operand.vmem [shape: f32[2,16,64], index: 2, kind: input, shape index: {}, may-alias: {0,2}]
  %s3 = inlined_call_operand.vmem [shape: f32[2,1,16], index: 3, kind: input, shape index: {}]
  %s4 = inlined_call_operand.vmem [shape: f32[64,128], index: 4, kind: input, shape index: {}]
  %s5 = inlined_call_operand.vmem [shape: f32[64,128], index: 5, kind: input, shape index: {}]
  %s6 = inlined_call_operand.vmem [shape: f32[1,128], index: 6, kind: input, shape index: {}]
  %s7 = inlined_call_operand.vmem [shape: f32[2,16,128], index: 7, kind: output, shape index: {}]
  %s8 = sld [smem:[#allocation0]]
  $region61: #{_lambda_.7} parent=0
    _
  %s10 = ssub.s32 1, %s8
  %s11 = scalar_select 0, %s10, %s8
  loop: start=0, step=1, limit=4
  $region2: #{_lambda_.7} parent=0 // loop_pre_header
    _
  $region3: #{_lambda_.7} parent=0 // loop_header
    %s13 = sphi 0, %s17
    %p14 = scmp.ge.s32.totalorder %s13, 4
    %s20 = sphi 0, %s32
    %s21 = sphi 0, %s28
    %s22 = sphi 0, %s20
    %s23 = sphi 0, %s21
    %s24 = sphi 0, %s22
    %s25 = sphi 0, %s23
    %s37 = sphi 0, %s39
    %s40 = sphi 0, %s37
    %s41 = sphi 0, %s40
    %s57 = sphi 0, %s41
    %s63 = sphi 0, %s65
    %s66 = sphi 0, %s63
    %s67 = sphi 0, %s66
    %s83 = sphi 0, %s67
    %s89 = sphi 0, %s91
    %s92 = sphi 0, %s89
    %s93 = sphi 0, %s92
    %s109 = sphi 0, %s93
    %s115 = sphi 0, %s117
    %s118 = sphi 0, %s115
    %s119 = sphi 0, %s118
    %s135 = sphi 0, %s119
    %s139 = sphi 0, %s139
    %s141 = sphi 0, %s139
    %s142 = sphi 0, %s141
    %s156 = sphi 0, %s142
    %s160 = sphi 0, %s160
    %s162 = sphi 0, %s160
    %s163 = sphi 0, %s162
    %s177 = sphi 0, %s163
    %s181 = sphi 0, %s181
    %s183 = sphi 0, %s181
    %s184 = sphi 0, %s183
    %s198 = sphi 0, %s184
    %s206 = sphi 0, %s208
    %s209 = sphi 0, %s206
    %s210 = sphi 0, %s209
    %s226 = sphi 0, %s210
  $region4: #{_lambda_.7} parent=0 // loop_header_branch
    %16 = sbr.rel (%p14) target = $region8
  $region5: #{_lambda_.7} parent=0 // loop_body
    %s18 = ssub.s32 %s13, 1
    %s19 = ssub.s32 %s13, 2
    %s26 = sadd.s32 1, %s21
    %p27 = scmp.ge.s32.totalorder %s26, 1
    %s28 = scalar_select %p27, 0, %s26
    %s29 = sadd.s32 1, %s20
    %s30 = scalar_select %p27, %s29, %s20
    %p31 = scmp.ge.s32.totalorder %s30, 2
    %s32 = scalar_select %p31, 0, %s30
    %s33 = ssub.s32 %s20, %s32
    %s34 = ssub.s32 %s21, %s28
    %s35 = sor.u32 %s33, %s34
    %p36 = scmp.eq.s32.totalorder %s35, 0
    %s38 = sadd.s32 %s37, 1
    %s39 = scalar_select %p36, %s37, %s38
    %p42 = pneg %p36
    %p43 = scmp.eq.s32.totalorder %s13, 1
    %p44 = por %p42, %p43
    %p45 = scmp.ne.s32.totalorder %s37, %s40
    %p46 = scmp.eq.s32.totalorder %s13, 0
    %p47 = por %p45, %p46
    %p48 = scmp.ne.s32.totalorder %s37, %s40
    %p49 = scmp.eq.s32.totalorder %s18, 1
    %p50 = por %p48, %p49
    %p51 = scmp.ne.s32.totalorder %s40, %s41
    %p52 = scmp.eq.s32.totalorder %s18, 0
    %p53 = por %p51, %p52
    %p54 = scmp.ne.s32.totalorder %s40, %s41
    %p55 = scmp.eq.s32.totalorder %s19, 1
    %p56 = por %p54, %p55
    %p58 = scmp.ne.s32.totalorder %s41, %s57
    %p59 = scmp.eq.s32.totalorder %s19, 0
    %p60 = por %p58, %p59
    %s61 = ssub.s32 %s20, %s32
    %p62 = scmp.eq.s32.totalorder %s61, 0
    %s64 = sadd.s32 %s63, 1
    %s65 = scalar_select %p62, %s63, %s64
    %p68 = pneg %p62
    %p69 = scmp.eq.s32.totalorder %s13, 1
    %p70 = por %p68, %p69
    %p71 = scmp.ne.s32.totalorder %s63, %s66
    %p72 = scmp.eq.s32.totalorder %s13, 0
    %p73 = por %p71, %p72
    %p74 = scmp.ne.s32.totalorder %s63, %s66
    %p75 = scmp.eq.s32.totalorder %s18, 1
    %p76 = por %p74, %p75
    %p77 = scmp.ne.s32.totalorder %s66, %s67
    %p78 = scmp.eq.s32.totalorder %s18, 0
    %p79 = por %p77, %p78
    %p80 = scmp.ne.s32.totalorder %s66, %s67
    %p81 = scmp.eq.s32.totalorder %s19, 1
    %p82 = por %p80, %p81
    %p84 = scmp.ne.s32.totalorder %s67, %s83
    %p85 = scmp.eq.s32.totalorder %s19, 0
    %p86 = por %p84, %p85
    %s87 = ssub.s32 %s20, %s32
    %p88 = scmp.eq.s32.totalorder %s87, 0
    %s90 = sadd.s32 %s89, 1
    %s91 = scalar_select %p88, %s89, %s90
    %p94 = pneg %p88
    %p95 = scmp.eq.s32.totalorder %s13, 1
    %p96 = por %p94, %p95
    %p97 = scmp.ne.s32.totalorder %s89, %s92
    %p98 = scmp.eq.s32.totalorder %s13, 0
    %p99 = por %p97, %p98
    %p100 = scmp.ne.s32.totalorder %s89, %s92
    %p101 = scmp.eq.s32.totalorder %s18, 1
    %p102 = por %p100, %p101
    %p103 = scmp.ne.s32.totalorder %s92, %s93
    %p104 = scmp.eq.s32.totalorder %s18, 0
    %p105 = por %p103, %p104
    %p106 = scmp.ne.s32.totalorder %s92, %s93
    %p107 = scmp.eq.s32.totalorder %s19, 1
    %p108 = por %p106, %p107
    %p110 = scmp.ne.s32.totalorder %s93, %s109
    %p111 = scmp.eq.s32.totalorder %s19, 0
    %p112 = por %p110, %p111
    %s113 = ssub.s32 %s20, %s32
    %p114 = scmp.eq.s32.totalorder %s113, 0
    %s116 = sadd.s32 %s115, 1
    %s117 = scalar_select %p114, %s115, %s116
    %p120 = pneg %p114
    %p121 = scmp.eq.s32.totalorder %s13, 1
    %p122 = por %p120, %p121
    %p123 = scmp.ne.s32.totalorder %s115, %s118
    %p124 = scmp.eq.s32.totalorder %s13, 0
    %p125 = por %p123, %p124
    %p126 = scmp.ne.s32.totalorder %s115, %s118
    %p127 = scmp.eq.s32.totalorder %s18, 1
    %p128 = por %p126, %p127
    %p129 = scmp.ne.s32.totalorder %s118, %s119
    %p130 = scmp.eq.s32.totalorder %s18, 0
    %p131 = por %p129, %p130
    %p132 = scmp.ne.s32.totalorder %s118, %s119
    %p133 = scmp.eq.s32.totalorder %s19, 1
    %p134 = por %p132, %p133
    %p136 = scmp.ne.s32.totalorder %s119, %s135
    %p137 = scmp.eq.s32.totalorder %s19, 0
    %p138 = por %p136, %p137
    %s140 = sadd.s32 %s139, 1
    %p143 = scmp.eq.s32.totalorder %s13, 1
    %p144 = scmp.ne.s32.totalorder %s139, %s141
    %p145 = scmp.eq.s32.totalorder %s13, 0
    %p146 = por %p144, %p145
    %p147 = scmp.ne.s32.totalorder %s139, %s141
    %p148 = scmp.eq.s32.totalorder %s18, 1
    %p149 = por %p147, %p148
    %p150 = scmp.ne.s32.totalorder %s141, %s142
    %p151 = scmp.eq.s32.totalorder %s18, 0
    %p152 = por %p150, %p151
    %p153 = scmp.ne.s32.totalorder %s141, %s142
    %p154 = scmp.eq.s32.totalorder %s19, 1
    %p155 = por %p153, %p154
    %p157 = scmp.ne.s32.totalorder %s142, %s156
    %p158 = scmp.eq.s32.totalorder %s19, 0
    %p159 = por %p157, %p158
    %s161 = sadd.s32 %s160, 1
    %p164 = scmp.eq.s32.totalorder %s13, 1
    %p165 = scmp.ne.s32.totalorder %s160, %s162
    %p166 = scmp.eq.s32.totalorder %s13, 0
    %p167 = por %p165, %p166
    %p168 = scmp.ne.s32.totalorder %s160, %s162
    %p169 = scmp.eq.s32.totalorder %s18, 1
    %p170 = por %p168, %p169
    %p171 = scmp.ne.s32.totalorder %s162, %s163
    %p172 = scmp.eq.s32.totalorder %s18, 0
    %p173 = por %p171, %p172
    %p174 = scmp.ne.s32.totalorder %s162, %s163
    %p175 = scmp.eq.s32.totalorder %s19, 1
    %p176 = por %p174, %p175
    %p178 = scmp.ne.s32.totalorder %s163, %s177
    %p179 = scmp.eq.s32.totalorder %s19, 0
    %p180 = por %p178, %p179
    %s182 = sadd.s32 %s181, 1
    %p185 = scmp.eq.s32.totalorder %s13, 1
    %p186 = scmp.ne.s32.totalorder %s181, %s183
    %p187 = scmp.eq.s32.totalorder %s13, 0
    %p188 = por %p186, %p187
    %p189 = scmp.ne.s32.totalorder %s181, %s183
    %p190 = scmp.eq.s32.totalorder %s18, 1
    %p191 = por %p189, %p190
    %p192 = scmp.ne.s32.totalorder %s183, %s184
    %p193 = scmp.eq.s32.totalorder %s18, 0
    %p194 = por %p192, %p193
    %p195 = scmp.ne.s32.totalorder %s183, %s184
    %p196 = scmp.eq.s32.totalorder %s19, 1
    %p197 = por %p195, %p196
    %p199 = scmp.ne.s32.totalorder %s184, %s198
    %p200 = scmp.eq.s32.totalorder %s19, 0
    %p201 = por %p199, %p200
    %s202 = ssub.s32 %s20, %s32
    %s203 = ssub.s32 %s21, %s28
    %s204 = sor.u32 %s202, %s203
    %p205 = scmp.eq.s32.totalorder %s204, 0
    %s207 = sadd.s32 %s206, 1
    %s208 = scalar_select %p205, %s206, %s207
    %p211 = pneg %p205
    %p212 = scmp.eq.s32.totalorder %s13, 1
    %p213 = por %p211, %p212
    %p214 = scmp.ne.s32.totalorder %s206, %s209
    %p215 = scmp.eq.s32.totalorder %s13, 0
    %p216 = por %p214, %p215
    %p217 = scmp.ne.s32.totalorder %s206, %s209
    %p218 = scmp.eq.s32.totalorder %s18, 1
    %p219 = por %p217, %p218
    %p220 = scmp.ne.s32.totalorder %s209, %s210
    %p221 = scmp.eq.s32.totalorder %s18, 0
    %p222 = por %p220, %p221
    %p223 = scmp.ne.s32.totalorder %s209, %s210
    %p224 = scmp.eq.s32.totalorder %s19, 1
    %p225 = por %p223, %p224
    %p227 = scmp.ne.s32.totalorder %s210, %s226
    %p228 = scmp.eq.s32.totalorder %s19, 0
    %p229 = por %p227, %p228
    %p230 = scmp.le.s32.totalorder 1, %s13
    %p231 = scmp.lt.s32.totalorder %s13, 3
    %p232 = pnand %p230, %p231
    %p233 = pneg %p232
    // Predicated region
    $region9: #{_lambda_.7} parent=5 // pred_check
      _
    $region10: #{_lambda_.7} parent=5 // pred_check_branch
      %235 = sbr.rel (%p232) target = $region12
    $region11: #{_lambda_.7} parent=5 // pred_region
      %s236 = ssub.s32 %s13, 1
      // Predicated region
      $region13: #{_lambda_.7} parent=11 // pred_check
        %p237 = pneg %p152
      $region14: #{_lambda_.7} parent=11 // pred_check_branch
        %239 = sbr.rel (%p237) target = $region16
      $region15: #{_lambda_.7} parent=11 // pred_region
        _
      $region16: #{_lambda_.7} parent=11 // pred_fallthru
        _
      // Predicated region
      $region17: #{_lambda_.7} parent=11 // pred_check
        %p240 = pneg %p173
      $region18: #{_lambda_.7} parent=11 // pred_check_branch
        %242 = sbr.rel (%p240) target = $region20
      $region19: #{_lambda_.7} parent=11 // pred_region
        _
      $region20: #{_lambda_.7} parent=11 // pred_fallthru
        _
      // Predicated region
      $region21: #{_lambda_.7} parent=11 // pred_check
        %p243 = pneg %p194
      $region22: #{_lambda_.7} parent=11 // pred_check_branch
        %245 = sbr.rel (%p243) target = $region24
      $region23: #{_lambda_.7} parent=11 // pred_region
        _
      $region24: #{_lambda_.7} parent=11 // pred_fallthru
        _
    $region12: #{_lambda_.7} parent=5 // pred_fallthru
      _
    %p246 = scmp.lt.s32.totalorder %s13, 2
    // Predicated region
    $region25: #{_lambda_.7} parent=5 // pred_check
      %p247 = pneg %p246
    $region26: #{_lambda_.7} parent=5 // pred_check_branch
      %249 = sbr.rel (%p247) target = $region28
    $region27: #{_lambda_.7} parent=5 // pred_region
      // Predicated region
      $region29: #{_lambda_.7} parent=27 // pred_check
        %p250 = pneg %p47
      $region30: #{_lambda_.7} parent=27 // pred_check_branch
        %252 = sbr.rel (%p250) target = $region32
      $region31: #{_lambda_.7} parent=27 // pred_region
        %s253 = smul.u32 2, %s21
        %p254 = scmp.lt.s32.totalorder %s20, 1
        %s255 = scalar_select %p254, %s20, 1
        %p256 = scmp.lt.s32.totalorder %s253, 1
        %s257 = scalar_select %p256, %s253, 1
        %s258 = smul.addr %s255, 2
        %s259 = sadd.s32 %s257, %s258
        %s260 = smul.addr %s259, 8
        %s261 = scalar_lea.vmem %s0, %s260
        %s262 = smul.u32 2, %s21
      $region32: #{_lambda_.7} parent=27 // pred_fallthru
        _
      // Predicated region
      $region33: #{_lambda_.7} parent=27 // pred_check
        %p263 = pneg %p73
      $region34: #{_lambda_.7} parent=27 // pred_check_branch
        %265 = sbr.rel (%p263) target = $region36
      $region35: #{_lambda_.7} parent=27 // pred_region
        %p266 = scmp.lt.s32.totalorder %s20, 1
        %s267 = scalar_select %p266, %s20, 1
        %s268 = smul.addr %s267, 8
        %s269 = smul.addr %s268, 8
        %s270 = scalar_lea.vmem %s1, %s269
      $region36: #{_lambda_.7} parent=27 // pred_fallthru
        _
      // Predicated region
      $region37: #{_lambda_.7} parent=27 // pred_check
        %p271 = pneg %p99
      $region38: #{_lambda_.7} parent=27 // pred_check_branch
        %273 = sbr.rel (%p271) target = $region40
      $region39: #{_lambda_.7} parent=27 // pred_region
        %p274 = scmp.lt.s32.totalorder %s20, 1
        %s275 = scalar_select %p274, %s20, 1
        %s276 = smul.addr %s275, 2
        %s277 = smul.addr %s276, 8
        %s278 = scalar_lea.vmem %s2, %s277
      $region40: #{_lambda_.7} parent=27 // pred_fallthru
        _
      // Predicated region
      $region41: #{_lambda_.7} parent=27 // pred_check
        %p279 = pneg %p125
      $region42: #{_lambda_.7} parent=27 // pred_check_branch
        %281 = sbr.rel (%p279) target = $region44
      $region43: #{_lambda_.7} parent=27 // pred_region
        %p282 = scmp.lt.s32.totalorder %s20, 1
        %s283 = scalar_select %p282, %s20, 1
        %s284 = scalar_lea.vmem %s3, %s283
      $region44: #{_lambda_.7} parent=27 // pred_fallthru
        _
    $region28: #{_lambda_.7} parent=5 // pred_fallthru
      _
    %p285 = scmp.le.s32.totalorder 1, %s13
    %p286 = scmp.lt.s32.totalorder %s13, 3
    %p287 = pnand %p285, %p286
    %p288 = pneg %p287
    // Predicated region
    $region45: #{_lambda_.7} parent=5 // pred_check
      _
    $region46: #{_lambda_.7} parent=5 // pred_check_branch
      %290 = sbr.rel (%p287) target = $region48
    $region47: #{_lambda_.7} parent=5 // pred_region
      %s291 = ssub.s32 %s13, 1
      %s292 = smul.u32 2, %s23
      %p293 = scmp.lt.s32.totalorder %s22, 1
      %s294 = scalar_select %p293, %s22, 1
      %p295 = scmp.lt.s32.totalorder %s292, 1
      %s296 = scalar_select %p295, %s292, 1
      %s297 = smul.addr %s294, 2
      %s298 = sadd.s32 %s296, %s297
      %s299 = smul.addr %s298, 8
      %s300 = scalar_lea.vmem %s0, %s299
      %p301 = pneg %p53
      %p302 = pneg %p50
      %p303 = scmp.lt.s32.totalorder %s22, 1
      %s304 = scalar_select %p303, %s22, 1
      %s305 = smul.addr %s304, 8
      %s306 = smul.addr %s305, 8
      %s307 = scalar_lea.vmem %s1, %s306
      %p308 = pneg %p79
      %p309 = pneg %p76
      %p310 = scmp.lt.s32.totalorder %s22, 1
      %s311 = scalar_select %p310, %s22, 1
      %s312 = smul.addr %s311, 2
      %s313 = smul.addr %s312, 8
      %s314 = scalar_lea.vmem %s2, %s313
      %p315 = pneg %p105
      %p316 = pneg %p102
      %p317 = scmp.lt.s32.totalorder %s22, 1
      %s318 = scalar_select %p317, %s22, 1
      %s319 = scalar_lea.vmem %s3, %s318
      %p320 = pneg %p131
      %p321 = pneg %p128
      %p322 = pneg %p152
      %p323 = pneg %p149
      %p324 = pneg %p173
      %p325 = pneg %p170
      %p326 = pneg %p194
      %p327 = pneg %p191
      %p328 = pneg %p222
      %p329 = pneg %p219
      %s330 = smul.u32 2, %s23
      %p331 = scmp.lt.s32.totalorder %s22, 1
      %s332 = scalar_select %p331, %s22, 1
      %p333 = scmp.lt.s32.totalorder %s330, 1
      %s334 = scalar_select %p333, %s330, 1
      %s335 = smul.addr %s332, 2
      %s336 = sadd.s32 %s334, %s335
      %s337 = smul.addr %s336, 8
      %s338 = scalar_lea.vmem %s7, %s337
      %s339 = smul.u32 2, %s23
      %p340 = scmp.lt.s32.totalorder %s22, 1
      %s341 = scalar_select %p340, %s22, 1
      %p342 = scmp.lt.s32.totalorder %s339, 1
      %s343 = scalar_select %p342, %s339, 1
      %s344 = smul.addr %s341, 2
      %s345 = sadd.s32 %s343, %s344
      %s346 = smul.addr %s345, 8
      %s347 = scalar_lea.vmem %s0, %s346
      %s348 = smul.u32 2, %s23
      %p349 = scmp.lt.s32.totalorder %s22, 1
      %s350 = scalar_select %p349, %s22, 1
      %s351 = smul.addr %s350, 8
      %s352 = smul.addr %s351, 8
      %s353 = scalar_lea.vmem %s1, %s352
      %p354 = scmp.lt.s32.totalorder %s22, 1
      %s355 = scalar_select %p354, %s22, 1
      %s356 = smul.addr %s355, 2
      %s357 = smul.addr %s356, 8
      %s358 = scalar_lea.vmem %s2, %s357
      %p359 = scmp.lt.s32.totalorder %s22, 1
      %s360 = scalar_select %p359, %s22, 1
      %s361 = scalar_lea.vmem %s3, %s360
      %s362 = smul.u32 2, %s23
      %p363 = scmp.lt.s32.totalorder %s22, 1
      %s364 = scalar_select %p363, %s22, 1
      %p365 = scmp.lt.s32.totalorder %s362, 1
      %s366 = scalar_select %p365, %s362, 1
      %s367 = smul.addr %s364, 2
      %s368 = sadd.s32 %s366, %s367
      %s369 = smul.addr %s368, 8
      %s370 = scalar_lea.vmem %s7, %s369
      %s371 = smul.u32 2, %s23
      %v372 = vld [vmem:[%s347] sm:$0xff]
      %v373 = vld [vmem:[%s347 + $0x8] sm:$0xff]
      %v374 = vld [vmem:[%s353] sm:$0xff]
      %v375 = vld [vmem:[%s353 + $0x8] sm:$0xff]
      %v376 = vld [vmem:[%s353 + $0x10] sm:$0xff]
      %v377 = vld [vmem:[%s353 + $0x18] sm:$0xff]
      %v378 = vld [vmem:[%s353 + $0x20] sm:$0xff]
      %v379 = vld [vmem:[%s353 + $0x28] sm:$0xff]
      %v380 = vld [vmem:[%s353 + $0x30] sm:$0xff]
      %v381 = vld [vmem:[%s353 + $0x38] sm:$0xff]
      %v382 = vld [vmem:[%s358] sm:$0xff]
      %v383 = vld [vmem:[%s358 + $0x8] sm:$0xff]
      %vm384 = vcmask 523264
      %v386 = vsel %vm384, %v372, 0
      %v389 = vsel %vm384, %v373, 0
      %391 = vmatprep.subr.mxu0 0.0
      %392 = vmatpush1.msra.mxu0 %v374
      %393 = vmatprep.subr.mxu0 0.0
      %394 = vmatpush1.msra.mxu0 %v375
      %395 = vmatprep.subr.mxu0 0.0
      %396 = vmatpush1.msra.mxu0 %v376
      %397 = vmatprep.subr.mxu0 0.0
      %398 = vmatpush1.msra.mxu0 %v377
      %399 = vmatprep.subr.mxu0 0.0
      %400 = vmatpush1.msra.mxu0 %v378
      %401 = vmatprep.subr.mxu0 0.0
      %402 = vmatpush1.msra.mxu0 %v379
      %403 = vmatprep.subr.mxu0 0.0
      %404 = vmatpush1.msra.mxu0 %v380
      %405 = vmatprep.subr.mxu0 0.0
      %406 = vmatpush1.msra.mxu0 %v381
      %407 = vmatprep.subr.mxu0 0.0
      %408 = vmatpush1.msra.mxu0 0.0
      %409 = vmatprep.subr.mxu0 0.0
      %410 = vmatpush1.msra.mxu0 0.0
      %411 = vmatprep.subr.mxu0 0.0
      %412 = vmatpush1.msra.mxu0 0.0
      %413 = vmatprep.subr.mxu0 0.0
      %414 = vmatpush1.msra.mxu0 0.0
      %415 = vmatprep.subr.mxu0 0.0
      %416 = vmatpush1.msra.mxu0 0.0
      %417 = vmatprep.subr.mxu0 0.0
      %418 = vmatpush1.msra.mxu0 0.0
      %419 = vmatprep.subr.mxu0 0.0
      %420 = vmatpush1.msra.mxu0 0.0
      %421 = vmatprep.subr.mxu0 0.0
      %422 = vmatpush1.msra.mxu0 0.0
      %423 = vmatprep.subr.mxu0 0.0
      %424 = vmatpush1.msra.mxu0 0.0
      %425 = vmatprep.subr.mxu0 0.0
      %426 = vmatpush1.msra.mxu0 0.0
      %427 = vmatprep.subr.mxu0 0.0
      %428 = vmatpush1.msra.mxu0 0.0
      %429 = vmatprep.subr.mxu0 0.0
      %430 = vmatpush1.msra.mxu0 0.0
      %431 = vmatprep.subr.mxu0 0.0
      %432 = vmatpush1.msra.mxu0 0.0
      %433 = vmatprep.subr.mxu0 0.0
      %434 = vmatpush1.msra.mxu0 0.0
      %435 = vmatprep.subr.mxu0 0.0
      %436 = vmatpush1.msra.mxu0 0.0
      %437 = vmatprep.subr.mxu0 0.0
      %438 = vmatpush1.msra.mxu0 0.0
      %439 = vmatprep.subr.mxu0 0.0
      %440 = vmatpush1.msra.mxu0 0.0
      %441 = vmatprep.subr.mxu0 0.0
      %442 = vmatpush1.msra.mxu0 0.0
      %443 = vmatprep.subr.mxu0 0.0
      %444 = vmatpush1.msra.mxu0 0.0
      %445 = vmatprep.subr.mxu0 0.0
      %446 = vmatpush1.msra.mxu0 0.0
      %447 = vmatprep.subr.mxu0 0.0
      %448 = vmatpush1.msra.mxu0 0.0
      %449 = vmatprep.subr.mxu0 0.0
      %450 = vmatpush1.msra.mxu0 0.0
      %451 = vmatprep.subr.mxu0 0.0
      %452 = vmatpush1.msra.mxu0 0.0
      %453 = vmatprep.subr.mxu0 0.0
      %454 = vmatpush1.msra.mxu0 0.0
      %455 = vmatprep.mubr.f32.mxu0 0.0
      %456 = vmatmul.mubr.f32.gmra.mrb[0].mxu0 %v386
      %v457 = vpop.f32.mrb[0].mxu0
      %v458 = vadd.f32 0.0, %v457
      %v459 = vpop.f32.mrb[0].mxu0
      %460 = vmatprep.mubr.f32.mxu0 0.0
      %461 = vmatmul.mubr.f32.gmra.mrb[0].mxu0 %v389
      %v462 = vpop.f32.mrb[0].mxu0
      %v463 = vadd.f32 0.0, %v462
      %v464 = vpop.f32.mrb[0].mxu0
      %465 = vdwg.mxu0
      %v466 = vmul.f32 %v458, 2.0
      %v467 = vmul.f32 %v463, 2.0
      %v468 = vld [vmem:[%s361] sm:$0x1]
      %v470 = vlaneseq
      %v471 = vshrl.u32 %v470, 7
      %v472 = vsub.s32 0, %v471
      %v473 = vrot.slane %v468, %v472
      %v475 = vsub.f32 %v466, %v473
      %v476 = vsub.f32 %v467, %v473
      %v477 = vld [vmem:[%s4] sm:$0xff]
      %v478 = vld [vmem:[%s4 + $0x8] sm:$0xff]
      %v479 = vld [vmem:[%s4 + $0x10] sm:$0xff]
      %v480 = vld [vmem:[%s4 + $0x18] sm:$0xff]
      %v481 = vld [vmem:[%s4 + $0x20] sm:$0xff]
      %v482 = vld [vmem:[%s4 + $0x28] sm:$0xff]
      %v483 = vld [vmem:[%s4 + $0x30] sm:$0xff]
      %v484 = vld [vmem:[%s4 + $0x38] sm:$0xff]
      %v486 = vsel %vm384, %v382, 0
      %v489 = vsel %vm384, %v383, 0
      %491 = vmatprep.subr.mxu0 0.0
      %492 = vmatpush1.msra.mxu0 %v477
      %493 = vmatprep.subr.mxu0 0.0
      %494 = vmatpush1.msra.mxu0 %v478
      %495 = vmatprep.subr.mxu0 0.0
      %496 = vmatpush1.msra.mxu0 %v479
      %497 = vmatprep.subr.mxu0 0.0
      %498 = vmatpush1.msra.mxu0 %v480
      %499 = vmatprep.subr.mxu0 0.0
      %500 = vmatpush1.msra.mxu0 %v481
      %501 = vmatprep.subr.mxu0 0.0
      %502 = vmatpush1.msra.mxu0 %v482
      %503 = vmatprep.subr.mxu0 0.0
      %504 = vmatpush1.msra.mxu0 %v483
      %505 = vmatprep.subr.mxu0 0.0
      %506 = vmatpush1.msra.mxu0 %v484
      %507 = vmatprep.subr.mxu0 0.0
      %508 = vmatpush1.msra.mxu0 0.0
      %509 = vmatprep.subr.mxu0 0.0
      %510 = vmatpush1.msra.mxu0 0.0
      %511 = vmatprep.subr.mxu0 0.0
      %512 = vmatpush1.msra.mxu0 0.0
      %513 = vmatprep.subr.mxu0 0.0
      %514 = vmatpush1.msra.mxu0 0.0
      %515 = vmatprep.subr.mxu0 0.0
      %516 = vmatpush1.msra.mxu0 0.0
      %517 = vmatprep.subr.mxu0 0.0
      %518 = vmatpush1.msra.mxu0 0.0
      %519 = vmatprep.subr.mxu0 0.0
      %520 = vmatpush1.msra.mxu0 0.0
      %521 = vmatprep.subr.mxu0 0.0
      %522 = vmatpush1.msra.mxu0 0.0
      %523 = vmatprep.subr.mxu0 0.0
      %524 = vmatpush1.msra.mxu0 0.0
      %525 = vmatprep.subr.mxu0 0.0
      %526 = vmatpush1.msra.mxu0 0.0
      %527 = vmatprep.subr.mxu0 0.0
      %528 = vmatpush1.msra.mxu0 0.0
      %529 = vmatprep.subr.mxu0 0.0
      %530 = vmatpush1.msra.mxu0 0.0
      %531 = vmatprep.subr.mxu0 0.0
      %532 = vmatpush1.msra.mxu0 0.0
      %533 = vmatprep.subr.mxu0 0.0
      %534 = vmatpush1.msra.mxu0 0.0
      %535 = vmatprep.subr.mxu0 0.0
      %536 = vmatpush1.msra.mxu0 0.0
      %537 = vmatprep.subr.mxu0 0.0
      %538 = vmatpush1.msra.mxu0 0.0
      %539 = vmatprep.subr.mxu0 0.0
      %540 = vmatpush1.msra.mxu0 0.0
      %541 = vmatprep.subr.mxu0 0.0
      %542 = vmatpush1.msra.mxu0 0.0
      %543 = vmatprep.subr.mxu0 0.0
      %544 = vmatpush1.msra.mxu0 0.0
      %545 = vmatprep.subr.mxu0 0.0
      %546 = vmatpush1.msra.mxu0 0.0
      %547 = vmatprep.subr.mxu0 0.0
      %548 = vmatpush1.msra.mxu0 0.0
      %549 = vmatprep.subr.mxu0 0.0
      %550 = vmatpush1.msra.mxu0 0.0
      %551 = vmatprep.subr.mxu0 0.0
      %552 = vmatpush1.msra.mxu0 0.0
      %553 = vmatprep.subr.mxu0 0.0
      %554 = vmatpush1.msra.mxu0 0.0
      %555 = vmatprep.mubr.f32.mxu0 0.0
      %556 = vmatmul.mubr.f32.gmra.mrb[0].mxu0 %v486
      %v557 = vpop.f32.mrb[0].mxu0
      %v558 = vadd.f32 0.0, %v557
      %v559 = vpop.f32.mrb[0].mxu0
      %560 = vmatprep.mubr.f32.mxu0 0.0
      %561 = vmatmul.mubr.f32.gmra.mrb[0].mxu0 %v489
      %v562 = vpop.f32.mrb[0].mxu0
      %v563 = vadd.f32 0.0, %v562
      %v564 = vpop.f32.mrb[0].mxu0
      %565 = vdwg.mxu0
      %v566 = vld [vmem:[%s5] sm:$0xff]
      %v567 = vld [vmem:[%s5 + $0x8] sm:$0xff]
      %v568 = vld [vmem:[%s5 + $0x10] sm:$0xff]
      %v569 = vld [vmem:[%s5 + $0x18] sm:$0xff]
      %v570 = vld [vmem:[%s5 + $0x20] sm:$0xff]
      %v571 = vld [vmem:[%s5 + $0x28] sm:$0xff]
      %v572 = vld [vmem:[%s5 + $0x30] sm:$0xff]
      %v573 = vld [vmem:[%s5 + $0x38] sm:$0xff]
      %v574 = vld [vmem:[%s6] sm:$0x1]
      %v576 = vlaneseq
      %v577 = vshrl.u32 %v576, 7
      %v578 = vsub.s32 0, %v577
      %v579 = vrot.slane %v574, %v578
      %581 = vmatprep.subr.mxu0 0.0
      %582 = vmatpush1.msra.mxu0 %v566
      %583 = vmatprep.subr.mxu0 0.0
      %584 = vmatpush1.msra.mxu0 %v567
      %585 = vmatprep.subr.mxu0 0.0
      %586 = vmatpush1.msra.mxu0 %v568
      %587 = vmatprep.subr.mxu0 0.0
      %588 = vmatpush1.msra.mxu0 %v569
      %589 = vmatprep.subr.mxu0 0.0
      %590 = vmatpush1.msra.mxu0 %v570
      %591 = vmatprep.subr.mxu0 0.0
      %592 = vmatpush1.msra.mxu0 %v571
      %593 = vmatprep.subr.mxu0 0.0
      %594 = vmatpush1.msra.mxu0 %v572
      %595 = vmatprep.subr.mxu0 0.0
      %596 = vmatpush1.msra.mxu0 %v573
      %597 = vmatprep.subr.mxu0 0.0
      %598 = vmatpush1.msra.mxu0 0.0
      %599 = vmatprep.subr.mxu0 0.0
      %600 = vmatpush1.msra.mxu0 0.0
      %601 = vmatprep.subr.mxu0 0.0
      %602 = vmatpush1.msra.mxu0 0.0
      %603 = vmatprep.subr.mxu0 0.0
      %604 = vmatpush1.msra.mxu0 0.0
      %605 = vmatprep.subr.mxu0 0.0
      %606 = vmatpush1.msra.mxu0 0.0
      %607 = vmatprep.subr.mxu0 0.0
      %608 = vmatpush1.msra.mxu0 0.0
      %609 = vmatprep.subr.mxu0 0.0
      %610 = vmatpush1.msra.mxu0 0.0
      %611 = vmatprep.subr.mxu0 0.0
      %612 = vmatpush1.msra.mxu0 0.0
      %613 = vmatprep.subr.mxu0 0.0
      %614 = vmatpush1.msra.mxu0 0.0
      %615 = vmatprep.subr.mxu0 0.0
      %616 = vmatpush1.msra.mxu0 0.0
      %617 = vmatprep.subr.mxu0 0.0
      %618 = vmatpush1.msra.mxu0 0.0
      %619 = vmatprep.subr.mxu0 0.0
      %620 = vmatpush1.msra.mxu0 0.0
      %621 = vmatprep.subr.mxu0 0.0
      %622 = vmatpush1.msra.mxu0 0.0
      %623 = vmatprep.subr.mxu0 0.0
      %624 = vmatpush1.msra.mxu0 0.0
      %625 = vmatprep.subr.mxu0 0.0
      %626 = vmatpush1.msra.mxu0 0.0
      %627 = vmatprep.subr.mxu0 0.0
      %628 = vmatpush1.msra.mxu0 0.0
      %629 = vmatprep.subr.mxu0 0.0
      %630 = vmatpush1.msra.mxu0 0.0
      %631 = vmatprep.subr.mxu0 0.0
      %632 = vmatpush1.msra.mxu0 0.0
      %633 = vmatprep.subr.mxu0 0.0
      %634 = vmatpush1.msra.mxu0 0.0
      %635 = vmatprep.subr.mxu0 0.0
      %636 = vmatpush1.msra.mxu0 0.0
      %637 = vmatprep.subr.mxu0 0.0
      %638 = vmatpush1.msra.mxu0 0.0
      %639 = vmatprep.subr.mxu0 0.0
      %640 = vmatpush1.msra.mxu0 0.0
      %641 = vmatprep.subr.mxu0 0.0
      %642 = vmatpush1.msra.mxu0 0.0
      %643 = vmatprep.subr.mxu0 0.0
      %644 = vmatpush1.msra.mxu0 0.0
      %645 = vmatprep.mubr.f32.mxu0 0.0
      %646 = vmatmul.mubr.f32.gmra.mrb[0].mxu0 %v386
      %v647 = vpop.f32.mrb[0].mxu0
      %v648 = vadd.f32 %v579, %v647
      %v649 = vpop.f32.mrb[0].mxu0
      %650 = vmatprep.mubr.f32.mxu0 0.0
      %651 = vmatmul.mubr.f32.gmra.mrb[0].mxu0 %v389
      %v652 = vpop.f32.mrb[0].mxu0
      %v653 = vadd.f32 %v579, %v652
      %v654 = vpop.f32.mrb[0].mxu0
      %655 = vdwg.mxu0
      %v656 = vlaneseq
      %v657 = vand.u32 %v656, 127
      %v658 = vcvt.s32.f32 %v657
      %vm659 = vcmask 130048
      %v660 = vsel %vm659, %v475, -inf
      %661 = vmax.xlane.f32.xlu0 %v660
      %v662 = vpop.xlane.xlu0 %661
      %v663 = vsel %vm659, %v476, -inf
      %664 = vmax.xlane.f32.xlu0 %v663
      %v665 = vpop.xlane.xlu0 %664
      %vm666 = vcmp.eq.f32.partialorder %v475, %v662
      %vm667 = vcmp.eq.f32.partialorder %v476, %v665
      %v668 = vsel %vm666, %v658, 16.0
      %v669 = vsel %vm667, %v658, 16.0
      %v670 = vsel %vm659, %v668, inf
      %671 = vmin.xlane.f32.xlu0 %v670
      %v672 = vpop.xlane.xlu0 %671
      %v673 = vsel %vm659, %v669, inf
      %674 = vmin.xlane.f32.xlu0 %v673
      %v675 = vpop.xlane.xlu0 %674
      %vm676 = vcmp.eq.f32.partialorder %v658, %v672
      %vm677 = vcmp.eq.f32.partialorder %v658, %v675
      %v678 = vsel %vm676, 1, 0
      %v679 = vsel %vm677, 1, 0
      %v680 = vcvt.s32.f32 %v678
      %v681 = vcvt.s32.f32 %v679
      %v683 = vsel %vm659, %v680, 0
      %v686 = vsel %vm659, %v681, 0
      %688 = vmatprep.subr.mxu0 0.0
      %689 = vmatpush1.msra.mxu0 %v558
      %690 = vmatprep.subr.mxu0 0.0
      %691 = vmatpush1.msra.mxu0 %v563
      %692 = vmatprep.subr.mxu0 0.0
      %693 = vmatpush1.msra.mxu0 0.0
      %694 = vmatprep.subr.mxu0 0.0
      %695 = vmatpush1.msra.mxu0 0.0
      %696 = vmatprep.subr.mxu0 0.0
      %697 = vmatpush1.msra.mxu0 0.0
      %698 = vmatprep.subr.mxu0 0.0
      %699 = vmatpush1.msra.mxu0 0.0
      %700 = vmatprep.subr.mxu0 0.0
      %701 = vmatpush1.msra.mxu0 0.0
      %702 = vmatprep.subr.mxu0 0.0
      %703 = vmatpush1.msra.mxu0 0.0
      %704 = vmatprep.subr.mxu0 0.0
      %705 = vmatpush1.msra.mxu0 0.0
      %706 = vmatprep.subr.mxu0 0.0
      %707 = vmatpush1.msra.mxu0 0.0
      %708 = vmatprep.subr.mxu0 0.0
      %709 = vmatpush1.msra.mxu0 0.0
      %710 = vmatprep.subr.mxu0 0.0
      %711 = vmatpush1.msra.mxu0 0.0
      %712 = vmatprep.subr.mxu0 0.0
      %713 = vmatpush1.msra.mxu0 0.0
      %714 = vmatprep.subr.mxu0 0.0
      %715 = vmatpush1.msra.mxu0 0.0
      %716 = vmatprep.subr.mxu0 0.0
      %717 = vmatpush1.msra.mxu0 0.0
      %718 = vmatprep.subr.mxu0 0.0
      %719 = vmatpush1.msra.mxu0 0.0
      %720 = vmatprep.subr.mxu0 0.0
      %721 = vmatpush1.msra.mxu0 0.0
      %722 = vmatprep.subr.mxu0 0.0
      %723 = vmatpush1.msra.mxu0 0.0
      %724 = vmatprep.subr.mxu0 0.0
      %725 = vmatpush1.msra.mxu0 0.0
      %726 = vmatprep.subr.mxu0 0.0
      %727 = vmatpush1.msra.mxu0 0.0
      %728 = vmatprep.subr.mxu0 0.0
      %729 = vmatpush1.msra.mxu0 0.0
      %730 = vmatprep.subr.mxu0 0.0
      %731 = vmatpush1.msra.mxu0 0.0
      %732 = vmatprep.subr.mxu0 0.0
      %733 = vmatpush1.msra.mxu0 0.0
      %734 = vmatprep.subr.mxu0 0.0
      %735 = vmatpush1.msra.mxu0 0.0
      %736 = vmatprep.subr.mxu0 0.0
      %737 = vmatpush1.msra.mxu0 0.0
      %738 = vmatprep.subr.mxu0 0.0
      %739 = vmatpush1.msra.mxu0 0.0
      %740 = vmatprep.subr.mxu0 0.0
      %741 = vmatpush1.msra.mxu0 0.0
      %742 = vmatprep.subr.mxu0 0.0
      %743 = vmatpush1.msra.mxu0 0.0
      %744 = vmatprep.subr.mxu0 0.0
      %745 = vmatpush1.msra.mxu0 0.0
      %746 = vmatprep.subr.mxu0 0.0
      %747 = vmatpush1.msra.mxu0 0.0
      %748 = vmatprep.subr.mxu0 0.0
      %749 = vmatpush1.msra.mxu0 0.0
      %750 = vmatprep.subr.mxu0 0.0
      %751 = vmatpush1.msra.mxu0 0.0
      %752 = vmatprep.mubr.f32.mxu0 0.0
      %753 = vmatmul.mubr.f32.gmra.mrb[0].mxu0 %v683
      %v754 = vpop.f32.mrb[0].mxu0
      %v755 = vadd.f32 0.0, %v754
      %v756 = vpop.f32.mrb[0].mxu0
      %757 = vmatprep.mubr.f32.mxu0 0.0
      %758 = vmatmul.mubr.f32.gmra.mrb[0].mxu0 %v686
      %v759 = vpop.f32.mrb[0].mxu0
      %v760 = vadd.f32 0.0, %v759
      %v761 = vpop.f32.mrb[0].mxu0
      %762 = vdwg.mxu0
      %v763 = vsel %vm676, -inf, %v475
      %v764 = vsel %vm677, -inf, %v476
      %v765 = vsel %vm659, %v763, -inf
      %766 = vmax.xlane.f32.xlu0 %v765
      %v767 = vpop.xlane.xlu0 %766
      %v768 = vsel %vm659, %v764, -inf
      %769 = vmax.xlane.f32.xlu0 %v768
      %v770 = vpop.xlane.xlu0 %769
      %vm771 = vcmp.eq.f32.partialorder %v763, %v767
      %vm772 = vcmp.eq.f32.partialorder %v764, %v770
      %v773 = vsel %vm771, %v658, 16.0
      %v774 = vsel %vm772, %v658, 16.0
      %v775 = vsel %vm659, %v773, inf
      %776 = vmin.xlane.f32.xlu0 %v775
      %v777 = vpop.xlane.xlu0 %776
      %v778 = vsel %vm659, %v774, inf
      %779 = vmin.xlane.f32.xlu0 %v778
      %v780 = vpop.xlane.xlu0 %779
      %vm781 = vcmp.eq.f32.partialorder %v658, %v777
      %vm782 = vcmp.eq.f32.partialorder %v658, %v780
      %v783 = vsel %vm781, 1, 0
      %v784 = vsel %vm782, 1, 0
      %v785 = vcvt.s32.f32 %v783
      %v786 = vcvt.s32.f32 %v784
      %v788 = vsel %vm659, %v785, 0
      %v791 = vsel %vm659, %v786, 0
      %793 = vmatprep.subr.mxu0 0.0
      %794 = vmatpush1.msra.mxu0 %v558
      %795 = vmatprep.subr.mxu0 0.0
      %796 = vmatpush1.msra.mxu0 %v563
      %797 = vmatprep.subr.mxu0 0.0
      %798 = vmatpush1.msra.mxu0 0.0
      %799 = vmatprep.subr.mxu0 0.0
      %800 = vmatpush1.msra.mxu0 0.0
      %801 = vmatprep.subr.mxu0 0.0
      %802 = vmatpush1.msra.mxu0 0.0
      %803 = vmatprep.subr.mxu0 0.0
      %804 = vmatpush1.msra.mxu0 0.0
      %805 = vmatprep.subr.mxu0 0.0
      %806 = vmatpush1.msra.mxu0 0.0
      %807 = vmatprep.subr.mxu0 0.0
      %808 = vmatpush1.msra.mxu0 0.0
      %809 = vmatprep.subr.mxu0 0.0
      %810 = vmatpush1.msra.mxu0 0.0
      %811 = vmatprep.subr.mxu0 0.0
      %812 = vmatpush1.msra.mxu0 0.0
      %813 = vmatprep.subr.mxu0 0.0
      %814 = vmatpush1.msra.mxu0 0.0
      %815 = vmatprep.subr.mxu0 0.0
      %816 = vmatpush1.msra.mxu0 0.0
      %817 = vmatprep.subr.mxu0 0.0
      %818 = vmatpush1.msra.mxu0 0.0
      %819 = vmatprep.subr.mxu0 0.0
      %820 = vmatpush1.msra.mxu0 0.0
      %821 = vmatprep.subr.mxu0 0.0
      %822 = vmatpush1.msra.mxu0 0.0
      %823 = vmatprep.subr.mxu0 0.0
      %824 = vmatpush1.msra.mxu0 0.0
      %825 = vmatprep.subr.mxu0 0.0
      %826 = vmatpush1.msra.mxu0 0.0
      %827 = vmatprep.subr.mxu0 0.0
      %828 = vmatpush1.msra.mxu0 0.0
      %829 = vmatprep.subr.mxu0 0.0
      %830 = vmatpush1.msra.mxu0 0.0
      %831 = vmatprep.subr.mxu0 0.0
      %832 = vmatpush1.msra.mxu0 0.0
      %833 = vmatprep.subr.mxu0 0.0
      %834 = vmatpush1.msra.mxu0 0.0
      %835 = vmatprep.subr.mxu0 0.0
      %836 = vmatpush1.msra.mxu0 0.0
      %837 = vmatprep.subr.mxu0 0.0
      %838 = vmatpush1.msra.mxu0 0.0
      %839 = vmatprep.subr.mxu0 0.0
      %840 = vmatpush1.msra.mxu0 0.0
      %841 = vmatprep.subr.mxu0 0.0
      %842 = vmatpush1.msra.mxu0 0.0
      %843 = vmatprep.subr.mxu0 0.0
      %844 = vmatpush1.msra.mxu0 0.0
      %845 = vmatprep.subr.mxu0 0.0
      %846 = vmatpush1.msra.mxu0 0.0
      %847 = vmatprep.subr.mxu0 0.0
      %848 = vmatpush1.msra.mxu0 0.0
      %849 = vmatprep.subr.mxu0 0.0
      %850 = vmatpush1.msra.mxu0 0.0
      %851 = vmatprep.subr.mxu0 0.0
      %852 = vmatpush1.msra.mxu0 0.0
      %853 = vmatprep.subr.mxu0 0.0
      %854 = vmatpush1.msra.mxu0 0.0
      %855 = vmatprep.subr.mxu0 0.0
      %856 = vmatpush1.msra.mxu0 0.0
      %857 = vmatprep.mubr.f32.mxu0 0.0
      %858 = vmatmul.mubr.f32.gmra.mrb[0].mxu0 %v788
      %v859 = vpop.f32.mrb[0].mxu0
      %v860 = vadd.f32 0.0, %v859
      %v861 = vpop.f32.mrb[0].mxu0
      %862 = vmatprep.mubr.f32.mxu0 0.0
      %863 = vmatmul.mubr.f32.gmra.mrb[0].mxu0 %v791
      %v864 = vpop.f32.mrb[0].mxu0
      %v865 = vadd.f32 0.0, %v864
      %v866 = vpop.f32.mrb[0].mxu0
      %867 = vdwg.mxu0
      %v868 = vmax.f32 %v755, %v860
      %v869 = vmax.f32 %v760, %v865
      %v870 = vsel %vm781, -inf, %v763
      %v871 = vsel %vm782, -inf, %v764
      %v872 = vsel %vm659, %v870, -inf
      %873 = vmax.xlane.f32.xlu0 %v872
      %v874 = vpop.xlane.xlu0 %873
      %v875 = vsel %vm659, %v871, -inf
      %876 = vmax.xlane.f32.xlu0 %v875
      %v877 = vpop.xlane.xlu0 %876
      %vm878 = vcmp.eq.f32.partialorder %v870, %v874
      %vm879 = vcmp.eq.f32.partialorder %v871, %v877
      %v880 = vsel %vm878, %v658, 16.0
      %v881 = vsel %vm879, %v658, 16.0
      %v882 = vsel %vm659, %v880, inf
      %883 = vmin.xlane.f32.xlu0 %v882
      %v884 = vpop.xlane.xlu0 %883
      %v885 = vsel %vm659, %v881, inf
      %886 = vmin.xlane.f32.xlu0 %v885
      %v887 = vpop.xlane.xlu0 %886
      %vm888 = vcmp.eq.f32.partialorder %v658, %v884
      %vm889 = vcmp.eq.f32.partialorder %v658, %v887
      %v890 = vsel %vm888, 1, 0
      %v891 = vsel %vm889, 1, 0
      %v892 = vcvt.s32.f32 %v890
      %v893 = vcvt.s32.f32 %v891
      %v895 = vsel %vm659, %v892, 0
      %v898 = vsel %vm659, %v893, 0
      %900 = vmatprep.subr.mxu0 0.0
      %901 = vmatpush1.msra.mxu0 %v558
      %902 = vmatprep.subr.mxu0 0.0
      %903 = vmatpush1.msra.mxu0 %v563
      %904 = vmatprep.subr.mxu0 0.0
      %905 = vmatpush1.msra.mxu0 0.0
      %906 = vmatprep.subr.mxu0 0.0
      %907 = vmatpush1.msra.mxu0 0.0
      %908 = vmatprep.subr.mxu0 0.0
      %909 = vmatpush1.msra.mxu0 0.0
      %910 = vmatprep.subr.mxu0 0.0
      %911 = vmatpush1.msra.mxu0 0.0
      %912 = vmatprep.subr.mxu0 0.0
      %913 = vmatpush1.msra.mxu0 0.0
      %914 = vmatprep.subr.mxu0 0.0
      %915 = vmatpush1.msra.mxu0 0.0
      %916 = vmatprep.subr.mxu0 0.0
      %917 = vmatpush1.msra.mxu0 0.0
      %918 = vmatprep.subr.mxu0 0.0
      %919 = vmatpush1.msra.mxu0 0.0
      %920 = vmatprep.subr.mxu0 0.0
      %921 = vmatpush1.msra.mxu0 0.0
      %922 = vmatprep.subr.mxu0 0.0
      %923 = vmatpush1.msra.mxu0 0.0
      %924 = vmatprep.subr.mxu0 0.0
      %925 = vmatpush1.msra.mxu0 0.0
      %926 = vmatprep.subr.mxu0 0.0
      %927 = vmatpush1.msra.mxu0 0.0
      %928 = vmatprep.subr.mxu0 0.0
      %929 = vmatpush1.msra.mxu0 0.0
      %930 = vmatprep.subr.mxu0 0.0
      %931 = vmatpush1.msra.mxu0 0.0
      %932 = vmatprep.subr.mxu0 0.0
      %933 = vmatpush1.msra.mxu0 0.0
      %934 = vmatprep.subr.mxu0 0.0
      %935 = vmatpush1.msra.mxu0 0.0
      %936 = vmatprep.subr.mxu0 0.0
      %937 = vmatpush1.msra.mxu0 0.0
      %938 = vmatprep.subr.mxu0 0.0
      %939 = vmatpush1.msra.mxu0 0.0
      %940 = vmatprep.subr.mxu0 0.0
      %941 = vmatpush1.msra.mxu0 0.0
      %942 = vmatprep.subr.mxu0 0.0
      %943 = vmatpush1.msra.mxu0 0.0
      %944 = vmatprep.subr.mxu0 0.0
      %945 = vmatpush1.msra.mxu0 0.0
      %946 = vmatprep.subr.mxu0 0.0
      %947 = vmatpush1.msra.mxu0 0.0
      %948 = vmatprep.subr.mxu0 0.0
      %949 = vmatpush1.msra.mxu0 0.0
      %950 = vmatprep.subr.mxu0 0.0
      %951 = vmatpush1.msra.mxu0 0.0
      %952 = vmatprep.subr.mxu0 0.0
      %953 = vmatpush1.msra.mxu0 0.0
      %954 = vmatprep.subr.mxu0 0.0
      %955 = vmatpush1.msra.mxu0 0.0
      %956 = vmatprep.subr.mxu0 0.0
      %957 = vmatpush1.msra.mxu0 0.0
      %958 = vmatprep.subr.mxu0 0.0
      %959 = vmatpush1.msra.mxu0 0.0
      %960 = vmatprep.subr.mxu0 0.0
      %961 = vmatpush1.msra.mxu0 0.0
      %962 = vmatprep.subr.mxu0 0.0
      %963 = vmatpush1.msra.mxu0 0.0
      %964 = vmatprep.mubr.f32.mxu0 0.0
      %965 = vmatmul.mubr.f32.gmra.mrb[0].mxu0 %v895
      %v966 = vpop.f32.mrb[0].mxu0
      %v967 = vadd.f32 0.0, %v966
      %v968 = vpop.f32.mrb[0].mxu0
      %969 = vmatprep.mubr.f32.mxu0 0.0
      %970 = vmatmul.mubr.f32.gmra.mrb[0].mxu0 %v898
      %v971 = vpop.f32.mrb[0].mxu0
      %v972 = vadd.f32 0.0, %v971
      %v973 = vpop.f32.mrb[0].mxu0
      %974 = vdwg.mxu0
      %v975 = vmax.f32 %v868, %v967
      %v976 = vmax.f32 %v869, %v972
      %v977 = vsel %vm888, -inf, %v870
      %v978 = vsel %vm889, -inf, %v871
      %v979 = vsel %vm659, %v977, -inf
      %980 = vmax.xlane.f32.xlu0 %v979
      %v981 = vpop.xlane.xlu0 %980
      %v982 = vsel %vm659, %v978, -inf
      %983 = vmax.xlane.f32.xlu0 %v982
      %v984 = vpop.xlane.xlu0 %983
      %vm985 = vcmp.eq.f32.partialorder %v977, %v981
      %vm986 = vcmp.eq.f32.partialorder %v978, %v984
      %v987 = vsel %vm985, %v658, 16.0
      %v988 = vsel %vm986, %v658, 16.0
      %v989 = vsel %vm659, %v987, inf
      %990 = vmin.xlane.f32.xlu0 %v989
      %v991 = vpop.xlane.xlu0 %990
      %v992 = vsel %vm659, %v988, inf
      %993 = vmin.xlane.f32.xlu0 %v992
      %v994 = vpop.xlane.xlu0 %993
      %vm995 = vcmp.eq.f32.partialorder %v658, %v991
      %vm996 = vcmp.eq.f32.partialorder %v658, %v994
      %v997 = vsel %vm995, 1, 0
      %v998 = vsel %vm996, 1, 0
      %v999 = vcvt.s32.f32 %v997
      %v1000 = vcvt.s32.f32 %v998
      %v1002 = vsel %vm659, %v999, 0
      %v1005 = vsel %vm659, %v1000, 0
      %1007 = vmatprep.subr.mxu0 0.0
      %1008 = vmatpush1.msra.mxu0 %v558
      %1009 = vmatprep.subr.mxu0 0.0
      %1010 = vmatpush1.msra.mxu0 %v563
      %1011 = vmatprep.subr.mxu0 0.0
      %1012 = vmatpush1.msra.mxu0 0.0
      %1013 = vmatprep.subr.mxu0 0.0
      %1014 = vmatpush1.msra.mxu0 0.0
      %1015 = vmatprep.subr.mxu0 0.0
      %1016 = vmatpush1.msra.mxu0 0.0
      %1017 = vmatprep.subr.mxu0 0.0
      %1018 = vmatpush1.msra.mxu0 0.0
      %1019 = vmatprep.subr.mxu0 0.0
      %1020 = vmatpush1.msra.mxu0 0.0
      %1021 = vmatprep.subr.mxu0 0.0
      %1022 = vmatpush1.msra.mxu0 0.0
      %1023 = vmatprep.subr.mxu0 0.0
      %1024 = vmatpush1.msra.mxu0 0.0
      %1025 = vmatprep.subr.mxu0 0.0
      %1026 = vmatpush1.msra.mxu0 0.0
      %1027 = vmatprep.subr.mxu0 0.0
      %1028 = vmatpush1.msra.mxu0 0.0
      %1029 = vmatprep.subr.mxu0 0.0
      %1030 = vmatpush1.msra.mxu0 0.0
      %1031 = vmatprep.subr.mxu0 0.0
      %1032 = vmatpush1.msra.mxu0 0.0
      %1033 = vmatprep.subr.mxu0 0.0
      %1034 = vmatpush1.msra.mxu0 0.0
      %1035 = vmatprep.subr.mxu0 0.0
      %1036 = vmatpush1.msra.mxu0 0.0
      %1037 = vmatprep.subr.mxu0 0.0
      %1038 = vmatpush1.msra.mxu0 0.0
      %1039 = vmatprep.subr.mxu0 0.0
      %1040 = vmatpush1.msra.mxu0 0.0
      %1041 = vmatprep.subr.mxu0 0.0
      %1042 = vmatpush1.msra.mxu0 0.0
      %1043 = vmatprep.subr.mxu0 0.0
      %1044 = vmatpush1.msra.mxu0 0.0
      %1045 = vmatprep.subr.mxu0 0.0
      %1046 = vmatpush1.msra.mxu0 0.0
      %1047 = vmatprep.subr.mxu0 0.0
      %1048 = vmatpush1.msra.mxu0 0.0
      %1049 = vmatprep.subr.mxu0 0.0
      %1050 = vmatpush1.msra.mxu0 0.0
      %1051 = vmatprep.subr.mxu0 0.0
      %1052 = vmatpush1.msra.mxu0 0.0
      %1053 = vmatprep.subr.mxu0 0.0
      %1054 = vmatpush1.msra.mxu0 0.0
      %1055 = vmatprep.subr.mxu0 0.0
      %1056 = vmatpush1.msra.mxu0 0.0
      %1057 = vmatprep.subr.mxu0 0.0
      %1058 = vmatpush1.msra.mxu0 0.0
      %1059 = vmatprep.subr.mxu0 0.0
      %1060 = vmatpush1.msra.mxu0 0.0
      %1061 = vmatprep.subr.mxu0 0.0
      %1062 = vmatpush1.msra.mxu0 0.0
      %1063 = vmatprep.subr.mxu0 0.0
      %1064 = vmatpush1.msra.mxu0 0.0
      %1065 = vmatprep.subr.mxu0 0.0
      %1066 = vmatpush1.msra.mxu0 0.0
      %1067 = vmatprep.subr.mxu0 0.0
      %1068 = vmatpush1.msra.mxu0 0.0
      %1069 = vmatprep.subr.mxu0 0.0
      %1070 = vmatpush1.msra.mxu0 0.0
      %1071 = vmatprep.mubr.f32.mxu0 0.0
      %1072 = vmatmul.mubr.f32.gmra.mrb[0].mxu0 %v1002
      %v1073 = vpop.f32.mrb[0].mxu0
      %v1074 = vadd.f32 0.0, %v1073
      %v1075 = vpop.f32.mrb[0].mxu0
      %1076 = vmatprep.mubr.f32.mxu0 0.0
      %1077 = vmatmul.mubr.f32.gmra.mrb[0].mxu0 %v1005
      %v1078 = vpop.f32.mrb[0].mxu0
      %v1079 = vadd.f32 0.0, %v1078
      %v1080 = vpop.f32.mrb[0].mxu0
      %1081 = vdwg.mxu0
      %v1082 = vmax.f32 %v975, %v1074
      %v1083 = vmax.f32 %v976, %v1079
      %v1084 = vadd.f32 %v1082, %v648
      %v1085 = vadd.f32 %v1083, %v653
      %vm1086 = vcmp.ge.f32.partialorder %v1084, 0.0
      %vm1087 = vcmp.ge.f32.partialorder %v1085, 0.0
      %v1088 = vmul.f32 %v1084, 0.2
      %v1089 = vmul.f32 %v1085, 0.2
      %v1090 = vsel %vm1086, %v1084, %v1088
      %v1091 = vsel %vm1087, %v1085, %v1089
      %1092 = vst [vmem:[%s370] sm:$0xff] %v1090
      %1093 = vst [vmem:[%s370 + $0x8] sm:$0xff] %v1091
      %s1094 = smul.u32 2, %s23
      %p1095 = scmp.lt.s32.totalorder %s22, 1
      %s1096 = scalar_select %p1095, %s22, 1
      %p1097 = scmp.lt.s32.totalorder %s1094, 1
      %s1098 = scalar_select %p1097, %s1094, 1
      %s1099 = smul.addr %s1096, 2
      %s1100 = sadd.s32 %s1098, %s1099
      %s1101 = smul.addr %s1100, 8
      %s1102 = scalar_lea.vmem %s7, %s1101
      // Predicated region
      $region49: #{_lambda_.7} parent=47 // pred_check
        %p1103 = pneg %p219
      $region50: #{_lambda_.7} parent=47 // pred_check_branch
        %1105 = sbr.rel (%p1103) target = $region52
      $region51: #{_lambda_.7} parent=47 // pred_region
        %s1106 = smul.u32 2, %s23
      $region52: #{_lambda_.7} parent=47 // pred_fallthru
        _
    $region48: #{_lambda_.7} parent=5 // pred_fallthru
      _
    %p1107 = scmp.le.s32.totalorder 2, %s13
    // Predicated region
    $region53: #{_lambda_.7} parent=5 // pred_check
      %p1108 = pneg %p1107
    $region54: #{_lambda_.7} parent=5 // pred_check_branch
      %1110 = sbr.rel (%p1108) target = $region56
    $region55: #{_lambda_.7} parent=5 // pred_region
      %s1111 = ssub.s32 %s13, 2
      // Predicated region
      $region57: #{_lambda_.7} parent=55 // pred_check
        %p1112 = pneg %p225
      $region58: #{_lambda_.7} parent=55 // pred_check_branch
        %1114 = sbr.rel (%p1112) target = $region60
      $region59: #{_lambda_.7} parent=55 // pred_region
        %s1115 = smul.u32 2, %s25
        %p1116 = scmp.lt.s32.totalorder %s24, 1
        %s1117 = scalar_select %p1116, %s24, 1
        %p1118 = scmp.lt.s32.totalorder %s1115, 1
        %s1119 = scalar_select %p1118, %s1115, 1
        %s1120 = smul.addr %s1117, 2
        %s1121 = sadd.s32 %s1119, %s1120
        %s1122 = smul.addr %s1121, 8
        %s1123 = scalar_lea.vmem %s7, %s1122
      $region60: #{_lambda_.7} parent=55 // pred_fallthru
        _
    $region56: #{_lambda_.7} parent=5 // pred_fallthru
      _
  $region6: #{_lambda_.7} parent=0 // loop_footer
    %s17 = sadd.s32 1, %s13
  $region7: #{_lambda_.7} parent=0 // loop_footer_branch
    %12 = sbr.rel target = $region3
  $region8: #{_lambda_.7} parent=0 // loop_exit
    _

// kernel: _lambda_.8
$region0: #{_lambda_.8}
  #allocation0 [shape = 'u32[]', space=smem, size = 0x4, offset = 0x4, fixed_abs, tag = 'smem constant byte address 0x4 - core index']
  #allocation1 [shape = 'u32[144,128]{1,0:T(1,128)}', space=vmem, size = 0x12000, scoped, tag = 'internal scratch']
  %s0 = inlined_call_operand.vmem [shape: f32[2,16,128], index: 0, kind: input, shape index: {}, may-alias: {0,2}]
  %s1 = inlined_call_operand.vmem [shape: f32[2,128,16], index: 1, kind: input, shape index: {}]
  %s2 = inlined_call_operand.vmem [shape: f32[2,16,128], index: 2, kind: input, shape index: {}, may-alias: {0,2}]
  %s3 = inlined_call_operand.vmem [shape: f32[2,1,16], index: 3, kind: input, shape index: {}]
  %s4 = inlined_call_operand.vmem [shape: f32[128,256], index: 4, kind: input, shape index: {}]
  %s5 = inlined_call_operand.vmem [shape: f32[128,256], index: 5, kind: input, shape index: {}]
  %s6 = inlined_call_operand.vmem [shape: f32[1,256], index: 6, kind: input, shape index: {}]
  %s7 = inlined_call_operand.vmem [shape: f32[2,16,256], index: 7, kind: output, shape index: {}]
  %s8 = sld [smem:[#allocation0]]
  $region61: #{_lambda_.8} parent=0
    _
  %s10 = ssub.s32 1, %s8
  %s11 = scalar_select 0, %s10, %s8
  loop: start=0, step=1, limit=4
  $region2: #{_lambda_.8} parent=0 // loop_pre_header
    _
  $region3: #{_lambda_.8} parent=0 // loop_header
    %s13 = sphi 0, %s17
    %p14 = scmp.ge.s32.totalorder %s13, 4
    %s20 = sphi 0, %s32
    %s21 = sphi 0, %s28
    %s22 = sphi 0, %s20
    %s23 = sphi 0, %s21
    %s24 = sphi 0, %s22
    %s25 = sphi 0, %s23
    %s37 = sphi 0, %s39
    %s40 = sphi 0, %s37
    %s41 = sphi 0, %s40
    %s57 = sphi 0, %s41
    %s63 = sphi 0, %s65
    %s66 = sphi 0, %s63
    %s67 = sphi 0, %s66
    %s83 = sphi 0, %s67
    %s89 = sphi 0, %s91
    %s92 = sphi 0, %s89
    %s93 = sphi 0, %s92
    %s109 = sphi 0, %s93
    %s115 = sphi 0, %s117
    %s118 = sphi 0, %s115
    %s119 = sphi 0, %s118
    %s135 = sphi 0, %s119
    %s139 = sphi 0, %s139
    %s141 = sphi 0, %s139
    %s142 = sphi 0, %s141
    %s156 = sphi 0, %s142
    %s160 = sphi 0, %s160
    %s162 = sphi 0, %s160
    %s163 = sphi 0, %s162
    %s177 = sphi 0, %s163
    %s181 = sphi 0, %s181
    %s183 = sphi 0, %s181
    %s184 = sphi 0, %s183
    %s198 = sphi 0, %s184
    %s206 = sphi 0, %s208
    %s209 = sphi 0, %s206
    %s210 = sphi 0, %s209
    %s226 = sphi 0, %s210
  $region4: #{_lambda_.8} parent=0 // loop_header_branch
    %16 = sbr.rel (%p14) target = $region8
  $region5: #{_lambda_.8} parent=0 // loop_body
    %s18 = ssub.s32 %s13, 1
    %s19 = ssub.s32 %s13, 2
    %s26 = sadd.s32 1, %s21
    %p27 = scmp.ge.s32.totalorder %s26, 1
    %s28 = scalar_select %p27, 0, %s26
    %s29 = sadd.s32 1, %s20
    %s30 = scalar_select %p27, %s29, %s20
    %p31 = scmp.ge.s32.totalorder %s30, 2
    %s32 = scalar_select %p31, 0, %s30
    %s33 = ssub.s32 %s20, %s32
    %s34 = ssub.s32 %s21, %s28
    %s35 = sor.u32 %s33, %s34
    %p36 = scmp.eq.s32.totalorder %s35, 0
    %s38 = sadd.s32 %s37, 1
    %s39 = scalar_select %p36, %s37, %s38
    %p42 = pneg %p36
    %p43 = scmp.eq.s32.totalorder %s13, 1
    %p44 = por %p42, %p43
    %p45 = scmp.ne.s32.totalorder %s37, %s40
    %p46 = scmp.eq.s32.totalorder %s13, 0
    %p47 = por %p45, %p46
    %p48 = scmp.ne.s32.totalorder %s37, %s40
    %p49 = scmp.eq.s32.totalorder %s18, 1
    %p50 = por %p48, %p49
    %p51 = scmp.ne.s32.totalorder %s40, %s41
    %p52 = scmp.eq.s32.totalorder %s18, 0
    %p53 = por %p51, %p52
    %p54 = scmp.ne.s32.totalorder %s40, %s41
    %p55 = scmp.eq.s32.totalorder %s19, 1
    %p56 = por %p54, %p55
    %p58 = scmp.ne.s32.totalorder %s41, %s57
    %p59 = scmp.eq.s32.totalorder %s19, 0
    %p60 = por %p58, %p59
    %s61 = ssub.s32 %s20, %s32
    %p62 = scmp.eq.s32.totalorder %s61, 0
    %s64 = sadd.s32 %s63, 1
    %s65 = scalar_select %p62, %s63, %s64
    %p68 = pneg %p62
    %p69 = scmp.eq.s32.totalorder %s13, 1
    %p70 = por %p68, %p69
    %p71 = scmp.ne.s32.totalorder %s63, %s66
    %p72 = scmp.eq.s32.totalorder %s13, 0
    %p73 = por %p71, %p72
    %p74 = scmp.ne.s32.totalorder %s63, %s66
    %p75 = scmp.eq.s32.totalorder %s18, 1
    %p76 = por %p74, %p75
    %p77 = scmp.ne.s32.totalorder %s66, %s67
    %p78 = scmp.eq.s32.totalorder %s18, 0
    %p79 = por %p77, %p78
    %p80 = scmp.ne.s32.totalorder %s66, %s67
    %p81 = scmp.eq.s32.totalorder %s19, 1
    %p82 = por %p80, %p81
    %p84 = scmp.ne.s32.totalorder %s67, %s83
    %p85 = scmp.eq.s32.totalorder %s19, 0
    %p86 = por %p84, %p85
    %s87 = ssub.s32 %s20, %s32
    %p88 = scmp.eq.s32.totalorder %s87, 0
    %s90 = sadd.s32 %s89, 1
    %s91 = scalar_select %p88, %s89, %s90
    %p94 = pneg %p88
    %p95 = scmp.eq.s32.totalorder %s13, 1
    %p96 = por %p94, %p95
    %p97 = scmp.ne.s32.totalorder %s89, %s92
    %p98 = scmp.eq.s32.totalorder %s13, 0
    %p99 = por %p97, %p98
    %p100 = scmp.ne.s32.totalorder %s89, %s92
    %p101 = scmp.eq.s32.totalorder %s18, 1
    %p102 = por %p100, %p101
    %p103 = scmp.ne.s32.totalorder %s92, %s93
    %p104 = scmp.eq.s32.totalorder %s18, 0
    %p105 = por %p103, %p104
    %p106 = scmp.ne.s32.totalorder %s92, %s93
    %p107 = scmp.eq.s32.totalorder %s19, 1
    %p108 = por %p106, %p107
    %p110 = scmp.ne.s32.totalorder %s93, %s109
    %p111 = scmp.eq.s32.totalorder %s19, 0
    %p112 = por %p110, %p111
    %s113 = ssub.s32 %s20, %s32
    %p114 = scmp.eq.s32.totalorder %s113, 0
    %s116 = sadd.s32 %s115, 1
    %s117 = scalar_select %p114, %s115, %s116
    %p120 = pneg %p114
    %p121 = scmp.eq.s32.totalorder %s13, 1
    %p122 = por %p120, %p121
    %p123 = scmp.ne.s32.totalorder %s115, %s118
    %p124 = scmp.eq.s32.totalorder %s13, 0
    %p125 = por %p123, %p124
    %p126 = scmp.ne.s32.totalorder %s115, %s118
    %p127 = scmp.eq.s32.totalorder %s18, 1
    %p128 = por %p126, %p127
    %p129 = scmp.ne.s32.totalorder %s118, %s119
    %p130 = scmp.eq.s32.totalorder %s18, 0
    %p131 = por %p129, %p130
    %p132 = scmp.ne.s32.totalorder %s118, %s119
    %p133 = scmp.eq.s32.totalorder %s19, 1
    %p134 = por %p132, %p133
    %p136 = scmp.ne.s32.totalorder %s119, %s135
    %p137 = scmp.eq.s32.totalorder %s19, 0
    %p138 = por %p136, %p137
    %s140 = sadd.s32 %s139, 1
    %p143 = scmp.eq.s32.totalorder %s13, 1
    %p144 = scmp.ne.s32.totalorder %s139, %s141
    %p145 = scmp.eq.s32.totalorder %s13, 0
    %p146 = por %p144, %p145
    %p147 = scmp.ne.s32.totalorder %s139, %s141
    %p148 = scmp.eq.s32.totalorder %s18, 1
    %p149 = por %p147, %p148
    %p150 = scmp.ne.s32.totalorder %s141, %s142
    %p151 = scmp.eq.s32.totalorder %s18, 0
    %p152 = por %p150, %p151
    %p153 = scmp.ne.s32.totalorder %s141, %s142
    %p154 = scmp.eq.s32.totalorder %s19, 1
    %p155 = por %p153, %p154
    %p157 = scmp.ne.s32.totalorder %s142, %s156
    %p158 = scmp.eq.s32.totalorder %s19, 0
    %p159 = por %p157, %p158
    %s161 = sadd.s32 %s160, 1
    %p164 = scmp.eq.s32.totalorder %s13, 1
    %p165 = scmp.ne.s32.totalorder %s160, %s162
    %p166 = scmp.eq.s32.totalorder %s13, 0
    %p167 = por %p165, %p166
    %p168 = scmp.ne.s32.totalorder %s160, %s162
    %p169 = scmp.eq.s32.totalorder %s18, 1
    %p170 = por %p168, %p169
    %p171 = scmp.ne.s32.totalorder %s162, %s163
    %p172 = scmp.eq.s32.totalorder %s18, 0
    %p173 = por %p171, %p172
    %p174 = scmp.ne.s32.totalorder %s162, %s163
    %p175 = scmp.eq.s32.totalorder %s19, 1
    %p176 = por %p174, %p175
    %p178 = scmp.ne.s32.totalorder %s163, %s177
    %p179 = scmp.eq.s32.totalorder %s19, 0
    %p180 = por %p178, %p179
    %s182 = sadd.s32 %s181, 1
    %p185 = scmp.eq.s32.totalorder %s13, 1
    %p186 = scmp.ne.s32.totalorder %s181, %s183
    %p187 = scmp.eq.s32.totalorder %s13, 0
    %p188 = por %p186, %p187
    %p189 = scmp.ne.s32.totalorder %s181, %s183
    %p190 = scmp.eq.s32.totalorder %s18, 1
    %p191 = por %p189, %p190
    %p192 = scmp.ne.s32.totalorder %s183, %s184
    %p193 = scmp.eq.s32.totalorder %s18, 0
    %p194 = por %p192, %p193
    %p195 = scmp.ne.s32.totalorder %s183, %s184
    %p196 = scmp.eq.s32.totalorder %s19, 1
    %p197 = por %p195, %p196
    %p199 = scmp.ne.s32.totalorder %s184, %s198
    %p200 = scmp.eq.s32.totalorder %s19, 0
    %p201 = por %p199, %p200
    %s202 = ssub.s32 %s20, %s32
    %s203 = ssub.s32 %s21, %s28
    %s204 = sor.u32 %s202, %s203
    %p205 = scmp.eq.s32.totalorder %s204, 0
    %s207 = sadd.s32 %s206, 1
    %s208 = scalar_select %p205, %s206, %s207
    %p211 = pneg %p205
    %p212 = scmp.eq.s32.totalorder %s13, 1
    %p213 = por %p211, %p212
    %p214 = scmp.ne.s32.totalorder %s206, %s209
    %p215 = scmp.eq.s32.totalorder %s13, 0
    %p216 = por %p214, %p215
    %p217 = scmp.ne.s32.totalorder %s206, %s209
    %p218 = scmp.eq.s32.totalorder %s18, 1
    %p219 = por %p217, %p218
    %p220 = scmp.ne.s32.totalorder %s209, %s210
    %p221 = scmp.eq.s32.totalorder %s18, 0
    %p222 = por %p220, %p221
    %p223 = scmp.ne.s32.totalorder %s209, %s210
    %p224 = scmp.eq.s32.totalorder %s19, 1
    %p225 = por %p223, %p224
    %p227 = scmp.ne.s32.totalorder %s210, %s226
    %p228 = scmp.eq.s32.totalorder %s19, 0
    %p229 = por %p227, %p228
    %p230 = scmp.le.s32.totalorder 1, %s13
    %p231 = scmp.lt.s32.totalorder %s13, 3
    %p232 = pnand %p230, %p231
    %p233 = pneg %p232
    // Predicated region
    $region9: #{_lambda_.8} parent=5 // pred_check
      _
    $region10: #{_lambda_.8} parent=5 // pred_check_branch
      %235 = sbr.rel (%p232) target = $region12
    $region11: #{_lambda_.8} parent=5 // pred_region
      %s236 = ssub.s32 %s13, 1
      // Predicated region
      $region13: #{_lambda_.8} parent=11 // pred_check
        %p237 = pneg %p152
      $region14: #{_lambda_.8} parent=11 // pred_check_branch
        %239 = sbr.rel (%p237) target = $region16
      $region15: #{_lambda_.8} parent=11 // pred_region
        _
      $region16: #{_lambda_.8} parent=11 // pred_fallthru
        _
      // Predicated region
      $region17: #{_lambda_.8} parent=11 // pred_check
        %p240 = pneg %p173
      $region18: #{_lambda_.8} parent=11 // pred_check_branch
        %242 = sbr.rel (%p240) target = $region20
      $region19: #{_lambda_.8} parent=11 // pred_region
        _
      $region20: #{_lambda_.8} parent=11 // pred_fallthru
        _
      // Predicated region
      $region21: #{_lambda_.8} parent=11 // pred_check
        %p243 = pneg %p194
      $region22: #{_lambda_.8} parent=11 // pred_check_branch
        %245 = sbr.rel (%p243) target = $region24
      $region23: #{_lambda_.8} parent=11 // pred_region
        _
      $region24: #{_lambda_.8} parent=11 // pred_fallthru
        _
    $region12: #{_lambda_.8} parent=5 // pred_fallthru
      _
    %p246 = scmp.lt.s32.totalorder %s13, 2
    // Predicated region
    $region25: #{_lambda_.8} parent=5 // pred_check
      %p247 = pneg %p246
    $region26: #{_lambda_.8} parent=5 // pred_check_branch
      %249 = sbr.rel (%p247) target = $region28
    $region27: #{_lambda_.8} parent=5 // pred_region
      // Predicated region
      $region29: #{_lambda_.8} parent=27 // pred_check
        %p250 = pneg %p47
      $region30: #{_lambda_.8} parent=27 // pred_check_branch
        %252 = sbr.rel (%p250) target = $region32
      $region31: #{_lambda_.8} parent=27 // pred_region
        %s253 = smul.u32 2, %s21
        %p254 = scmp.lt.s32.totalorder %s20, 1
        %s255 = scalar_select %p254, %s20, 1
        %p256 = scmp.lt.s32.totalorder %s253, 1
        %s257 = scalar_select %p256, %s253, 1
        %s258 = smul.addr %s255, 2
        %s259 = sadd.s32 %s257, %s258
        %s260 = smul.addr %s259, 8
        %s261 = scalar_lea.vmem %s0, %s260
        %s262 = smul.u32 2, %s21
      $region32: #{_lambda_.8} parent=27 // pred_fallthru
        _
      // Predicated region
      $region33: #{_lambda_.8} parent=27 // pred_check
        %p263 = pneg %p73
      $region34: #{_lambda_.8} parent=27 // pred_check_branch
        %265 = sbr.rel (%p263) target = $region36
      $region35: #{_lambda_.8} parent=27 // pred_region
        %p266 = scmp.lt.s32.totalorder %s20, 1
        %s267 = scalar_select %p266, %s20, 1
        %s268 = smul.addr %s267, 16
        %s269 = smul.addr %s268, 8
        %s270 = scalar_lea.vmem %s1, %s269
      $region36: #{_lambda_.8} parent=27 // pred_fallthru
        _
      // Predicated region
      $region37: #{_lambda_.8} parent=27 // pred_check
        %p271 = pneg %p99
      $region38: #{_lambda_.8} parent=27 // pred_check_branch
        %273 = sbr.rel (%p271) target = $region40
      $region39: #{_lambda_.8} parent=27 // pred_region
        %p274 = scmp.lt.s32.totalorder %s20, 1
        %s275 = scalar_select %p274, %s20, 1
        %s276 = smul.addr %s275, 2
        %s277 = smul.addr %s276, 8
        %s278 = scalar_lea.vmem %s2, %s277
      $region40: #{_lambda_.8} parent=27 // pred_fallthru
        _
      // Predicated region
      $region41: #{_lambda_.8} parent=27 // pred_check
        %p279 = pneg %p125
      $region42: #{_lambda_.8} parent=27 // pred_check_branch
        %281 = sbr.rel (%p279) target = $region44
      $region43: #{_lambda_.8} parent=27 // pred_region
        %p282 = scmp.lt.s32.totalorder %s20, 1
        %s283 = scalar_select %p282, %s20, 1
        %s284 = scalar_lea.vmem %s3, %s283
      $region44: #{_lambda_.8} parent=27 // pred_fallthru
        _
    $region28: #{_lambda_.8} parent=5 // pred_fallthru
      _
    %p285 = scmp.le.s32.totalorder 1, %s13
    %p286 = scmp.lt.s32.totalorder %s13, 3
    %p287 = pnand %p285, %p286
    %p288 = pneg %p287
    // Predicated region
    $region45: #{_lambda_.8} parent=5 // pred_check
      _
    $region46: #{_lambda_.8} parent=5 // pred_check_branch
      %290 = sbr.rel (%p287) target = $region48
    $region47: #{_lambda_.8} parent=5 // pred_region
      %s291 = ssub.s32 %s13, 1
      %s292 = smul.u32 2, %s23
      %p293 = scmp.lt.s32.totalorder %s22, 1
      %s294 = scalar_select %p293, %s22, 1
      %p295 = scmp.lt.s32.totalorder %s292, 1
      %s296 = scalar_select %p295, %s292, 1
      %s297 = smul.addr %s294, 2
      %s298 = sadd.s32 %s296, %s297
      %s299 = smul.addr %s298, 8
      %s300 = scalar_lea.vmem %s0, %s299
      %p301 = pneg %p53
      %p302 = pneg %p50
      %p303 = scmp.lt.s32.totalorder %s22, 1
      %s304 = scalar_select %p303, %s22, 1
      %s305 = smul.addr %s304, 16
      %s306 = smul.addr %s305, 8
      %s307 = scalar_lea.vmem %s1, %s306
      %p308 = pneg %p79
      %p309 = pneg %p76
      %p310 = scmp.lt.s32.totalorder %s22, 1
      %s311 = scalar_select %p310, %s22, 1
      %s312 = smul.addr %s311, 2
      %s313 = smul.addr %s312, 8
      %s314 = scalar_lea.vmem %s2, %s313
      %p315 = pneg %p105
      %p316 = pneg %p102
      %p317 = scmp.lt.s32.totalorder %s22, 1
      %s318 = scalar_select %p317, %s22, 1
      %s319 = scalar_lea.vmem %s3, %s318
      %p320 = pneg %p131
      %p321 = pneg %p128
      %p322 = pneg %p152
      %p323 = pneg %p149
      %p324 = pneg %p173
      %p325 = pneg %p170
      %p326 = pneg %p194
      %p327 = pneg %p191
      %p328 = pneg %p222
      %p329 = pneg %p219
      %s330 = smul.u32 2, %s23
      %p331 = scmp.lt.s32.totalorder %s22, 1
      %s332 = scalar_select %p331, %s22, 1
      %p333 = scmp.lt.s32.totalorder %s330, 1
      %s334 = scalar_select %p333, %s330, 1
      %s335 = smul.addr %s334, 2
      %s336 = smul.addr %s332, 4
      %s337 = sadd.s32 %s335, %s336
      %s338 = smul.addr %s337, 8
      %s339 = scalar_lea.vmem %s7, %s338
      %s340 = smul.u32 2, %s23
      %p341 = scmp.lt.s32.totalorder %s22, 1
      %s342 = scalar_select %p341, %s22, 1
      %p343 = scmp.lt.s32.totalorder %s340, 1
      %s344 = scalar_select %p343, %s340, 1
      %s345 = smul.addr %s342, 2
      %s346 = sadd.s32 %s344, %s345
      %s347 = smul.addr %s346, 8
      %s348 = scalar_lea.vmem %s0, %s347
      %s349 = smul.u32 2, %s23
      %p350 = scmp.lt.s32.totalorder %s22, 1
      %s351 = scalar_select %p350, %s22, 1
      %s352 = smul.addr %s351, 16
      %s353 = smul.addr %s352, 8
      %s354 = scalar_lea.vmem %s1, %s353
      %p355 = scmp.lt.s32.totalorder %s22, 1
      %s356 = scalar_select %p355, %s22, 1
      %s357 = smul.addr %s356, 2
      %s358 = smul.addr %s357, 8
      %s359 = scalar_lea.vmem %s2, %s358
      %p360 = scmp.lt.s32.totalorder %s22, 1
      %s361 = scalar_select %p360, %s22, 1
      %s362 = scalar_lea.vmem %s3, %s361
      %s363 = smul.u32 2, %s23
      %p364 = scmp.lt.s32.totalorder %s22, 1
      %s365 = scalar_select %p364, %s22, 1
      %p366 = scmp.lt.s32.totalorder %s363, 1
      %s367 = scalar_select %p366, %s363, 1
      %s368 = smul.addr %s367, 2
      %s369 = smul.addr %s365, 4
      %s370 = sadd.s32 %s368, %s369
      %s371 = smul.addr %s370, 8
      %s372 = scalar_lea.vmem %s7, %s371
      %s373 = smul.u32 2, %s23
      %v374 = vld [vmem:[%s348] sm:$0xff]
      %v375 = vld [vmem:[%s348 + $0x8] sm:$0xff]
      %v376 = vld [vmem:[%s354] sm:$0xff]
      %v377 = vld [vmem:[%s354 + $0x8] sm:$0xff]
      %v378 = vld [vmem:[%s354 + $0x10] sm:$0xff]
      %v379 = vld [vmem:[%s354 + $0x18] sm:$0xff]
      %v380 = vld [vmem:[%s354 + $0x20] sm:$0xff]
      %v381 = vld [vmem:[%s354 + $0x28] sm:$0xff]
      %v382 = vld [vmem:[%s354 + $0x30] sm:$0xff]
      %v383 = vld [vmem:[%s354 + $0x38] sm:$0xff]
      %v384 = vld [vmem:[%s354 + $0x40] sm:$0xff]
      %v385 = vld [vmem:[%s354 + $0x48] sm:$0xff]
      %v386 = vld [vmem:[%s354 + $0x50] sm:$0xff]
      %v387 = vld [vmem:[%s354 + $0x58] sm:$0xff]
      %v388 = vld [vmem:[%s354 + $0x60] sm:$0xff]
      %v389 = vld [vmem:[%s354 + $0x68] sm:$0xff]
      %v390 = vld [vmem:[%s354 + $0x70] sm:$0xff]
      %v391 = vld [vmem:[%s354 + $0x78] sm:$0xff]
      %v392 = vld [vmem:[%s359] sm:$0xff]
      %v393 = vld [vmem:[%s359 + $0x8] sm:$0xff]
      %394 = vmatprep.subr.mxu0 0.0
      %395 = vmatpush1.msra.mxu0 %v376
      %396 = vmatprep.subr.mxu0 0.0
      %397 = vmatpush1.msra.mxu0 %v377
      %398 = vmatprep.subr.mxu0 0.0
      %399 = vmatpush1.msra.mxu0 %v378
      %400 = vmatprep.subr.mxu0 0.0
      %401 = vmatpush1.msra.mxu0 %v379
      %402 = vmatprep.subr.mxu0 0.0
      %403 = vmatpush1.msra.mxu0 %v380
      %404 = vmatprep.subr.mxu0 0.0
      %405 = vmatpush1.msra.mxu0 %v381
      %406 = vmatprep.subr.mxu0 0.0
      %407 = vmatpush1.msra.mxu0 %v382
      %408 = vmatprep.subr.mxu0 0.0
      %409 = vmatpush1.msra.mxu0 %v383
      %410 = vmatprep.subr.mxu0 0.0
      %411 = vmatpush1.msra.mxu0 %v384
      %412 = vmatprep.subr.mxu0 0.0
      %413 = vmatpush1.msra.mxu0 %v385
      %414 = vmatprep.subr.mxu0 0.0
      %415 = vmatpush1.msra.mxu0 %v386
      %416 = vmatprep.subr.mxu0 0.0
      %417 = vmatpush1.msra.mxu0 %v387
      %418 = vmatprep.subr.mxu0 0.0
      %419 = vmatpush1.msra.mxu0 %v388
      %420 = vmatprep.subr.mxu0 0.0
      %421 = vmatpush1.msra.mxu0 %v389
      %422 = vmatprep.subr.mxu0 0.0
      %423 = vmatpush1.msra.mxu0 %v390
      %424 = vmatprep.subr.mxu0 0.0
      %425 = vmatpush1.msra.mxu0 %v391
      %426 = vmatprep.subr.mxu0 0.0
      %427 = vmatpush1.msra.mxu0 0.0
      %428 = vmatprep.subr.mxu0 0.0
      %429 = vmatpush1.msra.mxu0 0.0
      %430 = vmatprep.subr.mxu0 0.0
      %431 = vmatpush1.msra.mxu0 0.0
      %432 = vmatprep.subr.mxu0 0.0
      %433 = vmatpush1.msra.mxu0 0.0
      %434 = vmatprep.subr.mxu0 0.0
      %435 = vmatpush1.msra.mxu0 0.0
      %436 = vmatprep.subr.mxu0 0.0
      %437 = vmatpush1.msra.mxu0 0.0
      %438 = vmatprep.subr.mxu0 0.0
      %439 = vmatpush1.msra.mxu0 0.0
      %440 = vmatprep.subr.mxu0 0.0
      %441 = vmatpush1.msra.mxu0 0.0
      %442 = vmatprep.subr.mxu0 0.0
      %443 = vmatpush1.msra.mxu0 0.0
      %444 = vmatprep.subr.mxu0 0.0
      %445 = vmatpush1.msra.mxu0 0.0
      %446 = vmatprep.subr.mxu0 0.0
      %447 = vmatpush1.msra.mxu0 0.0
      %448 = vmatprep.subr.mxu0 0.0
      %449 = vmatpush1.msra.mxu0 0.0
      %450 = vmatprep.subr.mxu0 0.0
      %451 = vmatpush1.msra.mxu0 0.0
      %452 = vmatprep.subr.mxu0 0.0
      %453 = vmatpush1.msra.mxu0 0.0
      %454 = vmatprep.subr.mxu0 0.0
      %455 = vmatpush1.msra.mxu0 0.0
      %456 = vmatprep.subr.mxu0 0.0
      %457 = vmatpush1.msra.mxu0 0.0
      %458 = vmatprep.mubr.f32.mxu0 0.0
      %459 = vmatmul.mubr.f32.gmra.mrb[0].mxu0 %v374
      %v460 = vpop.f32.mrb[0].mxu0
      %v461 = vadd.f32 0.0, %v460
      %v462 = vpop.f32.mrb[0].mxu0
      %463 = vmatprep.mubr.f32.mxu0 0.0
      %464 = vmatmul.mubr.f32.gmra.mrb[0].mxu0 %v375
      %v465 = vpop.f32.mrb[0].mxu0
      %v466 = vadd.f32 0.0, %v465
      %v467 = vpop.f32.mrb[0].mxu0
      %468 = vdwg.mxu0
      %v469 = vmul.f32 %v461, 2.0
      %v470 = vmul.f32 %v466, 2.0
      %v471 = vld [vmem:[%s362] sm:$0x1]
      %v473 = vlaneseq
      %v474 = vshrl.u32 %v473, 7
      %v475 = vsub.s32 0, %v474
      %v476 = vrot.slane %v471, %v475
      %v478 = vsub.f32 %v469, %v476
      %v479 = vsub.f32 %v470, %v476
      %v480 = vld [vmem:[%s4] sm:$0xff]
      %v481 = vld [vmem:[%s4 + $0x8] sm:$0xff]
      %v482 = vld [vmem:[%s4 + $0x10] sm:$0xff]
      %v483 = vld [vmem:[%s4 + $0x18] sm:$0xff]
      %v484 = vld [vmem:[%s4 + $0x20] sm:$0xff]
      %v485 = vld [vmem:[%s4 + $0x28] sm:$0xff]
      %v486 = vld [vmem:[%s4 + $0x30] sm:$0xff]
      %v487 = vld [vmem:[%s4 + $0x38] sm:$0xff]
      %v488 = vld [vmem:[%s4 + $0x40] sm:$0xff]
      %v489 = vld [vmem:[%s4 + $0x48] sm:$0xff]
      %v490 = vld [vmem:[%s4 + $0x50] sm:$0xff]
      %v491 = vld [vmem:[%s4 + $0x58] sm:$0xff]
      %v492 = vld [vmem:[%s4 + $0x60] sm:$0xff]
      %v493 = vld [vmem:[%s4 + $0x68] sm:$0xff]
      %v494 = vld [vmem:[%s4 + $0x70] sm:$0xff]
      %v495 = vld [vmem:[%s4 + $0x78] sm:$0xff]
      %v496 = vld [vmem:[%s4 + $0x80] sm:$0xff]
      %v497 = vld [vmem:[%s4 + $0x88] sm:$0xff]
      %v498 = vld [vmem:[%s4 + $0x90] sm:$0xff]
      %v499 = vld [vmem:[%s4 + $0x98] sm:$0xff]
      %v500 = vld [vmem:[%s4 + $0xa0] sm:$0xff]
      %v501 = vld [vmem:[%s4 + $0xa8] sm:$0xff]
      %v502 = vld [vmem:[%s4 + $0xb0] sm:$0xff]
      %v503 = vld [vmem:[%s4 + $0xb8] sm:$0xff]
      %v504 = vld [vmem:[%s4 + $0xc0] sm:$0xff]
      %v505 = vld [vmem:[%s4 + $0xc8] sm:$0xff]
      %v506 = vld [vmem:[%s4 + $0xd0] sm:$0xff]
      %v507 = vld [vmem:[%s4 + $0xd8] sm:$0xff]
      %v508 = vld [vmem:[%s4 + $0xe0] sm:$0xff]
      %v509 = vld [vmem:[%s4 + $0xe8] sm:$0xff]
      %v510 = vld [vmem:[%s4 + $0xf0] sm:$0xff]
      %v511 = vld [vmem:[%s4 + $0xf8] sm:$0xff]
      %512 = vmatprep.subr.mxu0 %v481
      %513 = vmatpush1.msra.mxu0 %v480
      %514 = vmatprep.subr.mxu0 %v483
      %515 = vmatpush1.msra.mxu0 %v482
      %516 = vmatprep.subr.mxu0 %v485
      %517 = vmatpush1.msra.mxu0 %v484
      %518 = vmatprep.subr.mxu0 %v487
      %519 = vmatpush1.msra.mxu0 %v486
      %520 = vmatprep.subr.mxu0 %v489
      %521 = vmatpush1.msra.mxu0 %v488
      %522 = vmatprep.subr.mxu0 %v491
      %523 = vmatpush1.msra.mxu0 %v490
      %524 = vmatprep.subr.mxu0 %v493
      %525 = vmatpush1.msra.mxu0 %v492
      %526 = vmatprep.subr.mxu0 %v495
      %527 = vmatpush1.msra.mxu0 %v494
      %528 = vmatprep.subr.mxu0 %v497
      %529 = vmatpush1.msra.mxu0 %v496
      %530 = vmatprep.subr.mxu0 %v499
      %531 = vmatpush1.msra.mxu0 %v498
      %532 = vmatprep.subr.mxu0 %v501
      %533 = vmatpush1.msra.mxu0 %v500
      %534 = vmatprep.subr.mxu0 %v503
      %535 = vmatpush1.msra.mxu0 %v502
      %536 = vmatprep.subr.mxu0 %v505
      %537 = vmatpush1.msra.mxu0 %v504
      %538 = vmatprep.subr.mxu0 %v507
      %539 = vmatpush1.msra.mxu0 %v506
      %540 = vmatprep.subr.mxu0 %v509
      %541 = vmatpush1.msra.mxu0 %v508
      %542 = vmatprep.subr.mxu0 %v511
      %543 = vmatpush1.msra.mxu0 %v510
      %544 = vmatprep.subr.mxu0 0.0
      %545 = vmatpush1.msra.mxu0 0.0
      %546 = vmatprep.subr.mxu0 0.0
      %547 = vmatpush1.msra.mxu0 0.0
      %548 = vmatprep.subr.mxu0 0.0
      %549 = vmatpush1.msra.mxu0 0.0
      %550 = vmatprep.subr.mxu0 0.0
      %551 = vmatpush1.msra.mxu0 0.0
      %552 = vmatprep.subr.mxu0 0.0
      %553 = vmatpush1.msra.mxu0 0.0
      %554 = vmatprep.subr.mxu0 0.0
      %555 = vmatpush1.msra.mxu0 0.0
      %556 = vmatprep.subr.mxu0 0.0
      %557 = vmatpush1.msra.mxu0 0.0
      %558 = vmatprep.subr.mxu0 0.0
      %559 = vmatpush1.msra.mxu0 0.0
      %560 = vmatprep.subr.mxu0 0.0
      %561 = vmatpush1.msra.mxu0 0.0
      %562 = vmatprep.subr.mxu0 0.0
      %563 = vmatpush1.msra.mxu0 0.0
      %564 = vmatprep.subr.mxu0 0.0
      %565 = vmatpush1.msra.mxu0 0.0
      %566 = vmatprep.subr.mxu0 0.0
      %567 = vmatpush1.msra.mxu0 0.0
      %568 = vmatprep.subr.mxu0 0.0
      %569 = vmatpush1.msra.mxu0 0.0
      %570 = vmatprep.subr.mxu0 0.0
      %571 = vmatpush1.msra.mxu0 0.0
      %572 = vmatprep.subr.mxu0 0.0
      %573 = vmatpush1.msra.mxu0 0.0
      %574 = vmatprep.subr.mxu0 0.0
      %575 = vmatpush1.msra.mxu0 0.0
      %576 = vmatprep.mubr.f32.mxu0 0.0
      %577 = vmatmul.mubr.f32.gmra.mrb[0].mxu0 %v392
      %v578 = vpop.f32.mrb[0].mxu0
      %v579 = vadd.f32 0.0, %v578
      %v580 = vpop.f32.mrb[0].mxu0
      %v581 = vadd.f32 0.0, %v580
      %582 = vmatprep.mubr.f32.mxu0 0.0
      %583 = vmatmul.mubr.f32.gmra.mrb[0].mxu0 %v393
      %v584 = vpop.f32.mrb[0].mxu0
      %v585 = vadd.f32 0.0, %v584
      %v586 = vpop.f32.mrb[0].mxu0
      %v587 = vadd.f32 0.0, %v586
      %588 = vdwg.mxu0
      %v589 = vld [vmem:[%s5] sm:$0xff]
      %v590 = vld [vmem:[%s5 + $0x8] sm:$0xff]
      %v591 = vld [vmem:[%s5 + $0x10] sm:$0xff]
      %v592 = vld [vmem:[%s5 + $0x18] sm:$0xff]
      %v593 = vld [vmem:[%s5 + $0x20] sm:$0xff]
      %v594 = vld [vmem:[%s5 + $0x28] sm:$0xff]
      %v595 = vld [vmem:[%s5 + $0x30] sm:$0xff]
      %v596 = vld [vmem:[%s5 + $0x38] sm:$0xff]
      %v597 = vld [vmem:[%s5 + $0x40] sm:$0xff]
      %v598 = vld [vmem:[%s5 + $0x48] sm:$0xff]
      %v599 = vld [vmem:[%s5 + $0x50] sm:$0xff]
      %v600 = vld [vmem:[%s5 + $0x58] sm:$0xff]
      %v601 = vld [vmem:[%s5 + $0x60] sm:$0xff]
      %v602 = vld [vmem:[%s5 + $0x68] sm:$0xff]
      %v603 = vld [vmem:[%s5 + $0x70] sm:$0xff]
      %v604 = vld [vmem:[%s5 + $0x78] sm:$0xff]
      %v605 = vld [vmem:[%s5 + $0x80] sm:$0xff]
      %v606 = vld [vmem:[%s5 + $0x88] sm:$0xff]
      %v607 = vld [vmem:[%s5 + $0x90] sm:$0xff]
      %v608 = vld [vmem:[%s5 + $0x98] sm:$0xff]
      %v609 = vld [vmem:[%s5 + $0xa0] sm:$0xff]
      %v610 = vld [vmem:[%s5 + $0xa8] sm:$0xff]
      %v611 = vld [vmem:[%s5 + $0xb0] sm:$0xff]
      %v612 = vld [vmem:[%s5 + $0xb8] sm:$0xff]
      %v613 = vld [vmem:[%s5 + $0xc0] sm:$0xff]
      %v614 = vld [vmem:[%s5 + $0xc8] sm:$0xff]
      %v615 = vld [vmem:[%s5 + $0xd0] sm:$0xff]
      %v616 = vld [vmem:[%s5 + $0xd8] sm:$0xff]
      %v617 = vld [vmem:[%s5 + $0xe0] sm:$0xff]
      %v618 = vld [vmem:[%s5 + $0xe8] sm:$0xff]
      %v619 = vld [vmem:[%s5 + $0xf0] sm:$0xff]
      %v620 = vld [vmem:[%s5 + $0xf8] sm:$0xff]
      %v621 = vld [vmem:[%s6] sm:$0x3]
      %v623 = vlaneseq
      %v624 = vshrl.u32 %v623, 7
      %v625 = vsub.s32 0, %v624
      %v626 = vrot.slane %v621, %v625
      %v627 = vlaneseq
      %v628 = vshrl.u32 %v627, 7
      %v629 = vsub.s32 1, %v628
      %v630 = vrot.slane %v621, %v629
      %633 = vmatprep.subr.mxu0 %v590
      %634 = vmatpush1.msra.mxu0 %v589
      %635 = vmatprep.subr.mxu0 %v592
      %636 = vmatpush1.msra.mxu0 %v591
      %637 = vmatprep.subr.mxu0 %v594
      %638 = vmatpush1.msra.mxu0 %v593
      %639 = vmatprep.subr.mxu0 %v596
      %640 = vmatpush1.msra.mxu0 %v595
      %641 = vmatprep.subr.mxu0 %v598
      %642 = vmatpush1.msra.mxu0 %v597
      %643 = vmatprep.subr.mxu0 %v600
      %644 = vmatpush1.msra.mxu0 %v599
      %645 = vmatprep.subr.mxu0 %v602
      %646 = vmatpush1.msra.mxu0 %v601
      %647 = vmatprep.subr.mxu0 %v604
      %648 = vmatpush1.msra.mxu0 %v603
      %649 = vmatprep.subr.mxu0 %v606
      %650 = vmatpush1.msra.mxu0 %v605
      %651 = vmatprep.subr.mxu0 %v608
      %652 = vmatpush1.msra.mxu0 %v607
      %653 = vmatprep.subr.mxu0 %v610
      %654 = vmatpush1.msra.mxu0 %v609
      %655 = vmatprep.subr.mxu0 %v612
      %656 = vmatpush1.msra.mxu0 %v611
      %657 = vmatprep.subr.mxu0 %v614
      %658 = vmatpush1.msra.mxu0 %v613
      %659 = vmatprep.subr.mxu0 %v616
      %660 = vmatpush1.msra.mxu0 %v615
      %661 = vmatprep.subr.mxu0 %v618
      %662 = vmatpush1.msra.mxu0 %v617
      %663 = vmatprep.subr.mxu0 %v620
      %664 = vmatpush1.msra.mxu0 %v619
      %665 = vmatprep.subr.mxu0 0.0
      %666 = vmatpush1.msra.mxu0 0.0
      %667 = vmatprep.subr.mxu0 0.0
      %668 = vmatpush1.msra.mxu0 0.0
      %669 = vmatprep.subr.mxu0 0.0
      %670 = vmatpush1.msra.mxu0 0.0
      %671 = vmatprep.subr.mxu0 0.0
      %672 = vmatpush1.msra.mxu0 0.0
      %673 = vmatprep.subr.mxu0 0.0
      %674 = vmatpush1.msra.mxu0 0.0
      %675 = vmatprep.subr.mxu0 0.0
      %676 = vmatpush1.msra.mxu0 0.0
      %677 = vmatprep.subr.mxu0 0.0
      %678 = vmatpush1.msra.mxu0 0.0
      %679 = vmatprep.subr.mxu0 0.0
      %680 = vmatpush1.msra.mxu0 0.0
      %681 = vmatprep.subr.mxu0 0.0
      %682 = vmatpush1.msra.mxu0 0.0
      %683 = vmatprep.subr.mxu0 0.0
      %684 = vmatpush1.msra.mxu0 0.0
      %685 = vmatprep.subr.mxu0 0.0
      %686 = vmatpush1.msra.mxu0 0.0
      %687 = vmatprep.subr.mxu0 0.0
      %688 = vmatpush1.msra.mxu0 0.0
      %689 = vmatprep.subr.mxu0 0.0
      %690 = vmatpush1.msra.mxu0 0.0
      %691 = vmatprep.subr.mxu0 0.0
      %692 = vmatpush1.msra.mxu0 0.0
      %693 = vmatprep.subr.mxu0 0.0
      %694 = vmatpush1.msra.mxu0 0.0
      %695 = vmatprep.subr.mxu0 0.0
      %696 = vmatpush1.msra.mxu0 0.0
      %697 = vmatprep.mubr.f32.mxu0 0.0
      %698 = vmatmul.mubr.f32.gmra.mrb[0].mxu0 %v374
      %v699 = vpop.f32.mrb[0].mxu0
      %v700 = vadd.f32 %v626, %v699
      %v701 = vpop.f32.mrb[0].mxu0
      %v702 = vadd.f32 %v630, %v701
      %703 = vmatprep.mubr.f32.mxu0 0.0
      %704 = vmatmul.mubr.f32.gmra.mrb[0].mxu0 %v375
      %v705 = vpop.f32.mrb[0].mxu0
      %v706 = vadd.f32 %v626, %v705
      %v707 = vpop.f32.mrb[0].mxu0
      %v708 = vadd.f32 %v630, %v707
      %709 = vdwg.mxu0
      %v710 = vlaneseq
      %v711 = vand.u32 %v710, 127
      %v712 = vcvt.s32.f32 %v711
      %vm713 = vcmask 130048
      %v714 = vsel %vm713, %v478, -inf
      %715 = vmax.xlane.f32.xlu0 %v714
      %v716 = vpop.xlane.xlu0 %715
      %v717 = vsel %vm713, %v479, -inf
      %718 = vmax.xlane.f32.xlu0 %v717
      %v719 = vpop.xlane.xlu0 %718
      %vm720 = vcmp.eq.f32.partialorder %v478, %v716
      %vm721 = vcmp.eq.f32.partialorder %v479, %v719
      %v722 = vsel %vm720, %v712, 16.0
      %v723 = vsel %vm721, %v712, 16.0
      %v724 = vsel %vm713, %v722, inf
      %725 = vmin.xlane.f32.xlu0 %v724
      %v726 = vpop.xlane.xlu0 %725
      %v727 = vsel %vm713, %v723, inf
      %728 = vmin.xlane.f32.xlu0 %v727
      %v729 = vpop.xlane.xlu0 %728
      %vm730 = vcmp.eq.f32.partialorder %v712, %v726
      %vm731 = vcmp.eq.f32.partialorder %v712, %v729
      %v732 = vsel %vm730, 1, 0
      %v733 = vsel %vm731, 1, 0
      %v734 = vcvt.s32.f32 %v732
      %v735 = vcvt.s32.f32 %v733
      %v737 = vsel %vm713, %v734, 0
      %v740 = vsel %vm713, %v735, 0
      %742 = vmatprep.subr.mxu0 %v581
      %743 = vmatpush1.msra.mxu0 %v579
      %744 = vmatprep.subr.mxu0 %v587
      %745 = vmatpush1.msra.mxu0 %v585
      %746 = vmatprep.subr.mxu0 0.0
      %747 = vmatpush1.msra.mxu0 0.0
      %748 = vmatprep.subr.mxu0 0.0
      %749 = vmatpush1.msra.mxu0 0.0
      %750 = vmatprep.subr.mxu0 0.0
      %751 = vmatpush1.msra.mxu0 0.0
      %752 = vmatprep.subr.mxu0 0.0
      %753 = vmatpush1.msra.mxu0 0.0
      %754 = vmatprep.subr.mxu0 0.0
      %755 = vmatpush1.msra.mxu0 0.0
      %756 = vmatprep.subr.mxu0 0.0
      %757 = vmatpush1.msra.mxu0 0.0
      %758 = vmatprep.subr.mxu0 0.0
      %759 = vmatpush1.msra.mxu0 0.0
      %760 = vmatprep.subr.mxu0 0.0
      %761 = vmatpush1.msra.mxu0 0.0
      %762 = vmatprep.subr.mxu0 0.0
      %763 = vmatpush1.msra.mxu0 0.0
      %764 = vmatprep.subr.mxu0 0.0
      %765 = vmatpush1.msra.mxu0 0.0
      %766 = vmatprep.subr.mxu0 0.0
      %767 = vmatpush1.msra.mxu0 0.0
      %768 = vmatprep.subr.mxu0 0.0
      %769 = vmatpush1.msra.mxu0 0.0
      %770 = vmatprep.subr.mxu0 0.0
      %771 = vmatpush1.msra.mxu0 0.0
      %772 = vmatprep.subr.mxu0 0.0
      %773 = vmatpush1.msra.mxu0 0.0
      %774 = vmatprep.subr.mxu0 0.0
      %775 = vmatpush1.msra.mxu0 0.0
      %776 = vmatprep.subr.mxu0 0.0
      %777 = vmatpush1.msra.mxu0 0.0
      %778 = vmatprep.subr.mxu0 0.0
      %779 = vmatpush1.msra.mxu0 0.0
      %780 = vmatprep.subr.mxu0 0.0
      %781 = vmatpush1.msra.mxu0 0.0
      %782 = vmatprep.subr.mxu0 0.0
      %783 = vmatpush1.msra.mxu0 0.0
      %784 = vmatprep.subr.mxu0 0.0
      %785 = vmatpush1.msra.mxu0 0.0
      %786 = vmatprep.subr.mxu0 0.0
      %787 = vmatpush1.msra.mxu0 0.0
      %788 = vmatprep.subr.mxu0 0.0
      %789 = vmatpush1.msra.mxu0 0.0
      %790 = vmatprep.subr.mxu0 0.0
      %791 = vmatpush1.msra.mxu0 0.0
      %792 = vmatprep.subr.mxu0 0.0
      %793 = vmatpush1.msra.mxu0 0.0
      %794 = vmatprep.subr.mxu0 0.0
      %795 = vmatpush1.msra.mxu0 0.0
      %796 = vmatprep.subr.mxu0 0.0
      %797 = vmatpush1.msra.mxu0 0.0
      %798 = vmatprep.subr.mxu0 0.0
      %799 = vmatpush1.msra.mxu0 0.0
      %800 = vmatprep.subr.mxu0 0.0
      %801 = vmatpush1.msra.mxu0 0.0
      %802 = vmatprep.subr.mxu0 0.0
      %803 = vmatpush1.msra.mxu0 0.0
      %804 = vmatprep.subr.mxu0 0.0
      %805 = vmatpush1.msra.mxu0 0.0
      %806 = vmatprep.mubr.f32.mxu0 0.0
      %807 = vmatmul.mubr.f32.gmra.mrb[0].mxu0 %v737
      %v808 = vpop.f32.mrb[0].mxu0
      %v809 = vadd.f32 0.0, %v808
      %v810 = vpop.f32.mrb[0].mxu0
      %v811 = vadd.f32 0.0, %v810
      %812 = vmatprep.mubr.f32.mxu0 0.0
      %813 = vmatmul.mubr.f32.gmra.mrb[0].mxu0 %v740
      %v814 = vpop.f32.mrb[0].mxu0
      %v815 = vadd.f32 0.0, %v814
      %v816 = vpop.f32.mrb[0].mxu0
      %v817 = vadd.f32 0.0, %v816
      %818 = vdwg.mxu0
      %v819 = vsel %vm730, -inf, %v478
      %v820 = vsel %vm731, -inf, %v479
      %v821 = vsel %vm713, %v819, -inf
      %822 = vmax.xlane.f32.xlu0 %v821
      %v823 = vpop.xlane.xlu0 %822
      %v824 = vsel %vm713, %v820, -inf
      %825 = vmax.xlane.f32.xlu0 %v824
      %v826 = vpop.xlane.xlu0 %825
      %vm827 = vcmp.eq.f32.partialorder %v819, %v823
      %vm828 = vcmp.eq.f32.partialorder %v820, %v826
      %v829 = vsel %vm827, %v712, 16.0
      %v830 = vsel %vm828, %v712, 16.0
      %v831 = vsel %vm713, %v829, inf
      %832 = vmin.xlane.f32.xlu0 %v831
      %v833 = vpop.xlane.xlu0 %832
      %v834 = vsel %vm713, %v830, inf
      %835 = vmin.xlane.f32.xlu0 %v834
      %v836 = vpop.xlane.xlu0 %835
      %vm837 = vcmp.eq.f32.partialorder %v712, %v833
      %vm838 = vcmp.eq.f32.partialorder %v712, %v836
      %v839 = vsel %vm837, 1, 0
      %v840 = vsel %vm838, 1, 0
      %v841 = vcvt.s32.f32 %v839
      %v842 = vcvt.s32.f32 %v840
      %v844 = vsel %vm713, %v841, 0
      %v847 = vsel %vm713, %v842, 0
      %849 = vmatprep.subr.mxu0 %v581
      %850 = vmatpush1.msra.mxu0 %v579
      %851 = vmatprep.subr.mxu0 %v587
      %852 = vmatpush1.msra.mxu0 %v585
      %853 = vmatprep.subr.mxu0 0.0
      %854 = vmatpush1.msra.mxu0 0.0
      %855 = vmatprep.subr.mxu0 0.0
      %856 = vmatpush1.msra.mxu0 0.0
      %857 = vmatprep.subr.mxu0 0.0
      %858 = vmatpush1.msra.mxu0 0.0
      %859 = vmatprep.subr.mxu0 0.0
      %860 = vmatpush1.msra.mxu0 0.0
      %861 = vmatprep.subr.mxu0 0.0
      %862 = vmatpush1.msra.mxu0 0.0
      %863 = vmatprep.subr.mxu0 0.0
      %864 = vmatpush1.msra.mxu0 0.0
      %865 = vmatprep.subr.mxu0 0.0
      %866 = vmatpush1.msra.mxu0 0.0
      %867 = vmatprep.subr.mxu0 0.0
      %868 = vmatpush1.msra.mxu0 0.0
      %869 = vmatprep.subr.mxu0 0.0
      %870 = vmatpush1.msra.mxu0 0.0
      %871 = vmatprep.subr.mxu0 0.0
      %872 = vmatpush1.msra.mxu0 0.0
      %873 = vmatprep.subr.mxu0 0.0
      %874 = vmatpush1.msra.mxu0 0.0
      %875 = vmatprep.subr.mxu0 0.0
      %876 = vmatpush1.msra.mxu0 0.0
      %877 = vmatprep.subr.mxu0 0.0
      %878 = vmatpush1.msra.mxu0 0.0
      %879 = vmatprep.subr.mxu0 0.0
      %880 = vmatpush1.msra.mxu0 0.0
      %881 = vmatprep.subr.mxu0 0.0
      %882 = vmatpush1.msra.mxu0 0.0
      %883 = vmatprep.subr.mxu0 0.0
      %884 = vmatpush1.msra.mxu0 0.0
      %885 = vmatprep.subr.mxu0 0.0
      %886 = vmatpush1.msra.mxu0 0.0
      %887 = vmatprep.subr.mxu0 0.0
      %888 = vmatpush1.msra.mxu0 0.0
      %889 = vmatprep.subr.mxu0 0.0
      %890 = vmatpush1.msra.mxu0 0.0
      %891 = vmatprep.subr.mxu0 0.0
      %892 = vmatpush1.msra.mxu0 0.0
      %893 = vmatprep.subr.mxu0 0.0
      %894 = vmatpush1.msra.mxu0 0.0
      %895 = vmatprep.subr.mxu0 0.0
      %896 = vmatpush1.msra.mxu0 0.0
      %897 = vmatprep.subr.mxu0 0.0
      %898 = vmatpush1.msra.mxu0 0.0
      %899 = vmatprep.subr.mxu0 0.0
      %900 = vmatpush1.msra.mxu0 0.0
      %901 = vmatprep.subr.mxu0 0.0
      %902 = vmatpush1.msra.mxu0 0.0
      %903 = vmatprep.subr.mxu0 0.0
      %904 = vmatpush1.msra.mxu0 0.0
      %905 = vmatprep.subr.mxu0 0.0
      %906 = vmatpush1.msra.mxu0 0.0
      %907 = vmatprep.subr.mxu0 0.0
      %908 = vmatpush1.msra.mxu0 0.0
      %909 = vmatprep.subr.mxu0 0.0
      %910 = vmatpush1.msra.mxu0 0.0
      %911 = vmatprep.subr.mxu0 0.0
      %912 = vmatpush1.msra.mxu0 0.0
      %913 = vmatprep.mubr.f32.mxu0 0.0
      %914 = vmatmul.mubr.f32.gmra.mrb[0].mxu0 %v844
      %v915 = vpop.f32.mrb[0].mxu0
      %v916 = vadd.f32 0.0, %v915
      %v917 = vpop.f32.mrb[0].mxu0
      %v918 = vadd.f32 0.0, %v917
      %919 = vmatprep.mubr.f32.mxu0 0.0
      %920 = vmatmul.mubr.f32.gmra.mrb[0].mxu0 %v847
      %v921 = vpop.f32.mrb[0].mxu0
      %v922 = vadd.f32 0.0, %v921
      %v923 = vpop.f32.mrb[0].mxu0
      %v924 = vadd.f32 0.0, %v923
      %925 = vdwg.mxu0
      %v926 = vmax.f32 %v809, %v916
      %v927 = vmax.f32 %v811, %v918
      %v928 = vmax.f32 %v815, %v922
      %v929 = vmax.f32 %v817, %v924
      %v930 = vsel %vm837, -inf, %v819
      %v931 = vsel %vm838, -inf, %v820
      %v932 = vsel %vm713, %v930, -inf
      %933 = vmax.xlane.f32.xlu0 %v932
      %v934 = vpop.xlane.xlu0 %933
      %v935 = vsel %vm713, %v931, -inf
      %936 = vmax.xlane.f32.xlu0 %v935
      %v937 = vpop.xlane.xlu0 %936
      %vm938 = vcmp.eq.f32.partialorder %v930, %v934
      %vm939 = vcmp.eq.f32.partialorder %v931, %v937
      %v940 = vsel %vm938, %v712, 16.0
      %v941 = vsel %vm939, %v712, 16.0
      %v942 = vsel %vm713, %v940, inf
      %943 = vmin.xlane.f32.xlu0 %v942
      %v944 = vpop.xlane.xlu0 %943
      %v945 = vsel %vm713, %v941, inf
      %946 = vmin.xlane.f32.xlu0 %v945
      %v947 = vpop.xlane.xlu0 %946
      %vm948 = vcmp.eq.f32.partialorder %v712, %v944
      %vm949 = vcmp.eq.f32.partialorder %v712, %v947
      %v950 = vsel %vm948, 1, 0
      %v951 = vsel %vm949, 1, 0
      %v952 = vcvt.s32.f32 %v950
      %v953 = vcvt.s32.f32 %v951
      %v955 = vsel %vm713, %v952, 0
      %v958 = vsel %vm713, %v953, 0
      %960 = vmatprep.subr.mxu0 %v581
      %961 = vmatpush1.msra.mxu0 %v579
      %962 = vmatprep.subr.mxu0 %v587
      %963 = vmatpush1.msra.mxu0 %v585
      %964 = vmatprep.subr.mxu0 0.0
      %965 = vmatpush1.msra.mxu0 0.0
      %966 = vmatprep.subr.mxu0 0.0
      %967 = vmatpush1.msra.mxu0 0.0
      %968 = vmatprep.subr.mxu0 0.0
      %969 = vmatpush1.msra.mxu0 0.0
      %970 = vmatprep.subr.mxu0 0.0
      %971 = vmatpush1.msra.mxu0 0.0
      %972 = vmatprep.subr.mxu0 0.0
      %973 = vmatpush1.msra.mxu0 0.0
      %974 = vmatprep.subr.mxu0 0.0
      %975 = vmatpush1.msra.mxu0 0.0
      %976 = vmatprep.subr.mxu0 0.0
      %977 = vmatpush1.msra.mxu0 0.0
      %978 = vmatprep.subr.mxu0 0.0
      %979 = vmatpush1.msra.mxu0 0.0
      %980 = vmatprep.subr.mxu0 0.0
      %981 = vmatpush1.msra.mxu0 0.0
      %982 = vmatprep.subr.mxu0 0.0
      %983 = vmatpush1.msra.mxu0 0.0
      %984 = vmatprep.subr.mxu0 0.0
      %985 = vmatpush1.msra.mxu0 0.0
      %986 = vmatprep.subr.mxu0 0.0
      %987 = vmatpush1.msra.mxu0 0.0
      %988 = vmatprep.subr.mxu0 0.0
      %989 = vmatpush1.msra.mxu0 0.0
      %990 = vmatprep.subr.mxu0 0.0
      %991 = vmatpush1.msra.mxu0 0.0
      %992 = vmatprep.subr.mxu0 0.0
      %993 = vmatpush1.msra.mxu0 0.0
      %994 = vmatprep.subr.mxu0 0.0
      %995 = vmatpush1.msra.mxu0 0.0
      %996 = vmatprep.subr.mxu0 0.0
      %997 = vmatpush1.msra.mxu0 0.0
      %998 = vmatprep.subr.mxu0 0.0
      %999 = vmatpush1.msra.mxu0 0.0
      %1000 = vmatprep.subr.mxu0 0.0
      %1001 = vmatpush1.msra.mxu0 0.0
      %1002 = vmatprep.subr.mxu0 0.0
      %1003 = vmatpush1.msra.mxu0 0.0
      %1004 = vmatprep.subr.mxu0 0.0
      %1005 = vmatpush1.msra.mxu0 0.0
      %1006 = vmatprep.subr.mxu0 0.0
      %1007 = vmatpush1.msra.mxu0 0.0
      %1008 = vmatprep.subr.mxu0 0.0
      %1009 = vmatpush1.msra.mxu0 0.0
      %1010 = vmatprep.subr.mxu0 0.0
      %1011 = vmatpush1.msra.mxu0 0.0
      %1012 = vmatprep.subr.mxu0 0.0
      %1013 = vmatpush1.msra.mxu0 0.0
      %1014 = vmatprep.subr.mxu0 0.0
      %1015 = vmatpush1.msra.mxu0 0.0
      %1016 = vmatprep.subr.mxu0 0.0
      %1017 = vmatpush1.msra.mxu0 0.0
      %1018 = vmatprep.subr.mxu0 0.0
      %1019 = vmatpush1.msra.mxu0 0.0
      %1020 = vmatprep.subr.mxu0 0.0
      %1021 = vmatpush1.msra.mxu0 0.0
      %1022 = vmatprep.subr.mxu0 0.0
      %1023 = vmatpush1.msra.mxu0 0.0
      %1024 = vmatprep.mubr.f32.mxu0 0.0
      %1025 = vmatmul.mubr.f32.gmra.mrb[0].mxu0 %v955
      %v1026 = vpop.f32.mrb[0].mxu0
      %v1027 = vadd.f32 0.0, %v1026
      %v1028 = vpop.f32.mrb[0].mxu0
      %v1029 = vadd.f32 0.0, %v1028
      %1030 = vmatprep.mubr.f32.mxu0 0.0
      %1031 = vmatmul.mubr.f32.gmra.mrb[0].mxu0 %v958
      %v1032 = vpop.f32.mrb[0].mxu0
      %v1033 = vadd.f32 0.0, %v1032
      %v1034 = vpop.f32.mrb[0].mxu0
      %v1035 = vadd.f32 0.0, %v1034
      %1036 = vdwg.mxu0
      %v1037 = vmax.f32 %v926, %v1027
      %v1038 = vmax.f32 %v927, %v1029
      %v1039 = vmax.f32 %v928, %v1033
      %v1040 = vmax.f32 %v929, %v1035
      %v1041 = vsel %vm948, -inf, %v930
      %v1042 = vsel %vm949, -inf, %v931
      %v1043 = vsel %vm713, %v1041, -inf
      %1044 = vmax.xlane.f32.xlu0 %v1043
      %v1045 = vpop.xlane.xlu0 %1044
      %v1046 = vsel %vm713, %v1042, -inf
      %1047 = vmax.xlane.f32.xlu0 %v1046
      %v1048 = vpop.xlane.xlu0 %1047
      %vm1049 = vcmp.eq.f32.partialorder %v1041, %v1045
      %vm1050 = vcmp.eq.f32.partialorder %v1042, %v1048
      %v1051 = vsel %vm1049, %v712, 16.0
      %v1052 = vsel %vm1050, %v712, 16.0
      %v1053 = vsel %vm713, %v1051, inf
      %1054 = vmin.xlane.f32.xlu0 %v1053
      %v1055 = vpop.xlane.xlu0 %1054
      %v1056 = vsel %vm713, %v1052, inf
      %1057 = vmin.xlane.f32.xlu0 %v1056
      %v1058 = vpop.xlane.xlu0 %1057
      %vm1059 = vcmp.eq.f32.partialorder %v712, %v1055
      %vm1060 = vcmp.eq.f32.partialorder %v712, %v1058
      %v1061 = vsel %vm1059, 1, 0
      %v1062 = vsel %vm1060, 1, 0
      %v1063 = vcvt.s32.f32 %v1061
      %v1064 = vcvt.s32.f32 %v1062
      %v1066 = vsel %vm713, %v1063, 0
      %v1069 = vsel %vm713, %v1064, 0
      %1071 = vmatprep.subr.mxu0 %v581
      %1072 = vmatpush1.msra.mxu0 %v579
      %1073 = vmatprep.subr.mxu0 %v587
      %1074 = vmatpush1.msra.mxu0 %v585
      %1075 = vmatprep.subr.mxu0 0.0
      %1076 = vmatpush1.msra.mxu0 0.0
      %1077 = vmatprep.subr.mxu0 0.0
      %1078 = vmatpush1.msra.mxu0 0.0
      %1079 = vmatprep.subr.mxu0 0.0
      %1080 = vmatpush1.msra.mxu0 0.0
      %1081 = vmatprep.subr.mxu0 0.0
      %1082 = vmatpush1.msra.mxu0 0.0
      %1083 = vmatprep.subr.mxu0 0.0
      %1084 = vmatpush1.msra.mxu0 0.0
      %1085 = vmatprep.subr.mxu0 0.0
      %1086 = vmatpush1.msra.mxu0 0.0
      %1087 = vmatprep.subr.mxu0 0.0
      %1088 = vmatpush1.msra.mxu0 0.0
      %1089 = vmatprep.subr.mxu0 0.0
      %1090 = vmatpush1.msra.mxu0 0.0
      %1091 = vmatprep.subr.mxu0 0.0
      %1092 = vmatpush1.msra.mxu0 0.0
      %1093 = vmatprep.subr.mxu0 0.0
      %1094 = vmatpush1.msra.mxu0 0.0
      %1095 = vmatprep.subr.mxu0 0.0
      %1096 = vmatpush1.msra.mxu0 0.0
      %1097 = vmatprep.subr.mxu0 0.0
      %1098 = vmatpush1.msra.mxu0 0.0
      %1099 = vmatprep.subr.mxu0 0.0
      %1100 = vmatpush1.msra.mxu0 0.0
      %1101 = vmatprep.subr.mxu0 0.0
      %1102 = vmatpush1.msra.mxu0 0.0
      %1103 = vmatprep.subr.mxu0 0.0
      %1104 = vmatpush1.msra.mxu0 0.0
      %1105 = vmatprep.subr.mxu0 0.0
      %1106 = vmatpush1.msra.mxu0 0.0
      %1107 = vmatprep.subr.mxu0 0.0
      %1108 = vmatpush1.msra.mxu0 0.0
      %1109 = vmatprep.subr.mxu0 0.0
      %1110 = vmatpush1.msra.mxu0 0.0
      %1111 = vmatprep.subr.mxu0 0.0
      %1112 = vmatpush1.msra.mxu0 0.0
      %1113 = vmatprep.subr.mxu0 0.0
      %1114 = vmatpush1.msra.mxu0 0.0
      %1115 = vmatprep.subr.mxu0 0.0
      %1116 = vmatpush1.msra.mxu0 0.0
      %1117 = vmatprep.subr.mxu0 0.0
      %1118 = vmatpush1.msra.mxu0 0.0
      %1119 = vmatprep.subr.mxu0 0.0
      %1120 = vmatpush1.msra.mxu0 0.0
      %1121 = vmatprep.subr.mxu0 0.0
      %1122 = vmatpush1.msra.mxu0 0.0
      %1123 = vmatprep.subr.mxu0 0.0
      %1124 = vmatpush1.msra.mxu0 0.0
      %1125 = vmatprep.subr.mxu0 0.0
      %1126 = vmatpush1.msra.mxu0 0.0
      %1127 = vmatprep.subr.mxu0 0.0
      %1128 = vmatpush1.msra.mxu0 0.0
      %1129 = vmatprep.subr.mxu0 0.0
      %1130 = vmatpush1.msra.mxu0 0.0
      %1131 = vmatprep.subr.mxu0 0.0
      %1132 = vmatpush1.msra.mxu0 0.0
      %1133 = vmatprep.subr.mxu0 0.0
      %1134 = vmatpush1.msra.mxu0 0.0
      %1135 = vmatprep.mubr.f32.mxu0 0.0
      %1136 = vmatmul.mubr.f32.gmra.mrb[0].mxu0 %v1066
      %v1137 = vpop.f32.mrb[0].mxu0
      %v1138 = vadd.f32 0.0, %v1137
      %v1139 = vpop.f32.mrb[0].mxu0
      %v1140 = vadd.f32 0.0, %v1139
      %1141 = vmatprep.mubr.f32.mxu0 0.0
      %1142 = vmatmul.mubr.f32.gmra.mrb[0].mxu0 %v1069
      %v1143 = vpop.f32.mrb[0].mxu0
      %v1144 = vadd.f32 0.0, %v1143
      %v1145 = vpop.f32.mrb[0].mxu0
      %v1146 = vadd.f32 0.0, %v1145
      %1147 = vdwg.mxu0
      %v1148 = vmax.f32 %v1037, %v1138
      %v1149 = vmax.f32 %v1038, %v1140
      %v1150 = vmax.f32 %v1039, %v1144
      %v1151 = vmax.f32 %v1040, %v1146
      %v1152 = vadd.f32 %v1148, %v700
      %v1153 = vadd.f32 %v1149, %v702
      %v1154 = vadd.f32 %v1150, %v706
      %v1155 = vadd.f32 %v1151, %v708
      %vm1156 = vcmp.ge.f32.partialorder %v1152, 0.0
      %vm1157 = vcmp.ge.f32.partialorder %v1153, 0.0
      %vm1158 = vcmp.ge.f32.partialorder %v1154, 0.0
      %vm1159 = vcmp.ge.f32.partialorder %v1155, 0.0
      %v1160 = vmul.f32 %v1152, 0.2
      %v1161 = vmul.f32 %v1153, 0.2
      %v1162 = vmul.f32 %v1154, 0.2
      %v1163 = vmul.f32 %v1155, 0.2
      %v1164 = vsel %vm1156, %v1152, %v1160
      %v1165 = vsel %vm1157, %v1153, %v1161
      %v1166 = vsel %vm1158, %v1154, %v1162
      %v1167 = vsel %vm1159, %v1155, %v1163
      %1168 = vst [vmem:[%s372] sm:$0xff] %v1164
      %1169 = vst [vmem:[%s372 + $0x8] sm:$0xff] %v1165
      %1170 = vst [vmem:[%s372 + $0x10] sm:$0xff] %v1166
      %1171 = vst [vmem:[%s372 + $0x18] sm:$0xff] %v1167
      %s1172 = smul.u32 2, %s23
      %p1173 = scmp.lt.s32.totalorder %s22, 1
      %s1174 = scalar_select %p1173, %s22, 1
      %p1175 = scmp.lt.s32.totalorder %s1172, 1
      %s1176 = scalar_select %p1175, %s1172, 1
      %s1177 = smul.addr %s1176, 2
      %s1178 = smul.addr %s1174, 4
      %s1179 = sadd.s32 %s1177, %s1178
      %s1180 = smul.addr %s1179, 8
      %s1181 = scalar_lea.vmem %s7, %s1180
      // Predicated region
      $region49: #{_lambda_.8} parent=47 // pred_check
        %p1182 = pneg %p219
      $region50: #{_lambda_.8} parent=47 // pred_check_branch
        %1184 = sbr.rel (%p1182) target = $region52
      $region51: #{_lambda_.8} parent=47 // pred_region
        %s1185 = smul.u32 2, %s23
      $region52: #{_lambda_.8} parent=47 // pred_fallthru
        _
    $region48: #{_lambda_.8} parent=5 // pred_fallthru
      _
    %p1186 = scmp.le.s32.totalorder 2, %s13
    // Predicated region
    $region53: #{_lambda_.8} parent=5 // pred_check
      %p1187 = pneg %p1186
    $region54: #{_lambda_.8} parent=5 // pred_check_branch
      %1189 = sbr.rel (%p1187) target = $region56
    $region55: #{_lambda_.8} parent=5 // pred_region
      %s1190 = ssub.s32 %s13, 2
      // Predicated region
      $region57: #{_lambda_.8} parent=55 // pred_check
        %p1191 = pneg %p225
      $region58: #{_lambda_.8} parent=55 // pred_check_branch
        %1193 = sbr.rel (%p1191) target = $region60
      $region59: #{_lambda_.8} parent=55 // pred_region
        %s1194 = smul.u32 2, %s25
        %p1195 = scmp.lt.s32.totalorder %s24, 1
        %s1196 = scalar_select %p1195, %s24, 1
        %p1197 = scmp.lt.s32.totalorder %s1194, 1
        %s1198 = scalar_select %p1197, %s1194, 1
        %s1199 = smul.addr %s1198, 2
        %s1200 = smul.addr %s1196, 4
        %s1201 = sadd.s32 %s1199, %s1200
        %s1202 = smul.addr %s1201, 8
        %s1203 = scalar_lea.vmem %s7, %s1202
      $region60: #{_lambda_.8} parent=55 // pred_fallthru
        _
    $region56: #{_lambda_.8} parent=5 // pred_fallthru
      _
  $region6: #{_lambda_.8} parent=0 // loop_footer
    %s17 = sadd.s32 1, %s13
  $region7: #{_lambda_.8} parent=0 // loop_footer_branch
    %12 = sbr.rel target = $region3
  $region8: #{_lambda_.8} parent=0 // loop_exit
    _

// kernel: _lambda_.9
$region0: #{_lambda_.9}
  #allocation0 [shape = 'u32[]', space=smem, size = 0x4, offset = 0x4, fixed_abs, tag = 'smem constant byte address 0x4 - core index']
  #allocation1 [shape = 'u32[144,128]{1,0:T(1,128)}', space=vmem, size = 0x12000, scoped, tag = 'internal scratch']
  %s0 = inlined_call_operand.vmem [shape: f32[2,16,64], index: 0, kind: input, shape index: {}]
  %s1 = inlined_call_operand.vmem [shape: f32[2,16,64], index: 1, kind: input, shape index: {}]
  %s2 = inlined_call_operand.vmem [shape: f32[2,16,128], index: 2, kind: input, shape index: {}]
  %s3 = inlined_call_operand.vmem [shape: f32[2,16,256], index: 3, kind: input, shape index: {}]
  %s4 = inlined_call_operand.vmem [shape: f32[64,256], index: 4, kind: input, shape index: {}]
  %s5 = inlined_call_operand.vmem [shape: f32[64,256], index: 5, kind: input, shape index: {}]
  %s6 = inlined_call_operand.vmem [shape: f32[128,256], index: 6, kind: input, shape index: {}]
  %s7 = inlined_call_operand.vmem [shape: f32[256,256], index: 7, kind: input, shape index: {}]
  %s8 = inlined_call_operand.vmem [shape: f32[1,256], index: 8, kind: input, shape index: {}]
  %s9 = inlined_call_operand.vmem [shape: f32[256,64], index: 9, kind: input, shape index: {}]
  %s10 = inlined_call_operand.vmem [shape: f32[1,64], index: 10, kind: input, shape index: {}]
  %s11 = inlined_call_operand.vmem [shape: f32[64,3], index: 11, kind: input, shape index: {}]
  %s12 = inlined_call_operand.vmem [shape: f32[1,3], index: 12, kind: input, shape index: {}]
  %s13 = inlined_call_operand.vmem [shape: f32[2,16,3], index: 13, kind: output, shape index: {}]
  %s14 = sld [smem:[#allocation0]]
  $region85: #{_lambda_.9} parent=0
    _
  %s16 = ssub.s32 1, %s14
  %s17 = scalar_select 0, %s16, %s14
  loop: start=0, step=1, limit=4
  $region2: #{_lambda_.9} parent=0 // loop_pre_header
    _
  $region3: #{_lambda_.9} parent=0 // loop_header
    %s19 = sphi 0, %s23
    %p20 = scmp.ge.s32.totalorder %s19, 4
    %s26 = sphi 0, %s38
    %s27 = sphi 0, %s34
    %s28 = sphi 0, %s26
    %s29 = sphi 0, %s27
    %s30 = sphi 0, %s28
    %s31 = sphi 0, %s29
    %s43 = sphi 0, %s45
    %s46 = sphi 0, %s43
    %s47 = sphi 0, %s46
    %s63 = sphi 0, %s47
    %s71 = sphi 0, %s73
    %s74 = sphi 0, %s71
    %s75 = sphi 0, %s74
    %s91 = sphi 0, %s75
    %s99 = sphi 0, %s101
    %s102 = sphi 0, %s99
    %s103 = sphi 0, %s102
    %s119 = sphi 0, %s103
    %s127 = sphi 0, %s129
    %s130 = sphi 0, %s127
    %s131 = sphi 0, %s130
    %s147 = sphi 0, %s131
    %s151 = sphi 0, %s151
    %s153 = sphi 0, %s151
    %s154 = sphi 0, %s153
    %s168 = sphi 0, %s154
    %s172 = sphi 0, %s172
    %s174 = sphi 0, %s172
    %s175 = sphi 0, %s174
    %s189 = sphi 0, %s175
    %s193 = sphi 0, %s193
    %s195 = sphi 0, %s193
    %s196 = sphi 0, %s195
    %s210 = sphi 0, %s196
    %s214 = sphi 0, %s214
    %s216 = sphi 0, %s214
    %s217 = sphi 0, %s216
    %s231 = sphi 0, %s217
    %s235 = sphi 0, %s235
    %s237 = sphi 0, %s235
    %s238 = sphi 0, %s237
    %s252 = sphi 0, %s238
    %s256 = sphi 0, %s256
    %s258 = sphi 0, %s256
    %s259 = sphi 0, %s258
    %s273 = sphi 0, %s259
    %s277 = sphi 0, %s277
    %s279 = sphi 0, %s277
    %s280 = sphi 0, %s279
    %s294 = sphi 0, %s280
    %s298 = sphi 0, %s298
    %s300 = sphi 0, %s298
    %s301 = sphi 0, %s300
    %s315 = sphi 0, %s301
    %s319 = sphi 0, %s319
    %s321 = sphi 0, %s319
    %s322 = sphi 0, %s321
    %s336 = sphi 0, %s322
    %s344 = sphi 0, %s346
    %s347 = sphi 0, %s344
    %s348 = sphi 0, %s347
    %s364 = sphi 0, %s348
  $region4: #{_lambda_.9} parent=0 // loop_header_branch
    %22 = sbr.rel (%p20) target = $region8
  $region5: #{_lambda_.9} parent=0 // loop_body
    %s24 = ssub.s32 %s19, 1
    %s25 = ssub.s32 %s19, 2
    %s32 = sadd.s32 1, %s27
    %p33 = scmp.ge.s32.totalorder %s32, 1
    %s34 = scalar_select %p33, 0, %s32
    %s35 = sadd.s32 1, %s26
    %s36 = scalar_select %p33, %s35, %s26
    %p37 = scmp.ge.s32.totalorder %s36, 2
    %s38 = scalar_select %p37, 0, %s36
    %s39 = ssub.s32 %s26, %s38
    %s40 = ssub.s32 %s27, %s34
    %s41 = sor.u32 %s39, %s40
    %p42 = scmp.eq.s32.totalorder %s41, 0
    %s44 = sadd.s32 %s43, 1
    %s45 = scalar_select %p42, %s43, %s44
    %p48 = pneg %p42
    %p49 = scmp.eq.s32.totalorder %s19, 1
    %p50 = por %p48, %p49
    %p51 = scmp.ne.s32.totalorder %s43, %s46
    %p52 = scmp.eq.s32.totalorder %s19, 0
    %p53 = por %p51, %p52
    %p54 = scmp.ne.s32.totalorder %s43, %s46
    %p55 = scmp.eq.s32.totalorder %s24, 1
    %p56 = por %p54, %p55
    %p57 = scmp.ne.s32.totalorder %s46, %s47
    %p58 = scmp.eq.s32.totalorder %s24, 0
    %p59 = por %p57, %p58
    %p60 = scmp.ne.s32.totalorder %s46, %s47
    %p61 = scmp.eq.s32.totalorder %s25, 1
    %p62 = por %p60, %p61
    %p64 = scmp.ne.s32.totalorder %s47, %s63
    %p65 = scmp.eq.s32.totalorder %s25, 0
    %p66 = por %p64, %p65
    %s67 = ssub.s32 %s26, %s38
    %s68 = ssub.s32 %s27, %s34
    %s69 = sor.u32 %s67, %s68
    %p70 = scmp.eq.s32.totalorder %s69, 0
    %s72 = sadd.s32 %s71, 1
    %s73 = scalar_select %p70, %s71, %s72
    %p76 = pneg %p70
    %p77 = scmp.eq.s32.totalorder %s19, 1
    %p78 = por %p76, %p77
    %p79 = scmp.ne.s32.totalorder %s71, %s74
    %p80 = scmp.eq.s32.totalorder %s19, 0
    %p81 = por %p79, %p80
    %p82 = scmp.ne.s32.totalorder %s71, %s74
    %p83 = scmp.eq.s32.totalorder %s24, 1
    %p84 = por %p82, %p83
    %p85 = scmp.ne.s32.totalorder %s74, %s75
    %p86 = scmp.eq.s32.totalorder %s24, 0
    %p87 = por %p85, %p86
    %p88 = scmp.ne.s32.totalorder %s74, %s75
    %p89 = scmp.eq.s32.totalorder %s25, 1
    %p90 = por %p88, %p89
    %p92 = scmp.ne.s32.totalorder %s75, %s91
    %p93 = scmp.eq.s32.totalorder %s25, 0
    %p94 = por %p92, %p93
    %s95 = ssub.s32 %s26, %s38
    %s96 = ssub.s32 %s27, %s34
    %s97 = sor.u32 %s95, %s96
    %p98 = scmp.eq.s32.totalorder %s97, 0
    %s100 = sadd.s32 %s99, 1
    %s101 = scalar_select %p98, %s99, %s100
    %p104 = pneg %p98
    %p105 = scmp.eq.s32.totalorder %s19, 1
    %p106 = por %p104, %p105
    %p107 = scmp.ne.s32.totalorder %s99, %s102
    %p108 = scmp.eq.s32.totalorder %s19, 0
    %p109 = por %p107, %p108
    %p110 = scmp.ne.s32.totalorder %s99, %s102
    %p111 = scmp.eq.s32.totalorder %s24, 1
    %p112 = por %p110, %p111
    %p113 = scmp.ne.s32.totalorder %s102, %s103
    %p114 = scmp.eq.s32.totalorder %s24, 0
    %p115 = por %p113, %p114
    %p116 = scmp.ne.s32.totalorder %s102, %s103
    %p117 = scmp.eq.s32.totalorder %s25, 1
    %p118 = por %p116, %p117
    %p120 = scmp.ne.s32.totalorder %s103, %s119
    %p121 = scmp.eq.s32.totalorder %s25, 0
    %p122 = por %p120, %p121
    %s123 = ssub.s32 %s26, %s38
    %s124 = ssub.s32 %s27, %s34
    %s125 = sor.u32 %s123, %s124
    %p126 = scmp.eq.s32.totalorder %s125, 0
    %s128 = sadd.s32 %s127, 1
    %s129 = scalar_select %p126, %s127, %s128
    %p132 = pneg %p126
    %p133 = scmp.eq.s32.totalorder %s19, 1
    %p134 = por %p132, %p133
    %p135 = scmp.ne.s32.totalorder %s127, %s130
    %p136 = scmp.eq.s32.totalorder %s19, 0
    %p137 = por %p135, %p136
    %p138 = scmp.ne.s32.totalorder %s127, %s130
    %p139 = scmp.eq.s32.totalorder %s24, 1
    %p140 = por %p138, %p139
    %p141 = scmp.ne.s32.totalorder %s130, %s131
    %p142 = scmp.eq.s32.totalorder %s24, 0
    %p143 = por %p141, %p142
    %p144 = scmp.ne.s32.totalorder %s130, %s131
    %p145 = scmp.eq.s32.totalorder %s25, 1
    %p146 = por %p144, %p145
    %p148 = scmp.ne.s32.totalorder %s131, %s147
    %p149 = scmp.eq.s32.totalorder %s25, 0
    %p150 = por %p148, %p149
    %s152 = sadd.s32 %s151, 1
    %p155 = scmp.eq.s32.totalorder %s19, 1
    %p156 = scmp.ne.s32.totalorder %s151, %s153
    %p157 = scmp.eq.s32.totalorder %s19, 0
    %p158 = por %p156, %p157
    %p159 = scmp.ne.s32.totalorder %s151, %s153
    %p160 = scmp.eq.s32.totalorder %s24, 1
    %p161 = por %p159, %p160
    %p162 = scmp.ne.s32.totalorder %s153, %s154
    %p163 = scmp.eq.s32.totalorder %s24, 0
    %p164 = por %p162, %p163
    %p165 = scmp.ne.s32.totalorder %s153, %s154
    %p166 = scmp.eq.s32.totalorder %s25, 1
    %p167 = por %p165, %p166
    %p169 = scmp.ne.s32.totalorder %s154, %s168
    %p170 = scmp.eq.s32.totalorder %s25, 0
    %p171 = por %p169, %p170
    %s173 = sadd.s32 %s172, 1
    %p176 = scmp.eq.s32.totalorder %s19, 1
    %p177 = scmp.ne.s32.totalorder %s172, %s174
    %p178 = scmp.eq.s32.totalorder %s19, 0
    %p179 = por %p177, %p178
    %p180 = scmp.ne.s32.totalorder %s172, %s174
    %p181 = scmp.eq.s32.totalorder %s24, 1
    %p182 = por %p180, %p181
    %p183 = scmp.ne.s32.totalorder %s174, %s175
    %p184 = scmp.eq.s32.totalorder %s24, 0
    %p185 = por %p183, %p184
    %p186 = scmp.ne.s32.totalorder %s174, %s175
    %p187 = scmp.eq.s32.totalorder %s25, 1
    %p188 = por %p186, %p187
    %p190 = scmp.ne.s32.totalorder %s175, %s189
    %p191 = scmp.eq.s32.totalorder %s25, 0
    %p192 = por %p190, %p191
    %s194 = sadd.s32 %s193, 1
    %p197 = scmp.eq.s32.totalorder %s19, 1
    %p198 = scmp.ne.s32.totalorder %s193, %s195
    %p199 = scmp.eq.s32.totalorder %s19, 0
    %p200 = por %p198, %p199
    %p201 = scmp.ne.s32.totalorder %s193, %s195
    %p202 = scmp.eq.s32.totalorder %s24, 1
    %p203 = por %p201, %p202
    %p204 = scmp.ne.s32.totalorder %s195, %s196
    %p205 = scmp.eq.s32.totalorder %s24, 0
    %p206 = por %p204, %p205
    %p207 = scmp.ne.s32.totalorder %s195, %s196
    %p208 = scmp.eq.s32.totalorder %s25, 1
    %p209 = por %p207, %p208
    %p211 = scmp.ne.s32.totalorder %s196, %s210
    %p212 = scmp.eq.s32.totalorder %s25, 0
    %p213 = por %p211, %p212
    %s215 = sadd.s32 %s214, 1
    %p218 = scmp.eq.s32.totalorder %s19, 1
    %p219 = scmp.ne.s32.totalorder %s214, %s216
    %p220 = scmp.eq.s32.totalorder %s19, 0
    %p221 = por %p219, %p220
    %p222 = scmp.ne.s32.totalorder %s214, %s216
    %p223 = scmp.eq.s32.totalorder %s24, 1
    %p224 = por %p222, %p223
    %p225 = scmp.ne.s32.totalorder %s216, %s217
    %p226 = scmp.eq.s32.totalorder %s24, 0
    %p227 = por %p225, %p226
    %p228 = scmp.ne.s32.totalorder %s216, %s217
    %p229 = scmp.eq.s32.totalorder %s25, 1
    %p230 = por %p228, %p229
    %p232 = scmp.ne.s32.totalorder %s217, %s231
    %p233 = scmp.eq.s32.totalorder %s25, 0
    %p234 = por %p232, %p233
    %s236 = sadd.s32 %s235, 1
    %p239 = scmp.eq.s32.totalorder %s19, 1
    %p240 = scmp.ne.s32.totalorder %s235, %s237
    %p241 = scmp.eq.s32.totalorder %s19, 0
    %p242 = por %p240, %p241
    %p243 = scmp.ne.s32.totalorder %s235, %s237
    %p244 = scmp.eq.s32.totalorder %s24, 1
    %p245 = por %p243, %p244
    %p246 = scmp.ne.s32.totalorder %s237, %s238
    %p247 = scmp.eq.s32.totalorder %s24, 0
    %p248 = por %p246, %p247
    %p249 = scmp.ne.s32.totalorder %s237, %s238
    %p250 = scmp.eq.s32.totalorder %s25, 1
    %p251 = por %p249, %p250
    %p253 = scmp.ne.s32.totalorder %s238, %s252
    %p254 = scmp.eq.s32.totalorder %s25, 0
    %p255 = por %p253, %p254
    %s257 = sadd.s32 %s256, 1
    %p260 = scmp.eq.s32.totalorder %s19, 1
    %p261 = scmp.ne.s32.totalorder %s256, %s258
    %p262 = scmp.eq.s32.totalorder %s19, 0
    %p263 = por %p261, %p262
    %p264 = scmp.ne.s32.totalorder %s256, %s258
    %p265 = scmp.eq.s32.totalorder %s24, 1
    %p266 = por %p264, %p265
    %p267 = scmp.ne.s32.totalorder %s258, %s259
    %p268 = scmp.eq.s32.totalorder %s24, 0
    %p269 = por %p267, %p268
    %p270 = scmp.ne.s32.totalorder %s258, %s259
    %p271 = scmp.eq.s32.totalorder %s25, 1
    %p272 = por %p270, %p271
    %p274 = scmp.ne.s32.totalorder %s259, %s273
    %p275 = scmp.eq.s32.totalorder %s25, 0
    %p276 = por %p274, %p275
    %s278 = sadd.s32 %s277, 1
    %p281 = scmp.eq.s32.totalorder %s19, 1
    %p282 = scmp.ne.s32.totalorder %s277, %s279
    %p283 = scmp.eq.s32.totalorder %s19, 0
    %p284 = por %p282, %p283
    %p285 = scmp.ne.s32.totalorder %s277, %s279
    %p286 = scmp.eq.s32.totalorder %s24, 1
    %p287 = por %p285, %p286
    %p288 = scmp.ne.s32.totalorder %s279, %s280
    %p289 = scmp.eq.s32.totalorder %s24, 0
    %p290 = por %p288, %p289
    %p291 = scmp.ne.s32.totalorder %s279, %s280
    %p292 = scmp.eq.s32.totalorder %s25, 1
    %p293 = por %p291, %p292
    %p295 = scmp.ne.s32.totalorder %s280, %s294
    %p296 = scmp.eq.s32.totalorder %s25, 0
    %p297 = por %p295, %p296
    %s299 = sadd.s32 %s298, 1
    %p302 = scmp.eq.s32.totalorder %s19, 1
    %p303 = scmp.ne.s32.totalorder %s298, %s300
    %p304 = scmp.eq.s32.totalorder %s19, 0
    %p305 = por %p303, %p304
    %p306 = scmp.ne.s32.totalorder %s298, %s300
    %p307 = scmp.eq.s32.totalorder %s24, 1
    %p308 = por %p306, %p307
    %p309 = scmp.ne.s32.totalorder %s300, %s301
    %p310 = scmp.eq.s32.totalorder %s24, 0
    %p311 = por %p309, %p310
    %p312 = scmp.ne.s32.totalorder %s300, %s301
    %p313 = scmp.eq.s32.totalorder %s25, 1
    %p314 = por %p312, %p313
    %p316 = scmp.ne.s32.totalorder %s301, %s315
    %p317 = scmp.eq.s32.totalorder %s25, 0
    %p318 = por %p316, %p317
    %s320 = sadd.s32 %s319, 1
    %p323 = scmp.eq.s32.totalorder %s19, 1
    %p324 = scmp.ne.s32.totalorder %s319, %s321
    %p325 = scmp.eq.s32.totalorder %s19, 0
    %p326 = por %p324, %p325
    %p327 = scmp.ne.s32.totalorder %s319, %s321
    %p328 = scmp.eq.s32.totalorder %s24, 1
    %p329 = por %p327, %p328
    %p330 = scmp.ne.s32.totalorder %s321, %s322
    %p331 = scmp.eq.s32.totalorder %s24, 0
    %p332 = por %p330, %p331
    %p333 = scmp.ne.s32.totalorder %s321, %s322
    %p334 = scmp.eq.s32.totalorder %s25, 1
    %p335 = por %p333, %p334
    %p337 = scmp.ne.s32.totalorder %s322, %s336
    %p338 = scmp.eq.s32.totalorder %s25, 0
    %p339 = por %p337, %p338
    %s340 = ssub.s32 %s26, %s38
    %s341 = ssub.s32 %s27, %s34
    %s342 = sor.u32 %s340, %s341
    %p343 = scmp.eq.s32.totalorder %s342, 0
    %s345 = sadd.s32 %s344, 1
    %s346 = scalar_select %p343, %s344, %s345
    %p349 = pneg %p343
    %p350 = scmp.eq.s32.totalorder %s19, 1
    %p351 = por %p349, %p350
    %p352 = scmp.ne.s32.totalorder %s344, %s347
    %p353 = scmp.eq.s32.totalorder %s19, 0
    %p354 = por %p352, %p353
    %p355 = scmp.ne.s32.totalorder %s344, %s347
    %p356 = scmp.eq.s32.totalorder %s24, 1
    %p357 = por %p355, %p356
    %p358 = scmp.ne.s32.totalorder %s347, %s348
    %p359 = scmp.eq.s32.totalorder %s24, 0
    %p360 = por %p358, %p359
    %p361 = scmp.ne.s32.totalorder %s347, %s348
    %p362 = scmp.eq.s32.totalorder %s25, 1
    %p363 = por %p361, %p362
    %p365 = scmp.ne.s32.totalorder %s348, %s364
    %p366 = scmp.eq.s32.totalorder %s25, 0
    %p367 = por %p365, %p366
    %p368 = scmp.le.s32.totalorder 1, %s19
    %p369 = scmp.lt.s32.totalorder %s19, 3
    %p370 = pnand %p368, %p369
    %p371 = pneg %p370
    // Predicated region
    $region9: #{_lambda_.9} parent=5 // pred_check
      _
    $region10: #{_lambda_.9} parent=5 // pred_check_branch
      %373 = sbr.rel (%p370) target = $region12
    $region11: #{_lambda_.9} parent=5 // pred_region
      %s374 = ssub.s32 %s19, 1
      // Predicated region
      $region13: #{_lambda_.9} parent=11 // pred_check
        %p375 = pneg %p164
      $region14: #{_lambda_.9} parent=11 // pred_check_branch
        %377 = sbr.rel (%p375) target = $region16
      $region15: #{_lambda_.9} parent=11 // pred_region
        _
      $region16: #{_lambda_.9} parent=11 // pred_fallthru
        _
      // Predicated region
      $region17: #{_lambda_.9} parent=11 // pred_check
        %p378 = pneg %p185
      $region18: #{_lambda_.9} parent=11 // pred_check_branch
        %380 = sbr.rel (%p378) target = $region20
      $region19: #{_lambda_.9} parent=11 // pred_region
        _
      $region20: #{_lambda_.9} parent=11 // pred_fallthru
        _
      // Predicated region
      $region21: #{_lambda_.9} parent=11 // pred_check
        %p381 = pneg %p206
      $region22: #{_lambda_.9} parent=11 // pred_check_branch
        %383 = sbr.rel (%p381) target = $region24
      $region23: #{_lambda_.9} parent=11 // pred_region
        _
      $region24: #{_lambda_.9} parent=11 // pred_fallthru
        _
      // Predicated region
      $region25: #{_lambda_.9} parent=11 // pred_check
        %p384 = pneg %p227
      $region26: #{_lambda_.9} parent=11 // pred_check_branch
        %386 = sbr.rel (%p384) target = $region28
      $region27: #{_lambda_.9} parent=11 // pred_region
        _
      $region28: #{_lambda_.9} parent=11 // pred_fallthru
        _
      // Predicated region
      $region29: #{_lambda_.9} parent=11 // pred_check
        %p387 = pneg %p248
      $region30: #{_lambda_.9} parent=11 // pred_check_branch
        %389 = sbr.rel (%p387) target = $region32
      $region31: #{_lambda_.9} parent=11 // pred_region
        _
      $region32: #{_lambda_.9} parent=11 // pred_fallthru
        _
      // Predicated region
      $region33: #{_lambda_.9} parent=11 // pred_check
        %p390 = pneg %p269
      $region34: #{_lambda_.9} parent=11 // pred_check_branch
        %392 = sbr.rel (%p390) target = $region36
      $region35: #{_lambda_.9} parent=11 // pred_region
        _
      $region36: #{_lambda_.9} parent=11 // pred_fallthru
        _
      // Predicated region
      $region37: #{_lambda_.9} parent=11 // pred_check
        %p393 = pneg %p290
      $region38: #{_lambda_.9} parent=11 // pred_check_branch
        %395 = sbr.rel (%p393) target = $region40
      $region39: #{_lambda_.9} parent=11 // pred_region
        _
      $region40: #{_lambda_.9} parent=11 // pred_fallthru
        _
      // Predicated region
      $region41: #{_lambda_.9} parent=11 // pred_check
        %p396 = pneg %p311
      $region42: #{_lambda_.9} parent=11 // pred_check_branch
        %398 = sbr.rel (%p396) target = $region44
      $region43: #{_lambda_.9} parent=11 // pred_region
        _
      $region44: #{_lambda_.9} parent=11 // pred_fallthru
        _
      // Predicated region
      $region45: #{_lambda_.9} parent=11 // pred_check
        %p399 = pneg %p332
      $region46: #{_lambda_.9} parent=11 // pred_check_branch
        %401 = sbr.rel (%p399) target = $region48
      $region47: #{_lambda_.9} parent=11 // pred_region
        _
      $region48: #{_lambda_.9} parent=11 // pred_fallthru
        _
    $region12: #{_lambda_.9} parent=5 // pred_fallthru
      _
    %p402 = scmp.lt.s32.totalorder %s19, 2
    // Predicated region
    $region49: #{_lambda_.9} parent=5 // pred_check
      %p403 = pneg %p402
    $region50: #{_lambda_.9} parent=5 // pred_check_branch
      %405 = sbr.rel (%p403) target = $region52
    $region51: #{_lambda_.9} parent=5 // pred_region
      // Predicated region
      $region53: #{_lambda_.9} parent=51 // pred_check
        %p406 = pneg %p53
      $region54: #{_lambda_.9} parent=51 // pred_check_branch
        %408 = sbr.rel (%p406) target = $region56
      $region55: #{_lambda_.9} parent=51 // pred_region
        %s409 = smul.u32 2, %s27
        %p410 = scmp.lt.s32.totalorder %s26, 1
        %s411 = scalar_select %p410, %s26, 1
        %p412 = scmp.lt.s32.totalorder %s409, 1
        %s413 = scalar_select %p412, %s409, 1
        %s414 = smul.addr %s411, 2
        %s415 = sadd.s32 %s413, %s414
        %s416 = smul.addr %s415, 8
        %s417 = scalar_lea.vmem %s0, %s416
        %s418 = smul.u32 2, %s27
      $region56: #{_lambda_.9} parent=51 // pred_fallthru
        _
      // Predicated region
      $region57: #{_lambda_.9} parent=51 // pred_check
        %p419 = pneg %p81
      $region58: #{_lambda_.9} parent=51 // pred_check_branch
        %421 = sbr.rel (%p419) target = $region60
      $region59: #{_lambda_.9} parent=51 // pred_region
        %s422 = smul.u32 2, %s27
        %p423 = scmp.lt.s32.totalorder %s26, 1
        %s424 = scalar_select %p423, %s26, 1
        %p425 = scmp.lt.s32.totalorder %s422, 1
        %s426 = scalar_select %p425, %s422, 1
        %s427 = smul.addr %s424, 2
        %s428 = sadd.s32 %s426, %s427
        %s429 = smul.addr %s428, 8
        %s430 = scalar_lea.vmem %s1, %s429
        %s431 = smul.u32 2, %s27
      $region60: #{_lambda_.9} parent=51 // pred_fallthru
        _
      // Predicated region
      $region61: #{_lambda_.9} parent=51 // pred_check
        %p432 = pneg %p109
      $region62: #{_lambda_.9} parent=51 // pred_check_branch
        %434 = sbr.rel (%p432) target = $region64
      $region63: #{_lambda_.9} parent=51 // pred_region
        %s435 = smul.u32 2, %s27
        %p436 = scmp.lt.s32.totalorder %s26, 1
        %s437 = scalar_select %p436, %s26, 1
        %p438 = scmp.lt.s32.totalorder %s435, 1
        %s439 = scalar_select %p438, %s435, 1
        %s440 = smul.addr %s437, 2
        %s441 = sadd.s32 %s439, %s440
        %s442 = smul.addr %s441, 8
        %s443 = scalar_lea.vmem %s2, %s442
        %s444 = smul.u32 2, %s27
      $region64: #{_lambda_.9} parent=51 // pred_fallthru
        _
      // Predicated region
      $region65: #{_lambda_.9} parent=51 // pred_check
        %p445 = pneg %p137
      $region66: #{_lambda_.9} parent=51 // pred_check_branch
        %447 = sbr.rel (%p445) target = $region68
      $region67: #{_lambda_.9} parent=51 // pred_region
        %s448 = smul.u32 2, %s27
        %p449 = scmp.lt.s32.totalorder %s26, 1
        %s450 = scalar_select %p449, %s26, 1
        %p451 = scmp.lt.s32.totalorder %s448, 1
        %s452 = scalar_select %p451, %s448, 1
        %s453 = smul.addr %s452, 2
        %s454 = smul.addr %s450, 4
        %s455 = sadd.s32 %s453, %s454
        %s456 = smul.addr %s455, 8
        %s457 = scalar_lea.vmem %s3, %s456
        %s458 = smul.u32 2, %s27
      $region68: #{_lambda_.9} parent=51 // pred_fallthru
        _
    $region52: #{_lambda_.9} parent=5 // pred_fallthru
      _
    %p459 = scmp.le.s32.totalorder 1, %s19
    %p460 = scmp.lt.s32.totalorder %s19, 3
    %p461 = pnand %p459, %p460
    %p462 = pneg %p461
    // Predicated region
    $region69: #{_lambda_.9} parent=5 // pred_check
      _
    $region70: #{_lambda_.9} parent=5 // pred_check_branch
      %464 = sbr.rel (%p461) target = $region72
    $region71: #{_lambda_.9} parent=5 // pred_region
      %s465 = ssub.s32 %s19, 1
      %s466 = smul.u32 2, %s29
      %p467 = scmp.lt.s32.totalorder %s28, 1
      %s468 = scalar_select %p467, %s28, 1
      %p469 = scmp.lt.s32.totalorder %s466, 1
      %s470 = scalar_select %p469, %s466, 1
      %s471 = smul.addr %s468, 2
      %s472 = sadd.s32 %s470, %s471
      %s473 = smul.addr %s472, 8
      %s474 = scalar_lea.vmem %s0, %s473
      %p475 = pneg %p59
      %p476 = pneg %p56
      %s477 = smul.u32 2, %s29
      %p478 = scmp.lt.s32.totalorder %s28, 1
      %s479 = scalar_select %p478, %s28, 1
      %p480 = scmp.lt.s32.totalorder %s477, 1
      %s481 = scalar_select %p480, %s477, 1
      %s482 = smul.addr %s479, 2
      %s483 = sadd.s32 %s481, %s482
      %s484 = smul.addr %s483, 8
      %s485 = scalar_lea.vmem %s1, %s484
      %p486 = pneg %p87
      %p487 = pneg %p84
      %s488 = smul.u32 2, %s29
      %p489 = scmp.lt.s32.totalorder %s28, 1
      %s490 = scalar_select %p489, %s28, 1
      %p491 = scmp.lt.s32.totalorder %s488, 1
      %s492 = scalar_select %p491, %s488, 1
      %s493 = smul.addr %s490, 2
      %s494 = sadd.s32 %s492, %s493
      %s495 = smul.addr %s494, 8
      %s496 = scalar_lea.vmem %s2, %s495
      %p497 = pneg %p115
      %p498 = pneg %p112
      %s499 = smul.u32 2, %s29
      %p500 = scmp.lt.s32.totalorder %s28, 1
      %s501 = scalar_select %p500, %s28, 1
      %p502 = scmp.lt.s32.totalorder %s499, 1
      %s503 = scalar_select %p502, %s499, 1
      %s504 = smul.addr %s503, 2
      %s505 = smul.addr %s501, 4
      %s506 = sadd.s32 %s504, %s505
      %s507 = smul.addr %s506, 8
      %s508 = scalar_lea.vmem %s3, %s507
      %p509 = pneg %p143
      %p510 = pneg %p140
      %p511 = pneg %p164
      %p512 = pneg %p161
      %p513 = pneg %p185
      %p514 = pneg %p182
      %p515 = pneg %p206
      %p516 = pneg %p203
      %p517 = pneg %p227
      %p518 = pneg %p224
      %p519 = pneg %p248
      %p520 = pneg %p245
      %p521 = pneg %p269
      %p522 = pneg %p266
      %p523 = pneg %p290
      %p524 = pneg %p287
      %p525 = pneg %p311
      %p526 = pneg %p308
      %p527 = pneg %p332
      %p528 = pneg %p329
      %p529 = pneg %p360
      %p530 = pneg %p357
      %s531 = smul.u32 2, %s29
      %p532 = scmp.lt.s32.totalorder %s28, 1
      %s533 = scalar_select %p532, %s28, 1
      %p534 = scmp.lt.s32.totalorder %s531, 1
      %s535 = scalar_select %p534, %s531, 1
      %s536 = smul.addr %s533, 2
      %s537 = sadd.s32 %s535, %s536
      %s538 = smul.addr %s537, 8
      %s539 = scalar_lea.vmem %s13, %s538
      %s540 = smul.u32 2, %s29
      %p541 = scmp.lt.s32.totalorder %s28, 1
      %s542 = scalar_select %p541, %s28, 1
      %p543 = scmp.lt.s32.totalorder %s540, 1
      %s544 = scalar_select %p543, %s540, 1
      %s545 = smul.addr %s542, 2
      %s546 = sadd.s32 %s544, %s545
      %s547 = smul.addr %s546, 8
      %s548 = scalar_lea.vmem %s0, %s547
      %s549 = smul.u32 2, %s29
      %s550 = smul.u32 2, %s29
      %p551 = scmp.lt.s32.totalorder %s28, 1
      %s552 = scalar_select %p551, %s28, 1
      %p553 = scmp.lt.s32.totalorder %s550, 1
      %s554 = scalar_select %p553, %s550, 1
      %s555 = smul.addr %s552, 2
      %s556 = sadd.s32 %s554, %s555
      %s557 = smul.addr %s556, 8
      %s558 = scalar_lea.vmem %s1, %s557
      %s559 = smul.u32 2, %s29
      %s560 = smul.u32 2, %s29
      %p561 = scmp.lt.s32.totalorder %s28, 1
      %s562 = scalar_select %p561, %s28, 1
      %p563 = scmp.lt.s32.totalorder %s560, 1
      %s564 = scalar_select %p563, %s560, 1
      %s565 = smul.addr %s562, 2
      %s566 = sadd.s32 %s564, %s565
      %s567 = smul.addr %s566, 8
      %s568 = scalar_lea.vmem %s2, %s567
      %s569 = smul.u32 2, %s29
      %s570 = smul.u32 2, %s29
      %p571 = scmp.lt.s32.totalorder %s28, 1
      %s572 = scalar_select %p571, %s28, 1
      %p573 = scmp.lt.s32.totalorder %s570, 1
      %s574 = scalar_select %p573, %s570, 1
      %s575 = smul.addr %s574, 2
      %s576 = smul.addr %s572, 4
      %s577 = sadd.s32 %s575, %s576
      %s578 = smul.addr %s577, 8
      %s579 = scalar_lea.vmem %s3, %s578
      %s580 = smul.u32 2, %s29
      %s581 = smul.u32 2, %s29
      %p582 = scmp.lt.s32.totalorder %s28, 1
      %s583 = scalar_select %p582, %s28, 1
      %p584 = scmp.lt.s32.totalorder %s581, 1
      %s585 = scalar_select %p584, %s581, 1
      %s586 = smul.addr %s583, 2
      %s587 = sadd.s32 %s585, %s586
      %s588 = smul.addr %s587, 8
      %s589 = scalar_lea.vmem %s13, %s588
      %s590 = smul.u32 2, %s29
      %v591 = vld [vmem:[%s548] sm:$0xff]
      %v592 = vld [vmem:[%s548 + $0x8] sm:$0xff]
      %v593 = vld [vmem:[%s4] sm:$0xff]
      %v594 = vld [vmem:[%s4 + $0x8] sm:$0xff]
      %v595 = vld [vmem:[%s4 + $0x10] sm:$0xff]
      %v596 = vld [vmem:[%s4 + $0x18] sm:$0xff]
      %v597 = vld [vmem:[%s4 + $0x20] sm:$0xff]
      %v598 = vld [vmem:[%s4 + $0x28] sm:$0xff]
      %v599 = vld [vmem:[%s4 + $0x30] sm:$0xff]
      %v600 = vld [vmem:[%s4 + $0x38] sm:$0xff]
      %v601 = vld [vmem:[%s4 + $0x40] sm:$0xff]
      %v602 = vld [vmem:[%s4 + $0x48] sm:$0xff]
      %v603 = vld [vmem:[%s4 + $0x50] sm:$0xff]
      %v604 = vld [vmem:[%s4 + $0x58] sm:$0xff]
      %v605 = vld [vmem:[%s4 + $0x60] sm:$0xff]
      %v606 = vld [vmem:[%s4 + $0x68] sm:$0xff]
      %v607 = vld [vmem:[%s4 + $0x70] sm:$0xff]
      %v608 = vld [vmem:[%s4 + $0x78] sm:$0xff]
      %v609 = vld [vmem:[%s558] sm:$0xff]
      %v610 = vld [vmem:[%s558 + $0x8] sm:$0xff]
      %v611 = vld [vmem:[%s5] sm:$0xff]
      %v612 = vld [vmem:[%s5 + $0x8] sm:$0xff]
      %v613 = vld [vmem:[%s5 + $0x10] sm:$0xff]
      %v614 = vld [vmem:[%s5 + $0x18] sm:$0xff]
      %v615 = vld [vmem:[%s5 + $0x20] sm:$0xff]
      %v616 = vld [vmem:[%s5 + $0x28] sm:$0xff]
      %v617 = vld [vmem:[%s5 + $0x30] sm:$0xff]
      %v618 = vld [vmem:[%s5 + $0x38] sm:$0xff]
      %v619 = vld [vmem:[%s5 + $0x40] sm:$0xff]
      %v620 = vld [vmem:[%s5 + $0x48] sm:$0xff]
      %v621 = vld [vmem:[%s5 + $0x50] sm:$0xff]
      %v622 = vld [vmem:[%s5 + $0x58] sm:$0xff]
      %v623 = vld [vmem:[%s5 + $0x60] sm:$0xff]
      %v624 = vld [vmem:[%s5 + $0x68] sm:$0xff]
      %v625 = vld [vmem:[%s5 + $0x70] sm:$0xff]
      %v626 = vld [vmem:[%s5 + $0x78] sm:$0xff]
      %vm627 = vcmask 523264
      %v629 = vsel %vm627, %v609, 0
      %v632 = vsel %vm627, %v610, 0
      %634 = vmatprep.subr.mxu0 %v612
      %635 = vmatpush1.msra.mxu0 %v611
      %636 = vmatprep.subr.mxu0 %v614
      %637 = vmatpush1.msra.mxu0 %v613
      %638 = vmatprep.subr.mxu0 %v616
      %639 = vmatpush1.msra.mxu0 %v615
      %640 = vmatprep.subr.mxu0 %v618
      %641 = vmatpush1.msra.mxu0 %v617
      %642 = vmatprep.subr.mxu0 %v620
      %643 = vmatpush1.msra.mxu0 %v619
      %644 = vmatprep.subr.mxu0 %v622
      %645 = vmatpush1.msra.mxu0 %v621
      %646 = vmatprep.subr.mxu0 %v624
      %647 = vmatpush1.msra.mxu0 %v623
      %648 = vmatprep.subr.mxu0 %v626
      %649 = vmatpush1.msra.mxu0 %v625
      %650 = vmatprep.subr.mxu0 0.0
      %651 = vmatpush1.msra.mxu0 0.0
      %652 = vmatprep.subr.mxu0 0.0
      %653 = vmatpush1.msra.mxu0 0.0
      %654 = vmatprep.subr.mxu0 0.0
      %655 = vmatpush1.msra.mxu0 0.0
      %656 = vmatprep.subr.mxu0 0.0
      %657 = vmatpush1.msra.mxu0 0.0
      %658 = vmatprep.subr.mxu0 0.0
      %659 = vmatpush1.msra.mxu0 0.0
      %660 = vmatprep.subr.mxu0 0.0
      %661 = vmatpush1.msra.mxu0 0.0
      %662 = vmatprep.subr.mxu0 0.0
      %663 = vmatpush1.msra.mxu0 0.0
      %664 = vmatprep.subr.mxu0 0.0
      %665 = vmatpush1.msra.mxu0 0.0
      %666 = vmatprep.subr.mxu0 0.0
      %667 = vmatpush1.msra.mxu0 0.0
      %668 = vmatprep.subr.mxu0 0.0
      %669 = vmatpush1.msra.mxu0 0.0
      %670 = vmatprep.subr.mxu0 0.0
      %671 = vmatpush1.msra.mxu0 0.0
      %672 = vmatprep.subr.mxu0 0.0
      %673 = vmatpush1.msra.mxu0 0.0
      %674 = vmatprep.subr.mxu0 0.0
      %675 = vmatpush1.msra.mxu0 0.0
      %676 = vmatprep.subr.mxu0 0.0
      %677 = vmatpush1.msra.mxu0 0.0
      %678 = vmatprep.subr.mxu0 0.0
      %679 = vmatpush1.msra.mxu0 0.0
      %680 = vmatprep.subr.mxu0 0.0
      %681 = vmatpush1.msra.mxu0 0.0
      %682 = vmatprep.subr.mxu0 0.0
      %683 = vmatpush1.msra.mxu0 0.0
      %684 = vmatprep.subr.mxu0 0.0
      %685 = vmatpush1.msra.mxu0 0.0
      %686 = vmatprep.subr.mxu0 0.0
      %687 = vmatpush1.msra.mxu0 0.0
      %688 = vmatprep.subr.mxu0 0.0
      %689 = vmatpush1.msra.mxu0 0.0
      %690 = vmatprep.subr.mxu0 0.0
      %691 = vmatpush1.msra.mxu0 0.0
      %692 = vmatprep.subr.mxu0 0.0
      %693 = vmatpush1.msra.mxu0 0.0
      %694 = vmatprep.subr.mxu0 0.0
      %695 = vmatpush1.msra.mxu0 0.0
      %696 = vmatprep.subr.mxu0 0.0
      %697 = vmatpush1.msra.mxu0 0.0
      %698 = vmatprep.mubr.f32.mxu0 0.0
      %699 = vmatmul.mubr.f32.gmra.mrb[0].mxu0 %v629
      %v700 = vpop.f32.mrb[0].mxu0
      %v701 = vadd.f32 0.0, %v700
      %v702 = vpop.f32.mrb[0].mxu0
      %v703 = vadd.f32 0.0, %v702
      %704 = vmatprep.mubr.f32.mxu0 0.0
      %705 = vmatmul.mubr.f32.gmra.mrb[0].mxu0 %v632
      %v706 = vpop.f32.mrb[0].mxu0
      %v707 = vadd.f32 0.0, %v706
      %v708 = vpop.f32.mrb[0].mxu0
      %v709 = vadd.f32 0.0, %v708
      %710 = vdwg.mxu0
      %v712 = vsel %vm627, %v591, 0
      %v715 = vsel %vm627, %v592, 0
      %717 = vmatprep.subr.mxu0 %v594
      %718 = vmatpush1.msra.mxu0 %v593
      %719 = vmatprep.subr.mxu0 %v596
      %720 = vmatpush1.msra.mxu0 %v595
      %721 = vmatprep.subr.mxu0 %v598
      %722 = vmatpush1.msra.mxu0 %v597
      %723 = vmatprep.subr.mxu0 %v600
      %724 = vmatpush1.msra.mxu0 %v599
      %725 = vmatprep.subr.mxu0 %v602
      %726 = vmatpush1.msra.mxu0 %v601
      %727 = vmatprep.subr.mxu0 %v604
      %728 = vmatpush1.msra.mxu0 %v603
      %729 = vmatprep.subr.mxu0 %v606
      %730 = vmatpush1.msra.mxu0 %v605
      %731 = vmatprep.subr.mxu0 %v608
      %732 = vmatpush1.msra.mxu0 %v607
      %733 = vmatprep.subr.mxu0 0.0
      %734 = vmatpush1.msra.mxu0 0.0
      %735 = vmatprep.subr.mxu0 0.0
      %736 = vmatpush1.msra.mxu0 0.0
      %737 = vmatprep.subr.mxu0 0.0
      %738 = vmatpush1.msra.mxu0 0.0
      %739 = vmatprep.subr.mxu0 0.0
      %740 = vmatpush1.msra.mxu0 0.0
      %741 = vmatprep.subr.mxu0 0.0
      %742 = vmatpush1.msra.mxu0 0.0
      %743 = vmatprep.subr.mxu0 0.0
      %744 = vmatpush1.msra.mxu0 0.0
      %745 = vmatprep.subr.mxu0 0.0
      %746 = vmatpush1.msra.mxu0 0.0
      %747 = vmatprep.subr.mxu0 0.0
      %748 = vmatpush1.msra.mxu0 0.0
      %749 = vmatprep.subr.mxu0 0.0
      %750 = vmatpush1.msra.mxu0 0.0
      %751 = vmatprep.subr.mxu0 0.0
      %752 = vmatpush1.msra.mxu0 0.0
      %753 = vmatprep.subr.mxu0 0.0
      %754 = vmatpush1.msra.mxu0 0.0
      %755 = vmatprep.subr.mxu0 0.0
      %756 = vmatpush1.msra.mxu0 0.0
      %757 = vmatprep.subr.mxu0 0.0
      %758 = vmatpush1.msra.mxu0 0.0
      %759 = vmatprep.subr.mxu0 0.0
      %760 = vmatpush1.msra.mxu0 0.0
      %761 = vmatprep.subr.mxu0 0.0
      %762 = vmatpush1.msra.mxu0 0.0
      %763 = vmatprep.subr.mxu0 0.0
      %764 = vmatpush1.msra.mxu0 0.0
      %765 = vmatprep.subr.mxu0 0.0
      %766 = vmatpush1.msra.mxu0 0.0
      %767 = vmatprep.subr.mxu0 0.0
      %768 = vmatpush1.msra.mxu0 0.0
      %769 = vmatprep.subr.mxu0 0.0
      %770 = vmatpush1.msra.mxu0 0.0
      %771 = vmatprep.subr.mxu0 0.0
      %772 = vmatpush1.msra.mxu0 0.0
      %773 = vmatprep.subr.mxu0 0.0
      %774 = vmatpush1.msra.mxu0 0.0
      %775 = vmatprep.subr.mxu0 0.0
      %776 = vmatpush1.msra.mxu0 0.0
      %777 = vmatprep.subr.mxu0 0.0
      %778 = vmatpush1.msra.mxu0 0.0
      %779 = vmatprep.subr.mxu0 0.0
      %780 = vmatpush1.msra.mxu0 0.0
      %781 = vmatprep.mubr.f32.mxu0 0.0
      %782 = vmatmul.mubr.f32.gmra.mrb[0].mxu0 %v712
      %v783 = vpop.f32.mrb[0].mxu0
      %v784 = vadd.f32 %v701, %v783
      %v785 = vpop.f32.mrb[0].mxu0
      %v786 = vadd.f32 %v703, %v785
      %787 = vmatprep.mubr.f32.mxu0 0.0
      %788 = vmatmul.mubr.f32.gmra.mrb[0].mxu0 %v715
      %v789 = vpop.f32.mrb[0].mxu0
      %v790 = vadd.f32 %v707, %v789
      %v791 = vpop.f32.mrb[0].mxu0
      %v792 = vadd.f32 %v709, %v791
      %793 = vdwg.mxu0
      %v794 = vld [vmem:[%s568] sm:$0xff]
      %v795 = vld [vmem:[%s568 + $0x8] sm:$0xff]
      %v796 = vld [vmem:[%s6] sm:$0xff]
      %v797 = vld [vmem:[%s6 + $0x8] sm:$0xff]
      %v798 = vld [vmem:[%s6 + $0x10] sm:$0xff]
      %v799 = vld [vmem:[%s6 + $0x18] sm:$0xff]
      %v800 = vld [vmem:[%s6 + $0x20] sm:$0xff]
      %v801 = vld [vmem:[%s6 + $0x28] sm:$0xff]
      %v802 = vld [vmem:[%s6 + $0x30] sm:$0xff]
      %v803 = vld [vmem:[%s6 + $0x38] sm:$0xff]
      %v804 = vld [vmem:[%s6 + $0x40] sm:$0xff]
      %v805 = vld [vmem:[%s6 + $0x48] sm:$0xff]
      %v806 = vld [vmem:[%s6 + $0x50] sm:$0xff]
      %v807 = vld [vmem:[%s6 + $0x58] sm:$0xff]
      %v808 = vld [vmem:[%s6 + $0x60] sm:$0xff]
      %v809 = vld [vmem:[%s6 + $0x68] sm:$0xff]
      %v810 = vld [vmem:[%s6 + $0x70] sm:$0xff]
      %v811 = vld [vmem:[%s6 + $0x78] sm:$0xff]
      %v812 = vld [vmem:[%s6 + $0x80] sm:$0xff]
      %v813 = vld [vmem:[%s6 + $0x88] sm:$0xff]
      %v814 = vld [vmem:[%s6 + $0x90] sm:$0xff]
      %v815 = vld [vmem:[%s6 + $0x98] sm:$0xff]
      %v816 = vld [vmem:[%s6 + $0xa0] sm:$0xff]
      %v817 = vld [vmem:[%s6 + $0xa8] sm:$0xff]
      %v818 = vld [vmem:[%s6 + $0xb0] sm:$0xff]
      %v819 = vld [vmem:[%s6 + $0xb8] sm:$0xff]
      %v820 = vld [vmem:[%s6 + $0xc0] sm:$0xff]
      %v821 = vld [vmem:[%s6 + $0xc8] sm:$0xff]
      %v822 = vld [vmem:[%s6 + $0xd0] sm:$0xff]
      %v823 = vld [vmem:[%s6 + $0xd8] sm:$0xff]
      %v824 = vld [vmem:[%s6 + $0xe0] sm:$0xff]
      %v825 = vld [vmem:[%s6 + $0xe8] sm:$0xff]
      %v826 = vld [vmem:[%s6 + $0xf0] sm:$0xff]
      %v827 = vld [vmem:[%s6 + $0xf8] sm:$0xff]
      %828 = vmatprep.subr.mxu0 %v797
      %829 = vmatpush1.msra.mxu0 %v796
      %830 = vmatprep.subr.mxu0 %v799
      %831 = vmatpush1.msra.mxu0 %v798
      %832 = vmatprep.subr.mxu0 %v801
      %833 = vmatpush1.msra.mxu0 %v800
      %834 = vmatprep.subr.mxu0 %v803
      %835 = vmatpush1.msra.mxu0 %v802
      %836 = vmatprep.subr.mxu0 %v805
      %837 = vmatpush1.msra.mxu0 %v804
      %838 = vmatprep.subr.mxu0 %v807
      %839 = vmatpush1.msra.mxu0 %v806
      %840 = vmatprep.subr.mxu0 %v809
      %841 = vmatpush1.msra.mxu0 %v808
      %842 = vmatprep.subr.mxu0 %v811
      %843 = vmatpush1.msra.mxu0 %v810
      %844 = vmatprep.subr.mxu0 %v813
      %845 = vmatpush1.msra.mxu0 %v812
      %846 = vmatprep.subr.mxu0 %v815
      %847 = vmatpush1.msra.mxu0 %v814
      %848 = vmatprep.subr.mxu0 %v817
      %849 = vmatpush1.msra.mxu0 %v816
      %850 = vmatprep.subr.mxu0 %v819
      %851 = vmatpush1.msra.mxu0 %v818
      %852 = vmatprep.subr.mxu0 %v821
      %853 = vmatpush1.msra.mxu0 %v820
      %854 = vmatprep.subr.mxu0 %v823
      %855 = vmatpush1.msra.mxu0 %v822
      %856 = vmatprep.subr.mxu0 %v825
      %857 = vmatpush1.msra.mxu0 %v824
      %858 = vmatprep.subr.mxu0 %v827
      %859 = vmatpush1.msra.mxu0 %v826
      %860 = vmatprep.subr.mxu0 0.0
      %861 = vmatpush1.msra.mxu0 0.0
      %862 = vmatprep.subr.mxu0 0.0
      %863 = vmatpush1.msra.mxu0 0.0
      %864 = vmatprep.subr.mxu0 0.0
      %865 = vmatpush1.msra.mxu0 0.0
      %866 = vmatprep.subr.mxu0 0.0
      %867 = vmatpush1.msra.mxu0 0.0
      %868 = vmatprep.subr.mxu0 0.0
      %869 = vmatpush1.msra.mxu0 0.0
      %870 = vmatprep.subr.mxu0 0.0
      %871 = vmatpush1.msra.mxu0 0.0
      %872 = vmatprep.subr.mxu0 0.0
      %873 = vmatpush1.msra.mxu0 0.0
      %874 = vmatprep.subr.mxu0 0.0
      %875 = vmatpush1.msra.mxu0 0.0
      %876 = vmatprep.subr.mxu0 0.0
      %877 = vmatpush1.msra.mxu0 0.0
      %878 = vmatprep.subr.mxu0 0.0
      %879 = vmatpush1.msra.mxu0 0.0
      %880 = vmatprep.subr.mxu0 0.0
      %881 = vmatpush1.msra.mxu0 0.0
      %882 = vmatprep.subr.mxu0 0.0
      %883 = vmatpush1.msra.mxu0 0.0
      %884 = vmatprep.subr.mxu0 0.0
      %885 = vmatpush1.msra.mxu0 0.0
      %886 = vmatprep.subr.mxu0 0.0
      %887 = vmatpush1.msra.mxu0 0.0
      %888 = vmatprep.subr.mxu0 0.0
      %889 = vmatpush1.msra.mxu0 0.0
      %890 = vmatprep.subr.mxu0 0.0
      %891 = vmatpush1.msra.mxu0 0.0
      %892 = vmatprep.mubr.f32.mxu0 0.0
      %893 = vmatmul.mubr.f32.gmra.mrb[0].mxu0 %v794
      %v894 = vpop.f32.mrb[0].mxu0
      %v895 = vadd.f32 0.0, %v894
      %v896 = vpop.f32.mrb[0].mxu0
      %v897 = vadd.f32 0.0, %v896
      %898 = vmatprep.mubr.f32.mxu0 0.0
      %899 = vmatmul.mubr.f32.gmra.mrb[0].mxu0 %v795
      %v900 = vpop.f32.mrb[0].mxu0
      %v901 = vadd.f32 0.0, %v900
      %v902 = vpop.f32.mrb[0].mxu0
      %v903 = vadd.f32 0.0, %v902
      %904 = vdwg.mxu0
      %v905 = vadd.f32 %v784, %v895
      %v906 = vadd.f32 %v786, %v897
      %v907 = vadd.f32 %v790, %v901
      %v908 = vadd.f32 %v792, %v903
      %v909 = vld [vmem:[%s579] sm:$0xff]
      %v910 = vld [vmem:[%s579 + $0x8] sm:$0xff]
      %v911 = vld [vmem:[%s579 + $0x10] sm:$0xff]
      %v912 = vld [vmem:[%s579 + $0x18] sm:$0xff]
      %v913 = vld [vmem:[%s7] sm:$0xff]
      %v914 = vld [vmem:[%s7 + $0x8] sm:$0xff]
      %v915 = vld [vmem:[%s7 + $0x10] sm:$0xff]
      %v916 = vld [vmem:[%s7 + $0x18] sm:$0xff]
      %v917 = vld [vmem:[%s7 + $0x20] sm:$0xff]
      %v918 = vld [vmem:[%s7 + $0x28] sm:$0xff]
      %v919 = vld [vmem:[%s7 + $0x30] sm:$0xff]
      %v920 = vld [vmem:[%s7 + $0x38] sm:$0xff]
      %v921 = vld [vmem:[%s7 + $0x40] sm:$0xff]
      %v922 = vld [vmem:[%s7 + $0x48] sm:$0xff]
      %v923 = vld [vmem:[%s7 + $0x50] sm:$0xff]
      %v924 = vld [vmem:[%s7 + $0x58] sm:$0xff]
      %v925 = vld [vmem:[%s7 + $0x60] sm:$0xff]
      %v926 = vld [vmem:[%s7 + $0x68] sm:$0xff]
      %v927 = vld [vmem:[%s7 + $0x70] sm:$0xff]
      %v928 = vld [vmem:[%s7 + $0x78] sm:$0xff]
      %v929 = vld [vmem:[%s7 + $0x80] sm:$0xff]
      %v930 = vld [vmem:[%s7 + $0x88] sm:$0xff]
      %v931 = vld [vmem:[%s7 + $0x90] sm:$0xff]
      %v932 = vld [vmem:[%s7 + $0x98] sm:$0xff]
      %v933 = vld [vmem:[%s7 + $0xa0] sm:$0xff]
      %v934 = vld [vmem:[%s7 + $0xa8] sm:$0xff]
      %v935 = vld [vmem:[%s7 + $0xb0] sm:$0xff]
      %v936 = vld [vmem:[%s7 + $0xb8] sm:$0xff]
      %v937 = vld [vmem:[%s7 + $0xc0] sm:$0xff]
      %v938 = vld [vmem:[%s7 + $0xc8] sm:$0xff]
      %v939 = vld [vmem:[%s7 + $0xd0] sm:$0xff]
      %v940 = vld [vmem:[%s7 + $0xd8] sm:$0xff]
      %v941 = vld [vmem:[%s7 + $0xe0] sm:$0xff]
      %v942 = vld [vmem:[%s7 + $0xe8] sm:$0xff]
      %v943 = vld [vmem:[%s7 + $0xf0] sm:$0xff]
      %v944 = vld [vmem:[%s7 + $0xf8] sm:$0xff]
      %v945 = vld [vmem:[%s7 + $0x100] sm:$0xff]
      %v946 = vld [vmem:[%s7 + $0x108] sm:$0xff]
      %v947 = vld [vmem:[%s7 + $0x110] sm:$0xff]
      %v948 = vld [vmem:[%s7 + $0x118] sm:$0xff]
      %v949 = vld [vmem:[%s7 + $0x120] sm:$0xff]
      %v950 = vld [vmem:[%s7 + $0x128] sm:$0xff]
      %v951 = vld [vmem:[%s7 + $0x130] sm:$0xff]
      %v952 = vld [vmem:[%s7 + $0x138] sm:$0xff]
      %v953 = vld [vmem:[%s7 + $0x140] sm:$0xff]
      %v954 = vld [vmem:[%s7 + $0x148] sm:$0xff]
      %v955 = vld [vmem:[%s7 + $0x150] sm:$0xff]
      %v956 = vld [vmem:[%s7 + $0x158] sm:$0xff]
      %v957 = vld [vmem:[%s7 + $0x160] sm:$0xff]
      %v958 = vld [vmem:[%s7 + $0x168] sm:$0xff]
      %v959 = vld [vmem:[%s7 + $0x170] sm:$0xff]
      %v960 = vld [vmem:[%s7 + $0x178] sm:$0xff]
      %v961 = vld [vmem:[%s7 + $0x180] sm:$0xff]
      %v962 = vld [vmem:[%s7 + $0x188] sm:$0xff]
      %v963 = vld [vmem:[%s7 + $0x190] sm:$0xff]
      %v964 = vld [vmem:[%s7 + $0x198] sm:$0xff]
      %v965 = vld [vmem:[%s7 + $0x1a0] sm:$0xff]
      %v966 = vld [vmem:[%s7 + $0x1a8] sm:$0xff]
      %v967 = vld [vmem:[%s7 + $0x1b0] sm:$0xff]
      %v968 = vld [vmem:[%s7 + $0x1b8] sm:$0xff]
      %v969 = vld [vmem:[%s7 + $0x1c0] sm:$0xff]
      %v970 = vld [vmem:[%s7 + $0x1c8] sm:$0xff]
      %v971 = vld [vmem:[%s7 + $0x1d0] sm:$0xff]
      %v972 = vld [vmem:[%s7 + $0x1d8] sm:$0xff]
      %v973 = vld [vmem:[%s7 + $0x1e0] sm:$0xff]
      %v974 = vld [vmem:[%s7 + $0x1e8] sm:$0xff]
      %v975 = vld [vmem:[%s7 + $0x1f0] sm:$0xff]
      %v976 = vld [vmem:[%s7 + $0x1f8] sm:$0xff]
      %977 = vmatprep.subr.mxu0 %v914
      %978 = vmatpush1.msra.mxu0 %v913
      %979 = vmatprep.subr.mxu0 %v916
      %980 = vmatpush1.msra.mxu0 %v915
      %981 = vmatprep.subr.mxu0 %v918
      %982 = vmatpush1.msra.mxu0 %v917
      %983 = vmatprep.subr.mxu0 %v920
      %984 = vmatpush1.msra.mxu0 %v919
      %985 = vmatprep.subr.mxu0 %v922
      %986 = vmatpush1.msra.mxu0 %v921
      %987 = vmatprep.subr.mxu0 %v924
      %988 = vmatpush1.msra.mxu0 %v923
      %989 = vmatprep.subr.mxu0 %v926
      %990 = vmatpush1.msra.mxu0 %v925
      %991 = vmatprep.subr.mxu0 %v928
      %992 = vmatpush1.msra.mxu0 %v927
      %993 = vmatprep.subr.mxu0 %v930
      %994 = vmatpush1.msra.mxu0 %v929
      %995 = vmatprep.subr.mxu0 %v932
      %996 = vmatpush1.msra.mxu0 %v931
      %997 = vmatprep.subr.mxu0 %v934
      %998 = vmatpush1.msra.mxu0 %v933
      %999 = vmatprep.subr.mxu0 %v936
      %1000 = vmatpush1.msra.mxu0 %v935
      %1001 = vmatprep.subr.mxu0 %v938
      %1002 = vmatpush1.msra.mxu0 %v937
      %1003 = vmatprep.subr.mxu0 %v940
      %1004 = vmatpush1.msra.mxu0 %v939
      %1005 = vmatprep.subr.mxu0 %v942
      %1006 = vmatpush1.msra.mxu0 %v941
      %1007 = vmatprep.subr.mxu0 %v944
      %1008 = vmatpush1.msra.mxu0 %v943
      %1009 = vmatprep.subr.mxu0 %v946
      %1010 = vmatpush1.msra.mxu0 %v945
      %1011 = vmatprep.subr.mxu0 %v948
      %1012 = vmatpush1.msra.mxu0 %v947
      %1013 = vmatprep.subr.mxu0 %v950
      %1014 = vmatpush1.msra.mxu0 %v949
      %1015 = vmatprep.subr.mxu0 %v952
      %1016 = vmatpush1.msra.mxu0 %v951
      %1017 = vmatprep.subr.mxu0 %v954
      %1018 = vmatpush1.msra.mxu0 %v953
      %1019 = vmatprep.subr.mxu0 %v956
      %1020 = vmatpush1.msra.mxu0 %v955
      %1021 = vmatprep.subr.mxu0 %v958
      %1022 = vmatpush1.msra.mxu0 %v957
      %1023 = vmatprep.subr.mxu0 %v960
      %1024 = vmatpush1.msra.mxu0 %v959
      %1025 = vmatprep.subr.mxu0 %v962
      %1026 = vmatpush1.msra.mxu0 %v961
      %1027 = vmatprep.subr.mxu0 %v964
      %1028 = vmatpush1.msra.mxu0 %v963
      %1029 = vmatprep.subr.mxu0 %v966
      %1030 = vmatpush1.msra.mxu0 %v965
      %1031 = vmatprep.subr.mxu0 %v968
      %1032 = vmatpush1.msra.mxu0 %v967
      %1033 = vmatprep.subr.mxu0 %v970
      %1034 = vmatpush1.msra.mxu0 %v969
      %1035 = vmatprep.subr.mxu0 %v972
      %1036 = vmatpush1.msra.mxu0 %v971
      %1037 = vmatprep.subr.mxu0 %v974
      %1038 = vmatpush1.msra.mxu0 %v973
      %1039 = vmatprep.subr.mxu0 %v976
      %1040 = vmatpush1.msra.mxu0 %v975
      %1041 = vmatprep.mubr.f32.mxu0 %v910
      %1042 = vmatmul.mubr.f32.gmra.mrb[0].mxu0 %v909
      %v1043 = vpop.f32.mrb[0].mxu0
      %v1044 = vadd.f32 0.0, %v1043
      %v1045 = vpop.f32.mrb[0].mxu0
      %v1046 = vadd.f32 0.0, %v1045
      %1047 = vmatprep.mubr.f32.mxu0 %v912
      %1048 = vmatmul.mubr.f32.gmra.mrb[0].mxu0 %v911
      %v1049 = vpop.f32.mrb[0].mxu0
      %v1050 = vadd.f32 0.0, %v1049
      %v1051 = vpop.f32.mrb[0].mxu0
      %v1052 = vadd.f32 0.0, %v1051
      %1053 = vdwg.mxu0
      %v1054 = vadd.f32 %v905, %v1044
      %v1055 = vadd.f32 %v906, %v1046
      %v1056 = vadd.f32 %v907, %v1050
      %v1057 = vadd.f32 %v908, %v1052
      %v1058 = vld [vmem:[%s8] sm:$0x3]
      %v1060 = vlaneseq
      %v1061 = vshrl.u32 %v1060, 7
      %v1062 = vsub.s32 0, %v1061
      %v1063 = vrot.slane %v1058, %v1062
      %v1064 = vlaneseq
      %v1065 = vshrl.u32 %v1064, 7
      %v1066 = vsub.s32 1, %v1065
      %v1067 = vrot.slane %v1058, %v1066
      %v1070 = vadd.f32 %v1054, %v1063
      %v1071 = vadd.f32 %v1055, %v1067
      %v1072 = vadd.f32 %v1056, %v1063
      %v1073 = vadd.f32 %v1057, %v1067
      %v1074 = vmax.f32 %v1070, 0.0
      %v1075 = vmax.f32 %v1071, 0.0
      %v1076 = vmax.f32 %v1072, 0.0
      %v1077 = vmax.f32 %v1073, 0.0
      %v1078 = vld [vmem:[%s9] sm:$0xff]
      %v1079 = vld [vmem:[%s9 + $0x8] sm:$0xff]
      %v1080 = vld [vmem:[%s9 + $0x10] sm:$0xff]
      %v1081 = vld [vmem:[%s9 + $0x18] sm:$0xff]
      %v1082 = vld [vmem:[%s9 + $0x20] sm:$0xff]
      %v1083 = vld [vmem:[%s9 + $0x28] sm:$0xff]
      %v1084 = vld [vmem:[%s9 + $0x30] sm:$0xff]
      %v1085 = vld [vmem:[%s9 + $0x38] sm:$0xff]
      %v1086 = vld [vmem:[%s9 + $0x40] sm:$0xff]
      %v1087 = vld [vmem:[%s9 + $0x48] sm:$0xff]
      %v1088 = vld [vmem:[%s9 + $0x50] sm:$0xff]
      %v1089 = vld [vmem:[%s9 + $0x58] sm:$0xff]
      %v1090 = vld [vmem:[%s9 + $0x60] sm:$0xff]
      %v1091 = vld [vmem:[%s9 + $0x68] sm:$0xff]
      %v1092 = vld [vmem:[%s9 + $0x70] sm:$0xff]
      %v1093 = vld [vmem:[%s9 + $0x78] sm:$0xff]
      %v1094 = vld [vmem:[%s9 + $0x80] sm:$0xff]
      %v1095 = vld [vmem:[%s9 + $0x88] sm:$0xff]
      %v1096 = vld [vmem:[%s9 + $0x90] sm:$0xff]
      %v1097 = vld [vmem:[%s9 + $0x98] sm:$0xff]
      %v1098 = vld [vmem:[%s9 + $0xa0] sm:$0xff]
      %v1099 = vld [vmem:[%s9 + $0xa8] sm:$0xff]
      %v1100 = vld [vmem:[%s9 + $0xb0] sm:$0xff]
      %v1101 = vld [vmem:[%s9 + $0xb8] sm:$0xff]
      %v1102 = vld [vmem:[%s9 + $0xc0] sm:$0xff]
      %v1103 = vld [vmem:[%s9 + $0xc8] sm:$0xff]
      %v1104 = vld [vmem:[%s9 + $0xd0] sm:$0xff]
      %v1105 = vld [vmem:[%s9 + $0xd8] sm:$0xff]
      %v1106 = vld [vmem:[%s9 + $0xe0] sm:$0xff]
      %v1107 = vld [vmem:[%s9 + $0xe8] sm:$0xff]
      %v1108 = vld [vmem:[%s9 + $0xf0] sm:$0xff]
      %v1109 = vld [vmem:[%s9 + $0xf8] sm:$0xff]
      %v1110 = vld [vmem:[%s10] sm:$0x1]
      %v1112 = vlaneseq
      %v1113 = vshrl.u32 %v1112, 7
      %v1114 = vsub.s32 0, %v1113
      %v1115 = vrot.slane %v1110, %v1114
      %1117 = vmatprep.subr.mxu0 0.0
      %1118 = vmatpush1.msra.mxu0 %v1078
      %1119 = vmatprep.subr.mxu0 0.0
      %1120 = vmatpush1.msra.mxu0 %v1079
      %1121 = vmatprep.subr.mxu0 0.0
      %1122 = vmatpush1.msra.mxu0 %v1080
      %1123 = vmatprep.subr.mxu0 0.0
      %1124 = vmatpush1.msra.mxu0 %v1081
      %1125 = vmatprep.subr.mxu0 0.0
      %1126 = vmatpush1.msra.mxu0 %v1082
      %1127 = vmatprep.subr.mxu0 0.0
      %1128 = vmatpush1.msra.mxu0 %v1083
      %1129 = vmatprep.subr.mxu0 0.0
      %1130 = vmatpush1.msra.mxu0 %v1084
      %1131 = vmatprep.subr.mxu0 0.0
      %1132 = vmatpush1.msra.mxu0 %v1085
      %1133 = vmatprep.subr.mxu0 0.0
      %1134 = vmatpush1.msra.mxu0 %v1086
      %1135 = vmatprep.subr.mxu0 0.0
      %1136 = vmatpush1.msra.mxu0 %v1087
      %1137 = vmatprep.subr.mxu0 0.0
      %1138 = vmatpush1.msra.mxu0 %v1088
      %1139 = vmatprep.subr.mxu0 0.0
      %1140 = vmatpush1.msra.mxu0 %v1089
      %1141 = vmatprep.subr.mxu0 0.0
      %1142 = vmatpush1.msra.mxu0 %v1090
      %1143 = vmatprep.subr.mxu0 0.0
      %1144 = vmatpush1.msra.mxu0 %v1091
      %1145 = vmatprep.subr.mxu0 0.0
      %1146 = vmatpush1.msra.mxu0 %v1092
      %1147 = vmatprep.subr.mxu0 0.0
      %1148 = vmatpush1.msra.mxu0 %v1093
      %1149 = vmatprep.subr.mxu0 0.0
      %1150 = vmatpush1.msra.mxu0 %v1094
      %1151 = vmatprep.subr.mxu0 0.0
      %1152 = vmatpush1.msra.mxu0 %v1095
      %1153 = vmatprep.subr.mxu0 0.0
      %1154 = vmatpush1.msra.mxu0 %v1096
      %1155 = vmatprep.subr.mxu0 0.0
      %1156 = vmatpush1.msra.mxu0 %v1097
      %1157 = vmatprep.subr.mxu0 0.0
      %1158 = vmatpush1.msra.mxu0 %v1098
      %1159 = vmatprep.subr.mxu0 0.0
      %1160 = vmatpush1.msra.mxu0 %v1099
      %1161 = vmatprep.subr.mxu0 0.0
      %1162 = vmatpush1.msra.mxu0 %v1100
      %1163 = vmatprep.subr.mxu0 0.0
      %1164 = vmatpush1.msra.mxu0 %v1101
      %1165 = vmatprep.subr.mxu0 0.0
      %1166 = vmatpush1.msra.mxu0 %v1102
      %1167 = vmatprep.subr.mxu0 0.0
      %1168 = vmatpush1.msra.mxu0 %v1103
      %1169 = vmatprep.subr.mxu0 0.0
      %1170 = vmatpush1.msra.mxu0 %v1104
      %1171 = vmatprep.subr.mxu0 0.0
      %1172 = vmatpush1.msra.mxu0 %v1105
      %1173 = vmatprep.subr.mxu0 0.0
      %1174 = vmatpush1.msra.mxu0 %v1106
      %1175 = vmatprep.subr.mxu0 0.0
      %1176 = vmatpush1.msra.mxu0 %v1107
      %1177 = vmatprep.subr.mxu0 0.0
      %1178 = vmatpush1.msra.mxu0 %v1108
      %1179 = vmatprep.subr.mxu0 0.0
      %1180 = vmatpush1.msra.mxu0 %v1109
      %1181 = vmatprep.mubr.f32.mxu0 %v1075
      %1182 = vmatmul.mubr.f32.gmra.mrb[0].mxu0 %v1074
      %v1183 = vpop.f32.mrb[0].mxu0
      %v1184 = vadd.f32 %v1115, %v1183
      %v1185 = vpop.f32.mrb[0].mxu0
      %1186 = vmatprep.mubr.f32.mxu0 %v1077
      %1187 = vmatmul.mubr.f32.gmra.mrb[0].mxu0 %v1076
      %v1188 = vpop.f32.mrb[0].mxu0
      %v1189 = vadd.f32 %v1115, %v1188
      %v1190 = vpop.f32.mrb[0].mxu0
      %1191 = vdwg.mxu0
      %v1192 = vmax.f32 %v1184, 0.0
      %v1193 = vmax.f32 %v1189, 0.0
      %v1194 = vld [vmem:[%s11] sm:$0xff]
      %v1195 = vld [vmem:[%s11 + $0x8] sm:$0xff]
      %v1196 = vld [vmem:[%s11 + $0x10] sm:$0xff]
      %v1197 = vld [vmem:[%s11 + $0x18] sm:$0xff]
      %v1198 = vld [vmem:[%s11 + $0x20] sm:$0xff]
      %v1199 = vld [vmem:[%s11 + $0x28] sm:$0xff]
      %v1200 = vld [vmem:[%s11 + $0x30] sm:$0xff]
      %v1201 = vld [vmem:[%s11 + $0x38] sm:$0xff]
      %v1202 = vld [vmem:[%s12] sm:$0x1]
      %v1204 = vlaneseq
      %v1205 = vshrl.u32 %v1204, 7
      %v1206 = vsub.s32 0, %v1205
      %v1207 = vrot.slane %v1202, %v1206
      %v1210 = vsel %vm627, %v1192, 0
      %v1213 = vsel %vm627, %v1193, 0
      %1215 = vmatprep.subr.mxu0 0.0
      %1216 = vmatpush1.msra.mxu0 %v1194
      %1217 = vmatprep.subr.mxu0 0.0
      %1218 = vmatpush1.msra.mxu0 %v1195
      %1219 = vmatprep.subr.mxu0 0.0
      %1220 = vmatpush1.msra.mxu0 %v1196
      %1221 = vmatprep.subr.mxu0 0.0
      %1222 = vmatpush1.msra.mxu0 %v1197
      %1223 = vmatprep.subr.mxu0 0.0
      %1224 = vmatpush1.msra.mxu0 %v1198
      %1225 = vmatprep.subr.mxu0 0.0
      %1226 = vmatpush1.msra.mxu0 %v1199
      %1227 = vmatprep.subr.mxu0 0.0
      %1228 = vmatpush1.msra.mxu0 %v1200
      %1229 = vmatprep.subr.mxu0 0.0
      %1230 = vmatpush1.msra.mxu0 %v1201
      %1231 = vmatprep.subr.mxu0 0.0
      %1232 = vmatpush1.msra.mxu0 0.0
      %1233 = vmatprep.subr.mxu0 0.0
      %1234 = vmatpush1.msra.mxu0 0.0
      %1235 = vmatprep.subr.mxu0 0.0
      %1236 = vmatpush1.msra.mxu0 0.0
      %1237 = vmatprep.subr.mxu0 0.0
      %1238 = vmatpush1.msra.mxu0 0.0
      %1239 = vmatprep.subr.mxu0 0.0
      %1240 = vmatpush1.msra.mxu0 0.0
      %1241 = vmatprep.subr.mxu0 0.0
      %1242 = vmatpush1.msra.mxu0 0.0
      %1243 = vmatprep.subr.mxu0 0.0
      %1244 = vmatpush1.msra.mxu0 0.0
      %1245 = vmatprep.subr.mxu0 0.0
      %1246 = vmatpush1.msra.mxu0 0.0
      %1247 = vmatprep.subr.mxu0 0.0
      %1248 = vmatpush1.msra.mxu0 0.0
      %1249 = vmatprep.subr.mxu0 0.0
      %1250 = vmatpush1.msra.mxu0 0.0
      %1251 = vmatprep.subr.mxu0 0.0
      %1252 = vmatpush1.msra.mxu0 0.0
      %1253 = vmatprep.subr.mxu0 0.0
      %1254 = vmatpush1.msra.mxu0 0.0
      %1255 = vmatprep.subr.mxu0 0.0
      %1256 = vmatpush1.msra.mxu0 0.0
      %1257 = vmatprep.subr.mxu0 0.0
      %1258 = vmatpush1.msra.mxu0 0.0
      %1259 = vmatprep.subr.mxu0 0.0
      %1260 = vmatpush1.msra.mxu0 0.0
      %1261 = vmatprep.subr.mxu0 0.0
      %1262 = vmatpush1.msra.mxu0 0.0
      %1263 = vmatprep.subr.mxu0 0.0
      %1264 = vmatpush1.msra.mxu0 0.0
      %1265 = vmatprep.subr.mxu0 0.0
      %1266 = vmatpush1.msra.mxu0 0.0
      %1267 = vmatprep.subr.mxu0 0.0
      %1268 = vmatpush1.msra.mxu0 0.0
      %1269 = vmatprep.subr.mxu0 0.0
      %1270 = vmatpush1.msra.mxu0 0.0
      %1271 = vmatprep.subr.mxu0 0.0
      %1272 = vmatpush1.msra.mxu0 0.0
      %1273 = vmatprep.subr.mxu0 0.0
      %1274 = vmatpush1.msra.mxu0 0.0
      %1275 = vmatprep.subr.mxu0 0.0
      %1276 = vmatpush1.msra.mxu0 0.0
      %1277 = vmatprep.subr.mxu0 0.0
      %1278 = vmatpush1.msra.mxu0 0.0
      %1279 = vmatprep.mubr.f32.mxu0 0.0
      %1280 = vmatmul.mubr.f32.gmra.mrb[0].mxu0 %v1210
      %v1281 = vpop.f32.mrb[0].mxu0
      %v1282 = vadd.f32 %v1207, %v1281
      %v1283 = vpop.f32.mrb[0].mxu0
      %1284 = vmatprep.mubr.f32.mxu0 0.0
      %1285 = vmatmul.mubr.f32.gmra.mrb[0].mxu0 %v1213
      %v1286 = vpop.f32.mrb[0].mxu0
      %v1287 = vadd.f32 %v1207, %v1286
      %v1288 = vpop.f32.mrb[0].mxu0
      %1289 = vdwg.mxu0
      %vm1290 = vcmask 23552
      %1291 = vst.msk [vmem:[%s589] sm:$0xff] %vm1290, %v1282
      %1292 = vst.msk [vmem:[%s589 + $0x8] sm:$0xff] %vm1290, %v1287
      %s1293 = smul.u32 2, %s29
      %p1294 = scmp.lt.s32.totalorder %s28, 1
      %s1295 = scalar_select %p1294, %s28, 1
      %p1296 = scmp.lt.s32.totalorder %s1293, 1
      %s1297 = scalar_select %p1296, %s1293, 1
      %s1298 = smul.addr %s1295, 2
      %s1299 = sadd.s32 %s1297, %s1298
      %s1300 = smul.addr %s1299, 8
      %s1301 = scalar_lea.vmem %s13, %s1300
      // Predicated region
      $region73: #{_lambda_.9} parent=71 // pred_check
        %p1302 = pneg %p357
      $region74: #{_lambda_.9} parent=71 // pred_check_branch
        %1304 = sbr.rel (%p1302) target = $region76
      $region75: #{_lambda_.9} parent=71 // pred_region
        %s1305 = smul.u32 2, %s29
      $region76: #{_lambda_.9} parent=71 // pred_fallthru
        _
    $region72: #{_lambda_.9} parent=5 // pred_fallthru
      _
    %p1306 = scmp.le.s32.totalorder 2, %s19
    // Predicated region
    $region77: #{_lambda_.9} parent=5 // pred_check
      %p1307 = pneg %p1306
    $region78: #{_lambda_.9} parent=5 // pred_check_branch
      %1309 = sbr.rel (%p1307) target = $region80
    $region79: #{_lambda_.9} parent=5 // pred_region
      %s1310 = ssub.s32 %s19, 2
      // Predicated region
      $region81: #{_lambda_.9} parent=79 // pred_check
        %p1311 = pneg %p363
      $region82: #{_lambda_.9} parent=79 // pred_check_branch
        %1313 = sbr.rel (%p1311) target = $region84
      $region83: #{_lambda_.9} parent=79 // pred_region
        %s1314 = smul.u32 2, %s31
        %p1315 = scmp.lt.s32.totalorder %s30, 1
        %s1316 = scalar_select %p1315, %s30, 1
        %p1317 = scmp.lt.s32.totalorder %s1314, 1
        %s1318 = scalar_select %p1317, %s1314, 1
        %s1319 = smul.addr %s1316, 2
        %s1320 = sadd.s32 %s1318, %s1319
        %s1321 = smul.addr %s1320, 8
        %s1322 = scalar_lea.vmem %s13, %s1321
      $region84: #{_lambda_.9} parent=79 // pred_fallthru
        _
    $region80: #{_lambda_.9} parent=5 // pred_fallthru
      _
  $region6: #{_lambda_.9} parent=0 // loop_footer
    %s23 = sadd.s32 1, %s19
  $region7: #{_lambda_.9} parent=0 // loop_footer_branch
    %18 = sbr.rel target = $region3
  $region8: #{_lambda_.9} parent=0 // loop_exit
    _

</llo_original>
